<compile_context>
chip_gen: v7x
topology: tpu7x:2x2x1
jax: 0.10.0
libtpu: 0.0.40
codegen_flags: <defaults>
</compile_context>

<pallas_src>
import jax
import jax.numpy as jnp
from jax import lax
from jax.experimental import pallas as pl
from jax.experimental.pallas import tpu as pltpu

# ----------------------------- model / problem sizes -----------------------------
N_ATOMS = 16          # atoms per replica
HIDDEN = 32           # hidden width of IN layers (torch default 128; small for demo)
NUM_REPS = 2          # number of replicas
REPS_PER_BLOCK = 2    # replicas packed into one grid step
NUM_SOLVENTS = 4      # solvent vocabulary size
M_NODES = REPS_PER_BLOCK * N_ATOMS

# ----------------------------- physical constants --------------------------------
PD_EPS = 1e-6               # torch.nn.PairwiseDistance eps
OFFSET = 0.0195141          # GBNeck radius offset
SA_GAMMA = 0.00542
FRACTION = 0.5
COULOMB = 138.935485        # kJ*nm/(mol*e^2)
OBC_A, OBC_B, OBC_G = 1.0, 0.8, 4.85
GNN_RADIUS = 0.4            # build_gnn_graph radius (GNN3_multisolvent default)


def _silu(x):
    return x * jax.nn.sigmoid(x)


def gnn3_kernel(pos_ref, posT_ref, prm_ref, prmT_ref, oh_ref, diel_ref,
                wt1_ref, bt1_ref, wt2_ref, bt2_ref,
                w1t_ref, w1s_ref, w1e_ref, w1k_ref, b1_ref, w1o_ref, b1o_ref,
                w2t_ref, w2s_ref, w2e_ref, w2k_ref, b2_ref, w2o_ref, b2o_ref,
                w3t_ref, w3s_ref, w3e_ref, w3k_ref, b3_ref, w3o_ref, b3o_ref,
                out_ref):
    m = M_NODES
    pos = pos_ref[0]        # [M, 3]
    posT = posT_ref[0]      # [3, M]

    # ---------------- pairwise distances: D[i, j] = ||p_j - p_i + eps|| ----------------
    dx = posT[0:1, :] - pos[:, 0:1] + PD_EPS
    dy = posT[1:2, :] - pos[:, 1:2] + PD_EPS
    dz = posT[2:3, :] - pos[:, 2:3] + PD_EPS
    d = jnp.sqrt(dx * dx + dy * dy + dz * dz)                        # [M, M]

    row = lax.broadcasted_iota(jnp.int32, (m, m), 0)
    col = lax.broadcasted_iota(jnp.int32, (m, m), 1)
    # block-diagonal "same replica" mask (float floor avoids integer vector division)
    rep_r = jnp.floor(row.astype(jnp.float32) * (1.0 / N_ATOMS))
    rep_c = jnp.floor(col.astype(jnp.float32) * (1.0 / N_ATOMS))
    same_rep = rep_r == rep_c
    offdiag = row != col
    valid = same_rep & offdiag                # GBNeck r=10 nm graph => all within-rep pairs
    valid_f = valid.astype(jnp.float32)
    d_safe = jnp.where(valid, d, 1.0)

    q = prm_ref[:, 0:1]         # [M, 1] charge
    rho = prm_ref[:, 1:2]       # [M, 1] offset radius (x[:, 1])
    qT = prmT_ref[0:1, :]       # [1, M]
    rhoT = prmT_ref[1:2, :]
    sclT = prmT_ref[2:3, :]

    # ---------------- GBNeck_interaction: HCT descreening + OBC-II Born radii ----------------
    sr_j = sclT * rhoT
    U = d_safe + sr_j
    L = jnp.maximum(jnp.abs(d_safe - sr_j), rho)
    invU = 1.0 / U
    invL = 1.0 / L
    C = jnp.where(rho < sr_j - d_safe, 2.0 * (1.0 / rho - invL), 0.0)
    Iij = 0.5 * (invL - invU
                 + 0.25 * (d_safe - sr_j * sr_j / d_safe) * (invU * invU - invL * invL)
                 + 0.5 * jnp.log(L * invU) / d_safe
                 + C)
    Iij = jnp.where((d_safe + sr_j > rho) & valid, Iij, 0.0)
    # TODO(synk): GB-Neck2 "neck" lookup-table correction (d0/m0 per radius pair) omitted;
    #             only the HCT integral + OBC-II rescaling is implemented (layer source not provided).
    I = jnp.sum(Iij, axis=1, keepdims=True)                          # [M, 1]

    radius = rho + OFFSET
    psi = I * rho
    born = 1.0 / (1.0 / rho
                  - jnp.tanh(OBC_A * psi - OBC_B * psi * psi + OBC_G * psi * psi * psi) / radius)

    # ---------------- GNN sub-graph mask (within-rep edges with d < 0.4 nm) ----------------
    gmask = jnp.where(valid & (d < GNN_RADIUS), 1.0, 0.0)            # [M, M]
    deg = jnp.sum(gmask, axis=1, keepdims=True)                      # [M, 1]
    gmask3 = gmask[:, :, None]                                       # [M, M, 1]
    d3 = d[:, :, None]                                               # [M, M, 1]

    # ---------------- solvent token embedding: token_lin2(silu(token_lin1(one_hot))) ----------------
    oh = oh_ref[0]                                                   # [M, S]
    emb = _silu(jnp.dot(oh, wt1_ref[...], preferred_element_type=jnp.float32) + bt1_ref[...])
    emb = jnp.dot(emb, wt2_ref[...], preferred_element_type=jnp.float32) + bt2_ref[...]

    # ---------------- IN_layer_all_swish_2pass_tokens ----------------
    # message(x_i, x_j, d, emb_i) = lin2(silu(lin1([x_i, x_j, d, emb_i]))), aggr='add' at i.
    # Vectorized: pre[i,j,:] = A[i,:] + B[j,:] + d[i,j]*w_edge ; agg = sum_j silu(pre)*mask.
    # TODO(synk): exact IN_layer_all_swish_2pass_tokens source not provided; solvent tokens
    #             are folded in as a per-target-node lin1 contribution (emb @ W_token).
    def in_layer(X, wt, ws, we, wk, b1, wo, bo):
        A = (jnp.dot(X, wt, preferred_element_type=jnp.float32)
             + jnp.dot(emb, wk, preferred_element_type=jnp.float32) + b1)     # [M, H]
        B = jnp.dot(X, ws, preferred_element_type=jnp.float32)                # [M, H]
        h = we.shape[1]
        pre = A[:, None, :] + B[None, :, :] + d3 * we.reshape(1, 1, h)        # [M, M, H]
        agg = jnp.sum(_silu(pre) * gmask3, axis=1)                            # [M, H]
        return jnp.dot(agg, wo, preferred_element_type=jnp.float32) + deg * bo

    X0 = jnp.concatenate([born, q, rho], axis=1)                     # Bcn = concat(Bc, x[:,1])
    X1 = _silu(in_layer(X0, w1t_ref[...], w1s_ref[...], w1e_ref[...], w1k_ref[...],
                        b1_ref[...], w1o_ref[...], b1o_ref[...]))
    X2 = _silu(in_layer(X1, w2t_ref[...], w2s_ref[...], w2e_ref[...], w2k_ref[...],
                        b2_ref[...], w2o_ref[...], b2o_ref[...]))
    X3 = in_layer(X2, w3t_ref[...], w3s_ref[...], w3e_ref[...], w3k_ref[...],
                  b3_ref[...], w3o_ref[...], b3o_ref[...])            # [M, 2]

    c_scale = X3[:, 0:1]
    sa_scale = X3[:, 1:2]
    sasa = jax.nn.sigmoid(sa_scale) * (radius + 0.14) ** 2
    sa_energies = 4.184 * SA_GAMMA * sasa * 100.0                    # [M, 1]

    born_s = born * (FRACTION + jax.nn.sigmoid(c_scale) * (1.0 - FRACTION) * 2.0)

    # ---------------- GBNeck_energies_no_dielectric: per-atom solvent dielectric ----------------
    # TODO(synk): exact GBNeck_energies_no_dielectric source not provided; the standard GB
    #             pair/self energy with prefactor -0.5*k*(1 - 1/eps_i) per target atom is used.
    eps_s = diel_ref[0]                                              # [M, 1]
    prefac = -0.5 * COULOMB * (1.0 - 1.0 / eps_s)                    # [M, 1]

    eyef = jnp.where(row == col, 1.0, 0.0)
    born_row = jnp.sum(eyef * born_s, axis=0, keepdims=True)         # [1, M] = born_s transposed
    BiBj = born_s * born_row
    expf = jnp.exp(-(d_safe * d_safe) / (4.0 * BiBj))
    fgb = jnp.sqrt(d_safe * d_safe + BiBj * expf)
    e_cross = prefac * jnp.sum(valid_f * (q * qT) / fgb, axis=1, keepdims=True)
    e_self = prefac * (q * q) / born_s
    energies = e_cross + e_self + sa_energies                        # [M, 1]

    # per-block scalar, stored lane-dense across a full 128-lane row
    total = jnp.sum(energies, axis=0, keepdims=True)                 # [1, 1]
    out_ref[0] = jnp.broadcast_to(total, (1, 128))


def gnn3_forward(positions, prm, solvent_onehot, solvent_dielectric, weights):
    """positions: [R*N, 3]; prm: [N, 3]; solvent_onehot: [R*N, S]; solvent_dielectric: [R*N].
    Returns the scalar (energies + sa_energies).sum()."""
    R, N = NUM_REPS, N_ATOMS
    rpb = REPS_PER_BLOCK
    assert R % rpb == 0
    nb = R // rpb
    m = rpb * N

    pos = positions.reshape(nb, m, 3).astype(jnp.float32)
    posT = jnp.transpose(pos, (0, 2, 1))
    prm_t = jnp.tile(prm.astype(jnp.float32), (rpb, 1))              # [M, 3] (shared per block)
    prmT = prm_t.T                                                   # [3, M]
    oh = solvent_onehot.reshape(nb, m, NUM_SOLVENTS).astype(jnp.float32)
    diel = solvent_dielectric.reshape(nb, m, 1).astype(jnp.float32)

    in_specs = [
        pl.BlockSpec((1, m, 3), lambda b: (b, 0, 0)),                # pos
        pl.BlockSpec((1, 3, m), lambda b: (b, 0, 0)),                # posT
        pl.BlockSpec((m, 3), lambda b: (0, 0)),                      # prm (tiled over reps)
        pl.BlockSpec((3, m), lambda b: (0, 0)),                      # prmT
        pl.BlockSpec((1, m, NUM_SOLVENTS), lambda b: (b, 0, 0)),     # solvent one-hot
        pl.BlockSpec((1, m, 1), lambda b: (b, 0, 0)),                # solvent dielectric
    ] + [pl.BlockSpec(w.shape, lambda b: (0, 0)) for w in weights]

    out = pl.pallas_call(
        gnn3_kernel,
        out_shape=jax.ShapeDtypeStruct((nb, 1, 128), jnp.float32),
        grid_spec=pltpu.PrefetchScalarGridSpec(
            num_scalar_prefetch=0,
            grid=(nb,),
            in_specs=in_specs,
            out_specs=pl.BlockSpec((1, 1, 128), lambda b: (b, 0, 0)),
        ),
        compiler_params=pltpu.CompilerParams(dimension_semantics=("parallel",)),
    )(pos, posT, prm_t, prmT, oh, diel, *weights)

    return jnp.sum(out[:, 0, 0])


if __name__ == "__main__":
    key = jax.random.PRNGKey(0)
    ks = jax.random.split(key, 20)

    # deterministic positions: jittered 4x4 grid per replica (spacing 0.25 nm)
    base2d = jnp.stack(jnp.meshgrid(jnp.arange(4.0), jnp.arange(4.0), indexing="ij"),
                       axis=-1).reshape(N_ATOMS, 2) * 0.25
    base = jnp.concatenate([base2d, jnp.zeros((N_ATOMS, 1))], axis=1)
    reps = []
    for r in range(NUM_REPS):
        jitter = 0.03 * jax.random.uniform(ks[r], (N_ATOMS, 3), minval=-1.0, maxval=1.0)
        reps.append(base + jitter)
    positions = jnp.concatenate(reps, axis=0).astype(jnp.float32)    # [R*N, 3]

    # per-atom GB parameters: (charge, offset_radius, scale)
    charge = jax.random.uniform(ks[4], (N_ATOMS, 1), minval=-0.3, maxval=0.3)
    radius = jax.random.uniform(ks[5], (N_ATOMS, 1), minval=0.12, maxval=0.17)
    scale = jax.random.uniform(ks[6], (N_ATOMS, 1), minval=0.7, maxval=0.9)
    prm = jnp.concatenate([charge, radius - OFFSET, scale], axis=1).astype(jnp.float32)

    # per-node solvent model index + dielectric (constant within a replica)
    solvent_idx = jnp.repeat(jnp.arange(NUM_REPS) % NUM_SOLVENTS, N_ATOMS)
    dielectrics = jnp.array([78.5, 36.7, 46.7, 32.7], dtype=jnp.float32)
    solvent_dielectric = dielectrics[solvent_idx]
    solvent_onehot = jax.nn.one_hot(solvent_idx, NUM_SOLVENTS, dtype=jnp.float32)

    def lin_init(k, fan_in, fan_out):
        kw, kb = jax.random.split(k)
        bound = 1.0 / float(fan_in) ** 0.5
        W = jax.random.uniform(kw, (fan_in, fan_out), minval=-bound, maxval=bound)
        b = jax.random.uniform(kb, (1, fan_out), minval=-bound, maxval=bound)
        return W.astype(jnp.float32), b.astype(jnp.float32)

    H, S = HIDDEN, NUM_SOLVENTS
    # token MLP (num_solvents -> num_solvents, twice)
    wt1, bt1 = lin_init(ks[13], S, S)
    wt2, bt2 = lin_init(ks[14], S, S)

    # interaction layers; lin1 weight split host-side into target/source/edge/token parts
    def in_layer_init(k, fin, fout):
        k1, k2 = jax.random.split(k)
        W1, b1 = lin_init(k1, 2 * fin + 1 + S, H)     # lin1: [x_i, x_j, d, emb] -> hidden
        W2, b2 = lin_init(k2, H, fout)                # lin2: hidden -> fout
        return (W1[:fin], W1[fin:2 * fin], W1[2 * fin:2 * fin + 1], W1[2 * fin + 1:],
                b1, W2, b2)

    l1 = in_layer_init(ks[9], 3, H)       # interaction1 (3 + 3 node features)
    l2 = in_layer_init(ks[10], H, H)      # interaction2
    l3 = in_layer_init(ks[11], H, 2)      # interaction3
    weights = (wt1, bt1, wt2, bt2) + l1 + l2 + l3

    energy = gnn3_forward(positions, prm, solvent_onehot, solvent_dielectric, weights)
    jax.block_until_ready(energy)
    print("KERNEL_OK")
</pallas_src>

<mosaic_0001>
module attributes {stable_mosaic.version = 11 : i64} {
  func.func @gnn3_kernel(%arg0: i32, %arg1: memref<1x32x3xf32, #tpu.memory_space<vmem>>, %arg2: memref<1x3x32xf32, #tpu.memory_space<vmem>>, %arg3: memref<32x3xf32, #tpu.memory_space<vmem>>, %arg4: memref<3x32xf32, #tpu.memory_space<vmem>>, %arg5: memref<1x32x4xf32, #tpu.memory_space<vmem>>, %arg6: memref<1x32x1xf32, #tpu.memory_space<vmem>>, %arg7: memref<4x4xf32, #tpu.memory_space<vmem>>, %arg8: memref<1x4xf32, #tpu.memory_space<vmem>>, %arg9: memref<4x4xf32, #tpu.memory_space<vmem>>, %arg10: memref<1x4xf32, #tpu.memory_space<vmem>>, %arg11: memref<3x32xf32, #tpu.memory_space<vmem>>, %arg12: memref<3x32xf32, #tpu.memory_space<vmem>>, %arg13: memref<1x32xf32, #tpu.memory_space<vmem>>, %arg14: memref<4x32xf32, #tpu.memory_space<vmem>>, %arg15: memref<1x32xf32, #tpu.memory_space<vmem>>, %arg16: memref<32x32xf32, #tpu.memory_space<vmem>>, %arg17: memref<1x32xf32, #tpu.memory_space<vmem>>, %arg18: memref<32x32xf32, #tpu.memory_space<vmem>>, %arg19: memref<32x32xf32, #tpu.memory_space<vmem>>, %arg20: memref<1x32xf32, #tpu.memory_space<vmem>>, %arg21: memref<4x32xf32, #tpu.memory_space<vmem>>, %arg22: memref<1x32xf32, #tpu.memory_space<vmem>>, %arg23: memref<32x32xf32, #tpu.memory_space<vmem>>, %arg24: memref<1x32xf32, #tpu.memory_space<vmem>>, %arg25: memref<32x32xf32, #tpu.memory_space<vmem>>, %arg26: memref<32x32xf32, #tpu.memory_space<vmem>>, %arg27: memref<1x32xf32, #tpu.memory_space<vmem>>, %arg28: memref<4x32xf32, #tpu.memory_space<vmem>>, %arg29: memref<1x32xf32, #tpu.memory_space<vmem>>, %arg30: memref<32x2xf32, #tpu.memory_space<vmem>>, %arg31: memref<1x2xf32, #tpu.memory_space<vmem>>, %arg32: memref<1x1x128xf32, #tpu.memory_space<vmem>>) attributes {dimension_semantics = [#tpu.dimension_semantics<parallel>], iteration_bounds = array<i64: 1>, scalar_prefetch = 0 : i64, scratch_operands = 0 : i64, tpu.core_type = #tpu.core_type<tc>, window_params = [{transform_indices = @transform_0, window_bounds = array<i64: 1, 32, 3>}, {transform_indices = @transform_1, window_bounds = array<i64: 1, 3, 32>}, {pipeline_mode = #tpu.pipeline_mode<synchronous>, transform_indices = @transform_2, window_bounds = array<i64: 32, 3>}, {pipeline_mode = #tpu.pipeline_mode<synchronous>, transform_indices = @transform_3, window_bounds = array<i64: 3, 32>}, {transform_indices = @transform_4, window_bounds = array<i64: 1, 32, 4>}, {transform_indices = @transform_5, window_bounds = array<i64: 1, 32, 1>}, {pipeline_mode = #tpu.pipeline_mode<synchronous>, transform_indices = @transform_6, window_bounds = array<i64: 4, 4>}, {pipeline_mode = #tpu.pipeline_mode<synchronous>, transform_indices = @transform_7, window_bounds = array<i64: 1, 4>}, {pipeline_mode = #tpu.pipeline_mode<synchronous>, transform_indices = @transform_8, window_bounds = array<i64: 4, 4>}, {pipeline_mode = #tpu.pipeline_mode<synchronous>, transform_indices = @transform_9, window_bounds = array<i64: 1, 4>}, {pipeline_mode = #tpu.pipeline_mode<synchronous>, transform_indices = @transform_10, window_bounds = array<i64: 3, 32>}, {pipeline_mode = #tpu.pipeline_mode<synchronous>, transform_indices = @transform_11, window_bounds = array<i64: 3, 32>}, {pipeline_mode = #tpu.pipeline_mode<synchronous>, transform_indices = @transform_12, window_bounds = array<i64: 1, 32>}, {pipeline_mode = #tpu.pipeline_mode<synchronous>, transform_indices = @transform_13, window_bounds = array<i64: 4, 32>}, {pipeline_mode = #tpu.pipeline_mode<synchronous>, transform_indices = @transform_14, window_bounds = array<i64: 1, 32>}, {pipeline_mode = #tpu.pipeline_mode<synchronous>, transform_indices = @transform_15, window_bounds = array<i64: 32, 32>}, {pipeline_mode = #tpu.pipeline_mode<synchronous>, transform_indices = @transform_16, window_bounds = array<i64: 1, 32>}, {pipeline_mode = #tpu.pipeline_mode<synchronous>, transform_indices = @transform_17, window_bounds = array<i64: 32, 32>}, {pipeline_mode = #tpu.pipeline_mode<synchronous>, transform_indices = @transform_18, window_bounds = array<i64: 32, 32>}, {pipeline_mode = #tpu.pipeline_mode<synchronous>, transform_indices = @transform_19, window_bounds = array<i64: 1, 32>}, {pipeline_mode = #tpu.pipeline_mode<synchronous>, transform_indices = @transform_20, window_bounds = array<i64: 4, 32>}, {pipeline_mode = #tpu.pipeline_mode<synchronous>, transform_indices = @transform_21, window_bounds = array<i64: 1, 32>}, {pipeline_mode = #tpu.pipeline_mode<synchronous>, transform_indices = @transform_22, window_bounds = array<i64: 32, 32>}, {pipeline_mode = #tpu.pipeline_mode<synchronous>, transform_indices = @transform_23, window_bounds = array<i64: 1, 32>}, {pipeline_mode = #tpu.pipeline_mode<synchronous>, transform_indices = @transform_24, window_bounds = array<i64: 32, 32>}, {pipeline_mode = #tpu.pipeline_mode<synchronous>, transform_indices = @transform_25, window_bounds = array<i64: 32, 32>}, {pipeline_mode = #tpu.pipeline_mode<synchronous>, transform_indices = @transform_26, window_bounds = array<i64: 1, 32>}, {pipeline_mode = #tpu.pipeline_mode<synchronous>, transform_indices = @transform_27, window_bounds = array<i64: 4, 32>}, {pipeline_mode = #tpu.pipeline_mode<synchronous>, transform_indices = @transform_28, window_bounds = array<i64: 1, 32>}, {pipeline_mode = #tpu.pipeline_mode<synchronous>, transform_indices = @transform_29, window_bounds = array<i64: 32, 2>}, {pipeline_mode = #tpu.pipeline_mode<synchronous>, transform_indices = @transform_30, window_bounds = array<i64: 1, 2>}, {transform_indices = @transform_31, window_bounds = array<i64: 1, 1, 128>}]} {
    %c0 = arith.constant 0 : index
    %c0_0 = arith.constant 0 : index
    %c0_1 = arith.constant 0 : index
    %0 = vector.load %arg1[%c0, %c0_0, %c0_1] : memref<1x32x3xf32, #tpu.memory_space<vmem>>, vector<1x32x3xf32>
    %1 = vector.shape_cast %0 : vector<1x32x3xf32> to vector<32x3xf32>
    %c0_2 = arith.constant 0 : index
    %c0_3 = arith.constant 0 : index
    %c0_4 = arith.constant 0 : index
    %2 = vector.load %arg2[%c0_2, %c0_3, %c0_4] : memref<1x3x32xf32, #tpu.memory_space<vmem>>, vector<1x3x32xf32>
    %3 = vector.shape_cast %2 : vector<1x3x32xf32> to vector<3x32xf32>
    %4 = vector.extract_strided_slice %3 {offsets = [0, 0], sizes = [1, 32], strides = [1, 1]} : vector<3x32xf32> to vector<1x32xf32>
    %5 = vector.extract_strided_slice %1 {offsets = [0, 0], sizes = [32, 1], strides = [1, 1]} : vector<32x3xf32> to vector<32x1xf32>
    %6 = vector.broadcast %4 : vector<1x32xf32> to vector<32x32xf32>
    %7 = vector.broadcast %5 : vector<32x1xf32> to vector<32x32xf32>
    %8 = arith.subf %6, %7 : vector<32x32xf32>
    %cst = arith.constant 9.99999997E-7 : f32
    %9 = vector.broadcast %cst : f32 to vector<32x32xf32>
    %10 = arith.addf %8, %9 : vector<32x32xf32>
    %11 = vector.extract_strided_slice %3 {offsets = [1, 0], sizes = [1, 32], strides = [1, 1]} : vector<3x32xf32> to vector<1x32xf32>
    %12 = vector.extract_strided_slice %1 {offsets = [0, 1], sizes = [32, 1], strides = [1, 1]} : vector<32x3xf32> to vector<32x1xf32>
    %13 = vector.broadcast %11 : vector<1x32xf32> to vector<32x32xf32>
    %14 = vector.broadcast %12 : vector<32x1xf32> to vector<32x32xf32>
    %15 = arith.subf %13, %14 : vector<32x32xf32>
    %cst_5 = arith.constant 9.99999997E-7 : f32
    %16 = vector.broadcast %cst_5 : f32 to vector<32x32xf32>
    %17 = arith.addf %15, %16 : vector<32x32xf32>
    %18 = vector.extract_strided_slice %3 {offsets = [2, 0], sizes = [1, 32], strides = [1, 1]} : vector<3x32xf32> to vector<1x32xf32>
    %19 = vector.extract_strided_slice %1 {offsets = [0, 2], sizes = [32, 1], strides = [1, 1]} : vector<32x3xf32> to vector<32x1xf32>
    %20 = vector.broadcast %18 : vector<1x32xf32> to vector<32x32xf32>
    %21 = vector.broadcast %19 : vector<32x1xf32> to vector<32x32xf32>
    %22 = arith.subf %20, %21 : vector<32x32xf32>
    %cst_6 = arith.constant 9.99999997E-7 : f32
    %23 = vector.broadcast %cst_6 : f32 to vector<32x32xf32>
    %24 = arith.addf %22, %23 : vector<32x32xf32>
    %25 = arith.mulf %10, %10 : vector<32x32xf32>
    %26 = arith.mulf %17, %17 : vector<32x32xf32>
    %27 = arith.addf %25, %26 : vector<32x32xf32>
    %28 = arith.mulf %24, %24 : vector<32x32xf32>
    %29 = arith.addf %27, %28 : vector<32x32xf32>
    %30 = math.sqrt %29 : vector<32x32xf32>
    %31 = tpu.iota {dimensions = array<i32: 0>} : vector<32x32xi32>
    %32 = tpu.iota {dimensions = array<i32: 1>} : vector<32x32xi32>
    %33 = arith.sitofp %31 : vector<32x32xi32> to vector<32x32xf32>
    %cst_7 = arith.constant 6.250000e-02 : f32
    %34 = vector.broadcast %cst_7 : f32 to vector<32x32xf32>
    %35 = arith.mulf %33, %34 : vector<32x32xf32>
    %36 = math.floor %35 : vector<32x32xf32>
    %37 = arith.sitofp %32 : vector<32x32xi32> to vector<32x32xf32>
    %cst_8 = arith.constant 6.250000e-02 : f32
    %38 = vector.broadcast %cst_8 : f32 to vector<32x32xf32>
    %39 = arith.mulf %37, %38 : vector<32x32xf32>
    %40 = math.floor %39 : vector<32x32xf32>
    %41 = arith.cmpf oeq, %36, %40 : vector<32x32xf32>
    %42 = arith.cmpi ne, %31, %32 : vector<32x32xi32>
    %43 = arith.andi %41, %42 : vector<32x32xi1>
    %44 = arith.extui %43 : vector<32x32xi1> to vector<32x32xi32>
    %45 = arith.sitofp %44 : vector<32x32xi32> to vector<32x32xf32>
    %cst_9 = arith.constant 1.000000e+00 : f32
    %46 = vector.broadcast %cst_9 : f32 to vector<32x32xf32>
    %47 = arith.select %43, %30, %46 : vector<32x32xi1>, vector<32x32xf32>
    %c0_10 = arith.constant 0 : index
    %c0_11 = arith.constant 0 : index
    %48 = vector.load %arg3[%c0_10, %c0_11] : memref<32x3xf32, #tpu.memory_space<vmem>>, vector<32x1xf32>
    %c0_12 = arith.constant 0 : index
    %c1 = arith.constant 1 : index
    %49 = vector.load %arg3[%c0_12, %c1] : memref<32x3xf32, #tpu.memory_space<vmem>>, vector<32x1xf32>
    %c0_13 = arith.constant 0 : index
    %c0_14 = arith.constant 0 : index
    %50 = vector.load %arg4[%c0_13, %c0_14] : memref<3x32xf32, #tpu.memory_space<vmem>>, vector<1x32xf32>
    %c1_15 = arith.constant 1 : index
    %c0_16 = arith.constant 0 : index
    %51 = vector.load %arg4[%c1_15, %c0_16] : memref<3x32xf32, #tpu.memory_space<vmem>>, vector<1x32xf32>
    %c2 = arith.constant 2 : index
    %c0_17 = arith.constant 0 : index
    %52 = vector.load %arg4[%c2, %c0_17] : memref<3x32xf32, #tpu.memory_space<vmem>>, vector<1x32xf32>
    %53 = arith.mulf %52, %51 : vector<1x32xf32>
    %54 = vector.broadcast %53 : vector<1x32xf32> to vector<32x32xf32>
    %55 = arith.addf %47, %54 : vector<32x32xf32>
    %56 = vector.broadcast %53 : vector<1x32xf32> to vector<32x32xf32>
    %57 = arith.subf %47, %56 : vector<32x32xf32>
    %58 = math.absf %57 : vector<32x32xf32>
    %59 = vector.broadcast %49 : vector<32x1xf32> to vector<32x32xf32>
    %60 = arith.maximumf %58, %59 : vector<32x32xf32>
    %cst_18 = arith.constant 1.000000e+00 : f32
    %61 = vector.broadcast %cst_18 : f32 to vector<32x32xf32>
    %62 = arith.divf %61, %55 : vector<32x32xf32>
    %cst_19 = arith.constant 1.000000e+00 : f32
    %63 = vector.broadcast %cst_19 : f32 to vector<32x32xf32>
    %64 = arith.divf %63, %60 : vector<32x32xf32>
    %65 = vector.broadcast %53 : vector<1x32xf32> to vector<32x32xf32>
    %66 = arith.subf %65, %47 : vector<32x32xf32>
    %67 = vector.broadcast %49 : vector<32x1xf32> to vector<32x32xf32>
    %68 = arith.cmpf olt, %67, %66 : vector<32x32xf32>
    %cst_20 = arith.constant 1.000000e+00 : f32
    %69 = vector.broadcast %cst_20 : f32 to vector<32x1xf32>
    %70 = arith.divf %69, %49 : vector<32x1xf32>
    %71 = vector.broadcast %70 : vector<32x1xf32> to vector<32x32xf32>
    %72 = arith.subf %71, %64 : vector<32x32xf32>
    %cst_21 = arith.constant 2.000000e+00 : f32
    %73 = vector.broadcast %cst_21 : f32 to vector<32x32xf32>
    %74 = arith.mulf %73, %72 : vector<32x32xf32>
    %cst_22 = arith.constant 0.000000e+00 : f32
    %75 = vector.broadcast %cst_22 : f32 to vector<32x32xf32>
    %76 = arith.select %68, %74, %75 : vector<32x32xi1>, vector<32x32xf32>
    %77 = arith.subf %64, %62 : vector<32x32xf32>
    %78 = arith.mulf %53, %53 : vector<1x32xf32>
    %79 = vector.broadcast %78 : vector<1x32xf32> to vector<32x32xf32>
    %80 = arith.divf %79, %47 : vector<32x32xf32>
    %81 = arith.subf %47, %80 : vector<32x32xf32>
    %cst_23 = arith.constant 2.500000e-01 : f32
    %82 = vector.broadcast %cst_23 : f32 to vector<32x32xf32>
    %83 = arith.mulf %82, %81 : vector<32x32xf32>
    %84 = arith.mulf %62, %62 : vector<32x32xf32>
    %85 = arith.mulf %64, %64 : vector<32x32xf32>
    %86 = arith.subf %84, %85 : vector<32x32xf32>
    %87 = arith.mulf %83, %86 : vector<32x32xf32>
    %88 = arith.addf %77, %87 : vector<32x32xf32>
    %89 = arith.mulf %60, %62 : vector<32x32xf32>
    %90 = math.log %89 : vector<32x32xf32>
    %cst_24 = arith.constant 5.000000e-01 : f32
    %91 = vector.broadcast %cst_24 : f32 to vector<32x32xf32>
    %92 = arith.mulf %91, %90 : vector<32x32xf32>
    %93 = arith.divf %92, %47 : vector<32x32xf32>
    %94 = arith.addf %88, %93 : vector<32x32xf32>
    %95 = arith.addf %94, %76 : vector<32x32xf32>
    %cst_25 = arith.constant 5.000000e-01 : f32
    %96 = vector.broadcast %cst_25 : f32 to vector<32x32xf32>
    %97 = arith.mulf %96, %95 : vector<32x32xf32>
    %98 = vector.broadcast %53 : vector<1x32xf32> to vector<32x32xf32>
    %99 = arith.addf %47, %98 : vector<32x32xf32>
    %100 = vector.broadcast %49 : vector<32x1xf32> to vector<32x32xf32>
    %101 = arith.cmpf ogt, %99, %100 : vector<32x32xf32>
    %102 = arith.andi %101, %43 : vector<32x32xi1>
    %cst_26 = arith.constant 0.000000e+00 : f32
    %103 = vector.broadcast %cst_26 : f32 to vector<32x32xf32>
    %104 = arith.select %102, %97, %103 : vector<32x32xi1>, vector<32x32xf32>
    %cst_27 = arith.constant dense<0.000000e+00> : vector<32xf32>
    %105 = vector.multi_reduction <add>, %104, %cst_27 [1] : vector<32x32xf32> to vector<32xf32>
    %106 = vector.shape_cast %105 : vector<32xf32> to vector<32x1xf32>
    %cst_28 = arith.constant 1.951410e-02 : f32
    %107 = vector.broadcast %cst_28 : f32 to vector<32x1xf32>
    %108 = arith.addf %49, %107 : vector<32x1xf32>
    %109 = arith.mulf %106, %49 : vector<32x1xf32>
    %cst_29 = arith.constant 1.000000e+00 : f32
    %110 = vector.broadcast %cst_29 : f32 to vector<32x1xf32>
    %111 = arith.divf %110, %49 : vector<32x1xf32>
    %cst_30 = arith.constant 1.000000e+00 : f32
    %112 = vector.broadcast %cst_30 : f32 to vector<32x1xf32>
    %113 = arith.mulf %112, %109 : vector<32x1xf32>
    %cst_31 = arith.constant 8.000000e-01 : f32
    %114 = vector.broadcast %cst_31 : f32 to vector<32x1xf32>
    %115 = arith.mulf %114, %109 : vector<32x1xf32>
    %116 = arith.mulf %115, %109 : vector<32x1xf32>
    %117 = arith.subf %113, %116 : vector<32x1xf32>
    %cst_32 = arith.constant 4.850000e+00 : f32
    %118 = vector.broadcast %cst_32 : f32 to vector<32x1xf32>
    %119 = arith.mulf %118, %109 : vector<32x1xf32>
    %120 = arith.mulf %119, %109 : vector<32x1xf32>
    %121 = arith.mulf %120, %109 : vector<32x1xf32>
    %122 = arith.addf %117, %121 : vector<32x1xf32>
    %123 = math.tanh %122 : vector<32x1xf32>
    %124 = arith.divf %123, %108 : vector<32x1xf32>
    %125 = arith.subf %111, %124 : vector<32x1xf32>
    %cst_33 = arith.constant 1.000000e+00 : f32
    %126 = vector.broadcast %cst_33 : f32 to vector<32x1xf32>
    %127 = arith.divf %126, %125 : vector<32x1xf32>
    %cst_34 = arith.constant 4.000000e-01 : f32
    %128 = vector.broadcast %cst_34 : f32 to vector<32x32xf32>
    %129 = arith.cmpf olt, %30, %128 : vector<32x32xf32>
    %130 = arith.andi %43, %129 : vector<32x32xi1>
    %cst_35 = arith.constant 1.000000e+00 : f32
    %cst_36 = arith.constant 0.000000e+00 : f32
    %131 = vector.broadcast %cst_35 : f32 to vector<32x32xf32>
    %132 = vector.broadcast %cst_36 : f32 to vector<32x32xf32>
    %133 = arith.select %130, %131, %132 : vector<32x32xi1>, vector<32x32xf32>
    %cst_37 = arith.constant dense<0.000000e+00> : vector<32xf32>
    %134 = vector.multi_reduction <add>, %133, %cst_37 [1] : vector<32x32xf32> to vector<32xf32>
    %135 = vector.shape_cast %134 : vector<32xf32> to vector<32x1xf32>
    %136 = vector.shape_cast %133 : vector<32x32xf32> to vector<32x32x1xf32>
    %137 = vector.shape_cast %30 : vector<32x32xf32> to vector<32x32x1xf32>
    %c0_38 = arith.constant 0 : index
    %c0_39 = arith.constant 0 : index
    %c0_40 = arith.constant 0 : index
    %138 = vector.load %arg5[%c0_38, %c0_39, %c0_40] : memref<1x32x4xf32, #tpu.memory_space<vmem>>, vector<1x32x4xf32>
    %139 = vector.shape_cast %138 : vector<1x32x4xf32> to vector<32x4xf32>
    %c0_41 = arith.constant 0 : index
    %c0_42 = arith.constant 0 : index
    %140 = vector.load %arg7[%c0_41, %c0_42] : memref<4x4xf32, #tpu.memory_space<vmem>>, vector<4x4xf32>
    %cst_43 = arith.constant dense<0.000000e+00> : vector<32x4xf32>
    %141 = tpu.matmul %139, %140, %cst_43 {dimension_numbers = #tpu.dot_dimension_numbers<[1], [0], [0], [1], [0, 0, 1, 1], [], []>} : vector<32x4xf32>, vector<4x4xf32>, vector<32x4xf32> -> vector<32x4xf32>
    %c0_44 = arith.constant 0 : index
    %c0_45 = arith.constant 0 : index
    %142 = vector.load %arg8[%c0_44, %c0_45] : memref<1x4xf32, #tpu.memory_space<vmem>>, vector<1x4xf32>
    %143 = vector.broadcast %142 : vector<1x4xf32> to vector<32x4xf32>
    %144 = arith.addf %141, %143 : vector<32x4xf32>
    %145 = arith.negf %144 : vector<32x4xf32>
    %146 = math.exp %145 : vector<32x4xf32>
    %cst_46 = arith.constant 1.000000e+00 : f32
    %147 = vector.broadcast %cst_46 : f32 to vector<32x4xf32>
    %148 = arith.addf %147, %146 : vector<32x4xf32>
    %149 = arith.divf %147, %148 : vector<32x4xf32>
    %150 = arith.mulf %144, %149 : vector<32x4xf32>
    %c0_47 = arith.constant 0 : index
    %c0_48 = arith.constant 0 : index
    %151 = vector.load %arg9[%c0_47, %c0_48] : memref<4x4xf32, #tpu.memory_space<vmem>>, vector<4x4xf32>
    %cst_49 = arith.constant dense<0.000000e+00> : vector<32x4xf32>
    %152 = tpu.matmul %150, %151, %cst_49 {dimension_numbers = #tpu.dot_dimension_numbers<[1], [0], [0], [1], [0, 0, 1, 1], [], []>} : vector<32x4xf32>, vector<4x4xf32>, vector<32x4xf32> -> vector<32x4xf32>
    %c0_50 = arith.constant 0 : index
    %c0_51 = arith.constant 0 : index
    %153 = vector.load %arg10[%c0_50, %c0_51] : memref<1x4xf32, #tpu.memory_space<vmem>>, vector<1x4xf32>
    %154 = vector.broadcast %153 : vector<1x4xf32> to vector<32x4xf32>
    %155 = arith.addf %152, %154 : vector<32x4xf32>
    %156 = tpu.concatenate %127, %48, %49 in 1 : vector<32x1xf32>, vector<32x1xf32>, vector<32x1xf32> -> vector<32x3xf32>
    %c0_52 = arith.constant 0 : index
    %c0_53 = arith.constant 0 : index
    %157 = vector.load %arg11[%c0_52, %c0_53] : memref<3x32xf32, #tpu.memory_space<vmem>>, vector<3x32xf32>
    %c0_54 = arith.constant 0 : index
    %c0_55 = arith.constant 0 : index
    %158 = vector.load %arg12[%c0_54, %c0_55] : memref<3x32xf32, #tpu.memory_space<vmem>>, vector<3x32xf32>
    %c0_56 = arith.constant 0 : index
    %c0_57 = arith.constant 0 : index
    %159 = vector.load %arg13[%c0_56, %c0_57] : memref<1x32xf32, #tpu.memory_space<vmem>>, vector<1x32xf32>
    %c0_58 = arith.constant 0 : index
    %c0_59 = arith.constant 0 : index
    %160 = vector.load %arg14[%c0_58, %c0_59] : memref<4x32xf32, #tpu.memory_space<vmem>>, vector<4x32xf32>
    %c0_60 = arith.constant 0 : index
    %c0_61 = arith.constant 0 : index
    %161 = vector.load %arg15[%c0_60, %c0_61] : memref<1x32xf32, #tpu.memory_space<vmem>>, vector<1x32xf32>
    %c0_62 = arith.constant 0 : index
    %c0_63 = arith.constant 0 : index
    %162 = vector.load %arg16[%c0_62, %c0_63] : memref<32x32xf32, #tpu.memory_space<vmem>>, vector<32x32xf32>
    %c0_64 = arith.constant 0 : index
    %c0_65 = arith.constant 0 : index
    %163 = vector.load %arg17[%c0_64, %c0_65] : memref<1x32xf32, #tpu.memory_space<vmem>>, vector<1x32xf32>
    %cst_66 = arith.constant dense<0.000000e+00> : vector<32x32xf32>
    %164 = tpu.matmul %156, %157, %cst_66 {dimension_numbers = #tpu.dot_dimension_numbers<[1], [0], [0], [1], [0, 0, 1, 1], [], []>} : vector<32x3xf32>, vector<3x32xf32>, vector<32x32xf32> -> vector<32x32xf32>
    %cst_67 = arith.constant dense<0.000000e+00> : vector<32x32xf32>
    %165 = tpu.matmul %155, %160, %cst_67 {dimension_numbers = #tpu.dot_dimension_numbers<[1], [0], [0], [1], [0, 0, 1, 1], [], []>} : vector<32x4xf32>, vector<4x32xf32>, vector<32x32xf32> -> vector<32x32xf32>
    %166 = arith.addf %164, %165 : vector<32x32xf32>
    %167 = vector.broadcast %161 : vector<1x32xf32> to vector<32x32xf32>
    %168 = arith.addf %166, %167 : vector<32x32xf32>
    %cst_68 = arith.constant dense<0.000000e+00> : vector<32x32xf32>
    %169 = tpu.matmul %156, %158, %cst_68 {dimension_numbers = #tpu.dot_dimension_numbers<[1], [0], [0], [1], [0, 0, 1, 1], [], []>} : vector<32x3xf32>, vector<3x32xf32>, vector<32x32xf32> -> vector<32x32xf32>
    %170 = vector.shape_cast %168 : vector<32x32xf32> to vector<32x1x32xf32>
    %171 = vector.shape_cast %169 : vector<32x32xf32> to vector<1x32x32xf32>
    %172 = vector.broadcast %170 : vector<32x1x32xf32> to vector<32x32x32xf32>
    %173 = vector.broadcast %171 : vector<1x32x32xf32> to vector<32x32x32xf32>
    %174 = arith.addf %172, %173 : vector<32x32x32xf32>
    %175 = vector.shape_cast %159 : vector<1x32xf32> to vector<1x1x32xf32>
    %176 = vector.broadcast %137 : vector<32x32x1xf32> to vector<32x32x32xf32>
    %177 = vector.broadcast %175 : vector<1x1x32xf32> to vector<32x32x32xf32>
    %178 = arith.mulf %176, %177 : vector<32x32x32xf32>
    %179 = arith.addf %174, %178 : vector<32x32x32xf32>
    %180 = arith.negf %179 : vector<32x32x32xf32>
    %181 = math.exp %180 : vector<32x32x32xf32>
    %cst_69 = arith.constant 1.000000e+00 : f32
    %182 = vector.broadcast %cst_69 : f32 to vector<32x32x32xf32>
    %183 = arith.addf %182, %181 : vector<32x32x32xf32>
    %184 = arith.divf %182, %183 : vector<32x32x32xf32>
    %185 = arith.mulf %179, %184 : vector<32x32x32xf32>
    %186 = vector.broadcast %136 : vector<32x32x1xf32> to vector<32x32x32xf32>
    %187 = arith.mulf %185, %186 : vector<32x32x32xf32>
    %cst_70 = arith.constant dense<0.000000e+00> : vector<32x32xf32>
    %188 = vector.multi_reduction <add>, %187, %cst_70 [1] : vector<32x32x32xf32> to vector<32x32xf32>
    %cst_71 = arith.constant dense<0.000000e+00> : vector<32x32xf32>
    %189 = tpu.matmul %188, %162, %cst_71 {dimension_numbers = #tpu.dot_dimension_numbers<[1], [0], [0], [1], [0, 0, 1, 1], [], []>} : vector<32x32xf32>, vector<32x32xf32>, vector<32x32xf32> -> vector<32x32xf32>
    %190 = vector.broadcast %135 : vector<32x1xf32> to vector<32x32xf32>
    %191 = vector.broadcast %163 : vector<1x32xf32> to vector<32x32xf32>
    %192 = arith.mulf %190, %191 : vector<32x32xf32>
    %193 = arith.addf %189, %192 : vector<32x32xf32>
    %194 = arith.negf %193 : vector<32x32xf32>
    %195 = math.exp %194 : vector<32x32xf32>
    %cst_72 = arith.constant 1.000000e+00 : f32
    %196 = vector.broadcast %cst_72 : f32 to vector<32x32xf32>
    %197 = arith.addf %196, %195 : vector<32x32xf32>
    %198 = arith.divf %196, %197 : vector<32x32xf32>
    %199 = arith.mulf %193, %198 : vector<32x32xf32>
    %c0_73 = arith.constant 0 : index
    %c0_74 = arith.constant 0 : index
    %200 = vector.load %arg18[%c0_73, %c0_74] : memref<32x32xf32, #tpu.memory_space<vmem>>, vector<32x32xf32>
    %c0_75 = arith.constant 0 : index
    %c0_76 = arith.constant 0 : index
    %201 = vector.load %arg19[%c0_75, %c0_76] : memref<32x32xf32, #tpu.memory_space<vmem>>, vector<32x32xf32>
    %c0_77 = arith.constant 0 : index
    %c0_78 = arith.constant 0 : index
    %202 = vector.load %arg20[%c0_77, %c0_78] : memref<1x32xf32, #tpu.memory_space<vmem>>, vector<1x32xf32>
    %c0_79 = arith.constant 0 : index
    %c0_80 = arith.constant 0 : index
    %203 = vector.load %arg21[%c0_79, %c0_80] : memref<4x32xf32, #tpu.memory_space<vmem>>, vector<4x32xf32>
    %c0_81 = arith.constant 0 : index
    %c0_82 = arith.constant 0 : index
    %204 = vector.load %arg22[%c0_81, %c0_82] : memref<1x32xf32, #tpu.memory_space<vmem>>, vector<1x32xf32>
    %c0_83 = arith.constant 0 : index
    %c0_84 = arith.constant 0 : index
    %205 = vector.load %arg23[%c0_83, %c0_84] : memref<32x32xf32, #tpu.memory_space<vmem>>, vector<32x32xf32>
    %c0_85 = arith.constant 0 : index
    %c0_86 = arith.constant 0 : index
    %206 = vector.load %arg24[%c0_85, %c0_86] : memref<1x32xf32, #tpu.memory_space<vmem>>, vector<1x32xf32>
    %cst_87 = arith.constant dense<0.000000e+00> : vector<32x32xf32>
    %207 = tpu.matmul %199, %200, %cst_87 {dimension_numbers = #tpu.dot_dimension_numbers<[1], [0], [0], [1], [0, 0, 1, 1], [], []>} : vector<32x32xf32>, vector<32x32xf32>, vector<32x32xf32> -> vector<32x32xf32>
    %cst_88 = arith.constant dense<0.000000e+00> : vector<32x32xf32>
    %208 = tpu.matmul %155, %203, %cst_88 {dimension_numbers = #tpu.dot_dimension_numbers<[1], [0], [0], [1], [0, 0, 1, 1], [], []>} : vector<32x4xf32>, vector<4x32xf32>, vector<32x32xf32> -> vector<32x32xf32>
    %209 = arith.addf %207, %208 : vector<32x32xf32>
    %210 = vector.broadcast %204 : vector<1x32xf32> to vector<32x32xf32>
    %211 = arith.addf %209, %210 : vector<32x32xf32>
    %cst_89 = arith.constant dense<0.000000e+00> : vector<32x32xf32>
    %212 = tpu.matmul %199, %201, %cst_89 {dimension_numbers = #tpu.dot_dimension_numbers<[1], [0], [0], [1], [0, 0, 1, 1], [], []>} : vector<32x32xf32>, vector<32x32xf32>, vector<32x32xf32> -> vector<32x32xf32>
    %213 = vector.shape_cast %211 : vector<32x32xf32> to vector<32x1x32xf32>
    %214 = vector.shape_cast %212 : vector<32x32xf32> to vector<1x32x32xf32>
    %215 = vector.broadcast %213 : vector<32x1x32xf32> to vector<32x32x32xf32>
    %216 = vector.broadcast %214 : vector<1x32x32xf32> to vector<32x32x32xf32>
    %217 = arith.addf %215, %216 : vector<32x32x32xf32>
    %218 = vector.shape_cast %202 : vector<1x32xf32> to vector<1x1x32xf32>
    %219 = vector.broadcast %137 : vector<32x32x1xf32> to vector<32x32x32xf32>
    %220 = vector.broadcast %218 : vector<1x1x32xf32> to vector<32x32x32xf32>
    %221 = arith.mulf %219, %220 : vector<32x32x32xf32>
    %222 = arith.addf %217, %221 : vector<32x32x32xf32>
    %223 = arith.negf %222 : vector<32x32x32xf32>
    %224 = math.exp %223 : vector<32x32x32xf32>
    %cst_90 = arith.constant 1.000000e+00 : f32
    %225 = vector.broadcast %cst_90 : f32 to vector<32x32x32xf32>
    %226 = arith.addf %225, %224 : vector<32x32x32xf32>
    %227 = arith.divf %225, %226 : vector<32x32x32xf32>
    %228 = arith.mulf %222, %227 : vector<32x32x32xf32>
    %229 = vector.broadcast %136 : vector<32x32x1xf32> to vector<32x32x32xf32>
    %230 = arith.mulf %228, %229 : vector<32x32x32xf32>
    %cst_91 = arith.constant dense<0.000000e+00> : vector<32x32xf32>
    %231 = vector.multi_reduction <add>, %230, %cst_91 [1] : vector<32x32x32xf32> to vector<32x32xf32>
    %cst_92 = arith.constant dense<0.000000e+00> : vector<32x32xf32>
    %232 = tpu.matmul %231, %205, %cst_92 {dimension_numbers = #tpu.dot_dimension_numbers<[1], [0], [0], [1], [0, 0, 1, 1], [], []>} : vector<32x32xf32>, vector<32x32xf32>, vector<32x32xf32> -> vector<32x32xf32>
    %233 = vector.broadcast %135 : vector<32x1xf32> to vector<32x32xf32>
    %234 = vector.broadcast %206 : vector<1x32xf32> to vector<32x32xf32>
    %235 = arith.mulf %233, %234 : vector<32x32xf32>
    %236 = arith.addf %232, %235 : vector<32x32xf32>
    %237 = arith.negf %236 : vector<32x32xf32>
    %238 = math.exp %237 : vector<32x32xf32>
    %cst_93 = arith.constant 1.000000e+00 : f32
    %239 = vector.broadcast %cst_93 : f32 to vector<32x32xf32>
    %240 = arith.addf %239, %238 : vector<32x32xf32>
    %241 = arith.divf %239, %240 : vector<32x32xf32>
    %242 = arith.mulf %236, %241 : vector<32x32xf32>
    %c0_94 = arith.constant 0 : index
    %c0_95 = arith.constant 0 : index
    %243 = vector.load %arg25[%c0_94, %c0_95] : memref<32x32xf32, #tpu.memory_space<vmem>>, vector<32x32xf32>
    %c0_96 = arith.constant 0 : index
    %c0_97 = arith.constant 0 : index
    %244 = vector.load %arg26[%c0_96, %c0_97] : memref<32x32xf32, #tpu.memory_space<vmem>>, vector<32x32xf32>
    %c0_98 = arith.constant 0 : index
    %c0_99 = arith.constant 0 : index
    %245 = vector.load %arg27[%c0_98, %c0_99] : memref<1x32xf32, #tpu.memory_space<vmem>>, vector<1x32xf32>
    %c0_100 = arith.constant 0 : index
    %c0_101 = arith.constant 0 : index
    %246 = vector.load %arg28[%c0_100, %c0_101] : memref<4x32xf32, #tpu.memory_space<vmem>>, vector<4x32xf32>
    %c0_102 = arith.constant 0 : index
    %c0_103 = arith.constant 0 : index
    %247 = vector.load %arg29[%c0_102, %c0_103] : memref<1x32xf32, #tpu.memory_space<vmem>>, vector<1x32xf32>
    %c0_104 = arith.constant 0 : index
    %c0_105 = arith.constant 0 : index
    %248 = vector.load %arg30[%c0_104, %c0_105] : memref<32x2xf32, #tpu.memory_space<vmem>>, vector<32x2xf32>
    %c0_106 = arith.constant 0 : index
    %c0_107 = arith.constant 0 : index
    %249 = vector.load %arg31[%c0_106, %c0_107] : memref<1x2xf32, #tpu.memory_space<vmem>>, vector<1x2xf32>
    %cst_108 = arith.constant dense<0.000000e+00> : vector<32x32xf32>
    %250 = tpu.matmul %242, %243, %cst_108 {dimension_numbers = #tpu.dot_dimension_numbers<[1], [0], [0], [1], [0, 0, 1, 1], [], []>} : vector<32x32xf32>, vector<32x32xf32>, vector<32x32xf32> -> vector<32x32xf32>
    %cst_109 = arith.constant dense<0.000000e+00> : vector<32x32xf32>
    %251 = tpu.matmul %155, %246, %cst_109 {dimension_numbers = #tpu.dot_dimension_numbers<[1], [0], [0], [1], [0, 0, 1, 1], [], []>} : vector<32x4xf32>, vector<4x32xf32>, vector<32x32xf32> -> vector<32x32xf32>
    %252 = arith.addf %250, %251 : vector<32x32xf32>
    %253 = vector.broadcast %247 : vector<1x32xf32> to vector<32x32xf32>
    %254 = arith.addf %252, %253 : vector<32x32xf32>
    %cst_110 = arith.constant dense<0.000000e+00> : vector<32x32xf32>
    %255 = tpu.matmul %242, %244, %cst_110 {dimension_numbers = #tpu.dot_dimension_numbers<[1], [0], [0], [1], [0, 0, 1, 1], [], []>} : vector<32x32xf32>, vector<32x32xf32>, vector<32x32xf32> -> vector<32x32xf32>
    %256 = vector.shape_cast %254 : vector<32x32xf32> to vector<32x1x32xf32>
    %257 = vector.shape_cast %255 : vector<32x32xf32> to vector<1x32x32xf32>
    %258 = vector.broadcast %256 : vector<32x1x32xf32> to vector<32x32x32xf32>
    %259 = vector.broadcast %257 : vector<1x32x32xf32> to vector<32x32x32xf32>
    %260 = arith.addf %258, %259 : vector<32x32x32xf32>
    %261 = vector.shape_cast %245 : vector<1x32xf32> to vector<1x1x32xf32>
    %262 = vector.broadcast %137 : vector<32x32x1xf32> to vector<32x32x32xf32>
    %263 = vector.broadcast %261 : vector<1x1x32xf32> to vector<32x32x32xf32>
    %264 = arith.mulf %262, %263 : vector<32x32x32xf32>
    %265 = arith.addf %260, %264 : vector<32x32x32xf32>
    %266 = arith.negf %265 : vector<32x32x32xf32>
    %267 = math.exp %266 : vector<32x32x32xf32>
    %cst_111 = arith.constant 1.000000e+00 : f32
    %268 = vector.broadcast %cst_111 : f32 to vector<32x32x32xf32>
    %269 = arith.addf %268, %267 : vector<32x32x32xf32>
    %270 = arith.divf %268, %269 : vector<32x32x32xf32>
    %271 = arith.mulf %265, %270 : vector<32x32x32xf32>
    %272 = vector.broadcast %136 : vector<32x32x1xf32> to vector<32x32x32xf32>
    %273 = arith.mulf %271, %272 : vector<32x32x32xf32>
    %cst_112 = arith.constant dense<0.000000e+00> : vector<32x32xf32>
    %274 = vector.multi_reduction <add>, %273, %cst_112 [1] : vector<32x32x32xf32> to vector<32x32xf32>
    %cst_113 = arith.constant dense<0.000000e+00> : vector<32x2xf32>
    %275 = tpu.matmul %274, %248, %cst_113 {dimension_numbers = #tpu.dot_dimension_numbers<[1], [0], [0], [1], [0, 0, 1, 1], [], []>} : vector<32x32xf32>, vector<32x2xf32>, vector<32x2xf32> -> vector<32x2xf32>
    %276 = vector.broadcast %135 : vector<32x1xf32> to vector<32x2xf32>
    %277 = vector.broadcast %249 : vector<1x2xf32> to vector<32x2xf32>
    %278 = arith.mulf %276, %277 : vector<32x2xf32>
    %279 = arith.addf %275, %278 : vector<32x2xf32>
    %280 = vector.extract_strided_slice %279 {offsets = [0, 0], sizes = [32, 1], strides = [1, 1]} : vector<32x2xf32> to vector<32x1xf32>
    %281 = vector.extract_strided_slice %279 {offsets = [0, 1], sizes = [32, 1], strides = [1, 1]} : vector<32x2xf32> to vector<32x1xf32>
    %282 = arith.negf %281 : vector<32x1xf32>
    %283 = math.exp %282 : vector<32x1xf32>
    %cst_114 = arith.constant 1.000000e+00 : f32
    %284 = vector.broadcast %cst_114 : f32 to vector<32x1xf32>
    %285 = arith.addf %284, %283 : vector<32x1xf32>
    %286 = arith.divf %284, %285 : vector<32x1xf32>
    %cst_115 = arith.constant 1.400000e-01 : f32
    %287 = vector.broadcast %cst_115 : f32 to vector<32x1xf32>
    %288 = arith.addf %108, %287 : vector<32x1xf32>
    %289 = arith.mulf %288, %288 : vector<32x1xf32>
    %290 = arith.mulf %286, %289 : vector<32x1xf32>
    %cst_116 = arith.constant 0.02267728 : f32
    %291 = vector.broadcast %cst_116 : f32 to vector<32x1xf32>
    %292 = arith.mulf %291, %290 : vector<32x1xf32>
    %cst_117 = arith.constant 1.000000e+02 : f32
    %293 = vector.broadcast %cst_117 : f32 to vector<32x1xf32>
    %294 = arith.mulf %292, %293 : vector<32x1xf32>
    %295 = arith.negf %280 : vector<32x1xf32>
    %296 = math.exp %295 : vector<32x1xf32>
    %cst_118 = arith.constant 1.000000e+00 : f32
    %297 = vector.broadcast %cst_118 : f32 to vector<32x1xf32>
    %298 = arith.addf %297, %296 : vector<32x1xf32>
    %299 = arith.divf %297, %298 : vector<32x1xf32>
    %cst_119 = arith.constant 5.000000e-01 : f32
    %300 = vector.broadcast %cst_119 : f32 to vector<32x1xf32>
    %301 = arith.mulf %299, %300 : vector<32x1xf32>
    %cst_120 = arith.constant 2.000000e+00 : f32
    %302 = vector.broadcast %cst_120 : f32 to vector<32x1xf32>
    %303 = arith.mulf %301, %302 : vector<32x1xf32>
    %cst_121 = arith.constant 5.000000e-01 : f32
    %304 = vector.broadcast %cst_121 : f32 to vector<32x1xf32>
    %305 = arith.addf %304, %303 : vector<32x1xf32>
    %306 = arith.mulf %127, %305 : vector<32x1xf32>
    %c0_122 = arith.constant 0 : index
    %c0_123 = arith.constant 0 : index
    %c0_124 = arith.constant 0 : index
    %307 = vector.load %arg6[%c0_122, %c0_123, %c0_124] : memref<1x32x1xf32, #tpu.memory_space<vmem>>, vector<1x32x1xf32>
    %308 = vector.shape_cast %307 : vector<1x32x1xf32> to vector<32x1xf32>
    %cst_125 = arith.constant 1.000000e+00 : f32
    %309 = vector.broadcast %cst_125 : f32 to vector<32x1xf32>
    %310 = arith.divf %309, %308 : vector<32x1xf32>
    %cst_126 = arith.constant 1.000000e+00 : f32
    %311 = vector.broadcast %cst_126 : f32 to vector<32x1xf32>
    %312 = arith.subf %311, %310 : vector<32x1xf32>
    %cst_127 = arith.constant -69.4677429 : f32
    %313 = vector.broadcast %cst_127 : f32 to vector<32x1xf32>
    %314 = arith.mulf %313, %312 : vector<32x1xf32>
    %315 = arith.cmpi eq, %31, %32 : vector<32x32xi32>
    %cst_128 = arith.constant 1.000000e+00 : f32
    %cst_129 = arith.constant 0.000000e+00 : f32
    %316 = vector.broadcast %cst_128 : f32 to vector<32x32xf32>
    %317 = vector.broadcast %cst_129 : f32 to vector<32x32xf32>
    %318 = arith.select %315, %316, %317 : vector<32x32xi1>, vector<32x32xf32>
    %319 = vector.broadcast %306 : vector<32x1xf32> to vector<32x32xf32>
    %320 = arith.mulf %318, %319 : vector<32x32xf32>
    %cst_130 = arith.constant dense<0.000000e+00> : vector<32xf32>
    %321 = vector.multi_reduction <add>, %320, %cst_130 [0] : vector<32x32xf32> to vector<32xf32>
    %322 = vector.shape_cast %321 : vector<32xf32> to vector<1x32xf32>
    %323 = vector.broadcast %306 : vector<32x1xf32> to vector<32x32xf32>
    %324 = vector.broadcast %322 : vector<1x32xf32> to vector<32x32xf32>
    %325 = arith.mulf %323, %324 : vector<32x32xf32>
    %326 = arith.mulf %47, %47 : vector<32x32xf32>
    %cst_131 = arith.constant 0.000000e+00 : f32
    %327 = vector.broadcast %cst_131 : f32 to vector<32x32xf32>
    %328 = arith.subf %327, %326 : vector<32x32xf32>
    %cst_132 = arith.constant 4.000000e+00 : f32
    %329 = vector.broadcast %cst_132 : f32 to vector<32x32xf32>
    %330 = arith.mulf %329, %325 : vector<32x32xf32>
    %331 = arith.divf %328, %330 : vector<32x32xf32>
    %332 = math.exp %331 : vector<32x32xf32>
    %333 = arith.mulf %47, %47 : vector<32x32xf32>
    %334 = arith.mulf %325, %332 : vector<32x32xf32>
    %335 = arith.addf %333, %334 : vector<32x32xf32>
    %336 = math.sqrt %335 : vector<32x32xf32>
    %337 = vector.broadcast %48 : vector<32x1xf32> to vector<32x32xf32>
    %338 = vector.broadcast %50 : vector<1x32xf32> to vector<32x32xf32>
    %339 = arith.mulf %337, %338 : vector<32x32xf32>
    %340 = arith.mulf %45, %339 : vector<32x32xf32>
    %341 = arith.divf %340, %336 : vector<32x32xf32>
    %cst_133 = arith.constant dense<0.000000e+00> : vector<32xf32>
    %342 = vector.multi_reduction <add>, %341, %cst_133 [1] : vector<32x32xf32> to vector<32xf32>
    %343 = vector.shape_cast %342 : vector<32xf32> to vector<32x1xf32>
    %344 = arith.mulf %314, %343 : vector<32x1xf32>
    %345 = arith.mulf %48, %48 : vector<32x1xf32>
    %346 = arith.mulf %314, %345 : vector<32x1xf32>
    %347 = arith.divf %346, %306 : vector<32x1xf32>
    %348 = arith.addf %344, %347 : vector<32x1xf32>
    %349 = arith.addf %348, %294 : vector<32x1xf32>
    %cst_134 = arith.constant dense<0.000000e+00> : vector<1xf32>
    %350 = vector.multi_reduction <add>, %349, %cst_134 [0] : vector<32x1xf32> to vector<1xf32>
    %351 = vector.shape_cast %350 : vector<1xf32> to vector<1x1xf32>
    %352 = vector.shape_cast %351 : vector<1x1xf32> to vector<1x1xf32>
    %353 = vector.broadcast %352 : vector<1x1xf32> to vector<1x128xf32>
    %c0_135 = arith.constant 0 : index
    %c0_136 = arith.constant 0 : index
    %c0_137 = arith.constant 0 : index
    %354 = vector.load %arg32[%c0_135, %c0_136, %c0_137] : memref<1x1x128xf32, #tpu.memory_space<vmem>>, vector<1x1x128xf32>
    %355 = vector.shape_cast %354 : vector<1x1x128xf32> to vector<1x128xf32>
    %356 = vector.shape_cast %353 : vector<1x128xf32> to vector<1x1x128xf32>
    tpu.vector_store %arg32[%c0_135, %c0_136, %c0_137], %356 {strides = array<i32>} : memref<1x1x128xf32, #tpu.memory_space<vmem>>, vector<1x1x128xf32>,
    return
  }
  func.func @transform_0(%arg0: i32) -> (i32, i32, i32) {
    %c0_i32 = arith.constant 0 : i32
    %c0_i32_0 = arith.constant 0 : i32
    %c0_i32_1 = arith.constant 0 : i32
    return %arg0, %c0_i32, %c0_i32_0 : i32, i32, i32
  }
  func.func @transform_1(%arg0: i32) -> (i32, i32, i32) {
    %c0_i32 = arith.constant 0 : i32
    %c0_i32_0 = arith.constant 0 : i32
    %c0_i32_1 = arith.constant 0 : i32
    return %arg0, %c0_i32, %c0_i32_0 : i32, i32, i32
  }
  func.func @transform_2(%arg0: i32) -> (i32, i32) {
    %c0_i32 = arith.constant 0 : i32
    %c0_i32_0 = arith.constant 0 : i32
    %c0_i32_1 = arith.constant 0 : i32
    return %c0_i32, %c0_i32_0 : i32, i32
  }
  func.func @transform_3(%arg0: i32) -> (i32, i32) {
    %c0_i32 = arith.constant 0 : i32
    %c0_i32_0 = arith.constant 0 : i32
    %c0_i32_1 = arith.constant 0 : i32
    return %c0_i32, %c0_i32_0 : i32, i32
  }
  func.func @transform_4(%arg0: i32) -> (i32, i32, i32) {
    %c0_i32 = arith.constant 0 : i32
    %c0_i32_0 = arith.constant 0 : i32
    %c0_i32_1 = arith.constant 0 : i32
    return %arg0, %c0_i32, %c0_i32_0 : i32, i32, i32
  }
  func.func @transform_5(%arg0: i32) -> (i32, i32, i32) {
    %c0_i32 = arith.constant 0 : i32
    %c0_i32_0 = arith.constant 0 : i32
    %c0_i32_1 = arith.constant 0 : i32
    return %arg0, %c0_i32, %c0_i32_0 : i32, i32, i32
  }
  func.func @transform_6(%arg0: i32) -> (i32, i32) {
    %c0_i32 = arith.constant 0 : i32
    %c0_i32_0 = arith.constant 0 : i32
    %c0_i32_1 = arith.constant 0 : i32
    return %c0_i32, %c0_i32_0 : i32, i32
  }
  func.func @transform_7(%arg0: i32) -> (i32, i32) {
    %c0_i32 = arith.constant 0 : i32
    %c0_i32_0 = arith.constant 0 : i32
    %c0_i32_1 = arith.constant 0 : i32
    return %c0_i32, %c0_i32_0 : i32, i32
  }
  func.func @transform_8(%arg0: i32) -> (i32, i32) {
    %c0_i32 = arith.constant 0 : i32
    %c0_i32_0 = arith.constant 0 : i32
    %c0_i32_1 = arith.constant 0 : i32
    return %c0_i32, %c0_i32_0 : i32, i32
  }
  func.func @transform_9(%arg0: i32) -> (i32, i32) {
    %c0_i32 = arith.constant 0 : i32
    %c0_i32_0 = arith.constant 0 : i32
    %c0_i32_1 = arith.constant 0 : i32
    return %c0_i32, %c0_i32_0 : i32, i32
  }
  func.func @transform_10(%arg0: i32) -> (i32, i32) {
    %c0_i32 = arith.constant 0 : i32
    %c0_i32_0 = arith.constant 0 : i32
    %c0_i32_1 = arith.constant 0 : i32
    return %c0_i32, %c0_i32_0 : i32, i32
  }
  func.func @transform_11(%arg0: i32) -> (i32, i32) {
    %c0_i32 = arith.constant 0 : i32
    %c0_i32_0 = arith.constant 0 : i32
    %c0_i32_1 = arith.constant 0 : i32
    return %c0_i32, %c0_i32_0 : i32, i32
  }
  func.func @transform_12(%arg0: i32) -> (i32, i32) {
    %c0_i32 = arith.constant 0 : i32
    %c0_i32_0 = arith.constant 0 : i32
    %c0_i32_1 = arith.constant 0 : i32
    return %c0_i32, %c0_i32_0 : i32, i32
  }
  func.func @transform_13(%arg0: i32) -> (i32, i32) {
    %c0_i32 = arith.constant 0 : i32
    %c0_i32_0 = arith.constant 0 : i32
    %c0_i32_1 = arith.constant 0 : i32
    return %c0_i32, %c0_i32_0 : i32, i32
  }
  func.func @transform_14(%arg0: i32) -> (i32, i32) {
    %c0_i32 = arith.constant 0 : i32
    %c0_i32_0 = arith.constant 0 : i32
    %c0_i32_1 = arith.constant 0 : i32
    return %c0_i32, %c0_i32_0 : i32, i32
  }
  func.func @transform_15(%arg0: i32) -> (i32, i32) {
    %c0_i32 = arith.constant 0 : i32
    %c0_i32_0 = arith.constant 0 : i32
    %c0_i32_1 = arith.constant 0 : i32
    return %c0_i32, %c0_i32_0 : i32, i32
  }
  func.func @transform_16(%arg0: i32) -> (i32, i32) {
    %c0_i32 = arith.constant 0 : i32
    %c0_i32_0 = arith.constant 0 : i32
    %c0_i32_1 = arith.constant 0 : i32
    return %c0_i32, %c0_i32_0 : i32, i32
  }
  func.func @transform_17(%arg0: i32) -> (i32, i32) {
    %c0_i32 = arith.constant 0 : i32
    %c0_i32_0 = arith.constant 0 : i32
    %c0_i32_1 = arith.constant 0 : i32
    return %c0_i32, %c0_i32_0 : i32, i32
  }
  func.func @transform_18(%arg0: i32) -> (i32, i32) {
    %c0_i32 = arith.constant 0 : i32
    %c0_i32_0 = arith.constant 0 : i32
    %c0_i32_1 = arith.constant 0 : i32
    return %c0_i32, %c0_i32_0 : i32, i32
  }
  func.func @transform_19(%arg0: i32) -> (i32, i32) {
    %c0_i32 = arith.constant 0 : i32
    %c0_i32_0 = arith.constant 0 : i32
    %c0_i32_1 = arith.constant 0 : i32
    return %c0_i32, %c0_i32_0 : i32, i32
  }
  func.func @transform_20(%arg0: i32) -> (i32, i32) {
    %c0_i32 = arith.constant 0 : i32
    %c0_i32_0 = arith.constant 0 : i32
    %c0_i32_1 = arith.constant 0 : i32
    return %c0_i32, %c0_i32_0 : i32, i32
  }
  func.func @transform_21(%arg0: i32) -> (i32, i32) {
    %c0_i32 = arith.constant 0 : i32
    %c0_i32_0 = arith.constant 0 : i32
    %c0_i32_1 = arith.constant 0 : i32
    return %c0_i32, %c0_i32_0 : i32, i32
  }
  func.func @transform_22(%arg0: i32) -> (i32, i32) {
    %c0_i32 = arith.constant 0 : i32
    %c0_i32_0 = arith.constant 0 : i32
    %c0_i32_1 = arith.constant 0 : i32
    return %c0_i32, %c0_i32_0 : i32, i32
  }
  func.func @transform_23(%arg0: i32) -> (i32, i32) {
    %c0_i32 = arith.constant 0 : i32
    %c0_i32_0 = arith.constant 0 : i32
    %c0_i32_1 = arith.constant 0 : i32
    return %c0_i32, %c0_i32_0 : i32, i32
  }
  func.func @transform_24(%arg0: i32) -> (i32, i32) {
    %c0_i32 = arith.constant 0 : i32
    %c0_i32_0 = arith.constant 0 : i32
    %c0_i32_1 = arith.constant 0 : i32
    return %c0_i32, %c0_i32_0 : i32, i32
  }
  func.func @transform_25(%arg0: i32) -> (i32, i32) {
    %c0_i32 = arith.constant 0 : i32
    %c0_i32_0 = arith.constant 0 : i32
    %c0_i32_1 = arith.constant 0 : i32
    return %c0_i32, %c0_i32_0 : i32, i32
  }
  func.func @transform_26(%arg0: i32) -> (i32, i32) {
    %c0_i32 = arith.constant 0 : i32
    %c0_i32_0 = arith.constant 0 : i32
    %c0_i32_1 = arith.constant 0 : i32
    return %c0_i32, %c0_i32_0 : i32, i32
  }
  func.func @transform_27(%arg0: i32) -> (i32, i32) {
    %c0_i32 = arith.constant 0 : i32
    %c0_i32_0 = arith.constant 0 : i32
    %c0_i32_1 = arith.constant 0 : i32
    return %c0_i32, %c0_i32_0 : i32, i32
  }
  func.func @transform_28(%arg0: i32) -> (i32, i32) {
    %c0_i32 = arith.constant 0 : i32
    %c0_i32_0 = arith.constant 0 : i32
    %c0_i32_1 = arith.constant 0 : i32
    return %c0_i32, %c0_i32_0 : i32, i32
  }
  func.func @transform_29(%arg0: i32) -> (i32, i32) {
    %c0_i32 = arith.constant 0 : i32
    %c0_i32_0 = arith.constant 0 : i32
    %c0_i32_1 = arith.constant 0 : i32
    return %c0_i32, %c0_i32_0 : i32, i32
  }
  func.func @transform_30(%arg0: i32) -> (i32, i32) {
    %c0_i32 = arith.constant 0 : i32
    %c0_i32_0 = arith.constant 0 : i32
    %c0_i32_1 = arith.constant 0 : i32
    return %c0_i32, %c0_i32_0 : i32, i32
  }
  func.func @transform_31(%arg0: i32) -> (i32, i32, i32) {
    %c0_i32 = arith.constant 0 : i32
    %c0_i32_0 = arith.constant 0 : i32
    %c0_i32_1 = arith.constant 0 : i32
    return %arg0, %c0_i32, %c0_i32_0 : i32, i32, i32
  }
}

</mosaic_0001>

<llo_original>
// kernel: tpu_custom_call.1
$region0: #{tpu_custom_call.1}
  #allocation0 [shape = 'u32[]', space=smem, size = 0x4, offset = 0x4, fixed_abs, tag = 'smem constant byte address 0x4 - core index']
  #allocation1 [shape = 'u32[144,128]{1,0:T(1,128)}', space=vmem, size = 0x12000, scoped, tag = 'internal scratch']
  %s0 = inlined_call_operand.smem [shape: u32[32], index: -1, kind: input, shape index: {}]
  %s1 = sld [smem:[%s0]]
  %s2 = scalar_lea.smem %s0, 1
  %s3 = sld [smem:[%s2]]
  %s4 = scalar_lea.smem %s0, 2
  %s5 = sld [smem:[%s4]]
  %s6 = scalar_lea.smem %s0, 3
  %s7 = sld [smem:[%s6]]
  %s8 = scalar_lea.smem %s0, 4
  %s9 = sld [smem:[%s8]]
  %s10 = scalar_lea.smem %s0, 5
  %s11 = sld [smem:[%s10]]
  %s12 = scalar_lea.smem %s0, 6
  %s13 = sld [smem:[%s12]]
  %s14 = scalar_lea.smem %s0, 7
  %s15 = sld [smem:[%s14]]
  %s16 = scalar_lea.smem %s0, 8
  %s17 = sld [smem:[%s16]]
  %s18 = scalar_lea.smem %s0, 9
  %s19 = sld [smem:[%s18]]
  %s20 = scalar_lea.smem %s0, 10
  %s21 = sld [smem:[%s20]]
  %s22 = scalar_lea.smem %s0, 11
  %s23 = sld [smem:[%s22]]
  %s24 = scalar_lea.smem %s0, 12
  %s25 = sld [smem:[%s24]]
  %s26 = scalar_lea.smem %s0, 13
  %s27 = sld [smem:[%s26]]
  %s28 = scalar_lea.smem %s0, 14
  %s29 = sld [smem:[%s28]]
  %s30 = scalar_lea.smem %s0, 15
  %s31 = sld [smem:[%s30]]
  %s32 = scalar_lea.smem %s0, 16
  %s33 = sld [smem:[%s32]]
  %s34 = scalar_lea.smem %s0, 17
  %s35 = sld [smem:[%s34]]
  %s36 = scalar_lea.smem %s0, 18
  %s37 = sld [smem:[%s36]]
  %s38 = scalar_lea.smem %s0, 19
  %s39 = sld [smem:[%s38]]
  %s40 = scalar_lea.smem %s0, 20
  %s41 = sld [smem:[%s40]]
  %s42 = scalar_lea.smem %s0, 21
  %s43 = sld [smem:[%s42]]
  %s44 = scalar_lea.smem %s0, 22
  %s45 = sld [smem:[%s44]]
  %s46 = scalar_lea.smem %s0, 23
  %s47 = sld [smem:[%s46]]
  %s48 = scalar_lea.smem %s0, 24
  %s49 = sld [smem:[%s48]]
  %s50 = scalar_lea.smem %s0, 25
  %s51 = sld [smem:[%s50]]
  %s52 = scalar_lea.smem %s0, 26
  %s53 = sld [smem:[%s52]]
  %s54 = scalar_lea.smem %s0, 27
  %s55 = sld [smem:[%s54]]
  %s56 = scalar_lea.smem %s0, 28
  %s57 = sld [smem:[%s56]]
  %s58 = scalar_lea.smem %s0, 29
  %s59 = sld [smem:[%s58]]
  %s60 = scalar_lea.smem %s0, 30
  %s61 = sld [smem:[%s60]]
  %s62 = scalar_lea.smem %s0, 31
  %s63 = sld [smem:[%s62]]
  %s64 = sld [smem:[#allocation0]]
  $region146: #{tpu_custom_call.1} parent=0
    _
  %s66 = ssub.s32 1, %s64
  %s67 = scalar_select 0, %s66, %s64
  $region1: #{tpu_custom_call.1} parent=0
    #allocation2 [shape = 'u8[2048]{0}', space=vmem, size = 0x800, scoped, tag = 'input window, operand 3, single buffered']
    #allocation3 [shape = 's32[1]{0}', space=sflag, size = 0x4, scoped, tag = 'scoped memory for tpu_custom_call.1']
    #allocation4 [shape = 's32[1]{0}', space=sflag, size = 0x4, scoped, tag = 'scoped memory for tpu_custom_call.1']
    #allocation5 [shape = 'u8[512]{0}', space=vmem, size = 0x400, scoped, tag = 'input window, operand 7, single buffered']
    #allocation6 [shape = 's32[1]{0}', space=sflag, size = 0x4, scoped, tag = 'scoped memory for tpu_custom_call.1']
    #allocation7 [shape = 'u8[512]{0}', space=vmem, size = 0x400, scoped, tag = 'input window, operand 9, single buffered']
    #allocation8 [shape = 'u8[512]{0}', space=vmem, size = 0x400, scoped, tag = 'output window, operand 0, single buffered']
    %68 = vsyncpa [#allocation3], 0
    %69 = vsyncpa [#allocation6], 0
    %70 = vsyncpa [#allocation4], 0
    // Predicated region
    $region2: #{tpu_custom_call.1} parent=1 // pred_check
      _
    $region3: #{tpu_custom_call.1} parent=1 // pred_check_branch
      %72 = sbr.rel (0) target = $region5
    $region4: #{tpu_custom_call.1} parent=1 // pred_region
      _
    $region5: #{tpu_custom_call.1} parent=1 // pred_fallthru
      _
    // Predicated region
    $region6: #{tpu_custom_call.1} parent=1 // pred_check
      _
    $region7: #{tpu_custom_call.1} parent=1 // pred_check_branch
      %74 = sbr.rel (0) target = $region9
    $region8: #{tpu_custom_call.1} parent=1 // pred_region
      _
    $region9: #{tpu_custom_call.1} parent=1 // pred_fallthru
      _
    // Predicated region
    $region10: #{tpu_custom_call.1} parent=1 // pred_check
      _
    $region11: #{tpu_custom_call.1} parent=1 // pred_check_branch
      %76 = sbr.rel (0) target = $region13
    $region12: #{tpu_custom_call.1} parent=1 // pred_region
      _
    $region13: #{tpu_custom_call.1} parent=1 // pred_fallthru
      _
    // Predicated region
    $region14: #{tpu_custom_call.1} parent=1 // pred_check
      _
    $region15: #{tpu_custom_call.1} parent=1 // pred_check_branch
      %78 = sbr.rel (0) target = $region17
    $region16: #{tpu_custom_call.1} parent=1 // pred_region
      %s80 = ssub.s32 64, 64
      %81 = vsyncadd [#allocation3], %s80
      %s83 = sshll.u32 [#allocation2], 4
      %s84 = int_to_ptr.vmem [resolvable:$true] %s83
      %86 = dma.hbm_to_vmem [thread:$0]  %s7, 64, %s84, [#allocation3]
    $region17: #{tpu_custom_call.1} parent=1 // pred_fallthru
      _
    // Predicated region
    $region18: #{tpu_custom_call.1} parent=1 // pred_check
      _
    $region19: #{tpu_custom_call.1} parent=1 // pred_check_branch
      %88 = sbr.rel (0) target = $region21
    $region20: #{tpu_custom_call.1} parent=1 // pred_region
      _
    $region21: #{tpu_custom_call.1} parent=1 // pred_fallthru
      _
    // Predicated region
    $region22: #{tpu_custom_call.1} parent=1 // pred_check
      _
    $region23: #{tpu_custom_call.1} parent=1 // pred_check_branch
      %90 = sbr.rel (0) target = $region25
    $region24: #{tpu_custom_call.1} parent=1 // pred_region
      _
    $region25: #{tpu_custom_call.1} parent=1 // pred_fallthru
      _
    // Predicated region
    $region26: #{tpu_custom_call.1} parent=1 // pred_check
      _
    $region27: #{tpu_custom_call.1} parent=1 // pred_check_branch
      %92 = sbr.rel (0) target = $region29
    $region28: #{tpu_custom_call.1} parent=1 // pred_region
      _
    $region29: #{tpu_custom_call.1} parent=1 // pred_fallthru
      _
    // Predicated region
    $region30: #{tpu_custom_call.1} parent=1 // pred_check
      _
    $region31: #{tpu_custom_call.1} parent=1 // pred_check_branch
      %94 = sbr.rel (0) target = $region33
    $region32: #{tpu_custom_call.1} parent=1 // pred_region
      %s96 = ssub.s32 16, 16
      %97 = vsyncadd [#allocation6], %s96
      %s99 = sshll.u32 [#allocation5], 4
      %s100 = int_to_ptr.vmem [resolvable:$true] %s99
      %102 = dma.hbm_to_vmem [thread:$0]  %s15, 16, %s100, [#allocation6]
    $region33: #{tpu_custom_call.1} parent=1 // pred_fallthru
      _
    // Predicated region
    $region34: #{tpu_custom_call.1} parent=1 // pred_check
      _
    $region35: #{tpu_custom_call.1} parent=1 // pred_check_branch
      %104 = sbr.rel (0) target = $region37
    $region36: #{tpu_custom_call.1} parent=1 // pred_region
      _
    $region37: #{tpu_custom_call.1} parent=1 // pred_fallthru
      _
    // Predicated region
    $region38: #{tpu_custom_call.1} parent=1 // pred_check
      _
    $region39: #{tpu_custom_call.1} parent=1 // pred_check_branch
      %106 = sbr.rel (0) target = $region41
    $region40: #{tpu_custom_call.1} parent=1 // pred_region
      %s108 = ssub.s32 16, 16
      %109 = vsyncadd [#allocation6], %s108
      %s111 = sshll.u32 [#allocation7], 4
      %s112 = int_to_ptr.vmem [resolvable:$true] %s111
      %114 = dma.hbm_to_vmem [thread:$0]  %s19, 16, %s112, [#allocation6]
    $region41: #{tpu_custom_call.1} parent=1 // pred_fallthru
      _
    // Predicated region
    $region42: #{tpu_custom_call.1} parent=1 // pred_check
      _
    $region43: #{tpu_custom_call.1} parent=1 // pred_check_branch
      %116 = sbr.rel (0) target = $region45
    $region44: #{tpu_custom_call.1} parent=1 // pred_region
      _
    $region45: #{tpu_custom_call.1} parent=1 // pred_fallthru
      _
    // Predicated region
    $region46: #{tpu_custom_call.1} parent=1 // pred_check
      _
    $region47: #{tpu_custom_call.1} parent=1 // pred_check_branch
      %118 = sbr.rel (0) target = $region49
    $region48: #{tpu_custom_call.1} parent=1 // pred_region
      _
    $region49: #{tpu_custom_call.1} parent=1 // pred_fallthru
      _
    // Predicated region
    $region50: #{tpu_custom_call.1} parent=1 // pred_check
      _
    $region51: #{tpu_custom_call.1} parent=1 // pred_check_branch
      %120 = sbr.rel (0) target = $region53
    $region52: #{tpu_custom_call.1} parent=1 // pred_region
      _
    $region53: #{tpu_custom_call.1} parent=1 // pred_fallthru
      _
    // Predicated region
    $region54: #{tpu_custom_call.1} parent=1 // pred_check
      _
    $region55: #{tpu_custom_call.1} parent=1 // pred_check_branch
      %122 = sbr.rel (0) target = $region57
    $region56: #{tpu_custom_call.1} parent=1 // pred_region
      _
    $region57: #{tpu_custom_call.1} parent=1 // pred_fallthru
      _
    // Predicated region
    $region58: #{tpu_custom_call.1} parent=1 // pred_check
      _
    $region59: #{tpu_custom_call.1} parent=1 // pred_check_branch
      %124 = sbr.rel (0) target = $region61
    $region60: #{tpu_custom_call.1} parent=1 // pred_region
      _
    $region61: #{tpu_custom_call.1} parent=1 // pred_fallthru
      _
    // Predicated region
    $region62: #{tpu_custom_call.1} parent=1 // pred_check
      _
    $region63: #{tpu_custom_call.1} parent=1 // pred_check_branch
      %126 = sbr.rel (0) target = $region65
    $region64: #{tpu_custom_call.1} parent=1 // pred_region
      _
    $region65: #{tpu_custom_call.1} parent=1 // pred_fallthru
      _
    // Predicated region
    $region66: #{tpu_custom_call.1} parent=1 // pred_check
      _
    $region67: #{tpu_custom_call.1} parent=1 // pred_check_branch
      %128 = sbr.rel (0) target = $region69
    $region68: #{tpu_custom_call.1} parent=1 // pred_region
      _
    $region69: #{tpu_custom_call.1} parent=1 // pred_fallthru
      _
    // Predicated region
    $region70: #{tpu_custom_call.1} parent=1 // pred_check
      _
    $region71: #{tpu_custom_call.1} parent=1 // pred_check_branch
      %130 = sbr.rel (0) target = $region73
    $region72: #{tpu_custom_call.1} parent=1 // pred_region
      _
    $region73: #{tpu_custom_call.1} parent=1 // pred_fallthru
      _
    // Predicated region
    $region74: #{tpu_custom_call.1} parent=1 // pred_check
      _
    $region75: #{tpu_custom_call.1} parent=1 // pred_check_branch
      %132 = sbr.rel (0) target = $region77
    $region76: #{tpu_custom_call.1} parent=1 // pred_region
      _
    $region77: #{tpu_custom_call.1} parent=1 // pred_fallthru
      _
    // Predicated region
    $region78: #{tpu_custom_call.1} parent=1 // pred_check
      _
    $region79: #{tpu_custom_call.1} parent=1 // pred_check_branch
      %134 = sbr.rel (0) target = $region81
    $region80: #{tpu_custom_call.1} parent=1 // pred_region
      _
    $region81: #{tpu_custom_call.1} parent=1 // pred_fallthru
      _
    // Predicated region
    $region82: #{tpu_custom_call.1} parent=1 // pred_check
      _
    $region83: #{tpu_custom_call.1} parent=1 // pred_check_branch
      %136 = sbr.rel (0) target = $region85
    $region84: #{tpu_custom_call.1} parent=1 // pred_region
      _
    $region85: #{tpu_custom_call.1} parent=1 // pred_fallthru
      _
    // Predicated region
    $region86: #{tpu_custom_call.1} parent=1 // pred_check
      _
    $region87: #{tpu_custom_call.1} parent=1 // pred_check_branch
      %138 = sbr.rel (0) target = $region89
    $region88: #{tpu_custom_call.1} parent=1 // pred_region
      _
    $region89: #{tpu_custom_call.1} parent=1 // pred_fallthru
      _
    // Predicated region
    $region90: #{tpu_custom_call.1} parent=1 // pred_check
      _
    $region91: #{tpu_custom_call.1} parent=1 // pred_check_branch
      %140 = sbr.rel (0) target = $region93
    $region92: #{tpu_custom_call.1} parent=1 // pred_region
      _
    $region93: #{tpu_custom_call.1} parent=1 // pred_fallthru
      _
    // Predicated region
    $region94: #{tpu_custom_call.1} parent=1 // pred_check
      _
    $region95: #{tpu_custom_call.1} parent=1 // pred_check_branch
      %142 = sbr.rel (0) target = $region97
    $region96: #{tpu_custom_call.1} parent=1 // pred_region
      _
    $region97: #{tpu_custom_call.1} parent=1 // pred_fallthru
      _
    // Predicated region
    $region98: #{tpu_custom_call.1} parent=1 // pred_check
      _
    $region99: #{tpu_custom_call.1} parent=1 // pred_check_branch
      %144 = sbr.rel (0) target = $region101
    $region100: #{tpu_custom_call.1} parent=1 // pred_region
      _
    $region101: #{tpu_custom_call.1} parent=1 // pred_fallthru
      _
    // Predicated region
    $region102: #{tpu_custom_call.1} parent=1 // pred_check
      _
    $region103: #{tpu_custom_call.1} parent=1 // pred_check_branch
      %146 = sbr.rel (0) target = $region105
    $region104: #{tpu_custom_call.1} parent=1 // pred_region
      _
    $region105: #{tpu_custom_call.1} parent=1 // pred_fallthru
      _
    // Predicated region
    $region106: #{tpu_custom_call.1} parent=1 // pred_check
      _
    $region107: #{tpu_custom_call.1} parent=1 // pred_check_branch
      %148 = sbr.rel (0) target = $region109
    $region108: #{tpu_custom_call.1} parent=1 // pred_region
      _
    $region109: #{tpu_custom_call.1} parent=1 // pred_fallthru
      _
    // Predicated region
    $region110: #{tpu_custom_call.1} parent=1 // pred_check
      _
    $region111: #{tpu_custom_call.1} parent=1 // pred_check_branch
      %150 = sbr.rel (0) target = $region113
    $region112: #{tpu_custom_call.1} parent=1 // pred_region
      _
    $region113: #{tpu_custom_call.1} parent=1 // pred_fallthru
      _
    // Predicated region
    $region114: #{tpu_custom_call.1} parent=1 // pred_check
      _
    $region115: #{tpu_custom_call.1} parent=1 // pred_check_branch
      %152 = sbr.rel (0) target = $region117
    $region116: #{tpu_custom_call.1} parent=1 // pred_region
      _
    $region117: #{tpu_custom_call.1} parent=1 // pred_fallthru
      _
    // Predicated region
    $region118: #{tpu_custom_call.1} parent=1 // pred_check
      _
    $region119: #{tpu_custom_call.1} parent=1 // pred_check_branch
      %154 = sbr.rel (0) target = $region121
    $region120: #{tpu_custom_call.1} parent=1 // pred_region
      _
    $region121: #{tpu_custom_call.1} parent=1 // pred_fallthru
      _
    // Predicated region
    $region122: #{tpu_custom_call.1} parent=1 // pred_check
      _
    $region123: #{tpu_custom_call.1} parent=1 // pred_check_branch
      %156 = sbr.rel (0) target = $region125
    $region124: #{tpu_custom_call.1} parent=1 // pred_region
      _
    $region125: #{tpu_custom_call.1} parent=1 // pred_fallthru
      _
    // Predicated region
    $region126: #{tpu_custom_call.1} parent=1 // pred_check
      _
    $region127: #{tpu_custom_call.1} parent=1 // pred_check_branch
      %158 = sbr.rel (0) target = $region129
    $region128: #{tpu_custom_call.1} parent=1 // pred_region
      %159 = dma.done [#allocation3], 64
    $region129: #{tpu_custom_call.1} parent=1 // pred_fallthru
      _
    // Predicated region
    $region130: #{tpu_custom_call.1} parent=1 // pred_check
      _
    $region131: #{tpu_custom_call.1} parent=1 // pred_check_branch
      %161 = sbr.rel (0) target = $region133
    $region132: #{tpu_custom_call.1} parent=1 // pred_region
      %162 = dma.done [#allocation6], 16
    $region133: #{tpu_custom_call.1} parent=1 // pred_fallthru
      _
    // Predicated region
    $region134: #{tpu_custom_call.1} parent=1 // pred_check
      _
    $region135: #{tpu_custom_call.1} parent=1 // pred_check_branch
      %164 = sbr.rel (0) target = $region137
    $region136: #{tpu_custom_call.1} parent=1 // pred_region
      %165 = dma.done [#allocation6], 16
    $region137: #{tpu_custom_call.1} parent=1 // pred_fallthru
      _
    %v166 = vld [vmem:[%s1] sm:$0xff]
    %v167 = vld [vmem:[%s1 + $0x8] sm:$0xff]
    %v168 = vld [vmem:[%s1 + $0x10] sm:$0xff]
    %v169 = vld [vmem:[%s1 + $0x18] sm:$0xff]
    %v170 = vld [vmem:[%s3] sm:$0x7]
    %v171 = vlaneseq
    %v172 = vshrl.u32 %v171, 7
    %v173 = vsub.s32 0, %v172
    %v174 = vrot.slane %v170, %v173
    %176 = vset.pattern.permute.xlu0 0
    %177 = vperm.xlu0 %176, %v166
    %v178 = vpop.permute.xlu0 %177
    %181 = vset.pattern.permute.xlu0 0
    %182 = vperm.xlu0 %181, %v167
    %v183 = vpop.permute.xlu0 %182
    %186 = vset.pattern.permute.xlu0 0
    %187 = vperm.xlu0 %186, %v168
    %v188 = vpop.permute.xlu0 %187
    %191 = vset.pattern.permute.xlu0 0
    %192 = vperm.xlu0 %191, %v169
    %v193 = vpop.permute.xlu0 %192
    %v195 = vsub.f32 %v174, %v178
    %v196 = vsub.f32 %v174, %v183
    %v197 = vsub.f32 %v174, %v188
    %v198 = vsub.f32 %v174, %v193
    %v199 = vadd.f32 %v195, 1e-06
    %v200 = vadd.f32 %v196, 1e-06
    %v201 = vadd.f32 %v197, 1e-06
    %v202 = vadd.f32 %v198, 1e-06
    %v203 = vlaneseq
    %v204 = vshrl.u32 %v203, 7
    %v205 = vsub.s32 1, %v204
    %v206 = vrot.slane %v170, %v205
    %207 = vset.pattern.permute.xlu0 1
    %208 = vperm.xlu0 %207, %v166
    %v209 = vpop.permute.xlu0 %208
    %211 = vset.pattern.permute.xlu0 1
    %212 = vperm.xlu0 %211, %v167
    %v213 = vpop.permute.xlu0 %212
    %215 = vset.pattern.permute.xlu0 1
    %216 = vperm.xlu0 %215, %v168
    %v217 = vpop.permute.xlu0 %216
    %219 = vset.pattern.permute.xlu0 1
    %220 = vperm.xlu0 %219, %v169
    %v221 = vpop.permute.xlu0 %220
    %v223 = vsub.f32 %v206, %v209
    %v224 = vsub.f32 %v206, %v213
    %v225 = vsub.f32 %v206, %v217
    %v226 = vsub.f32 %v206, %v221
    %v227 = vadd.f32 %v223, 1e-06
    %v228 = vadd.f32 %v224, 1e-06
    %v229 = vadd.f32 %v225, 1e-06
    %v230 = vadd.f32 %v226, 1e-06
    %v231 = vlaneseq
    %v232 = vshrl.u32 %v231, 7
    %v233 = vsub.s32 2, %v232
    %v234 = vrot.slane %v170, %v233
    %235 = vset.pattern.permute.xlu0 2
    %236 = vperm.xlu0 %235, %v166
    %v237 = vpop.permute.xlu0 %236
    %239 = vset.pattern.permute.xlu0 2
    %240 = vperm.xlu0 %239, %v167
    %v241 = vpop.permute.xlu0 %240
    %243 = vset.pattern.permute.xlu0 2
    %244 = vperm.xlu0 %243, %v168
    %v245 = vpop.permute.xlu0 %244
    %247 = vset.pattern.permute.xlu0 2
    %248 = vperm.xlu0 %247, %v169
    %v249 = vpop.permute.xlu0 %248
    %v251 = vsub.f32 %v234, %v237
    %v252 = vsub.f32 %v234, %v241
    %v253 = vsub.f32 %v234, %v245
    %v254 = vsub.f32 %v234, %v249
    %v255 = vadd.f32 %v251, 1e-06
    %v256 = vadd.f32 %v252, 1e-06
    %v257 = vadd.f32 %v253, 1e-06
    %v258 = vadd.f32 %v254, 1e-06
    %v259 = vmul.f32 %v199, %v199
    %v260 = vmul.f32 %v200, %v200
    %v261 = vmul.f32 %v201, %v201
    %v262 = vmul.f32 %v202, %v202
    %v263 = vmul.f32 %v227, %v227
    %v264 = vmul.f32 %v228, %v228
    %v265 = vmul.f32 %v229, %v229
    %v266 = vmul.f32 %v230, %v230
    %v267 = vadd.f32 %v259, %v263
    %v268 = vadd.f32 %v260, %v264
    %v269 = vadd.f32 %v261, %v265
    %v270 = vadd.f32 %v262, %v266
    %v271 = vmul.f32 %v255, %v255
    %v272 = vmul.f32 %v256, %v256
    %v273 = vmul.f32 %v257, %v257
    %v274 = vmul.f32 %v258, %v258
    %v275 = vadd.f32 %v267, %v271
    %v276 = vadd.f32 %v268, %v272
    %v277 = vadd.f32 %v269, %v273
    %v278 = vadd.f32 %v270, %v274
    %v279 = vrsqrt.pop %v275
    %v280 = vmul.f32 %v275, %v279
    %vm281 = vcmp.eq.f32.partialorder %v275, inf
    %v282 = vsel %vm281, %v275, %v280
    %vm283 = vcmp.eq.f32.partialorder %v275, 0.0
    %v284 = vand.u32 %v275, 2147483648
    %v285 = vsel %vm283, %v284, %v282
    %v286 = vrsqrt.pop %v276
    %v287 = vmul.f32 %v276, %v286
    %vm288 = vcmp.eq.f32.partialorder %v276, inf
    %v289 = vsel %vm288, %v276, %v287
    %vm290 = vcmp.eq.f32.partialorder %v276, 0.0
    %v291 = vand.u32 %v276, 2147483648
    %v292 = vsel %vm290, %v291, %v289
    %v293 = vrsqrt.pop %v277
    %v294 = vmul.f32 %v277, %v293
    %vm295 = vcmp.eq.f32.partialorder %v277, inf
    %v296 = vsel %vm295, %v277, %v294
    %vm297 = vcmp.eq.f32.partialorder %v277, 0.0
    %v298 = vand.u32 %v277, 2147483648
    %v299 = vsel %vm297, %v298, %v296
    %v300 = vrsqrt.pop %v278
    %v301 = vmul.f32 %v278, %v300
    %vm302 = vcmp.eq.f32.partialorder %v278, inf
    %v303 = vsel %vm302, %v278, %v301
    %vm304 = vcmp.eq.f32.partialorder %v278, 0.0
    %v305 = vand.u32 %v278, 2147483648
    %v306 = vsel %vm304, %v305, %v303
    %v307 = vlaneseq
    %v308 = vshrl.u32 %v307, 7
    %v309 = vadd.s32 %v308, 8
    %v310 = vadd.s32 %v308, 16
    %v311 = vadd.s32 %v308, 24
    %v312 = vlaneseq
    %v313 = vand.u32 %v312, 127
    %v314 = vcvt.s32.f32 %v308
    %v315 = vcvt.s32.f32 %v309
    %v316 = vcvt.s32.f32 %v310
    %v317 = vcvt.s32.f32 %v311
    %v318 = vmul.f32 %v314, 0.0625
    %v319 = vmul.f32 %v315, 0.0625
    %v320 = vmul.f32 %v316, 0.0625
    %v321 = vmul.f32 %v317, 0.0625
    %v322 = vfloor.f32 %v318
    %v323 = vfloor.f32 %v319
    %v324 = vfloor.f32 %v320
    %v325 = vfloor.f32 %v321
    %v326 = vcvt.s32.f32 %v313
    %v327 = vmul.f32 %v326, 0.0625
    %v328 = vfloor.f32 %v327
    %vm329 = vcmp.eq.f32.partialorder %v322, %v328
    %vm330 = vcmp.eq.f32.partialorder %v323, %v328
    %vm331 = vcmp.eq.f32.partialorder %v324, %v328
    %vm332 = vcmp.eq.f32.partialorder %v325, %v328
    %vm333 = vcmp.ne.s32.totalorder %v308, %v313
    %vm334 = vcmp.ne.s32.totalorder %v309, %v313
    %vm335 = vcmp.ne.s32.totalorder %v310, %v313
    %vm336 = vcmp.ne.s32.totalorder %v311, %v313
    %vm337 = vmand %vm329, %vm333
    %vm338 = vmand %vm330, %vm334
    %vm339 = vmand %vm331, %vm335
    %vm340 = vmand %vm332, %vm336
    %v341 = vsel %vm337, 1, 0
    %v342 = vsel %vm338, 1, 0
    %v343 = vsel %vm339, 1, 0
    %v344 = vsel %vm340, 1, 0
    %v345 = vcvt.s32.f32 %v341
    %v346 = vcvt.s32.f32 %v342
    %v347 = vcvt.s32.f32 %v343
    %v348 = vcvt.s32.f32 %v344
    %v349 = vsel %vm337, %v285, 1.0
    %v350 = vsel %vm338, %v292, 1.0
    %v351 = vsel %vm339, %v299, 1.0
    %v352 = vsel %vm340, %v306, 1.0
    %v353 = vld [vmem:[%s5] sm:$0xff]
    %v354 = vld [vmem:[%s5 + $0x8] sm:$0xff]
    %v355 = vld [vmem:[%s5 + $0x10] sm:$0xff]
    %v356 = vld [vmem:[%s5 + $0x18] sm:$0xff]
    %v357 = vld [vmem:[#allocation2] sm:$0x1]
    %v358 = vld [vmem:[#allocation2 + $0x1] sm:$0x1]
    %v359 = vld [vmem:[#allocation2 + $0x2] sm:$0x1]
    %v360 = vmul.f32 %v359, %v358
    %v361 = vlaneseq
    %v362 = vshrl.u32 %v361, 7
    %v363 = vsub.s32 0, %v362
    %v364 = vrot.slane %v360, %v363
    %v365 = vadd.f32 %v349, %v364
    %v366 = vadd.f32 %v350, %v364
    %v367 = vadd.f32 %v351, %v364
    %v368 = vadd.f32 %v352, %v364
    %v369 = vsub.f32 %v349, %v364
    %v370 = vsub.f32 %v350, %v364
    %v371 = vsub.f32 %v351, %v364
    %v372 = vsub.f32 %v352, %v364
    %v373 = vand.u32 2147483647, %v369
    %v374 = vand.u32 2147483647, %v370
    %v375 = vand.u32 2147483647, %v371
    %v376 = vand.u32 2147483647, %v372
    %378 = vset.pattern.permute.xlu0 1
    %379 = vperm.xlu0 %378, %v353
    %v380 = vpop.permute.xlu0 %379
    %383 = vset.pattern.permute.xlu0 1
    %384 = vperm.xlu0 %383, %v354
    %v385 = vpop.permute.xlu0 %384
    %388 = vset.pattern.permute.xlu0 1
    %389 = vperm.xlu0 %388, %v355
    %v390 = vpop.permute.xlu0 %389
    %393 = vset.pattern.permute.xlu0 1
    %394 = vperm.xlu0 %393, %v356
    %v395 = vpop.permute.xlu0 %394
    %v397 = vmax.f32 %v373, %v380
    %v398 = vmax.f32 %v374, %v385
    %v399 = vmax.f32 %v375, %v390
    %v400 = vmax.f32 %v376, %v395
    %v401 = vrcp.pop %v365
    %v402 = vmul.f32 1.0, %v401
    %v403 = vrcp.pop %v366
    %v404 = vmul.f32 1.0, %v403
    %v405 = vrcp.pop %v367
    %v406 = vmul.f32 1.0, %v405
    %v407 = vrcp.pop %v368
    %v408 = vmul.f32 1.0, %v407
    %v409 = vrcp.pop %v397
    %v410 = vmul.f32 1.0, %v409
    %v411 = vrcp.pop %v398
    %v412 = vmul.f32 1.0, %v411
    %v413 = vrcp.pop %v399
    %v414 = vmul.f32 1.0, %v413
    %v415 = vrcp.pop %v400
    %v416 = vmul.f32 1.0, %v415
    %v417 = vsub.f32 %v364, %v349
    %v418 = vsub.f32 %v364, %v350
    %v419 = vsub.f32 %v364, %v351
    %v420 = vsub.f32 %v364, %v352
    %vm421 = vcmp.lt.f32.partialorder %v380, %v417
    %vm422 = vcmp.lt.f32.partialorder %v385, %v418
    %vm423 = vcmp.lt.f32.partialorder %v390, %v419
    %vm424 = vcmp.lt.f32.partialorder %v395, %v420
    %v425 = vrcp.pop %v353
    %v426 = vmul.f32 1.0, %v425
    %v427 = vrcp.pop %v354
    %v428 = vmul.f32 1.0, %v427
    %v429 = vrcp.pop %v355
    %v430 = vmul.f32 1.0, %v429
    %v431 = vrcp.pop %v356
    %v432 = vmul.f32 1.0, %v431
    %434 = vset.pattern.permute.xlu0 1
    %435 = vperm.xlu0 %434, %v426
    %v436 = vpop.permute.xlu0 %435
    %439 = vset.pattern.permute.xlu0 1
    %440 = vperm.xlu0 %439, %v428
    %v441 = vpop.permute.xlu0 %440
    %444 = vset.pattern.permute.xlu0 1
    %445 = vperm.xlu0 %444, %v430
    %v446 = vpop.permute.xlu0 %445
    %449 = vset.pattern.permute.xlu0 1
    %450 = vperm.xlu0 %449, %v432
    %v451 = vpop.permute.xlu0 %450
    %v453 = vsub.f32 %v436, %v410
    %v454 = vsub.f32 %v441, %v412
    %v455 = vsub.f32 %v446, %v414
    %v456 = vsub.f32 %v451, %v416
    %v457 = vmul.f32 %v453, 2.0
    %v458 = vmul.f32 %v454, 2.0
    %v459 = vmul.f32 %v455, 2.0
    %v460 = vmul.f32 %v456, 2.0
    %v461 = vsel %vm421, %v457, 0.0
    %v462 = vsel %vm422, %v458, 0.0
    %v463 = vsel %vm423, %v459, 0.0
    %v464 = vsel %vm424, %v460, 0.0
    %v465 = vsub.f32 %v410, %v402
    %v466 = vsub.f32 %v412, %v404
    %v467 = vsub.f32 %v414, %v406
    %v468 = vsub.f32 %v416, %v408
    %v469 = vmul.f32 %v360, %v360
    %v470 = vlaneseq
    %v471 = vshrl.u32 %v470, 7
    %v472 = vsub.s32 0, %v471
    %v473 = vrot.slane %v469, %v472
    %v474 = vrcp.pop %v349
    %v475 = vmul.f32 %v473, %v474
    %v476 = vrcp.pop %v350
    %v477 = vmul.f32 %v473, %v476
    %v478 = vrcp.pop %v351
    %v479 = vmul.f32 %v473, %v478
    %v480 = vrcp.pop %v352
    %v481 = vmul.f32 %v473, %v480
    %v482 = vsub.f32 %v349, %v475
    %v483 = vsub.f32 %v350, %v477
    %v484 = vsub.f32 %v351, %v479
    %v485 = vsub.f32 %v352, %v481
    %v486 = vmul.f32 %v482, 0.25
    %v487 = vmul.f32 %v483, 0.25
    %v488 = vmul.f32 %v484, 0.25
    %v489 = vmul.f32 %v485, 0.25
    %v490 = vmul.f32 %v402, %v402
    %v491 = vmul.f32 %v404, %v404
    %v492 = vmul.f32 %v406, %v406
    %v493 = vmul.f32 %v408, %v408
    %v494 = vmul.f32 %v410, %v410
    %v495 = vmul.f32 %v412, %v412
    %v496 = vmul.f32 %v414, %v414
    %v497 = vmul.f32 %v416, %v416
    %v498 = vsub.f32 %v490, %v494
    %v499 = vsub.f32 %v491, %v495
    %v500 = vsub.f32 %v492, %v496
    %v501 = vsub.f32 %v493, %v497
    %v502 = vmul.f32 %v486, %v498
    %v503 = vmul.f32 %v487, %v499
    %v504 = vmul.f32 %v488, %v500
    %v505 = vmul.f32 %v489, %v501
    %v506 = vadd.f32 %v465, %v502
    %v507 = vadd.f32 %v466, %v503
    %v508 = vadd.f32 %v467, %v504
    %v509 = vadd.f32 %v468, %v505
    %v510 = vmul.f32 %v397, %v402
    %v511 = vmul.f32 %v398, %v404
    %v512 = vmul.f32 %v399, %v406
    %v513 = vmul.f32 %v400, %v408
    %v514 = vlog2.pop %v510
    %v515 = vmul.f32 %v514, 0.6931472
    %v516 = vlog2.pop %v511
    %v517 = vmul.f32 %v516, 0.6931472
    %v518 = vlog2.pop %v512
    %v519 = vmul.f32 %v518, 0.6931472
    %v520 = vlog2.pop %v513
    %v521 = vmul.f32 %v520, 0.6931472
    %v522 = vmul.f32 %v515, 0.5
    %v523 = vmul.f32 %v517, 0.5
    %v524 = vmul.f32 %v519, 0.5
    %v525 = vmul.f32 %v521, 0.5
    %v526 = vmul.f32 %v522, %v474
    %v527 = vmul.f32 %v523, %v476
    %v528 = vmul.f32 %v524, %v478
    %v529 = vmul.f32 %v525, %v480
    %v530 = vadd.f32 %v506, %v526
    %v531 = vadd.f32 %v507, %v527
    %v532 = vadd.f32 %v508, %v528
    %v533 = vadd.f32 %v509, %v529
    %v534 = vadd.f32 %v530, %v461
    %v535 = vadd.f32 %v531, %v462
    %v536 = vadd.f32 %v532, %v463
    %v537 = vadd.f32 %v533, %v464
    %v538 = vmul.f32 %v534, 0.5
    %v539 = vmul.f32 %v535, 0.5
    %v540 = vmul.f32 %v536, 0.5
    %v541 = vmul.f32 %v537, 0.5
    %vm542 = vcmp.gt.f32.partialorder %v365, %v380
    %vm543 = vcmp.gt.f32.partialorder %v366, %v385
    %vm544 = vcmp.gt.f32.partialorder %v367, %v390
    %vm545 = vcmp.gt.f32.partialorder %v368, %v395
    %vm546 = vmand %vm542, %vm337
    %vm547 = vmand %vm543, %vm338
    %vm548 = vmand %vm544, %vm339
    %vm549 = vmand %vm545, %vm340
    %v550 = vsel %vm546, %v538, 0.0
    %v551 = vsel %vm547, %v539, 0.0
    %v552 = vsel %vm548, %v540, 0.0
    %v553 = vsel %vm549, %v541, 0.0
    %vm554 = vcmask 261120
    %v555 = vsel %vm554, %v550, 0.0
    %556 = vadd.xlane.f32.xlu0 %v555
    %v557 = vpop.xlane.xlu0 %556
    %v558 = vsel %vm554, %v551, 0.0
    %559 = vadd.xlane.f32.xlu0 %v558
    %v560 = vpop.xlane.xlu0 %559
    %v561 = vsel %vm554, %v552, 0.0
    %562 = vadd.xlane.f32.xlu0 %v561
    %v563 = vpop.xlane.xlu0 %562
    %v564 = vsel %vm554, %v553, 0.0
    %565 = vadd.xlane.f32.xlu0 %v564
    %v566 = vpop.xlane.xlu0 %565
    %v567 = vadd.f32 %v353, 0.0195141
    %v568 = vadd.f32 %v354, 0.0195141
    %v569 = vadd.f32 %v355, 0.0195141
    %v570 = vadd.f32 %v356, 0.0195141
    %v571 = vmul.f32 %v557, %v353
    %v572 = vmul.f32 %v560, %v354
    %v573 = vmul.f32 %v563, %v355
    %v574 = vmul.f32 %v566, %v356
    %v575 = vmul.f32 %v571, 0.8
    %v576 = vmul.f32 %v572, 0.8
    %v577 = vmul.f32 %v573, 0.8
    %v578 = vmul.f32 %v574, 0.8
    %v579 = vmul.f32 %v575, %v571
    %v580 = vmul.f32 %v576, %v572
    %v581 = vmul.f32 %v577, %v573
    %v582 = vmul.f32 %v578, %v574
    %v583 = vsub.f32 %v571, %v579
    %v584 = vsub.f32 %v572, %v580
    %v585 = vsub.f32 %v573, %v581
    %v586 = vsub.f32 %v574, %v582
    %v587 = vmul.f32 %v571, 4.85
    %v588 = vmul.f32 %v572, 4.85
    %v589 = vmul.f32 %v573, 4.85
    %v590 = vmul.f32 %v574, 4.85
    %v591 = vmul.f32 %v587, %v571
    %v592 = vmul.f32 %v588, %v572
    %v593 = vmul.f32 %v589, %v573
    %v594 = vmul.f32 %v590, %v574
    %v595 = vmul.f32 %v591, %v571
    %v596 = vmul.f32 %v592, %v572
    %v597 = vmul.f32 %v593, %v573
    %v598 = vmul.f32 %v594, %v574
    %v599 = vadd.f32 %v583, %v595
    %v600 = vadd.f32 %v584, %v596
    %v601 = vadd.f32 %v585, %v597
    %v602 = vadd.f32 %v586, %v598
    %v603 = vtanh.pop %v599
    %v604 = vtanh.pop %v600
    %v605 = vtanh.pop %v601
    %v606 = vtanh.pop %v602
    %v607 = vrcp.pop %v567
    %v608 = vmul.f32 %v603, %v607
    %v609 = vrcp.pop %v568
    %v610 = vmul.f32 %v604, %v609
    %v611 = vrcp.pop %v569
    %v612 = vmul.f32 %v605, %v611
    %v613 = vrcp.pop %v570
    %v614 = vmul.f32 %v606, %v613
    %v615 = vsub.f32 %v426, %v608
    %v616 = vsub.f32 %v428, %v610
    %v617 = vsub.f32 %v430, %v612
    %v618 = vsub.f32 %v432, %v614
    %v619 = vrcp.pop %v615
    %v620 = vmul.f32 1.0, %v619
    %v621 = vrcp.pop %v616
    %v622 = vmul.f32 1.0, %v621
    %v623 = vrcp.pop %v617
    %v624 = vmul.f32 1.0, %v623
    %v625 = vrcp.pop %v618
    %v626 = vmul.f32 1.0, %v625
    %vm627 = vcmp.lt.f32.partialorder %v285, 0.4
    %vm628 = vcmp.lt.f32.partialorder %v292, 0.4
    %vm629 = vcmp.lt.f32.partialorder %v299, 0.4
    %vm630 = vcmp.lt.f32.partialorder %v306, 0.4
    %vm631 = vmand %vm337, %vm627
    %vm632 = vmand %vm338, %vm628
    %vm633 = vmand %vm339, %vm629
    %vm634 = vmand %vm340, %vm630
    %v635 = vsel %vm631, 1.0, 0.0
    %v636 = vsel %vm632, 1.0, 0.0
    %v637 = vsel %vm633, 1.0, 0.0
    %v638 = vsel %vm634, 1.0, 0.0
    %v639 = vsel %vm554, %v635, 0.0
    %640 = vadd.xlane.f32.xlu0 %v639
    %v641 = vpop.xlane.xlu0 %640
    %v642 = vsel %vm554, %v636, 0.0
    %643 = vadd.xlane.f32.xlu0 %v642
    %v644 = vpop.xlane.xlu0 %643
    %v645 = vsel %vm554, %v637, 0.0
    %646 = vadd.xlane.f32.xlu0 %v645
    %v647 = vpop.xlane.xlu0 %646
    %v648 = vsel %vm554, %v638, 0.0
    %649 = vadd.xlane.f32.xlu0 %v648
    %v650 = vpop.xlane.xlu0 %649
    %v651 = vlaneseq
    %v652 = vshrl.u32 %v651, 7
    %v653 = vsub.s32 0, %v652
    %v654 = vrot.slane %v635, %v653
    %656 = vbcast.lane.b32.xlu0 %v654, 256
    %v657 = vpop.permute.xlu0 %656
    %s659 = sor.u32 256, 8
    %660 = vbcast.lane.b32.xlu0 %v654, %s659
    %v661 = vpop.permute.xlu0 %660
    %s663 = sor.u32 256, 16
    %664 = vbcast.lane.b32.xlu0 %v654, %s663
    %v665 = vpop.permute.xlu0 %664
    %s667 = sor.u32 256, 24
    %668 = vbcast.lane.b32.xlu0 %v654, %s667
    %v669 = vpop.permute.xlu0 %668
    %v670 = vlaneseq
    %v671 = vshrl.u32 %v670, 7
    %v672 = vsub.s32 1, %v671
    %v673 = vrot.slane %v635, %v672
    %675 = vbcast.lane.b32.xlu0 %v673, 256
    %v676 = vpop.permute.xlu0 %675
    %s678 = sor.u32 256, 8
    %679 = vbcast.lane.b32.xlu0 %v673, %s678
    %v680 = vpop.permute.xlu0 %679
    %s682 = sor.u32 256, 16
    %683 = vbcast.lane.b32.xlu0 %v673, %s682
    %v684 = vpop.permute.xlu0 %683
    %s686 = sor.u32 256, 24
    %687 = vbcast.lane.b32.xlu0 %v673, %s686
    %v688 = vpop.permute.xlu0 %687
    %v689 = vlaneseq
    %v690 = vshrl.u32 %v689, 7
    %v691 = vsub.s32 2, %v690
    %v692 = vrot.slane %v635, %v691
    %694 = vbcast.lane.b32.xlu0 %v692, 256
    %v695 = vpop.permute.xlu0 %694
    %s697 = sor.u32 256, 8
    %698 = vbcast.lane.b32.xlu0 %v692, %s697
    %v699 = vpop.permute.xlu0 %698
    %s701 = sor.u32 256, 16
    %702 = vbcast.lane.b32.xlu0 %v692, %s701
    %v703 = vpop.permute.xlu0 %702
    %s705 = sor.u32 256, 24
    %706 = vbcast.lane.b32.xlu0 %v692, %s705
    %v707 = vpop.permute.xlu0 %706
    %v708 = vlaneseq
    %v709 = vshrl.u32 %v708, 7
    %v710 = vsub.s32 3, %v709
    %v711 = vrot.slane %v635, %v710
    %713 = vbcast.lane.b32.xlu0 %v711, 256
    %v714 = vpop.permute.xlu0 %713
    %s716 = sor.u32 256, 8
    %717 = vbcast.lane.b32.xlu0 %v711, %s716
    %v718 = vpop.permute.xlu0 %717
    %s720 = sor.u32 256, 16
    %721 = vbcast.lane.b32.xlu0 %v711, %s720
    %v722 = vpop.permute.xlu0 %721
    %s724 = sor.u32 256, 24
    %725 = vbcast.lane.b32.xlu0 %v711, %s724
    %v726 = vpop.permute.xlu0 %725
    %v727 = vlaneseq
    %v728 = vshrl.u32 %v727, 7
    %v729 = vsub.s32 4, %v728
    %v730 = vrot.slane %v635, %v729
    %732 = vbcast.lane.b32.xlu0 %v730, 256
    %v733 = vpop.permute.xlu0 %732
    %s735 = sor.u32 256, 8
    %736 = vbcast.lane.b32.xlu0 %v730, %s735
    %v737 = vpop.permute.xlu0 %736
    %s739 = sor.u32 256, 16
    %740 = vbcast.lane.b32.xlu0 %v730, %s739
    %v741 = vpop.permute.xlu0 %740
    %s743 = sor.u32 256, 24
    %744 = vbcast.lane.b32.xlu0 %v730, %s743
    %v745 = vpop.permute.xlu0 %744
    %v746 = vlaneseq
    %v747 = vshrl.u32 %v746, 7
    %v748 = vsub.s32 5, %v747
    %v749 = vrot.slane %v635, %v748
    %751 = vbcast.lane.b32.xlu0 %v749, 256
    %v752 = vpop.permute.xlu0 %751
    %s754 = sor.u32 256, 8
    %755 = vbcast.lane.b32.xlu0 %v749, %s754
    %v756 = vpop.permute.xlu0 %755
    %s758 = sor.u32 256, 16
    %759 = vbcast.lane.b32.xlu0 %v749, %s758
    %v760 = vpop.permute.xlu0 %759
    %s762 = sor.u32 256, 24
    %763 = vbcast.lane.b32.xlu0 %v749, %s762
    %v764 = vpop.permute.xlu0 %763
    %v765 = vlaneseq
    %v766 = vshrl.u32 %v765, 7
    %v767 = vsub.s32 6, %v766
    %v768 = vrot.slane %v635, %v767
    %770 = vbcast.lane.b32.xlu0 %v768, 256
    %v771 = vpop.permute.xlu0 %770
    %s773 = sor.u32 256, 8
    %774 = vbcast.lane.b32.xlu0 %v768, %s773
    %v775 = vpop.permute.xlu0 %774
    %s777 = sor.u32 256, 16
    %778 = vbcast.lane.b32.xlu0 %v768, %s777
    %v779 = vpop.permute.xlu0 %778
    %s781 = sor.u32 256, 24
    %782 = vbcast.lane.b32.xlu0 %v768, %s781
    %v783 = vpop.permute.xlu0 %782
    %v784 = vlaneseq
    %v785 = vshrl.u32 %v784, 7
    %v786 = vsub.s32 7, %v785
    %v787 = vrot.slane %v635, %v786
    %789 = vbcast.lane.b32.xlu0 %v787, 256
    %v790 = vpop.permute.xlu0 %789
    %s792 = sor.u32 256, 8
    %793 = vbcast.lane.b32.xlu0 %v787, %s792
    %v794 = vpop.permute.xlu0 %793
    %s796 = sor.u32 256, 16
    %797 = vbcast.lane.b32.xlu0 %v787, %s796
    %v798 = vpop.permute.xlu0 %797
    %s800 = sor.u32 256, 24
    %801 = vbcast.lane.b32.xlu0 %v787, %s800
    %v802 = vpop.permute.xlu0 %801
    %v803 = vlaneseq
    %v804 = vshrl.u32 %v803, 7
    %v805 = vsub.s32 0, %v804
    %v806 = vrot.slane %v636, %v805
    %808 = vbcast.lane.b32.xlu0 %v806, 256
    %v809 = vpop.permute.xlu0 %808
    %s811 = sor.u32 256, 8
    %812 = vbcast.lane.b32.xlu0 %v806, %s811
    %v813 = vpop.permute.xlu0 %812
    %s815 = sor.u32 256, 16
    %816 = vbcast.lane.b32.xlu0 %v806, %s815
    %v817 = vpop.permute.xlu0 %816
    %s819 = sor.u32 256, 24
    %820 = vbcast.lane.b32.xlu0 %v806, %s819
    %v821 = vpop.permute.xlu0 %820
    %v822 = vlaneseq
    %v823 = vshrl.u32 %v822, 7
    %v824 = vsub.s32 1, %v823
    %v825 = vrot.slane %v636, %v824
    %827 = vbcast.lane.b32.xlu0 %v825, 256
    %v828 = vpop.permute.xlu0 %827
    %s830 = sor.u32 256, 8
    %831 = vbcast.lane.b32.xlu0 %v825, %s830
    %v832 = vpop.permute.xlu0 %831
    %s834 = sor.u32 256, 16
    %835 = vbcast.lane.b32.xlu0 %v825, %s834
    %v836 = vpop.permute.xlu0 %835
    %s838 = sor.u32 256, 24
    %839 = vbcast.lane.b32.xlu0 %v825, %s838
    %v840 = vpop.permute.xlu0 %839
    %v841 = vlaneseq
    %v842 = vshrl.u32 %v841, 7
    %v843 = vsub.s32 2, %v842
    %v844 = vrot.slane %v636, %v843
    %846 = vbcast.lane.b32.xlu0 %v844, 256
    %v847 = vpop.permute.xlu0 %846
    %s849 = sor.u32 256, 8
    %850 = vbcast.lane.b32.xlu0 %v844, %s849
    %v851 = vpop.permute.xlu0 %850
    %s853 = sor.u32 256, 16
    %854 = vbcast.lane.b32.xlu0 %v844, %s853
    %v855 = vpop.permute.xlu0 %854
    %s857 = sor.u32 256, 24
    %858 = vbcast.lane.b32.xlu0 %v844, %s857
    %v859 = vpop.permute.xlu0 %858
    %v860 = vlaneseq
    %v861 = vshrl.u32 %v860, 7
    %v862 = vsub.s32 3, %v861
    %v863 = vrot.slane %v636, %v862
    %865 = vbcast.lane.b32.xlu0 %v863, 256
    %v866 = vpop.permute.xlu0 %865
    %s868 = sor.u32 256, 8
    %869 = vbcast.lane.b32.xlu0 %v863, %s868
    %v870 = vpop.permute.xlu0 %869
    %s872 = sor.u32 256, 16
    %873 = vbcast.lane.b32.xlu0 %v863, %s872
    %v874 = vpop.permute.xlu0 %873
    %s876 = sor.u32 256, 24
    %877 = vbcast.lane.b32.xlu0 %v863, %s876
    %v878 = vpop.permute.xlu0 %877
    %v879 = vlaneseq
    %v880 = vshrl.u32 %v879, 7
    %v881 = vsub.s32 4, %v880
    %v882 = vrot.slane %v636, %v881
    %884 = vbcast.lane.b32.xlu0 %v882, 256
    %v885 = vpop.permute.xlu0 %884
    %s887 = sor.u32 256, 8
    %888 = vbcast.lane.b32.xlu0 %v882, %s887
    %v889 = vpop.permute.xlu0 %888
    %s891 = sor.u32 256, 16
    %892 = vbcast.lane.b32.xlu0 %v882, %s891
    %v893 = vpop.permute.xlu0 %892
    %s895 = sor.u32 256, 24
    %896 = vbcast.lane.b32.xlu0 %v882, %s895
    %v897 = vpop.permute.xlu0 %896
    %v898 = vlaneseq
    %v899 = vshrl.u32 %v898, 7
    %v900 = vsub.s32 5, %v899
    %v901 = vrot.slane %v636, %v900
    %903 = vbcast.lane.b32.xlu0 %v901, 256
    %v904 = vpop.permute.xlu0 %903
    %s906 = sor.u32 256, 8
    %907 = vbcast.lane.b32.xlu0 %v901, %s906
    %v908 = vpop.permute.xlu0 %907
    %s910 = sor.u32 256, 16
    %911 = vbcast.lane.b32.xlu0 %v901, %s910
    %v912 = vpop.permute.xlu0 %911
    %s914 = sor.u32 256, 24
    %915 = vbcast.lane.b32.xlu0 %v901, %s914
    %v916 = vpop.permute.xlu0 %915
    %v917 = vlaneseq
    %v918 = vshrl.u32 %v917, 7
    %v919 = vsub.s32 6, %v918
    %v920 = vrot.slane %v636, %v919
    %922 = vbcast.lane.b32.xlu0 %v920, 256
    %v923 = vpop.permute.xlu0 %922
    %s925 = sor.u32 256, 8
    %926 = vbcast.lane.b32.xlu0 %v920, %s925
    %v927 = vpop.permute.xlu0 %926
    %s929 = sor.u32 256, 16
    %930 = vbcast.lane.b32.xlu0 %v920, %s929
    %v931 = vpop.permute.xlu0 %930
    %s933 = sor.u32 256, 24
    %934 = vbcast.lane.b32.xlu0 %v920, %s933
    %v935 = vpop.permute.xlu0 %934
    %v936 = vlaneseq
    %v937 = vshrl.u32 %v936, 7
    %v938 = vsub.s32 7, %v937
    %v939 = vrot.slane %v636, %v938
    %941 = vbcast.lane.b32.xlu0 %v939, 256
    %v942 = vpop.permute.xlu0 %941
    %s944 = sor.u32 256, 8
    %945 = vbcast.lane.b32.xlu0 %v939, %s944
    %v946 = vpop.permute.xlu0 %945
    %s948 = sor.u32 256, 16
    %949 = vbcast.lane.b32.xlu0 %v939, %s948
    %v950 = vpop.permute.xlu0 %949
    %s952 = sor.u32 256, 24
    %953 = vbcast.lane.b32.xlu0 %v939, %s952
    %v954 = vpop.permute.xlu0 %953
    %v955 = vlaneseq
    %v956 = vshrl.u32 %v955, 7
    %v957 = vsub.s32 0, %v956
    %v958 = vrot.slane %v637, %v957
    %960 = vbcast.lane.b32.xlu0 %v958, 256
    %v961 = vpop.permute.xlu0 %960
    %s963 = sor.u32 256, 8
    %964 = vbcast.lane.b32.xlu0 %v958, %s963
    %v965 = vpop.permute.xlu0 %964
    %s967 = sor.u32 256, 16
    %968 = vbcast.lane.b32.xlu0 %v958, %s967
    %v969 = vpop.permute.xlu0 %968
    %s971 = sor.u32 256, 24
    %972 = vbcast.lane.b32.xlu0 %v958, %s971
    %v973 = vpop.permute.xlu0 %972
    %v974 = vlaneseq
    %v975 = vshrl.u32 %v974, 7
    %v976 = vsub.s32 1, %v975
    %v977 = vrot.slane %v637, %v976
    %979 = vbcast.lane.b32.xlu0 %v977, 256
    %v980 = vpop.permute.xlu0 %979
    %s982 = sor.u32 256, 8
    %983 = vbcast.lane.b32.xlu0 %v977, %s982
    %v984 = vpop.permute.xlu0 %983
    %s986 = sor.u32 256, 16
    %987 = vbcast.lane.b32.xlu0 %v977, %s986
    %v988 = vpop.permute.xlu0 %987
    %s990 = sor.u32 256, 24
    %991 = vbcast.lane.b32.xlu0 %v977, %s990
    %v992 = vpop.permute.xlu0 %991
    %v993 = vlaneseq
    %v994 = vshrl.u32 %v993, 7
    %v995 = vsub.s32 2, %v994
    %v996 = vrot.slane %v637, %v995
    %998 = vbcast.lane.b32.xlu0 %v996, 256
    %v999 = vpop.permute.xlu0 %998
    %s1001 = sor.u32 256, 8
    %1002 = vbcast.lane.b32.xlu0 %v996, %s1001
    %v1003 = vpop.permute.xlu0 %1002
    %s1005 = sor.u32 256, 16
    %1006 = vbcast.lane.b32.xlu0 %v996, %s1005
    %v1007 = vpop.permute.xlu0 %1006
    %s1009 = sor.u32 256, 24
    %1010 = vbcast.lane.b32.xlu0 %v996, %s1009
    %v1011 = vpop.permute.xlu0 %1010
    %v1012 = vlaneseq
    %v1013 = vshrl.u32 %v1012, 7
    %v1014 = vsub.s32 3, %v1013
    %v1015 = vrot.slane %v637, %v1014
    %1017 = vbcast.lane.b32.xlu0 %v1015, 256
    %v1018 = vpop.permute.xlu0 %1017
    %s1020 = sor.u32 256, 8
    %1021 = vbcast.lane.b32.xlu0 %v1015, %s1020
    %v1022 = vpop.permute.xlu0 %1021
    %s1024 = sor.u32 256, 16
    %1025 = vbcast.lane.b32.xlu0 %v1015, %s1024
    %v1026 = vpop.permute.xlu0 %1025
    %s1028 = sor.u32 256, 24
    %1029 = vbcast.lane.b32.xlu0 %v1015, %s1028
    %v1030 = vpop.permute.xlu0 %1029
    %v1031 = vlaneseq
    %v1032 = vshrl.u32 %v1031, 7
    %v1033 = vsub.s32 4, %v1032
    %v1034 = vrot.slane %v637, %v1033
    %1036 = vbcast.lane.b32.xlu0 %v1034, 256
    %v1037 = vpop.permute.xlu0 %1036
    %s1039 = sor.u32 256, 8
    %1040 = vbcast.lane.b32.xlu0 %v1034, %s1039
    %v1041 = vpop.permute.xlu0 %1040
    %s1043 = sor.u32 256, 16
    %1044 = vbcast.lane.b32.xlu0 %v1034, %s1043
    %v1045 = vpop.permute.xlu0 %1044
    %s1047 = sor.u32 256, 24
    %1048 = vbcast.lane.b32.xlu0 %v1034, %s1047
    %v1049 = vpop.permute.xlu0 %1048
    %v1050 = vlaneseq
    %v1051 = vshrl.u32 %v1050, 7
    %v1052 = vsub.s32 5, %v1051
    %v1053 = vrot.slane %v637, %v1052
    %1055 = vbcast.lane.b32.xlu0 %v1053, 256
    %v1056 = vpop.permute.xlu0 %1055
    %s1058 = sor.u32 256, 8
    %1059 = vbcast.lane.b32.xlu0 %v1053, %s1058
    %v1060 = vpop.permute.xlu0 %1059
    %s1062 = sor.u32 256, 16
    %1063 = vbcast.lane.b32.xlu0 %v1053, %s1062
    %v1064 = vpop.permute.xlu0 %1063
    %s1066 = sor.u32 256, 24
    %1067 = vbcast.lane.b32.xlu0 %v1053, %s1066
    %v1068 = vpop.permute.xlu0 %1067
    %v1069 = vlaneseq
    %v1070 = vshrl.u32 %v1069, 7
    %v1071 = vsub.s32 6, %v1070
    %v1072 = vrot.slane %v637, %v1071
    %1074 = vbcast.lane.b32.xlu0 %v1072, 256
    %v1075 = vpop.permute.xlu0 %1074
    %s1077 = sor.u32 256, 8
    %1078 = vbcast.lane.b32.xlu0 %v1072, %s1077
    %v1079 = vpop.permute.xlu0 %1078
    %s1081 = sor.u32 256, 16
    %1082 = vbcast.lane.b32.xlu0 %v1072, %s1081
    %v1083 = vpop.permute.xlu0 %1082
    %s1085 = sor.u32 256, 24
    %1086 = vbcast.lane.b32.xlu0 %v1072, %s1085
    %v1087 = vpop.permute.xlu0 %1086
    %v1088 = vlaneseq
    %v1089 = vshrl.u32 %v1088, 7
    %v1090 = vsub.s32 7, %v1089
    %v1091 = vrot.slane %v637, %v1090
    %1093 = vbcast.lane.b32.xlu0 %v1091, 256
    %v1094 = vpop.permute.xlu0 %1093
    %s1096 = sor.u32 256, 8
    %1097 = vbcast.lane.b32.xlu0 %v1091, %s1096
    %v1098 = vpop.permute.xlu0 %1097
    %s1100 = sor.u32 256, 16
    %1101 = vbcast.lane.b32.xlu0 %v1091, %s1100
    %v1102 = vpop.permute.xlu0 %1101
    %s1104 = sor.u32 256, 24
    %1105 = vbcast.lane.b32.xlu0 %v1091, %s1104
    %v1106 = vpop.permute.xlu0 %1105
    %v1107 = vlaneseq
    %v1108 = vshrl.u32 %v1107, 7
    %v1109 = vsub.s32 0, %v1108
    %v1110 = vrot.slane %v638, %v1109
    %1112 = vbcast.lane.b32.xlu0 %v1110, 256
    %v1113 = vpop.permute.xlu0 %1112
    %s1115 = sor.u32 256, 8
    %1116 = vbcast.lane.b32.xlu0 %v1110, %s1115
    %v1117 = vpop.permute.xlu0 %1116
    %s1119 = sor.u32 256, 16
    %1120 = vbcast.lane.b32.xlu0 %v1110, %s1119
    %v1121 = vpop.permute.xlu0 %1120
    %s1123 = sor.u32 256, 24
    %1124 = vbcast.lane.b32.xlu0 %v1110, %s1123
    %v1125 = vpop.permute.xlu0 %1124
    %v1126 = vlaneseq
    %v1127 = vshrl.u32 %v1126, 7
    %v1128 = vsub.s32 1, %v1127
    %v1129 = vrot.slane %v638, %v1128
    %1131 = vbcast.lane.b32.xlu0 %v1129, 256
    %v1132 = vpop.permute.xlu0 %1131
    %s1134 = sor.u32 256, 8
    %1135 = vbcast.lane.b32.xlu0 %v1129, %s1134
    %v1136 = vpop.permute.xlu0 %1135
    %s1138 = sor.u32 256, 16
    %1139 = vbcast.lane.b32.xlu0 %v1129, %s1138
    %v1140 = vpop.permute.xlu0 %1139
    %s1142 = sor.u32 256, 24
    %1143 = vbcast.lane.b32.xlu0 %v1129, %s1142
    %v1144 = vpop.permute.xlu0 %1143
    %v1145 = vlaneseq
    %v1146 = vshrl.u32 %v1145, 7
    %v1147 = vsub.s32 2, %v1146
    %v1148 = vrot.slane %v638, %v1147
    %1150 = vbcast.lane.b32.xlu0 %v1148, 256
    %v1151 = vpop.permute.xlu0 %1150
    %s1153 = sor.u32 256, 8
    %1154 = vbcast.lane.b32.xlu0 %v1148, %s1153
    %v1155 = vpop.permute.xlu0 %1154
    %s1157 = sor.u32 256, 16
    %1158 = vbcast.lane.b32.xlu0 %v1148, %s1157
    %v1159 = vpop.permute.xlu0 %1158
    %s1161 = sor.u32 256, 24
    %1162 = vbcast.lane.b32.xlu0 %v1148, %s1161
    %v1163 = vpop.permute.xlu0 %1162
    %v1164 = vlaneseq
    %v1165 = vshrl.u32 %v1164, 7
    %v1166 = vsub.s32 3, %v1165
    %v1167 = vrot.slane %v638, %v1166
    %1169 = vbcast.lane.b32.xlu0 %v1167, 256
    %v1170 = vpop.permute.xlu0 %1169
    %s1172 = sor.u32 256, 8
    %1173 = vbcast.lane.b32.xlu0 %v1167, %s1172
    %v1174 = vpop.permute.xlu0 %1173
    %s1176 = sor.u32 256, 16
    %1177 = vbcast.lane.b32.xlu0 %v1167, %s1176
    %v1178 = vpop.permute.xlu0 %1177
    %s1180 = sor.u32 256, 24
    %1181 = vbcast.lane.b32.xlu0 %v1167, %s1180
    %v1182 = vpop.permute.xlu0 %1181
    %v1183 = vlaneseq
    %v1184 = vshrl.u32 %v1183, 7
    %v1185 = vsub.s32 4, %v1184
    %v1186 = vrot.slane %v638, %v1185
    %1188 = vbcast.lane.b32.xlu0 %v1186, 256
    %v1189 = vpop.permute.xlu0 %1188
    %s1191 = sor.u32 256, 8
    %1192 = vbcast.lane.b32.xlu0 %v1186, %s1191
    %v1193 = vpop.permute.xlu0 %1192
    %s1195 = sor.u32 256, 16
    %1196 = vbcast.lane.b32.xlu0 %v1186, %s1195
    %v1197 = vpop.permute.xlu0 %1196
    %s1199 = sor.u32 256, 24
    %1200 = vbcast.lane.b32.xlu0 %v1186, %s1199
    %v1201 = vpop.permute.xlu0 %1200
    %v1202 = vlaneseq
    %v1203 = vshrl.u32 %v1202, 7
    %v1204 = vsub.s32 5, %v1203
    %v1205 = vrot.slane %v638, %v1204
    %1207 = vbcast.lane.b32.xlu0 %v1205, 256
    %v1208 = vpop.permute.xlu0 %1207
    %s1210 = sor.u32 256, 8
    %1211 = vbcast.lane.b32.xlu0 %v1205, %s1210
    %v1212 = vpop.permute.xlu0 %1211
    %s1214 = sor.u32 256, 16
    %1215 = vbcast.lane.b32.xlu0 %v1205, %s1214
    %v1216 = vpop.permute.xlu0 %1215
    %s1218 = sor.u32 256, 24
    %1219 = vbcast.lane.b32.xlu0 %v1205, %s1218
    %v1220 = vpop.permute.xlu0 %1219
    %v1221 = vlaneseq
    %v1222 = vshrl.u32 %v1221, 7
    %v1223 = vsub.s32 6, %v1222
    %v1224 = vrot.slane %v638, %v1223
    %1226 = vbcast.lane.b32.xlu0 %v1224, 256
    %v1227 = vpop.permute.xlu0 %1226
    %s1229 = sor.u32 256, 8
    %1230 = vbcast.lane.b32.xlu0 %v1224, %s1229
    %v1231 = vpop.permute.xlu0 %1230
    %s1233 = sor.u32 256, 16
    %1234 = vbcast.lane.b32.xlu0 %v1224, %s1233
    %v1235 = vpop.permute.xlu0 %1234
    %s1237 = sor.u32 256, 24
    %1238 = vbcast.lane.b32.xlu0 %v1224, %s1237
    %v1239 = vpop.permute.xlu0 %1238
    %v1240 = vlaneseq
    %v1241 = vshrl.u32 %v1240, 7
    %v1242 = vsub.s32 7, %v1241
    %v1243 = vrot.slane %v638, %v1242
    %1245 = vbcast.lane.b32.xlu0 %v1243, 256
    %v1246 = vpop.permute.xlu0 %1245
    %s1248 = sor.u32 256, 8
    %1249 = vbcast.lane.b32.xlu0 %v1243, %s1248
    %v1250 = vpop.permute.xlu0 %1249
    %s1252 = sor.u32 256, 16
    %1253 = vbcast.lane.b32.xlu0 %v1243, %s1252
    %v1254 = vpop.permute.xlu0 %1253
    %s1256 = sor.u32 256, 24
    %1257 = vbcast.lane.b32.xlu0 %v1243, %s1256
    %v1258 = vpop.permute.xlu0 %1257
    %v1259 = vlaneseq
    %v1260 = vshrl.u32 %v1259, 7
    %v1261 = vsub.s32 0, %v1260
    %v1262 = vrot.slane %v285, %v1261
    %1264 = vbcast.lane.b32.xlu0 %v1262, 256
    %v1265 = vpop.permute.xlu0 %1264
    %s1267 = sor.u32 256, 8
    %1268 = vbcast.lane.b32.xlu0 %v1262, %s1267
    %v1269 = vpop.permute.xlu0 %1268
    %s1271 = sor.u32 256, 16
    %1272 = vbcast.lane.b32.xlu0 %v1262, %s1271
    %v1273 = vpop.permute.xlu0 %1272
    %s1275 = sor.u32 256, 24
    %1276 = vbcast.lane.b32.xlu0 %v1262, %s1275
    %v1277 = vpop.permute.xlu0 %1276
    %v1278 = vlaneseq
    %v1279 = vshrl.u32 %v1278, 7
    %v1280 = vsub.s32 1, %v1279
    %v1281 = vrot.slane %v285, %v1280
    %1283 = vbcast.lane.b32.xlu0 %v1281, 256
    %v1284 = vpop.permute.xlu0 %1283
    %s1286 = sor.u32 256, 8
    %1287 = vbcast.lane.b32.xlu0 %v1281, %s1286
    %v1288 = vpop.permute.xlu0 %1287
    %s1290 = sor.u32 256, 16
    %1291 = vbcast.lane.b32.xlu0 %v1281, %s1290
    %v1292 = vpop.permute.xlu0 %1291
    %s1294 = sor.u32 256, 24
    %1295 = vbcast.lane.b32.xlu0 %v1281, %s1294
    %v1296 = vpop.permute.xlu0 %1295
    %v1297 = vlaneseq
    %v1298 = vshrl.u32 %v1297, 7
    %v1299 = vsub.s32 2, %v1298
    %v1300 = vrot.slane %v285, %v1299
    %1302 = vbcast.lane.b32.xlu0 %v1300, 256
    %v1303 = vpop.permute.xlu0 %1302
    %s1305 = sor.u32 256, 8
    %1306 = vbcast.lane.b32.xlu0 %v1300, %s1305
    %v1307 = vpop.permute.xlu0 %1306
    %s1309 = sor.u32 256, 16
    %1310 = vbcast.lane.b32.xlu0 %v1300, %s1309
    %v1311 = vpop.permute.xlu0 %1310
    %s1313 = sor.u32 256, 24
    %1314 = vbcast.lane.b32.xlu0 %v1300, %s1313
    %v1315 = vpop.permute.xlu0 %1314
    %v1316 = vlaneseq
    %v1317 = vshrl.u32 %v1316, 7
    %v1318 = vsub.s32 3, %v1317
    %v1319 = vrot.slane %v285, %v1318
    %1321 = vbcast.lane.b32.xlu0 %v1319, 256
    %v1322 = vpop.permute.xlu0 %1321
    %s1324 = sor.u32 256, 8
    %1325 = vbcast.lane.b32.xlu0 %v1319, %s1324
    %v1326 = vpop.permute.xlu0 %1325
    %s1328 = sor.u32 256, 16
    %1329 = vbcast.lane.b32.xlu0 %v1319, %s1328
    %v1330 = vpop.permute.xlu0 %1329
    %s1332 = sor.u32 256, 24
    %1333 = vbcast.lane.b32.xlu0 %v1319, %s1332
    %v1334 = vpop.permute.xlu0 %1333
    %v1335 = vlaneseq
    %v1336 = vshrl.u32 %v1335, 7
    %v1337 = vsub.s32 4, %v1336
    %v1338 = vrot.slane %v285, %v1337
    %1340 = vbcast.lane.b32.xlu0 %v1338, 256
    %v1341 = vpop.permute.xlu0 %1340
    %s1343 = sor.u32 256, 8
    %1344 = vbcast.lane.b32.xlu0 %v1338, %s1343
    %v1345 = vpop.permute.xlu0 %1344
    %s1347 = sor.u32 256, 16
    %1348 = vbcast.lane.b32.xlu0 %v1338, %s1347
    %v1349 = vpop.permute.xlu0 %1348
    %s1351 = sor.u32 256, 24
    %1352 = vbcast.lane.b32.xlu0 %v1338, %s1351
    %v1353 = vpop.permute.xlu0 %1352
    %v1354 = vlaneseq
    %v1355 = vshrl.u32 %v1354, 7
    %v1356 = vsub.s32 5, %v1355
    %v1357 = vrot.slane %v285, %v1356
    %1359 = vbcast.lane.b32.xlu0 %v1357, 256
    %v1360 = vpop.permute.xlu0 %1359
    %s1362 = sor.u32 256, 8
    %1363 = vbcast.lane.b32.xlu0 %v1357, %s1362
    %v1364 = vpop.permute.xlu0 %1363
    %s1366 = sor.u32 256, 16
    %1367 = vbcast.lane.b32.xlu0 %v1357, %s1366
    %v1368 = vpop.permute.xlu0 %1367
    %s1370 = sor.u32 256, 24
    %1371 = vbcast.lane.b32.xlu0 %v1357, %s1370
    %v1372 = vpop.permute.xlu0 %1371
    %v1373 = vlaneseq
    %v1374 = vshrl.u32 %v1373, 7
    %v1375 = vsub.s32 6, %v1374
    %v1376 = vrot.slane %v285, %v1375
    %1378 = vbcast.lane.b32.xlu0 %v1376, 256
    %v1379 = vpop.permute.xlu0 %1378
    %s1381 = sor.u32 256, 8
    %1382 = vbcast.lane.b32.xlu0 %v1376, %s1381
    %v1383 = vpop.permute.xlu0 %1382
    %s1385 = sor.u32 256, 16
    %1386 = vbcast.lane.b32.xlu0 %v1376, %s1385
    %v1387 = vpop.permute.xlu0 %1386
    %s1389 = sor.u32 256, 24
    %1390 = vbcast.lane.b32.xlu0 %v1376, %s1389
    %v1391 = vpop.permute.xlu0 %1390
    %v1392 = vlaneseq
    %v1393 = vshrl.u32 %v1392, 7
    %v1394 = vsub.s32 7, %v1393
    %v1395 = vrot.slane %v285, %v1394
    %1397 = vbcast.lane.b32.xlu0 %v1395, 256
    %v1398 = vpop.permute.xlu0 %1397
    %s1400 = sor.u32 256, 8
    %1401 = vbcast.lane.b32.xlu0 %v1395, %s1400
    %v1402 = vpop.permute.xlu0 %1401
    %s1404 = sor.u32 256, 16
    %1405 = vbcast.lane.b32.xlu0 %v1395, %s1404
    %v1406 = vpop.permute.xlu0 %1405
    %s1408 = sor.u32 256, 24
    %1409 = vbcast.lane.b32.xlu0 %v1395, %s1408
    %v1410 = vpop.permute.xlu0 %1409
    %v1411 = vlaneseq
    %v1412 = vshrl.u32 %v1411, 7
    %v1413 = vsub.s32 0, %v1412
    %v1414 = vrot.slane %v292, %v1413
    %1416 = vbcast.lane.b32.xlu0 %v1414, 256
    %v1417 = vpop.permute.xlu0 %1416
    %s1419 = sor.u32 256, 8
    %1420 = vbcast.lane.b32.xlu0 %v1414, %s1419
    %v1421 = vpop.permute.xlu0 %1420
    %s1423 = sor.u32 256, 16
    %1424 = vbcast.lane.b32.xlu0 %v1414, %s1423
    %v1425 = vpop.permute.xlu0 %1424
    %s1427 = sor.u32 256, 24
    %1428 = vbcast.lane.b32.xlu0 %v1414, %s1427
    %v1429 = vpop.permute.xlu0 %1428
    %v1430 = vlaneseq
    %v1431 = vshrl.u32 %v1430, 7
    %v1432 = vsub.s32 1, %v1431
    %v1433 = vrot.slane %v292, %v1432
    %1435 = vbcast.lane.b32.xlu0 %v1433, 256
    %v1436 = vpop.permute.xlu0 %1435
    %s1438 = sor.u32 256, 8
    %1439 = vbcast.lane.b32.xlu0 %v1433, %s1438
    %v1440 = vpop.permute.xlu0 %1439
    %s1442 = sor.u32 256, 16
    %1443 = vbcast.lane.b32.xlu0 %v1433, %s1442
    %v1444 = vpop.permute.xlu0 %1443
    %s1446 = sor.u32 256, 24
    %1447 = vbcast.lane.b32.xlu0 %v1433, %s1446
    %v1448 = vpop.permute.xlu0 %1447
    %v1449 = vlaneseq
    %v1450 = vshrl.u32 %v1449, 7
    %v1451 = vsub.s32 2, %v1450
    %v1452 = vrot.slane %v292, %v1451
    %1454 = vbcast.lane.b32.xlu0 %v1452, 256
    %v1455 = vpop.permute.xlu0 %1454
    %s1457 = sor.u32 256, 8
    %1458 = vbcast.lane.b32.xlu0 %v1452, %s1457
    %v1459 = vpop.permute.xlu0 %1458
    %s1461 = sor.u32 256, 16
    %1462 = vbcast.lane.b32.xlu0 %v1452, %s1461
    %v1463 = vpop.permute.xlu0 %1462
    %s1465 = sor.u32 256, 24
    %1466 = vbcast.lane.b32.xlu0 %v1452, %s1465
    %v1467 = vpop.permute.xlu0 %1466
    %v1468 = vlaneseq
    %v1469 = vshrl.u32 %v1468, 7
    %v1470 = vsub.s32 3, %v1469
    %v1471 = vrot.slane %v292, %v1470
    %1473 = vbcast.lane.b32.xlu0 %v1471, 256
    %v1474 = vpop.permute.xlu0 %1473
    %s1476 = sor.u32 256, 8
    %1477 = vbcast.lane.b32.xlu0 %v1471, %s1476
    %v1478 = vpop.permute.xlu0 %1477
    %s1480 = sor.u32 256, 16
    %1481 = vbcast.lane.b32.xlu0 %v1471, %s1480
    %v1482 = vpop.permute.xlu0 %1481
    %s1484 = sor.u32 256, 24
    %1485 = vbcast.lane.b32.xlu0 %v1471, %s1484
    %v1486 = vpop.permute.xlu0 %1485
    %v1487 = vlaneseq
    %v1488 = vshrl.u32 %v1487, 7
    %v1489 = vsub.s32 4, %v1488
    %v1490 = vrot.slane %v292, %v1489
    %1492 = vbcast.lane.b32.xlu0 %v1490, 256
    %v1493 = vpop.permute.xlu0 %1492
    %s1495 = sor.u32 256, 8
    %1496 = vbcast.lane.b32.xlu0 %v1490, %s1495
    %v1497 = vpop.permute.xlu0 %1496
    %s1499 = sor.u32 256, 16
    %1500 = vbcast.lane.b32.xlu0 %v1490, %s1499
    %v1501 = vpop.permute.xlu0 %1500
    %s1503 = sor.u32 256, 24
    %1504 = vbcast.lane.b32.xlu0 %v1490, %s1503
    %v1505 = vpop.permute.xlu0 %1504
    %v1506 = vlaneseq
    %v1507 = vshrl.u32 %v1506, 7
    %v1508 = vsub.s32 5, %v1507
    %v1509 = vrot.slane %v292, %v1508
    %1511 = vbcast.lane.b32.xlu0 %v1509, 256
    %v1512 = vpop.permute.xlu0 %1511
    %s1514 = sor.u32 256, 8
    %1515 = vbcast.lane.b32.xlu0 %v1509, %s1514
    %v1516 = vpop.permute.xlu0 %1515
    %s1518 = sor.u32 256, 16
    %1519 = vbcast.lane.b32.xlu0 %v1509, %s1518
    %v1520 = vpop.permute.xlu0 %1519
    %s1522 = sor.u32 256, 24
    %1523 = vbcast.lane.b32.xlu0 %v1509, %s1522
    %v1524 = vpop.permute.xlu0 %1523
    %v1525 = vlaneseq
    %v1526 = vshrl.u32 %v1525, 7
    %v1527 = vsub.s32 6, %v1526
    %v1528 = vrot.slane %v292, %v1527
    %1530 = vbcast.lane.b32.xlu0 %v1528, 256
    %v1531 = vpop.permute.xlu0 %1530
    %s1533 = sor.u32 256, 8
    %1534 = vbcast.lane.b32.xlu0 %v1528, %s1533
    %v1535 = vpop.permute.xlu0 %1534
    %s1537 = sor.u32 256, 16
    %1538 = vbcast.lane.b32.xlu0 %v1528, %s1537
    %v1539 = vpop.permute.xlu0 %1538
    %s1541 = sor.u32 256, 24
    %1542 = vbcast.lane.b32.xlu0 %v1528, %s1541
    %v1543 = vpop.permute.xlu0 %1542
    %v1544 = vlaneseq
    %v1545 = vshrl.u32 %v1544, 7
    %v1546 = vsub.s32 7, %v1545
    %v1547 = vrot.slane %v292, %v1546
    %1549 = vbcast.lane.b32.xlu0 %v1547, 256
    %v1550 = vpop.permute.xlu0 %1549
    %s1552 = sor.u32 256, 8
    %1553 = vbcast.lane.b32.xlu0 %v1547, %s1552
    %v1554 = vpop.permute.xlu0 %1553
    %s1556 = sor.u32 256, 16
    %1557 = vbcast.lane.b32.xlu0 %v1547, %s1556
    %v1558 = vpop.permute.xlu0 %1557
    %s1560 = sor.u32 256, 24
    %1561 = vbcast.lane.b32.xlu0 %v1547, %s1560
    %v1562 = vpop.permute.xlu0 %1561
    %v1563 = vlaneseq
    %v1564 = vshrl.u32 %v1563, 7
    %v1565 = vsub.s32 0, %v1564
    %v1566 = vrot.slane %v299, %v1565
    %1568 = vbcast.lane.b32.xlu0 %v1566, 256
    %v1569 = vpop.permute.xlu0 %1568
    %s1571 = sor.u32 256, 8
    %1572 = vbcast.lane.b32.xlu0 %v1566, %s1571
    %v1573 = vpop.permute.xlu0 %1572
    %s1575 = sor.u32 256, 16
    %1576 = vbcast.lane.b32.xlu0 %v1566, %s1575
    %v1577 = vpop.permute.xlu0 %1576
    %s1579 = sor.u32 256, 24
    %1580 = vbcast.lane.b32.xlu0 %v1566, %s1579
    %v1581 = vpop.permute.xlu0 %1580
    %v1582 = vlaneseq
    %v1583 = vshrl.u32 %v1582, 7
    %v1584 = vsub.s32 1, %v1583
    %v1585 = vrot.slane %v299, %v1584
    %1587 = vbcast.lane.b32.xlu0 %v1585, 256
    %v1588 = vpop.permute.xlu0 %1587
    %s1590 = sor.u32 256, 8
    %1591 = vbcast.lane.b32.xlu0 %v1585, %s1590
    %v1592 = vpop.permute.xlu0 %1591
    %s1594 = sor.u32 256, 16
    %1595 = vbcast.lane.b32.xlu0 %v1585, %s1594
    %v1596 = vpop.permute.xlu0 %1595
    %s1598 = sor.u32 256, 24
    %1599 = vbcast.lane.b32.xlu0 %v1585, %s1598
    %v1600 = vpop.permute.xlu0 %1599
    %v1601 = vlaneseq
    %v1602 = vshrl.u32 %v1601, 7
    %v1603 = vsub.s32 2, %v1602
    %v1604 = vrot.slane %v299, %v1603
    %1606 = vbcast.lane.b32.xlu0 %v1604, 256
    %v1607 = vpop.permute.xlu0 %1606
    %s1609 = sor.u32 256, 8
    %1610 = vbcast.lane.b32.xlu0 %v1604, %s1609
    %v1611 = vpop.permute.xlu0 %1610
    %s1613 = sor.u32 256, 16
    %1614 = vbcast.lane.b32.xlu0 %v1604, %s1613
    %v1615 = vpop.permute.xlu0 %1614
    %s1617 = sor.u32 256, 24
    %1618 = vbcast.lane.b32.xlu0 %v1604, %s1617
    %v1619 = vpop.permute.xlu0 %1618
    %v1620 = vlaneseq
    %v1621 = vshrl.u32 %v1620, 7
    %v1622 = vsub.s32 3, %v1621
    %v1623 = vrot.slane %v299, %v1622
    %1625 = vbcast.lane.b32.xlu0 %v1623, 256
    %v1626 = vpop.permute.xlu0 %1625
    %s1628 = sor.u32 256, 8
    %1629 = vbcast.lane.b32.xlu0 %v1623, %s1628
    %v1630 = vpop.permute.xlu0 %1629
    %s1632 = sor.u32 256, 16
    %1633 = vbcast.lane.b32.xlu0 %v1623, %s1632
    %v1634 = vpop.permute.xlu0 %1633
    %s1636 = sor.u32 256, 24
    %1637 = vbcast.lane.b32.xlu0 %v1623, %s1636
    %v1638 = vpop.permute.xlu0 %1637
    %v1639 = vlaneseq
    %v1640 = vshrl.u32 %v1639, 7
    %v1641 = vsub.s32 4, %v1640
    %v1642 = vrot.slane %v299, %v1641
    %1644 = vbcast.lane.b32.xlu0 %v1642, 256
    %v1645 = vpop.permute.xlu0 %1644
    %s1647 = sor.u32 256, 8
    %1648 = vbcast.lane.b32.xlu0 %v1642, %s1647
    %v1649 = vpop.permute.xlu0 %1648
    %s1651 = sor.u32 256, 16
    %1652 = vbcast.lane.b32.xlu0 %v1642, %s1651
    %v1653 = vpop.permute.xlu0 %1652
    %s1655 = sor.u32 256, 24
    %1656 = vbcast.lane.b32.xlu0 %v1642, %s1655
    %v1657 = vpop.permute.xlu0 %1656
    %v1658 = vlaneseq
    %v1659 = vshrl.u32 %v1658, 7
    %v1660 = vsub.s32 5, %v1659
    %v1661 = vrot.slane %v299, %v1660
    %1663 = vbcast.lane.b32.xlu0 %v1661, 256
    %v1664 = vpop.permute.xlu0 %1663
    %s1666 = sor.u32 256, 8
    %1667 = vbcast.lane.b32.xlu0 %v1661, %s1666
    %v1668 = vpop.permute.xlu0 %1667
    %s1670 = sor.u32 256, 16
    %1671 = vbcast.lane.b32.xlu0 %v1661, %s1670
    %v1672 = vpop.permute.xlu0 %1671
    %s1674 = sor.u32 256, 24
    %1675 = vbcast.lane.b32.xlu0 %v1661, %s1674
    %v1676 = vpop.permute.xlu0 %1675
    %v1677 = vlaneseq
    %v1678 = vshrl.u32 %v1677, 7
    %v1679 = vsub.s32 6, %v1678
    %v1680 = vrot.slane %v299, %v1679
    %1682 = vbcast.lane.b32.xlu0 %v1680, 256
    %v1683 = vpop.permute.xlu0 %1682
    %s1685 = sor.u32 256, 8
    %1686 = vbcast.lane.b32.xlu0 %v1680, %s1685
    %v1687 = vpop.permute.xlu0 %1686
    %s1689 = sor.u32 256, 16
    %1690 = vbcast.lane.b32.xlu0 %v1680, %s1689
    %v1691 = vpop.permute.xlu0 %1690
    %s1693 = sor.u32 256, 24
    %1694 = vbcast.lane.b32.xlu0 %v1680, %s1693
    %v1695 = vpop.permute.xlu0 %1694
    %v1696 = vlaneseq
    %v1697 = vshrl.u32 %v1696, 7
    %v1698 = vsub.s32 7, %v1697
    %v1699 = vrot.slane %v299, %v1698
    %1701 = vbcast.lane.b32.xlu0 %v1699, 256
    %v1702 = vpop.permute.xlu0 %1701
    %s1704 = sor.u32 256, 8
    %1705 = vbcast.lane.b32.xlu0 %v1699, %s1704
    %v1706 = vpop.permute.xlu0 %1705
    %s1708 = sor.u32 256, 16
    %1709 = vbcast.lane.b32.xlu0 %v1699, %s1708
    %v1710 = vpop.permute.xlu0 %1709
    %s1712 = sor.u32 256, 24
    %1713 = vbcast.lane.b32.xlu0 %v1699, %s1712
    %v1714 = vpop.permute.xlu0 %1713
    %v1715 = vlaneseq
    %v1716 = vshrl.u32 %v1715, 7
    %v1717 = vsub.s32 0, %v1716
    %v1718 = vrot.slane %v306, %v1717
    %1720 = vbcast.lane.b32.xlu0 %v1718, 256
    %v1721 = vpop.permute.xlu0 %1720
    %s1723 = sor.u32 256, 8
    %1724 = vbcast.lane.b32.xlu0 %v1718, %s1723
    %v1725 = vpop.permute.xlu0 %1724
    %s1727 = sor.u32 256, 16
    %1728 = vbcast.lane.b32.xlu0 %v1718, %s1727
    %v1729 = vpop.permute.xlu0 %1728
    %s1731 = sor.u32 256, 24
    %1732 = vbcast.lane.b32.xlu0 %v1718, %s1731
    %v1733 = vpop.permute.xlu0 %1732
    %v1734 = vlaneseq
    %v1735 = vshrl.u32 %v1734, 7
    %v1736 = vsub.s32 1, %v1735
    %v1737 = vrot.slane %v306, %v1736
    %1739 = vbcast.lane.b32.xlu0 %v1737, 256
    %v1740 = vpop.permute.xlu0 %1739
    %s1742 = sor.u32 256, 8
    %1743 = vbcast.lane.b32.xlu0 %v1737, %s1742
    %v1744 = vpop.permute.xlu0 %1743
    %s1746 = sor.u32 256, 16
    %1747 = vbcast.lane.b32.xlu0 %v1737, %s1746
    %v1748 = vpop.permute.xlu0 %1747
    %s1750 = sor.u32 256, 24
    %1751 = vbcast.lane.b32.xlu0 %v1737, %s1750
    %v1752 = vpop.permute.xlu0 %1751
    %v1753 = vlaneseq
    %v1754 = vshrl.u32 %v1753, 7
    %v1755 = vsub.s32 2, %v1754
    %v1756 = vrot.slane %v306, %v1755
    %1758 = vbcast.lane.b32.xlu0 %v1756, 256
    %v1759 = vpop.permute.xlu0 %1758
    %s1761 = sor.u32 256, 8
    %1762 = vbcast.lane.b32.xlu0 %v1756, %s1761
    %v1763 = vpop.permute.xlu0 %1762
    %s1765 = sor.u32 256, 16
    %1766 = vbcast.lane.b32.xlu0 %v1756, %s1765
    %v1767 = vpop.permute.xlu0 %1766
    %s1769 = sor.u32 256, 24
    %1770 = vbcast.lane.b32.xlu0 %v1756, %s1769
    %v1771 = vpop.permute.xlu0 %1770
    %v1772 = vlaneseq
    %v1773 = vshrl.u32 %v1772, 7
    %v1774 = vsub.s32 3, %v1773
    %v1775 = vrot.slane %v306, %v1774
    %1777 = vbcast.lane.b32.xlu0 %v1775, 256
    %v1778 = vpop.permute.xlu0 %1777
    %s1780 = sor.u32 256, 8
    %1781 = vbcast.lane.b32.xlu0 %v1775, %s1780
    %v1782 = vpop.permute.xlu0 %1781
    %s1784 = sor.u32 256, 16
    %1785 = vbcast.lane.b32.xlu0 %v1775, %s1784
    %v1786 = vpop.permute.xlu0 %1785
    %s1788 = sor.u32 256, 24
    %1789 = vbcast.lane.b32.xlu0 %v1775, %s1788
    %v1790 = vpop.permute.xlu0 %1789
    %v1791 = vlaneseq
    %v1792 = vshrl.u32 %v1791, 7
    %v1793 = vsub.s32 4, %v1792
    %v1794 = vrot.slane %v306, %v1793
    %1796 = vbcast.lane.b32.xlu0 %v1794, 256
    %v1797 = vpop.permute.xlu0 %1796
    %s1799 = sor.u32 256, 8
    %1800 = vbcast.lane.b32.xlu0 %v1794, %s1799
    %v1801 = vpop.permute.xlu0 %1800
    %s1803 = sor.u32 256, 16
    %1804 = vbcast.lane.b32.xlu0 %v1794, %s1803
    %v1805 = vpop.permute.xlu0 %1804
    %s1807 = sor.u32 256, 24
    %1808 = vbcast.lane.b32.xlu0 %v1794, %s1807
    %v1809 = vpop.permute.xlu0 %1808
    %v1810 = vlaneseq
    %v1811 = vshrl.u32 %v1810, 7
    %v1812 = vsub.s32 5, %v1811
    %v1813 = vrot.slane %v306, %v1812
    %1815 = vbcast.lane.b32.xlu0 %v1813, 256
    %v1816 = vpop.permute.xlu0 %1815
    %s1818 = sor.u32 256, 8
    %1819 = vbcast.lane.b32.xlu0 %v1813, %s1818
    %v1820 = vpop.permute.xlu0 %1819
    %s1822 = sor.u32 256, 16
    %1823 = vbcast.lane.b32.xlu0 %v1813, %s1822
    %v1824 = vpop.permute.xlu0 %1823
    %s1826 = sor.u32 256, 24
    %1827 = vbcast.lane.b32.xlu0 %v1813, %s1826
    %v1828 = vpop.permute.xlu0 %1827
    %v1829 = vlaneseq
    %v1830 = vshrl.u32 %v1829, 7
    %v1831 = vsub.s32 6, %v1830
    %v1832 = vrot.slane %v306, %v1831
    %1834 = vbcast.lane.b32.xlu0 %v1832, 256
    %v1835 = vpop.permute.xlu0 %1834
    %s1837 = sor.u32 256, 8
    %1838 = vbcast.lane.b32.xlu0 %v1832, %s1837
    %v1839 = vpop.permute.xlu0 %1838
    %s1841 = sor.u32 256, 16
    %1842 = vbcast.lane.b32.xlu0 %v1832, %s1841
    %v1843 = vpop.permute.xlu0 %1842
    %s1845 = sor.u32 256, 24
    %1846 = vbcast.lane.b32.xlu0 %v1832, %s1845
    %v1847 = vpop.permute.xlu0 %1846
    %v1848 = vlaneseq
    %v1849 = vshrl.u32 %v1848, 7
    %v1850 = vsub.s32 7, %v1849
    %v1851 = vrot.slane %v306, %v1850
    %1853 = vbcast.lane.b32.xlu0 %v1851, 256
    %v1854 = vpop.permute.xlu0 %1853
    %s1856 = sor.u32 256, 8
    %1857 = vbcast.lane.b32.xlu0 %v1851, %s1856
    %v1858 = vpop.permute.xlu0 %1857
    %s1860 = sor.u32 256, 16
    %1861 = vbcast.lane.b32.xlu0 %v1851, %s1860
    %v1862 = vpop.permute.xlu0 %1861
    %s1864 = sor.u32 256, 24
    %1865 = vbcast.lane.b32.xlu0 %v1851, %s1864
    %v1866 = vpop.permute.xlu0 %1865
    %v1867 = vld [vmem:[%s9] sm:$0xff]
    %v1868 = vld [vmem:[%s9 + $0x8] sm:$0xff]
    %v1869 = vld [vmem:[%s9 + $0x10] sm:$0xff]
    %v1870 = vld [vmem:[%s9 + $0x18] sm:$0xff]
    %v1871 = vld [vmem:[%s13] sm:$0xf]
    %v1872 = vld [vmem:[#allocation5] sm:$0x1]
    %v1874 = vlaneseq
    %v1875 = vshrl.u32 %v1874, 7
    %v1876 = vsub.s32 0, %v1875
    %v1877 = vrot.slane %v1872, %v1876
    %vm1879 = vcmask 31744
    %v1881 = vsel %vm1879, %v1867, 0
    %v1884 = vsel %vm1879, %v1868, 0
    %v1887 = vsel %vm1879, %v1869, 0
    %v1890 = vsel %vm1879, %v1870, 0
    %vm1892 = vcmask 1043456
    %v1894 = vsel %vm1892, %v1871, 0
    %1896 = vmatprep.subr.mxu0 0.0
    %1897 = vmatpush1.msra.mxu0 %v1894
    %1898 = vmatprep.subr.mxu0 0.0
    %1899 = vmatpush1.msra.mxu0 0.0
    %1900 = vmatprep.subr.mxu0 0.0
    %1901 = vmatpush1.msra.mxu0 0.0
    %1902 = vmatprep.subr.mxu0 0.0
    %1903 = vmatpush1.msra.mxu0 0.0
    %1904 = vmatprep.subr.mxu0 0.0
    %1905 = vmatpush1.msra.mxu0 0.0
    %1906 = vmatprep.subr.mxu0 0.0
    %1907 = vmatpush1.msra.mxu0 0.0
    %1908 = vmatprep.subr.mxu0 0.0
    %1909 = vmatpush1.msra.mxu0 0.0
    %1910 = vmatprep.subr.mxu0 0.0
    %1911 = vmatpush1.msra.mxu0 0.0
    %1912 = vmatprep.subr.mxu0 0.0
    %1913 = vmatpush1.msra.mxu0 0.0
    %1914 = vmatprep.subr.mxu0 0.0
    %1915 = vmatpush1.msra.mxu0 0.0
    %1916 = vmatprep.subr.mxu0 0.0
    %1917 = vmatpush1.msra.mxu0 0.0
    %1918 = vmatprep.subr.mxu0 0.0
    %1919 = vmatpush1.msra.mxu0 0.0
    %1920 = vmatprep.subr.mxu0 0.0
    %1921 = vmatpush1.msra.mxu0 0.0
    %1922 = vmatprep.subr.mxu0 0.0
    %1923 = vmatpush1.msra.mxu0 0.0
    %1924 = vmatprep.subr.mxu0 0.0
    %1925 = vmatpush1.msra.mxu0 0.0
    %1926 = vmatprep.subr.mxu0 0.0
    %1927 = vmatpush1.msra.mxu0 0.0
    %1928 = vmatprep.subr.mxu0 0.0
    %1929 = vmatpush1.msra.mxu0 0.0
    %1930 = vmatprep.subr.mxu0 0.0
    %1931 = vmatpush1.msra.mxu0 0.0
    %1932 = vmatprep.subr.mxu0 0.0
    %1933 = vmatpush1.msra.mxu0 0.0
    %1934 = vmatprep.subr.mxu0 0.0
    %1935 = vmatpush1.msra.mxu0 0.0
    %1936 = vmatprep.subr.mxu0 0.0
    %1937 = vmatpush1.msra.mxu0 0.0
    %1938 = vmatprep.subr.mxu0 0.0
    %1939 = vmatpush1.msra.mxu0 0.0
    %1940 = vmatprep.subr.mxu0 0.0
    %1941 = vmatpush1.msra.mxu0 0.0
    %1942 = vmatprep.subr.mxu0 0.0
    %1943 = vmatpush1.msra.mxu0 0.0
    %1944 = vmatprep.subr.mxu0 0.0
    %1945 = vmatpush1.msra.mxu0 0.0
    %1946 = vmatprep.subr.mxu0 0.0
    %1947 = vmatpush1.msra.mxu0 0.0
    %1948 = vmatprep.subr.mxu0 0.0
    %1949 = vmatpush1.msra.mxu0 0.0
    %1950 = vmatprep.subr.mxu0 0.0
    %1951 = vmatpush1.msra.mxu0 0.0
    %1952 = vmatprep.subr.mxu0 0.0
    %1953 = vmatpush1.msra.mxu0 0.0
    %1954 = vmatprep.subr.mxu0 0.0
    %1955 = vmatpush1.msra.mxu0 0.0
    %1956 = vmatprep.subr.mxu0 0.0
    %1957 = vmatpush1.msra.mxu0 0.0
    %1958 = vmatprep.subr.mxu0 0.0
    %1959 = vmatpush1.msra.mxu0 0.0
    %1960 = vmatprep.mubr.f32.mxu0 0.0
    %1961 = vmatmul.mubr.f32.gmra.mrb[0].mxu0 %v1881
    %v1962 = vpop.f32.mrb[0].mxu0
    %v1963 = vadd.f32 %v1877, %v1962
    %v1964 = vpop.f32.mrb[0].mxu0
    %1965 = vmatprep.mubr.f32.mxu0 0.0
    %1966 = vmatmul.mubr.f32.gmra.mrb[0].mxu0 %v1884
    %v1967 = vpop.f32.mrb[0].mxu0
    %v1968 = vadd.f32 %v1877, %v1967
    %v1969 = vpop.f32.mrb[0].mxu0
    %1970 = vmatprep.mubr.f32.mxu0 0.0
    %1971 = vmatmul.mubr.f32.gmra.mrb[0].mxu0 %v1887
    %v1972 = vpop.f32.mrb[0].mxu0
    %v1973 = vadd.f32 %v1877, %v1972
    %v1974 = vpop.f32.mrb[0].mxu0
    %1975 = vmatprep.mubr.f32.mxu0 0.0
    %1976 = vmatmul.mubr.f32.gmra.mrb[0].mxu0 %v1890
    %v1977 = vpop.f32.mrb[0].mxu0
    %v1978 = vadd.f32 %v1877, %v1977
    %v1979 = vpop.f32.mrb[0].mxu0
    %1980 = vdwg.mxu0
    %v1981 = vxor.u32 %v1963, 2147483648
    %v1982 = vxor.u32 %v1968, 2147483648
    %v1983 = vxor.u32 %v1973, 2147483648
    %v1984 = vxor.u32 %v1978, 2147483648
    %v1985 = vmul.f32 %v1981, 1.442695
    %v1986 = vpow.pop %v1985
    %v1987 = vmul.f32 %v1982, 1.442695
    %v1988 = vpow.pop %v1987
    %v1989 = vmul.f32 %v1983, 1.442695
    %v1990 = vpow.pop %v1989
    %v1991 = vmul.f32 %v1984, 1.442695
    %v1992 = vpow.pop %v1991
    %v1993 = vadd.f32 %v1986, 1.0
    %v1994 = vadd.f32 %v1988, 1.0
    %v1995 = vadd.f32 %v1990, 1.0
    %v1996 = vadd.f32 %v1992, 1.0
    %v1997 = vrcp.pop %v1993
    %v1998 = vmul.f32 1.0, %v1997
    %v1999 = vrcp.pop %v1994
    %v2000 = vmul.f32 1.0, %v1999
    %v2001 = vrcp.pop %v1995
    %v2002 = vmul.f32 1.0, %v2001
    %v2003 = vrcp.pop %v1996
    %v2004 = vmul.f32 1.0, %v2003
    %v2005 = vmul.f32 %v1963, %v1998
    %v2006 = vmul.f32 %v1968, %v2000
    %v2007 = vmul.f32 %v1973, %v2002
    %v2008 = vmul.f32 %v1978, %v2004
    %v2009 = vld [vmem:[%s17] sm:$0xf]
    %v2010 = vld [vmem:[#allocation7] sm:$0x1]
    %v2012 = vlaneseq
    %v2013 = vshrl.u32 %v2012, 7
    %v2014 = vsub.s32 0, %v2013
    %v2015 = vrot.slane %v2010, %v2014
    %v2018 = vsel %vm1879, %v2005, 0
    %v2021 = vsel %vm1879, %v2006, 0
    %v2024 = vsel %vm1879, %v2007, 0
    %v2027 = vsel %vm1879, %v2008, 0
    %v2030 = vsel %vm1892, %v2009, 0
    %2032 = vmatprep.subr.mxu0 0.0
    %2033 = vmatpush1.msra.mxu0 %v2030
    %2034 = vmatprep.subr.mxu0 0.0
    %2035 = vmatpush1.msra.mxu0 0.0
    %2036 = vmatprep.subr.mxu0 0.0
    %2037 = vmatpush1.msra.mxu0 0.0
    %2038 = vmatprep.subr.mxu0 0.0
    %2039 = vmatpush1.msra.mxu0 0.0
    %2040 = vmatprep.subr.mxu0 0.0
    %2041 = vmatpush1.msra.mxu0 0.0
    %2042 = vmatprep.subr.mxu0 0.0
    %2043 = vmatpush1.msra.mxu0 0.0
    %2044 = vmatprep.subr.mxu0 0.0
    %2045 = vmatpush1.msra.mxu0 0.0
    %2046 = vmatprep.subr.mxu0 0.0
    %2047 = vmatpush1.msra.mxu0 0.0
    %2048 = vmatprep.subr.mxu0 0.0
    %2049 = vmatpush1.msra.mxu0 0.0
    %2050 = vmatprep.subr.mxu0 0.0
    %2051 = vmatpush1.msra.mxu0 0.0
    %2052 = vmatprep.subr.mxu0 0.0
    %2053 = vmatpush1.msra.mxu0 0.0
    %2054 = vmatprep.subr.mxu0 0.0
    %2055 = vmatpush1.msra.mxu0 0.0
    %2056 = vmatprep.subr.mxu0 0.0
    %2057 = vmatpush1.msra.mxu0 0.0
    %2058 = vmatprep.subr.mxu0 0.0
    %2059 = vmatpush1.msra.mxu0 0.0
    %2060 = vmatprep.subr.mxu0 0.0
    %2061 = vmatpush1.msra.mxu0 0.0
    %2062 = vmatprep.subr.mxu0 0.0
    %2063 = vmatpush1.msra.mxu0 0.0
    %2064 = vmatprep.subr.mxu0 0.0
    %2065 = vmatpush1.msra.mxu0 0.0
    %2066 = vmatprep.subr.mxu0 0.0
    %2067 = vmatpush1.msra.mxu0 0.0
    %2068 = vmatprep.subr.mxu0 0.0
    %2069 = vmatpush1.msra.mxu0 0.0
    %2070 = vmatprep.subr.mxu0 0.0
    %2071 = vmatpush1.msra.mxu0 0.0
    %2072 = vmatprep.subr.mxu0 0.0
    %2073 = vmatpush1.msra.mxu0 0.0
    %2074 = vmatprep.subr.mxu0 0.0
    %2075 = vmatpush1.msra.mxu0 0.0
    %2076 = vmatprep.subr.mxu0 0.0
    %2077 = vmatpush1.msra.mxu0 0.0
    %2078 = vmatprep.subr.mxu0 0.0
    %2079 = vmatpush1.msra.mxu0 0.0
    %2080 = vmatprep.subr.mxu0 0.0
    %2081 = vmatpush1.msra.mxu0 0.0
    %2082 = vmatprep.subr.mxu0 0.0
    %2083 = vmatpush1.msra.mxu0 0.0
    %2084 = vmatprep.subr.mxu0 0.0
    %2085 = vmatpush1.msra.mxu0 0.0
    %2086 = vmatprep.subr.mxu0 0.0
    %2087 = vmatpush1.msra.mxu0 0.0
    %2088 = vmatprep.subr.mxu0 0.0
    %2089 = vmatpush1.msra.mxu0 0.0
    %2090 = vmatprep.subr.mxu0 0.0
    %2091 = vmatpush1.msra.mxu0 0.0
    %2092 = vmatprep.subr.mxu0 0.0
    %2093 = vmatpush1.msra.mxu0 0.0
    %2094 = vmatprep.subr.mxu0 0.0
    %2095 = vmatpush1.msra.mxu0 0.0
    %2096 = vmatprep.mubr.f32.mxu0 0.0
    %2097 = vmatmul.mubr.f32.gmra.mrb[0].mxu0 %v2018
    %v2098 = vpop.f32.mrb[0].mxu0
    %v2099 = vadd.f32 %v2015, %v2098
    %v2100 = vpop.f32.mrb[0].mxu0
    %2101 = vmatprep.mubr.f32.mxu0 0.0
    %2102 = vmatmul.mubr.f32.gmra.mrb[0].mxu0 %v2021
    %v2103 = vpop.f32.mrb[0].mxu0
    %v2104 = vadd.f32 %v2015, %v2103
    %v2105 = vpop.f32.mrb[0].mxu0
    %2106 = vmatprep.mubr.f32.mxu0 0.0
    %2107 = vmatmul.mubr.f32.gmra.mrb[0].mxu0 %v2024
    %v2108 = vpop.f32.mrb[0].mxu0
    %v2109 = vadd.f32 %v2015, %v2108
    %v2110 = vpop.f32.mrb[0].mxu0
    %2111 = vmatprep.mubr.f32.mxu0 0.0
    %2112 = vmatmul.mubr.f32.gmra.mrb[0].mxu0 %v2027
    %v2113 = vpop.f32.mrb[0].mxu0
    %v2114 = vadd.f32 %v2015, %v2113
    %v2115 = vpop.f32.mrb[0].mxu0
    %2116 = vdwg.mxu0
    %2121 = vrot.lane.b32.xlu0 %v620, 127
    %v2122 = vpop.permute.xlu0 %2121
    %2123 = vrot.lane.b32.xlu0 %v622, 127
    %v2124 = vpop.permute.xlu0 %2123
    %2125 = vrot.lane.b32.xlu0 %v624, 127
    %v2126 = vpop.permute.xlu0 %2125
    %2127 = vrot.lane.b32.xlu0 %v626, 127
    %v2128 = vpop.permute.xlu0 %2127
    %2133 = vrot.lane.b32.xlu0 %v353, 1
    %v2134 = vpop.permute.xlu0 %2133
    %2135 = vrot.lane.b32.xlu0 %v354, 1
    %v2136 = vpop.permute.xlu0 %2135
    %2137 = vrot.lane.b32.xlu0 %v355, 1
    %v2138 = vpop.permute.xlu0 %2137
    %2139 = vrot.lane.b32.xlu0 %v356, 1
    %v2140 = vpop.permute.xlu0 %2139
    %vm2145 = vcmask 7168
    %v2146 = vsel %vm2145, %v2122, %v2134
    %v2147 = vsel %vm2145, %v2124, %v2136
    %v2148 = vsel %vm2145, %v2126, %v2138
    %v2149 = vsel %vm2145, %v2128, %v2140
    %vm2150 = vcmask 15360
    %v2151 = vsel %vm2150, %v2146, %v2134
    %v2152 = vsel %vm2150, %v2147, %v2136
    %v2153 = vsel %vm2150, %v2148, %v2138
    %v2154 = vsel %vm2150, %v2149, %v2140
    %v2155 = vld [vmem:[%s21] sm:$0x7]
    %v2156 = vld [vmem:[%s23] sm:$0x7]
    %v2157 = vld [vmem:[%s25] sm:$0x1]
    %v2158 = vld [vmem:[%s27] sm:$0xf]
    %v2159 = vld [vmem:[%s29] sm:$0x1]
    %v2160 = vld [vmem:[%s31] sm:$0xff]
    %v2161 = vld [vmem:[%s31 + $0x8] sm:$0xff]
    %v2162 = vld [vmem:[%s31 + $0x10] sm:$0xff]
    %v2163 = vld [vmem:[%s31 + $0x18] sm:$0xff]
    %v2164 = vld [vmem:[%s33] sm:$0x1]
    %v2166 = vsel %vm1879, %v2099, 0
    %v2169 = vsel %vm1879, %v2104, 0
    %v2172 = vsel %vm1879, %v2109, 0
    %v2175 = vsel %vm1879, %v2114, 0
    %v2178 = vsel %vm1892, %v2158, 0
    %2180 = vmatprep.subr.mxu0 0.0
    %2181 = vmatpush1.msra.mxu0 %v2178
    %2182 = vmatprep.subr.mxu0 0.0
    %2183 = vmatpush1.msra.mxu0 0.0
    %2184 = vmatprep.subr.mxu0 0.0
    %2185 = vmatpush1.msra.mxu0 0.0
    %2186 = vmatprep.subr.mxu0 0.0
    %2187 = vmatpush1.msra.mxu0 0.0
    %2188 = vmatprep.subr.mxu0 0.0
    %2189 = vmatpush1.msra.mxu0 0.0
    %2190 = vmatprep.subr.mxu0 0.0
    %2191 = vmatpush1.msra.mxu0 0.0
    %2192 = vmatprep.subr.mxu0 0.0
    %2193 = vmatpush1.msra.mxu0 0.0
    %2194 = vmatprep.subr.mxu0 0.0
    %2195 = vmatpush1.msra.mxu0 0.0
    %2196 = vmatprep.subr.mxu0 0.0
    %2197 = vmatpush1.msra.mxu0 0.0
    %2198 = vmatprep.subr.mxu0 0.0
    %2199 = vmatpush1.msra.mxu0 0.0
    %2200 = vmatprep.subr.mxu0 0.0
    %2201 = vmatpush1.msra.mxu0 0.0
    %2202 = vmatprep.subr.mxu0 0.0
    %2203 = vmatpush1.msra.mxu0 0.0
    %2204 = vmatprep.subr.mxu0 0.0
    %2205 = vmatpush1.msra.mxu0 0.0
    %2206 = vmatprep.subr.mxu0 0.0
    %2207 = vmatpush1.msra.mxu0 0.0
    %2208 = vmatprep.subr.mxu0 0.0
    %2209 = vmatpush1.msra.mxu0 0.0
    %2210 = vmatprep.subr.mxu0 0.0
    %2211 = vmatpush1.msra.mxu0 0.0
    %2212 = vmatprep.subr.mxu0 0.0
    %2213 = vmatpush1.msra.mxu0 0.0
    %2214 = vmatprep.subr.mxu0 0.0
    %2215 = vmatpush1.msra.mxu0 0.0
    %2216 = vmatprep.subr.mxu0 0.0
    %2217 = vmatpush1.msra.mxu0 0.0
    %2218 = vmatprep.subr.mxu0 0.0
    %2219 = vmatpush1.msra.mxu0 0.0
    %2220 = vmatprep.subr.mxu0 0.0
    %2221 = vmatpush1.msra.mxu0 0.0
    %2222 = vmatprep.subr.mxu0 0.0
    %2223 = vmatpush1.msra.mxu0 0.0
    %2224 = vmatprep.subr.mxu0 0.0
    %2225 = vmatpush1.msra.mxu0 0.0
    %2226 = vmatprep.subr.mxu0 0.0
    %2227 = vmatpush1.msra.mxu0 0.0
    %2228 = vmatprep.subr.mxu0 0.0
    %2229 = vmatpush1.msra.mxu0 0.0
    %2230 = vmatprep.subr.mxu0 0.0
    %2231 = vmatpush1.msra.mxu0 0.0
    %2232 = vmatprep.subr.mxu0 0.0
    %2233 = vmatpush1.msra.mxu0 0.0
    %2234 = vmatprep.subr.mxu0 0.0
    %2235 = vmatpush1.msra.mxu0 0.0
    %2236 = vmatprep.subr.mxu0 0.0
    %2237 = vmatpush1.msra.mxu0 0.0
    %2238 = vmatprep.subr.mxu0 0.0
    %2239 = vmatpush1.msra.mxu0 0.0
    %2240 = vmatprep.subr.mxu0 0.0
    %2241 = vmatpush1.msra.mxu0 0.0
    %2242 = vmatprep.subr.mxu0 0.0
    %2243 = vmatpush1.msra.mxu0 0.0
    %2244 = vmatprep.mubr.f32.mxu0 0.0
    %2245 = vmatmul.mubr.f32.gmra.mrb[0].mxu0 %v2166
    %v2246 = vpop.f32.mrb[0].mxu0
    %v2247 = vadd.f32 0.0, %v2246
    %v2248 = vpop.f32.mrb[0].mxu0
    %2249 = vmatprep.mubr.f32.mxu0 0.0
    %2250 = vmatmul.mubr.f32.gmra.mrb[0].mxu0 %v2169
    %v2251 = vpop.f32.mrb[0].mxu0
    %v2252 = vadd.f32 0.0, %v2251
    %v2253 = vpop.f32.mrb[0].mxu0
    %2254 = vmatprep.mubr.f32.mxu0 0.0
    %2255 = vmatmul.mubr.f32.gmra.mrb[0].mxu0 %v2172
    %v2256 = vpop.f32.mrb[0].mxu0
    %v2257 = vadd.f32 0.0, %v2256
    %v2258 = vpop.f32.mrb[0].mxu0
    %2259 = vmatprep.mubr.f32.mxu0 0.0
    %2260 = vmatmul.mubr.f32.gmra.mrb[0].mxu0 %v2175
    %v2261 = vpop.f32.mrb[0].mxu0
    %v2262 = vadd.f32 0.0, %v2261
    %v2263 = vpop.f32.mrb[0].mxu0
    %2264 = vdwg.mxu0
    %vm2265 = vcmask 23552
    %v2267 = vsel %vm2265, %v2151, 0
    %v2270 = vsel %vm2265, %v2152, 0
    %v2273 = vsel %vm2265, %v2153, 0
    %v2276 = vsel %vm2265, %v2154, 0
    %vm2278 = vcmask 1042432
    %v2280 = vsel %vm2278, %v2155, 0
    %2282 = vmatprep.subr.mxu0 0.0
    %2283 = vmatpush1.msra.mxu0 %v2280
    %2284 = vmatprep.subr.mxu0 0.0
    %2285 = vmatpush1.msra.mxu0 0.0
    %2286 = vmatprep.subr.mxu0 0.0
    %2287 = vmatpush1.msra.mxu0 0.0
    %2288 = vmatprep.subr.mxu0 0.0
    %2289 = vmatpush1.msra.mxu0 0.0
    %2290 = vmatprep.subr.mxu0 0.0
    %2291 = vmatpush1.msra.mxu0 0.0
    %2292 = vmatprep.subr.mxu0 0.0
    %2293 = vmatpush1.msra.mxu0 0.0
    %2294 = vmatprep.subr.mxu0 0.0
    %2295 = vmatpush1.msra.mxu0 0.0
    %2296 = vmatprep.subr.mxu0 0.0
    %2297 = vmatpush1.msra.mxu0 0.0
    %2298 = vmatprep.subr.mxu0 0.0
    %2299 = vmatpush1.msra.mxu0 0.0
    %2300 = vmatprep.subr.mxu0 0.0
    %2301 = vmatpush1.msra.mxu0 0.0
    %2302 = vmatprep.subr.mxu0 0.0
    %2303 = vmatpush1.msra.mxu0 0.0
    %2304 = vmatprep.subr.mxu0 0.0
    %2305 = vmatpush1.msra.mxu0 0.0
    %2306 = vmatprep.subr.mxu0 0.0
    %2307 = vmatpush1.msra.mxu0 0.0
    %2308 = vmatprep.subr.mxu0 0.0
    %2309 = vmatpush1.msra.mxu0 0.0
    %2310 = vmatprep.subr.mxu0 0.0
    %2311 = vmatpush1.msra.mxu0 0.0
    %2312 = vmatprep.subr.mxu0 0.0
    %2313 = vmatpush1.msra.mxu0 0.0
    %2314 = vmatprep.subr.mxu0 0.0
    %2315 = vmatpush1.msra.mxu0 0.0
    %2316 = vmatprep.subr.mxu0 0.0
    %2317 = vmatpush1.msra.mxu0 0.0
    %2318 = vmatprep.subr.mxu0 0.0
    %2319 = vmatpush1.msra.mxu0 0.0
    %2320 = vmatprep.subr.mxu0 0.0
    %2321 = vmatpush1.msra.mxu0 0.0
    %2322 = vmatprep.subr.mxu0 0.0
    %2323 = vmatpush1.msra.mxu0 0.0
    %2324 = vmatprep.subr.mxu0 0.0
    %2325 = vmatpush1.msra.mxu0 0.0
    %2326 = vmatprep.subr.mxu0 0.0
    %2327 = vmatpush1.msra.mxu0 0.0
    %2328 = vmatprep.subr.mxu0 0.0
    %2329 = vmatpush1.msra.mxu0 0.0
    %2330 = vmatprep.subr.mxu0 0.0
    %2331 = vmatpush1.msra.mxu0 0.0
    %2332 = vmatprep.subr.mxu0 0.0
    %2333 = vmatpush1.msra.mxu0 0.0
    %2334 = vmatprep.subr.mxu0 0.0
    %2335 = vmatpush1.msra.mxu0 0.0
    %2336 = vmatprep.subr.mxu0 0.0
    %2337 = vmatpush1.msra.mxu0 0.0
    %2338 = vmatprep.subr.mxu0 0.0
    %2339 = vmatpush1.msra.mxu0 0.0
    %2340 = vmatprep.subr.mxu0 0.0
    %2341 = vmatpush1.msra.mxu0 0.0
    %2342 = vmatprep.subr.mxu0 0.0
    %2343 = vmatpush1.msra.mxu0 0.0
    %2344 = vmatprep.subr.mxu0 0.0
    %2345 = vmatpush1.msra.mxu0 0.0
    %2346 = vmatprep.mubr.f32.mxu0 0.0
    %2347 = vmatmul.mubr.f32.gmra.mrb[0].mxu0 %v2267
    %v2348 = vpop.f32.mrb[0].mxu0
    %v2349 = vadd.f32 %v2247, %v2348
    %v2350 = vpop.f32.mrb[0].mxu0
    %2351 = vmatprep.mubr.f32.mxu0 0.0
    %2352 = vmatmul.mubr.f32.gmra.mrb[0].mxu0 %v2270
    %v2353 = vpop.f32.mrb[0].mxu0
    %v2354 = vadd.f32 %v2252, %v2353
    %v2355 = vpop.f32.mrb[0].mxu0
    %2356 = vmatprep.mubr.f32.mxu0 0.0
    %2357 = vmatmul.mubr.f32.gmra.mrb[0].mxu0 %v2273
    %v2358 = vpop.f32.mrb[0].mxu0
    %v2359 = vadd.f32 %v2257, %v2358
    %v2360 = vpop.f32.mrb[0].mxu0
    %2361 = vmatprep.mubr.f32.mxu0 0.0
    %2362 = vmatmul.mubr.f32.gmra.mrb[0].mxu0 %v2276
    %v2363 = vpop.f32.mrb[0].mxu0
    %v2364 = vadd.f32 %v2262, %v2363
    %v2365 = vpop.f32.mrb[0].mxu0
    %2366 = vdwg.mxu0
    %v2368 = vlaneseq
    %v2369 = vshrl.u32 %v2368, 7
    %v2370 = vsub.s32 0, %v2369
    %v2371 = vrot.slane %v2159, %v2370
    %v2373 = vadd.f32 %v2349, %v2371
    %v2374 = vadd.f32 %v2354, %v2371
    %v2375 = vadd.f32 %v2359, %v2371
    %v2376 = vadd.f32 %v2364, %v2371
    %v2378 = vsel %vm2278, %v2156, 0
    %2380 = vmatprep.subr.mxu0 0.0
    %2381 = vmatpush1.msra.mxu0 %v2378
    %2382 = vmatprep.subr.mxu0 0.0
    %2383 = vmatpush1.msra.mxu0 0.0
    %2384 = vmatprep.subr.mxu0 0.0
    %2385 = vmatpush1.msra.mxu0 0.0
    %2386 = vmatprep.subr.mxu0 0.0
    %2387 = vmatpush1.msra.mxu0 0.0
    %2388 = vmatprep.subr.mxu0 0.0
    %2389 = vmatpush1.msra.mxu0 0.0
    %2390 = vmatprep.subr.mxu0 0.0
    %2391 = vmatpush1.msra.mxu0 0.0
    %2392 = vmatprep.subr.mxu0 0.0
    %2393 = vmatpush1.msra.mxu0 0.0
    %2394 = vmatprep.subr.mxu0 0.0
    %2395 = vmatpush1.msra.mxu0 0.0
    %2396 = vmatprep.subr.mxu0 0.0
    %2397 = vmatpush1.msra.mxu0 0.0
    %2398 = vmatprep.subr.mxu0 0.0
    %2399 = vmatpush1.msra.mxu0 0.0
    %2400 = vmatprep.subr.mxu0 0.0
    %2401 = vmatpush1.msra.mxu0 0.0
    %2402 = vmatprep.subr.mxu0 0.0
    %2403 = vmatpush1.msra.mxu0 0.0
    %2404 = vmatprep.subr.mxu0 0.0
    %2405 = vmatpush1.msra.mxu0 0.0
    %2406 = vmatprep.subr.mxu0 0.0
    %2407 = vmatpush1.msra.mxu0 0.0
    %2408 = vmatprep.subr.mxu0 0.0
    %2409 = vmatpush1.msra.mxu0 0.0
    %2410 = vmatprep.subr.mxu0 0.0
    %2411 = vmatpush1.msra.mxu0 0.0
    %2412 = vmatprep.subr.mxu0 0.0
    %2413 = vmatpush1.msra.mxu0 0.0
    %2414 = vmatprep.subr.mxu0 0.0
    %2415 = vmatpush1.msra.mxu0 0.0
    %2416 = vmatprep.subr.mxu0 0.0
    %2417 = vmatpush1.msra.mxu0 0.0
    %2418 = vmatprep.subr.mxu0 0.0
    %2419 = vmatpush1.msra.mxu0 0.0
    %2420 = vmatprep.subr.mxu0 0.0
    %2421 = vmatpush1.msra.mxu0 0.0
    %2422 = vmatprep.subr.mxu0 0.0
    %2423 = vmatpush1.msra.mxu0 0.0
    %2424 = vmatprep.subr.mxu0 0.0
    %2425 = vmatpush1.msra.mxu0 0.0
    %2426 = vmatprep.subr.mxu0 0.0
    %2427 = vmatpush1.msra.mxu0 0.0
    %2428 = vmatprep.subr.mxu0 0.0
    %2429 = vmatpush1.msra.mxu0 0.0
    %2430 = vmatprep.subr.mxu0 0.0
    %2431 = vmatpush1.msra.mxu0 0.0
    %2432 = vmatprep.subr.mxu0 0.0
    %2433 = vmatpush1.msra.mxu0 0.0
    %2434 = vmatprep.subr.mxu0 0.0
    %2435 = vmatpush1.msra.mxu0 0.0
    %2436 = vmatprep.subr.mxu0 0.0
    %2437 = vmatpush1.msra.mxu0 0.0
    %2438 = vmatprep.subr.mxu0 0.0
    %2439 = vmatpush1.msra.mxu0 0.0
    %2440 = vmatprep.subr.mxu0 0.0
    %2441 = vmatpush1.msra.mxu0 0.0
    %2442 = vmatprep.subr.mxu0 0.0
    %2443 = vmatpush1.msra.mxu0 0.0
    %2444 = vmatprep.mubr.f32.mxu0 0.0
    %2445 = vmatmul.mubr.f32.gmra.mrb[0].mxu0 %v2267
    %v2446 = vpop.f32.mrb[0].mxu0
    %v2447 = vadd.f32 0.0, %v2446
    %v2448 = vpop.f32.mrb[0].mxu0
    %2449 = vmatprep.mubr.f32.mxu0 0.0
    %2450 = vmatmul.mubr.f32.gmra.mrb[0].mxu0 %v2270
    %v2451 = vpop.f32.mrb[0].mxu0
    %v2452 = vadd.f32 0.0, %v2451
    %v2453 = vpop.f32.mrb[0].mxu0
    %2454 = vmatprep.mubr.f32.mxu0 0.0
    %2455 = vmatmul.mubr.f32.gmra.mrb[0].mxu0 %v2273
    %v2456 = vpop.f32.mrb[0].mxu0
    %v2457 = vadd.f32 0.0, %v2456
    %v2458 = vpop.f32.mrb[0].mxu0
    %2459 = vmatprep.mubr.f32.mxu0 0.0
    %2460 = vmatmul.mubr.f32.gmra.mrb[0].mxu0 %v2276
    %v2461 = vpop.f32.mrb[0].mxu0
    %v2462 = vadd.f32 0.0, %v2461
    %v2463 = vpop.f32.mrb[0].mxu0
    %2464 = vdwg.mxu0
    %v2469 = vcombine.high %v2373, %v2373
    %v2471 = vunpack.c.l.s4 1966171168
    %v2472 = vunpack.c.0.s8 %v2471
    %v2473 = vlaneseq
    %v2474 = vshrl.u32 %v2473, 7
    %v2475 = vsub.s32 %v2472, %v2474
    %v2476 = vrot.slane %v2373, %v2475
    %v2478 = vunpack.c.l.s4 1966171168
    %v2479 = vunpack.c.0.s8 %v2478
    %v2480 = vlaneseq
    %v2481 = vshrl.u32 %v2480, 7
    %v2482 = vsub.s32 %v2479, %v2481
    %v2483 = vrot.slane %v2469, %v2482
    %v2484 = vcombine.high %v2476, %v2476
    %v2485 = vcombine.high %v2483, %v2483
    %v2487 = vunpack.c.l.s4 1966171168
    %v2488 = vunpack.c.0.s8 %v2487
    %v2489 = vlaneseq
    %v2490 = vshrl.u32 %v2489, 7
    %v2491 = vsub.s32 %v2488, %v2490
    %v2492 = vrot.slane %v2476, %v2491
    %v2494 = vunpack.c.l.s4 1966171168
    %v2495 = vunpack.c.0.s8 %v2494
    %v2496 = vlaneseq
    %v2497 = vshrl.u32 %v2496, 7
    %v2498 = vsub.s32 %v2495, %v2497
    %v2499 = vrot.slane %v2483, %v2498
    %v2501 = vunpack.c.l.s4 1966171168
    %v2502 = vunpack.c.0.s8 %v2501
    %v2503 = vlaneseq
    %v2504 = vshrl.u32 %v2503, 7
    %v2505 = vsub.s32 %v2502, %v2504
    %v2506 = vrot.slane %v2484, %v2505
    %v2508 = vunpack.c.l.s4 1966171168
    %v2509 = vunpack.c.0.s8 %v2508
    %v2510 = vlaneseq
    %v2511 = vshrl.u32 %v2510, 7
    %v2512 = vsub.s32 %v2509, %v2511
    %v2513 = vrot.slane %v2485, %v2512
    %v2514 = vcombine.high %v2492, %v2492
    %v2515 = vcombine.high %v2499, %v2499
    %v2516 = vcombine.high %v2506, %v2506
    %v2517 = vcombine.high %v2513, %v2513
    %v2518 = vcombine.high %v2374, %v2374
    %v2520 = vunpack.c.l.s4 1966171168
    %v2521 = vunpack.c.0.s8 %v2520
    %v2522 = vlaneseq
    %v2523 = vshrl.u32 %v2522, 7
    %v2524 = vsub.s32 %v2521, %v2523
    %v2525 = vrot.slane %v2374, %v2524
    %v2527 = vunpack.c.l.s4 1966171168
    %v2528 = vunpack.c.0.s8 %v2527
    %v2529 = vlaneseq
    %v2530 = vshrl.u32 %v2529, 7
    %v2531 = vsub.s32 %v2528, %v2530
    %v2532 = vrot.slane %v2518, %v2531
    %v2533 = vcombine.high %v2525, %v2525
    %v2534 = vcombine.high %v2532, %v2532
    %v2536 = vunpack.c.l.s4 1966171168
    %v2537 = vunpack.c.0.s8 %v2536
    %v2538 = vlaneseq
    %v2539 = vshrl.u32 %v2538, 7
    %v2540 = vsub.s32 %v2537, %v2539
    %v2541 = vrot.slane %v2525, %v2540
    %v2543 = vunpack.c.l.s4 1966171168
    %v2544 = vunpack.c.0.s8 %v2543
    %v2545 = vlaneseq
    %v2546 = vshrl.u32 %v2545, 7
    %v2547 = vsub.s32 %v2544, %v2546
    %v2548 = vrot.slane %v2532, %v2547
    %v2550 = vunpack.c.l.s4 1966171168
    %v2551 = vunpack.c.0.s8 %v2550
    %v2552 = vlaneseq
    %v2553 = vshrl.u32 %v2552, 7
    %v2554 = vsub.s32 %v2551, %v2553
    %v2555 = vrot.slane %v2533, %v2554
    %v2557 = vunpack.c.l.s4 1966171168
    %v2558 = vunpack.c.0.s8 %v2557
    %v2559 = vlaneseq
    %v2560 = vshrl.u32 %v2559, 7
    %v2561 = vsub.s32 %v2558, %v2560
    %v2562 = vrot.slane %v2534, %v2561
    %v2563 = vcombine.high %v2541, %v2541
    %v2564 = vcombine.high %v2548, %v2548
    %v2565 = vcombine.high %v2555, %v2555
    %v2566 = vcombine.high %v2562, %v2562
    %v2567 = vcombine.high %v2375, %v2375
    %v2569 = vunpack.c.l.s4 1966171168
    %v2570 = vunpack.c.0.s8 %v2569
    %v2571 = vlaneseq
    %v2572 = vshrl.u32 %v2571, 7
    %v2573 = vsub.s32 %v2570, %v2572
    %v2574 = vrot.slane %v2375, %v2573
    %v2576 = vunpack.c.l.s4 1966171168
    %v2577 = vunpack.c.0.s8 %v2576
    %v2578 = vlaneseq
    %v2579 = vshrl.u32 %v2578, 7
    %v2580 = vsub.s32 %v2577, %v2579
    %v2581 = vrot.slane %v2567, %v2580
    %v2582 = vcombine.high %v2574, %v2574
    %v2583 = vcombine.high %v2581, %v2581
    %v2585 = vunpack.c.l.s4 1966171168
    %v2586 = vunpack.c.0.s8 %v2585
    %v2587 = vlaneseq
    %v2588 = vshrl.u32 %v2587, 7
    %v2589 = vsub.s32 %v2586, %v2588
    %v2590 = vrot.slane %v2574, %v2589
    %v2592 = vunpack.c.l.s4 1966171168
    %v2593 = vunpack.c.0.s8 %v2592
    %v2594 = vlaneseq
    %v2595 = vshrl.u32 %v2594, 7
    %v2596 = vsub.s32 %v2593, %v2595
    %v2597 = vrot.slane %v2581, %v2596
    %v2599 = vunpack.c.l.s4 1966171168
    %v2600 = vunpack.c.0.s8 %v2599
    %v2601 = vlaneseq
    %v2602 = vshrl.u32 %v2601, 7
    %v2603 = vsub.s32 %v2600, %v2602
    %v2604 = vrot.slane %v2582, %v2603
    %v2606 = vunpack.c.l.s4 1966171168
    %v2607 = vunpack.c.0.s8 %v2606
    %v2608 = vlaneseq
    %v2609 = vshrl.u32 %v2608, 7
    %v2610 = vsub.s32 %v2607, %v2609
    %v2611 = vrot.slane %v2583, %v2610
    %v2612 = vcombine.high %v2590, %v2590
    %v2613 = vcombine.high %v2597, %v2597
    %v2614 = vcombine.high %v2604, %v2604
    %v2615 = vcombine.high %v2611, %v2611
    %v2616 = vcombine.high %v2376, %v2376
    %v2618 = vunpack.c.l.s4 1966171168
    %v2619 = vunpack.c.0.s8 %v2618
    %v2620 = vlaneseq
    %v2621 = vshrl.u32 %v2620, 7
    %v2622 = vsub.s32 %v2619, %v2621
    %v2623 = vrot.slane %v2376, %v2622
    %v2625 = vunpack.c.l.s4 1966171168
    %v2626 = vunpack.c.0.s8 %v2625
    %v2627 = vlaneseq
    %v2628 = vshrl.u32 %v2627, 7
    %v2629 = vsub.s32 %v2626, %v2628
    %v2630 = vrot.slane %v2616, %v2629
    %v2631 = vcombine.high %v2623, %v2623
    %v2632 = vcombine.high %v2630, %v2630
    %v2634 = vunpack.c.l.s4 1966171168
    %v2635 = vunpack.c.0.s8 %v2634
    %v2636 = vlaneseq
    %v2637 = vshrl.u32 %v2636, 7
    %v2638 = vsub.s32 %v2635, %v2637
    %v2639 = vrot.slane %v2623, %v2638
    %v2641 = vunpack.c.l.s4 1966171168
    %v2642 = vunpack.c.0.s8 %v2641
    %v2643 = vlaneseq
    %v2644 = vshrl.u32 %v2643, 7
    %v2645 = vsub.s32 %v2642, %v2644
    %v2646 = vrot.slane %v2630, %v2645
    %v2648 = vunpack.c.l.s4 1966171168
    %v2649 = vunpack.c.0.s8 %v2648
    %v2650 = vlaneseq
    %v2651 = vshrl.u32 %v2650, 7
    %v2652 = vsub.s32 %v2649, %v2651
    %v2653 = vrot.slane %v2631, %v2652
    %v2655 = vunpack.c.l.s4 1966171168
    %v2656 = vunpack.c.0.s8 %v2655
    %v2657 = vlaneseq
    %v2658 = vshrl.u32 %v2657, 7
    %v2659 = vsub.s32 %v2656, %v2658
    %v2660 = vrot.slane %v2632, %v2659
    %v2661 = vcombine.high %v2639, %v2639
    %v2662 = vcombine.high %v2646, %v2646
    %v2663 = vcombine.high %v2653, %v2653
    %v2664 = vcombine.high %v2660, %v2660
    %v2665 = vlaneseq
    %v2666 = vshrl.u32 %v2665, 7
    %v2667 = vsub.s32 0, %v2666
    %v2668 = vrot.slane %v2492, %v2667
    %v2669 = vlaneseq
    %v2670 = vshrl.u32 %v2669, 7
    %v2671 = vsub.s32 0, %v2670
    %v2672 = vrot.slane %v2506, %v2671
    %v2673 = vlaneseq
    %v2674 = vshrl.u32 %v2673, 7
    %v2675 = vsub.s32 0, %v2674
    %v2676 = vrot.slane %v2514, %v2675
    %v2677 = vlaneseq
    %v2678 = vshrl.u32 %v2677, 7
    %v2679 = vsub.s32 0, %v2678
    %v2680 = vrot.slane %v2516, %v2679
    %v2681 = vlaneseq
    %v2682 = vshrl.u32 %v2681, 7
    %v2683 = vsub.s32 0, %v2682
    %v2684 = vrot.slane %v2499, %v2683
    %v2685 = vlaneseq
    %v2686 = vshrl.u32 %v2685, 7
    %v2687 = vsub.s32 0, %v2686
    %v2688 = vrot.slane %v2513, %v2687
    %v2689 = vlaneseq
    %v2690 = vshrl.u32 %v2689, 7
    %v2691 = vsub.s32 0, %v2690
    %v2692 = vrot.slane %v2515, %v2691
    %v2693 = vlaneseq
    %v2694 = vshrl.u32 %v2693, 7
    %v2695 = vsub.s32 0, %v2694
    %v2696 = vrot.slane %v2517, %v2695
    %v2697 = vlaneseq
    %v2698 = vshrl.u32 %v2697, 7
    %v2699 = vsub.s32 0, %v2698
    %v2700 = vrot.slane %v2541, %v2699
    %v2701 = vlaneseq
    %v2702 = vshrl.u32 %v2701, 7
    %v2703 = vsub.s32 0, %v2702
    %v2704 = vrot.slane %v2555, %v2703
    %v2705 = vlaneseq
    %v2706 = vshrl.u32 %v2705, 7
    %v2707 = vsub.s32 0, %v2706
    %v2708 = vrot.slane %v2563, %v2707
    %v2709 = vlaneseq
    %v2710 = vshrl.u32 %v2709, 7
    %v2711 = vsub.s32 0, %v2710
    %v2712 = vrot.slane %v2565, %v2711
    %v2713 = vlaneseq
    %v2714 = vshrl.u32 %v2713, 7
    %v2715 = vsub.s32 0, %v2714
    %v2716 = vrot.slane %v2548, %v2715
    %v2717 = vlaneseq
    %v2718 = vshrl.u32 %v2717, 7
    %v2719 = vsub.s32 0, %v2718
    %v2720 = vrot.slane %v2562, %v2719
    %v2721 = vlaneseq
    %v2722 = vshrl.u32 %v2721, 7
    %v2723 = vsub.s32 0, %v2722
    %v2724 = vrot.slane %v2564, %v2723
    %v2725 = vlaneseq
    %v2726 = vshrl.u32 %v2725, 7
    %v2727 = vsub.s32 0, %v2726
    %v2728 = vrot.slane %v2566, %v2727
    %v2729 = vlaneseq
    %v2730 = vshrl.u32 %v2729, 7
    %v2731 = vsub.s32 0, %v2730
    %v2732 = vrot.slane %v2590, %v2731
    %v2733 = vlaneseq
    %v2734 = vshrl.u32 %v2733, 7
    %v2735 = vsub.s32 0, %v2734
    %v2736 = vrot.slane %v2604, %v2735
    %v2737 = vlaneseq
    %v2738 = vshrl.u32 %v2737, 7
    %v2739 = vsub.s32 0, %v2738
    %v2740 = vrot.slane %v2612, %v2739
    %v2741 = vlaneseq
    %v2742 = vshrl.u32 %v2741, 7
    %v2743 = vsub.s32 0, %v2742
    %v2744 = vrot.slane %v2614, %v2743
    %v2745 = vlaneseq
    %v2746 = vshrl.u32 %v2745, 7
    %v2747 = vsub.s32 0, %v2746
    %v2748 = vrot.slane %v2597, %v2747
    %v2749 = vlaneseq
    %v2750 = vshrl.u32 %v2749, 7
    %v2751 = vsub.s32 0, %v2750
    %v2752 = vrot.slane %v2611, %v2751
    %v2753 = vlaneseq
    %v2754 = vshrl.u32 %v2753, 7
    %v2755 = vsub.s32 0, %v2754
    %v2756 = vrot.slane %v2613, %v2755
    %v2757 = vlaneseq
    %v2758 = vshrl.u32 %v2757, 7
    %v2759 = vsub.s32 0, %v2758
    %v2760 = vrot.slane %v2615, %v2759
    %v2761 = vlaneseq
    %v2762 = vshrl.u32 %v2761, 7
    %v2763 = vsub.s32 0, %v2762
    %v2764 = vrot.slane %v2639, %v2763
    %v2765 = vlaneseq
    %v2766 = vshrl.u32 %v2765, 7
    %v2767 = vsub.s32 0, %v2766
    %v2768 = vrot.slane %v2653, %v2767
    %v2769 = vlaneseq
    %v2770 = vshrl.u32 %v2769, 7
    %v2771 = vsub.s32 0, %v2770
    %v2772 = vrot.slane %v2661, %v2771
    %v2773 = vlaneseq
    %v2774 = vshrl.u32 %v2773, 7
    %v2775 = vsub.s32 0, %v2774
    %v2776 = vrot.slane %v2663, %v2775
    %v2777 = vlaneseq
    %v2778 = vshrl.u32 %v2777, 7
    %v2779 = vsub.s32 0, %v2778
    %v2780 = vrot.slane %v2646, %v2779
    %v2781 = vlaneseq
    %v2782 = vshrl.u32 %v2781, 7
    %v2783 = vsub.s32 0, %v2782
    %v2784 = vrot.slane %v2660, %v2783
    %v2785 = vlaneseq
    %v2786 = vshrl.u32 %v2785, 7
    %v2787 = vsub.s32 0, %v2786
    %v2788 = vrot.slane %v2662, %v2787
    %v2789 = vlaneseq
    %v2790 = vshrl.u32 %v2789, 7
    %v2791 = vsub.s32 0, %v2790
    %v2792 = vrot.slane %v2664, %v2791
    %v2825 = vadd.f32 %v2668, %v2447
    %v2826 = vadd.f32 %v2668, %v2452
    %v2827 = vadd.f32 %v2668, %v2457
    %v2828 = vadd.f32 %v2668, %v2462
    %v2829 = vadd.f32 %v2672, %v2447
    %v2830 = vadd.f32 %v2672, %v2452
    %v2831 = vadd.f32 %v2672, %v2457
    %v2832 = vadd.f32 %v2672, %v2462
    %v2833 = vadd.f32 %v2676, %v2447
    %v2834 = vadd.f32 %v2676, %v2452
    %v2835 = vadd.f32 %v2676, %v2457
    %v2836 = vadd.f32 %v2676, %v2462
    %v2837 = vadd.f32 %v2680, %v2447
    %v2838 = vadd.f32 %v2680, %v2452
    %v2839 = vadd.f32 %v2680, %v2457
    %v2840 = vadd.f32 %v2680, %v2462
    %v2841 = vadd.f32 %v2684, %v2447
    %v2842 = vadd.f32 %v2684, %v2452
    %v2843 = vadd.f32 %v2684, %v2457
    %v2844 = vadd.f32 %v2684, %v2462
    %v2845 = vadd.f32 %v2688, %v2447
    %v2846 = vadd.f32 %v2688, %v2452
    %v2847 = vadd.f32 %v2688, %v2457
    %v2848 = vadd.f32 %v2688, %v2462
    %v2849 = vadd.f32 %v2692, %v2447
    %v2850 = vadd.f32 %v2692, %v2452
    %v2851 = vadd.f32 %v2692, %v2457
    %v2852 = vadd.f32 %v2692, %v2462
    %v2853 = vadd.f32 %v2696, %v2447
    %v2854 = vadd.f32 %v2696, %v2452
    %v2855 = vadd.f32 %v2696, %v2457
    %v2856 = vadd.f32 %v2696, %v2462
    %v2857 = vadd.f32 %v2700, %v2447
    %v2858 = vadd.f32 %v2700, %v2452
    %v2859 = vadd.f32 %v2700, %v2457
    %v2860 = vadd.f32 %v2700, %v2462
    %v2861 = vadd.f32 %v2704, %v2447
    %v2862 = vadd.f32 %v2704, %v2452
    %v2863 = vadd.f32 %v2704, %v2457
    %v2864 = vadd.f32 %v2704, %v2462
    %v2865 = vadd.f32 %v2708, %v2447
    %v2866 = vadd.f32 %v2708, %v2452
    %v2867 = vadd.f32 %v2708, %v2457
    %v2868 = vadd.f32 %v2708, %v2462
    %v2869 = vadd.f32 %v2712, %v2447
    %v2870 = vadd.f32 %v2712, %v2452
    %v2871 = vadd.f32 %v2712, %v2457
    %v2872 = vadd.f32 %v2712, %v2462
    %v2873 = vadd.f32 %v2716, %v2447
    %v2874 = vadd.f32 %v2716, %v2452
    %v2875 = vadd.f32 %v2716, %v2457
    %v2876 = vadd.f32 %v2716, %v2462
    %v2877 = vadd.f32 %v2720, %v2447
    %v2878 = vadd.f32 %v2720, %v2452
    %v2879 = vadd.f32 %v2720, %v2457
    %v2880 = vadd.f32 %v2720, %v2462
    %v2881 = vadd.f32 %v2724, %v2447
    %v2882 = vadd.f32 %v2724, %v2452
    %v2883 = vadd.f32 %v2724, %v2457
    %v2884 = vadd.f32 %v2724, %v2462
    %v2885 = vadd.f32 %v2728, %v2447
    %v2886 = vadd.f32 %v2728, %v2452
    %v2887 = vadd.f32 %v2728, %v2457
    %v2888 = vadd.f32 %v2728, %v2462
    %v2889 = vadd.f32 %v2732, %v2447
    %v2890 = vadd.f32 %v2732, %v2452
    %v2891 = vadd.f32 %v2732, %v2457
    %v2892 = vadd.f32 %v2732, %v2462
    %v2893 = vadd.f32 %v2736, %v2447
    %v2894 = vadd.f32 %v2736, %v2452
    %v2895 = vadd.f32 %v2736, %v2457
    %v2896 = vadd.f32 %v2736, %v2462
    %v2897 = vadd.f32 %v2740, %v2447
    %v2898 = vadd.f32 %v2740, %v2452
    %v2899 = vadd.f32 %v2740, %v2457
    %v2900 = vadd.f32 %v2740, %v2462
    %v2901 = vadd.f32 %v2744, %v2447
    %v2902 = vadd.f32 %v2744, %v2452
    %v2903 = vadd.f32 %v2744, %v2457
    %v2904 = vadd.f32 %v2744, %v2462
    %v2905 = vadd.f32 %v2748, %v2447
    %v2906 = vadd.f32 %v2748, %v2452
    %v2907 = vadd.f32 %v2748, %v2457
    %v2908 = vadd.f32 %v2748, %v2462
    %v2909 = vadd.f32 %v2752, %v2447
    %v2910 = vadd.f32 %v2752, %v2452
    %v2911 = vadd.f32 %v2752, %v2457
    %v2912 = vadd.f32 %v2752, %v2462
    %v2913 = vadd.f32 %v2756, %v2447
    %v2914 = vadd.f32 %v2756, %v2452
    %v2915 = vadd.f32 %v2756, %v2457
    %v2916 = vadd.f32 %v2756, %v2462
    %v2917 = vadd.f32 %v2760, %v2447
    %v2918 = vadd.f32 %v2760, %v2452
    %v2919 = vadd.f32 %v2760, %v2457
    %v2920 = vadd.f32 %v2760, %v2462
    %v2921 = vadd.f32 %v2764, %v2447
    %v2922 = vadd.f32 %v2764, %v2452
    %v2923 = vadd.f32 %v2764, %v2457
    %v2924 = vadd.f32 %v2764, %v2462
    %v2925 = vadd.f32 %v2768, %v2447
    %v2926 = vadd.f32 %v2768, %v2452
    %v2927 = vadd.f32 %v2768, %v2457
    %v2928 = vadd.f32 %v2768, %v2462
    %v2929 = vadd.f32 %v2772, %v2447
    %v2930 = vadd.f32 %v2772, %v2452
    %v2931 = vadd.f32 %v2772, %v2457
    %v2932 = vadd.f32 %v2772, %v2462
    %v2933 = vadd.f32 %v2776, %v2447
    %v2934 = vadd.f32 %v2776, %v2452
    %v2935 = vadd.f32 %v2776, %v2457
    %v2936 = vadd.f32 %v2776, %v2462
    %v2937 = vadd.f32 %v2780, %v2447
    %v2938 = vadd.f32 %v2780, %v2452
    %v2939 = vadd.f32 %v2780, %v2457
    %v2940 = vadd.f32 %v2780, %v2462
    %v2941 = vadd.f32 %v2784, %v2447
    %v2942 = vadd.f32 %v2784, %v2452
    %v2943 = vadd.f32 %v2784, %v2457
    %v2944 = vadd.f32 %v2784, %v2462
    %v2945 = vadd.f32 %v2788, %v2447
    %v2946 = vadd.f32 %v2788, %v2452
    %v2947 = vadd.f32 %v2788, %v2457
    %v2948 = vadd.f32 %v2788, %v2462
    %v2949 = vadd.f32 %v2792, %v2447
    %v2950 = vadd.f32 %v2792, %v2452
    %v2951 = vadd.f32 %v2792, %v2457
    %v2952 = vadd.f32 %v2792, %v2462
    %v2954 = vlaneseq
    %v2955 = vshrl.u32 %v2954, 7
    %v2956 = vsub.s32 0, %v2955
    %v2957 = vrot.slane %v2157, %v2956
    %v2959 = vmul.f32 %v1265, %v2957
    %v2960 = vmul.f32 %v1269, %v2957
    %v2961 = vmul.f32 %v1273, %v2957
    %v2962 = vmul.f32 %v1277, %v2957
    %v2963 = vmul.f32 %v1284, %v2957
    %v2964 = vmul.f32 %v1288, %v2957
    %v2965 = vmul.f32 %v1292, %v2957
    %v2966 = vmul.f32 %v1296, %v2957
    %v2967 = vmul.f32 %v1303, %v2957
    %v2968 = vmul.f32 %v1307, %v2957
    %v2969 = vmul.f32 %v1311, %v2957
    %v2970 = vmul.f32 %v1315, %v2957
    %v2971 = vmul.f32 %v1322, %v2957
    %v2972 = vmul.f32 %v1326, %v2957
    %v2973 = vmul.f32 %v1330, %v2957
    %v2974 = vmul.f32 %v1334, %v2957
    %v2975 = vmul.f32 %v1341, %v2957
    %v2976 = vmul.f32 %v1345, %v2957
    %v2977 = vmul.f32 %v1349, %v2957
    %v2978 = vmul.f32 %v1353, %v2957
    %v2979 = vmul.f32 %v1360, %v2957
    %v2980 = vmul.f32 %v1364, %v2957
    %v2981 = vmul.f32 %v1368, %v2957
    %v2982 = vmul.f32 %v1372, %v2957
    %v2983 = vmul.f32 %v1379, %v2957
    %v2984 = vmul.f32 %v1383, %v2957
    %v2985 = vmul.f32 %v1387, %v2957
    %v2986 = vmul.f32 %v1391, %v2957
    %v2987 = vmul.f32 %v1398, %v2957
    %v2988 = vmul.f32 %v1402, %v2957
    %v2989 = vmul.f32 %v1406, %v2957
    %v2990 = vmul.f32 %v1410, %v2957
    %v2991 = vmul.f32 %v1417, %v2957
    %v2992 = vmul.f32 %v1421, %v2957
    %v2993 = vmul.f32 %v1425, %v2957
    %v2994 = vmul.f32 %v1429, %v2957
    %v2995 = vmul.f32 %v1436, %v2957
    %v2996 = vmul.f32 %v1440, %v2957
    %v2997 = vmul.f32 %v1444, %v2957
    %v2998 = vmul.f32 %v1448, %v2957
    %v2999 = vmul.f32 %v1455, %v2957
    %v3000 = vmul.f32 %v1459, %v2957
    %v3001 = vmul.f32 %v1463, %v2957
    %v3002 = vmul.f32 %v1467, %v2957
    %v3003 = vmul.f32 %v1474, %v2957
    %v3004 = vmul.f32 %v1478, %v2957
    %v3005 = vmul.f32 %v1482, %v2957
    %v3006 = vmul.f32 %v1486, %v2957
    %v3007 = vmul.f32 %v1493, %v2957
    %v3008 = vmul.f32 %v1497, %v2957
    %v3009 = vmul.f32 %v1501, %v2957
    %v3010 = vmul.f32 %v1505, %v2957
    %v3011 = vmul.f32 %v1512, %v2957
    %v3012 = vmul.f32 %v1516, %v2957
    %v3013 = vmul.f32 %v1520, %v2957
    %v3014 = vmul.f32 %v1524, %v2957
    %v3015 = vmul.f32 %v1531, %v2957
    %v3016 = vmul.f32 %v1535, %v2957
    %v3017 = vmul.f32 %v1539, %v2957
    %v3018 = vmul.f32 %v1543, %v2957
    %v3019 = vmul.f32 %v1550, %v2957
    %v3020 = vmul.f32 %v1554, %v2957
    %v3021 = vmul.f32 %v1558, %v2957
    %v3022 = vmul.f32 %v1562, %v2957
    %v3023 = vmul.f32 %v1569, %v2957
    %v3024 = vmul.f32 %v1573, %v2957
    %v3025 = vmul.f32 %v1577, %v2957
    %v3026 = vmul.f32 %v1581, %v2957
    %v3027 = vmul.f32 %v1588, %v2957
    %v3028 = vmul.f32 %v1592, %v2957
    %v3029 = vmul.f32 %v1596, %v2957
    %v3030 = vmul.f32 %v1600, %v2957
    %v3031 = vmul.f32 %v1607, %v2957
    %v3032 = vmul.f32 %v1611, %v2957
    %v3033 = vmul.f32 %v1615, %v2957
    %v3034 = vmul.f32 %v1619, %v2957
    %v3035 = vmul.f32 %v1626, %v2957
    %v3036 = vmul.f32 %v1630, %v2957
    %v3037 = vmul.f32 %v1634, %v2957
    %v3038 = vmul.f32 %v1638, %v2957
    %v3039 = vmul.f32 %v1645, %v2957
    %v3040 = vmul.f32 %v1649, %v2957
    %v3041 = vmul.f32 %v1653, %v2957
    %v3042 = vmul.f32 %v1657, %v2957
    %v3043 = vmul.f32 %v1664, %v2957
    %v3044 = vmul.f32 %v1668, %v2957
    %v3045 = vmul.f32 %v1672, %v2957
    %v3046 = vmul.f32 %v1676, %v2957
    %v3047 = vmul.f32 %v1683, %v2957
    %v3048 = vmul.f32 %v1687, %v2957
    %v3049 = vmul.f32 %v1691, %v2957
    %v3050 = vmul.f32 %v1695, %v2957
    %v3051 = vmul.f32 %v1702, %v2957
    %v3052 = vmul.f32 %v1706, %v2957
    %v3053 = vmul.f32 %v1710, %v2957
    %v3054 = vmul.f32 %v1714, %v2957
    %v3055 = vmul.f32 %v1721, %v2957
    %v3056 = vmul.f32 %v1725, %v2957
    %v3057 = vmul.f32 %v1729, %v2957
    %v3058 = vmul.f32 %v1733, %v2957
    %v3059 = vmul.f32 %v1740, %v2957
    %v3060 = vmul.f32 %v1744, %v2957
    %v3061 = vmul.f32 %v1748, %v2957
    %v3062 = vmul.f32 %v1752, %v2957
    %v3063 = vmul.f32 %v1759, %v2957
    %v3064 = vmul.f32 %v1763, %v2957
    %v3065 = vmul.f32 %v1767, %v2957
    %v3066 = vmul.f32 %v1771, %v2957
    %v3067 = vmul.f32 %v1778, %v2957
    %v3068 = vmul.f32 %v1782, %v2957
    %v3069 = vmul.f32 %v1786, %v2957
    %v3070 = vmul.f32 %v1790, %v2957
    %v3071 = vmul.f32 %v1797, %v2957
    %v3072 = vmul.f32 %v1801, %v2957
    %v3073 = vmul.f32 %v1805, %v2957
    %v3074 = vmul.f32 %v1809, %v2957
    %v3075 = vmul.f32 %v1816, %v2957
    %v3076 = vmul.f32 %v1820, %v2957
    %v3077 = vmul.f32 %v1824, %v2957
    %v3078 = vmul.f32 %v1828, %v2957
    %v3079 = vmul.f32 %v1835, %v2957
    %v3080 = vmul.f32 %v1839, %v2957
    %v3081 = vmul.f32 %v1843, %v2957
    %v3082 = vmul.f32 %v1847, %v2957
    %v3083 = vmul.f32 %v1854, %v2957
    %v3084 = vmul.f32 %v1858, %v2957
    %v3085 = vmul.f32 %v1862, %v2957
    %v3086 = vmul.f32 %v1866, %v2957
    %v3087 = vadd.f32 %v2825, %v2959
    %v3088 = vadd.f32 %v2826, %v2960
    %v3089 = vadd.f32 %v2827, %v2961
    %v3090 = vadd.f32 %v2828, %v2962
    %v3091 = vadd.f32 %v2829, %v2963
    %v3092 = vadd.f32 %v2830, %v2964
    %v3093 = vadd.f32 %v2831, %v2965
    %v3094 = vadd.f32 %v2832, %v2966
    %v3095 = vadd.f32 %v2833, %v2967
    %v3096 = vadd.f32 %v2834, %v2968
    %v3097 = vadd.f32 %v2835, %v2969
    %v3098 = vadd.f32 %v2836, %v2970
    %v3099 = vadd.f32 %v2837, %v2971
    %v3100 = vadd.f32 %v2838, %v2972
    %v3101 = vadd.f32 %v2839, %v2973
    %v3102 = vadd.f32 %v2840, %v2974
    %v3103 = vadd.f32 %v2841, %v2975
    %v3104 = vadd.f32 %v2842, %v2976
    %v3105 = vadd.f32 %v2843, %v2977
    %v3106 = vadd.f32 %v2844, %v2978
    %v3107 = vadd.f32 %v2845, %v2979
    %v3108 = vadd.f32 %v2846, %v2980
    %v3109 = vadd.f32 %v2847, %v2981
    %v3110 = vadd.f32 %v2848, %v2982
    %v3111 = vadd.f32 %v2849, %v2983
    %v3112 = vadd.f32 %v2850, %v2984
    %v3113 = vadd.f32 %v2851, %v2985
    %v3114 = vadd.f32 %v2852, %v2986
    %v3115 = vadd.f32 %v2853, %v2987
    %v3116 = vadd.f32 %v2854, %v2988
    %v3117 = vadd.f32 %v2855, %v2989
    %v3118 = vadd.f32 %v2856, %v2990
    %v3119 = vadd.f32 %v2857, %v2991
    %v3120 = vadd.f32 %v2858, %v2992
    %v3121 = vadd.f32 %v2859, %v2993
    %v3122 = vadd.f32 %v2860, %v2994
    %v3123 = vadd.f32 %v2861, %v2995
    %v3124 = vadd.f32 %v2862, %v2996
    %v3125 = vadd.f32 %v2863, %v2997
    %v3126 = vadd.f32 %v2864, %v2998
    %v3127 = vadd.f32 %v2865, %v2999
    %v3128 = vadd.f32 %v2866, %v3000
    %v3129 = vadd.f32 %v2867, %v3001
    %v3130 = vadd.f32 %v2868, %v3002
    %v3131 = vadd.f32 %v2869, %v3003
    %v3132 = vadd.f32 %v2870, %v3004
    %v3133 = vadd.f32 %v2871, %v3005
    %v3134 = vadd.f32 %v2872, %v3006
    %v3135 = vadd.f32 %v2873, %v3007
    %v3136 = vadd.f32 %v2874, %v3008
    %v3137 = vadd.f32 %v2875, %v3009
    %v3138 = vadd.f32 %v2876, %v3010
    %v3139 = vadd.f32 %v2877, %v3011
    %v3140 = vadd.f32 %v2878, %v3012
    %v3141 = vadd.f32 %v2879, %v3013
    %v3142 = vadd.f32 %v2880, %v3014
    %v3143 = vadd.f32 %v2881, %v3015
    %v3144 = vadd.f32 %v2882, %v3016
    %v3145 = vadd.f32 %v2883, %v3017
    %v3146 = vadd.f32 %v2884, %v3018
    %v3147 = vadd.f32 %v2885, %v3019
    %v3148 = vadd.f32 %v2886, %v3020
    %v3149 = vadd.f32 %v2887, %v3021
    %v3150 = vadd.f32 %v2888, %v3022
    %v3151 = vadd.f32 %v2889, %v3023
    %v3152 = vadd.f32 %v2890, %v3024
    %v3153 = vadd.f32 %v2891, %v3025
    %v3154 = vadd.f32 %v2892, %v3026
    %v3155 = vadd.f32 %v2893, %v3027
    %v3156 = vadd.f32 %v2894, %v3028
    %v3157 = vadd.f32 %v2895, %v3029
    %v3158 = vadd.f32 %v2896, %v3030
    %v3159 = vadd.f32 %v2897, %v3031
    %v3160 = vadd.f32 %v2898, %v3032
    %v3161 = vadd.f32 %v2899, %v3033
    %v3162 = vadd.f32 %v2900, %v3034
    %v3163 = vadd.f32 %v2901, %v3035
    %v3164 = vadd.f32 %v2902, %v3036
    %v3165 = vadd.f32 %v2903, %v3037
    %v3166 = vadd.f32 %v2904, %v3038
    %v3167 = vadd.f32 %v2905, %v3039
    %v3168 = vadd.f32 %v2906, %v3040
    %v3169 = vadd.f32 %v2907, %v3041
    %v3170 = vadd.f32 %v2908, %v3042
    %v3171 = vadd.f32 %v2909, %v3043
    %v3172 = vadd.f32 %v2910, %v3044
    %v3173 = vadd.f32 %v2911, %v3045
    %v3174 = vadd.f32 %v2912, %v3046
    %v3175 = vadd.f32 %v2913, %v3047
    %v3176 = vadd.f32 %v2914, %v3048
    %v3177 = vadd.f32 %v2915, %v3049
    %v3178 = vadd.f32 %v2916, %v3050
    %v3179 = vadd.f32 %v2917, %v3051
    %v3180 = vadd.f32 %v2918, %v3052
    %v3181 = vadd.f32 %v2919, %v3053
    %v3182 = vadd.f32 %v2920, %v3054
    %v3183 = vadd.f32 %v2921, %v3055
    %v3184 = vadd.f32 %v2922, %v3056
    %v3185 = vadd.f32 %v2923, %v3057
    %v3186 = vadd.f32 %v2924, %v3058
    %v3187 = vadd.f32 %v2925, %v3059
    %v3188 = vadd.f32 %v2926, %v3060
    %v3189 = vadd.f32 %v2927, %v3061
    %v3190 = vadd.f32 %v2928, %v3062
    %v3191 = vadd.f32 %v2929, %v3063
    %v3192 = vadd.f32 %v2930, %v3064
    %v3193 = vadd.f32 %v2931, %v3065
    %v3194 = vadd.f32 %v2932, %v3066
    %v3195 = vadd.f32 %v2933, %v3067
    %v3196 = vadd.f32 %v2934, %v3068
    %v3197 = vadd.f32 %v2935, %v3069
    %v3198 = vadd.f32 %v2936, %v3070
    %v3199 = vadd.f32 %v2937, %v3071
    %v3200 = vadd.f32 %v2938, %v3072
    %v3201 = vadd.f32 %v2939, %v3073
    %v3202 = vadd.f32 %v2940, %v3074
    %v3203 = vadd.f32 %v2941, %v3075
    %v3204 = vadd.f32 %v2942, %v3076
    %v3205 = vadd.f32 %v2943, %v3077
    %v3206 = vadd.f32 %v2944, %v3078
    %v3207 = vadd.f32 %v2945, %v3079
    %v3208 = vadd.f32 %v2946, %v3080
    %v3209 = vadd.f32 %v2947, %v3081
    %v3210 = vadd.f32 %v2948, %v3082
    %v3211 = vadd.f32 %v2949, %v3083
    %v3212 = vadd.f32 %v2950, %v3084
    %v3213 = vadd.f32 %v2951, %v3085
    %v3214 = vadd.f32 %v2952, %v3086
    %v3215 = vxor.u32 %v3087, 2147483648
    %v3216 = vxor.u32 %v3088, 2147483648
    %v3217 = vxor.u32 %v3089, 2147483648
    %v3218 = vxor.u32 %v3090, 2147483648
    %v3219 = vxor.u32 %v3091, 2147483648
    %v3220 = vxor.u32 %v3092, 2147483648
    %v3221 = vxor.u32 %v3093, 2147483648
    %v3222 = vxor.u32 %v3094, 2147483648
    %v3223 = vxor.u32 %v3095, 2147483648
    %v3224 = vxor.u32 %v3096, 2147483648
    %v3225 = vxor.u32 %v3097, 2147483648
    %v3226 = vxor.u32 %v3098, 2147483648
    %v3227 = vxor.u32 %v3099, 2147483648
    %v3228 = vxor.u32 %v3100, 2147483648
    %v3229 = vxor.u32 %v3101, 2147483648
    %v3230 = vxor.u32 %v3102, 2147483648
    %v3231 = vxor.u32 %v3103, 2147483648
    %v3232 = vxor.u32 %v3104, 2147483648
    %v3233 = vxor.u32 %v3105, 2147483648
    %v3234 = vxor.u32 %v3106, 2147483648
    %v3235 = vxor.u32 %v3107, 2147483648
    %v3236 = vxor.u32 %v3108, 2147483648
    %v3237 = vxor.u32 %v3109, 2147483648
    %v3238 = vxor.u32 %v3110, 2147483648
    %v3239 = vxor.u32 %v3111, 2147483648
    %v3240 = vxor.u32 %v3112, 2147483648
    %v3241 = vxor.u32 %v3113, 2147483648
    %v3242 = vxor.u32 %v3114, 2147483648
    %v3243 = vxor.u32 %v3115, 2147483648
    %v3244 = vxor.u32 %v3116, 2147483648
    %v3245 = vxor.u32 %v3117, 2147483648
    %v3246 = vxor.u32 %v3118, 2147483648
    %v3247 = vxor.u32 %v3119, 2147483648
    %v3248 = vxor.u32 %v3120, 2147483648
    %v3249 = vxor.u32 %v3121, 2147483648
    %v3250 = vxor.u32 %v3122, 2147483648
    %v3251 = vxor.u32 %v3123, 2147483648
    %v3252 = vxor.u32 %v3124, 2147483648
    %v3253 = vxor.u32 %v3125, 2147483648
    %v3254 = vxor.u32 %v3126, 2147483648
    %v3255 = vxor.u32 %v3127, 2147483648
    %v3256 = vxor.u32 %v3128, 2147483648
    %v3257 = vxor.u32 %v3129, 2147483648
    %v3258 = vxor.u32 %v3130, 2147483648
    %v3259 = vxor.u32 %v3131, 2147483648
    %v3260 = vxor.u32 %v3132, 2147483648
    %v3261 = vxor.u32 %v3133, 2147483648
    %v3262 = vxor.u32 %v3134, 2147483648
    %v3263 = vxor.u32 %v3135, 2147483648
    %v3264 = vxor.u32 %v3136, 2147483648
    %v3265 = vxor.u32 %v3137, 2147483648
    %v3266 = vxor.u32 %v3138, 2147483648
    %v3267 = vxor.u32 %v3139, 2147483648
    %v3268 = vxor.u32 %v3140, 2147483648
    %v3269 = vxor.u32 %v3141, 2147483648
    %v3270 = vxor.u32 %v3142, 2147483648
    %v3271 = vxor.u32 %v3143, 2147483648
    %v3272 = vxor.u32 %v3144, 2147483648
    %v3273 = vxor.u32 %v3145, 2147483648
    %v3274 = vxor.u32 %v3146, 2147483648
    %v3275 = vxor.u32 %v3147, 2147483648
    %v3276 = vxor.u32 %v3148, 2147483648
    %v3277 = vxor.u32 %v3149, 2147483648
    %v3278 = vxor.u32 %v3150, 2147483648
    %v3279 = vxor.u32 %v3151, 2147483648
    %v3280 = vxor.u32 %v3152, 2147483648
    %v3281 = vxor.u32 %v3153, 2147483648
    %v3282 = vxor.u32 %v3154, 2147483648
    %v3283 = vxor.u32 %v3155, 2147483648
    %v3284 = vxor.u32 %v3156, 2147483648
    %v3285 = vxor.u32 %v3157, 2147483648
    %v3286 = vxor.u32 %v3158, 2147483648
    %v3287 = vxor.u32 %v3159, 2147483648
    %v3288 = vxor.u32 %v3160, 2147483648
    %v3289 = vxor.u32 %v3161, 2147483648
    %v3290 = vxor.u32 %v3162, 2147483648
    %v3291 = vxor.u32 %v3163, 2147483648
    %v3292 = vxor.u32 %v3164, 2147483648
    %v3293 = vxor.u32 %v3165, 2147483648
    %v3294 = vxor.u32 %v3166, 2147483648
    %v3295 = vxor.u32 %v3167, 2147483648
    %v3296 = vxor.u32 %v3168, 2147483648
    %v3297 = vxor.u32 %v3169, 2147483648
    %v3298 = vxor.u32 %v3170, 2147483648
    %v3299 = vxor.u32 %v3171, 2147483648
    %v3300 = vxor.u32 %v3172, 2147483648
    %v3301 = vxor.u32 %v3173, 2147483648
    %v3302 = vxor.u32 %v3174, 2147483648
    %v3303 = vxor.u32 %v3175, 2147483648
    %v3304 = vxor.u32 %v3176, 2147483648
    %v3305 = vxor.u32 %v3177, 2147483648
    %v3306 = vxor.u32 %v3178, 2147483648
    %v3307 = vxor.u32 %v3179, 2147483648
    %v3308 = vxor.u32 %v3180, 2147483648
    %v3309 = vxor.u32 %v3181, 2147483648
    %v3310 = vxor.u32 %v3182, 2147483648
    %v3311 = vxor.u32 %v3183, 2147483648
    %v3312 = vxor.u32 %v3184, 2147483648
    %v3313 = vxor.u32 %v3185, 2147483648
    %v3314 = vxor.u32 %v3186, 2147483648
    %v3315 = vxor.u32 %v3187, 2147483648
    %v3316 = vxor.u32 %v3188, 2147483648
    %v3317 = vxor.u32 %v3189, 2147483648
    %v3318 = vxor.u32 %v3190, 2147483648
    %v3319 = vxor.u32 %v3191, 2147483648
    %v3320 = vxor.u32 %v3192, 2147483648
    %v3321 = vxor.u32 %v3193, 2147483648
    %v3322 = vxor.u32 %v3194, 2147483648
    %v3323 = vxor.u32 %v3195, 2147483648
    %v3324 = vxor.u32 %v3196, 2147483648
    %v3325 = vxor.u32 %v3197, 2147483648
    %v3326 = vxor.u32 %v3198, 2147483648
    %v3327 = vxor.u32 %v3199, 2147483648
    %v3328 = vxor.u32 %v3200, 2147483648
    %v3329 = vxor.u32 %v3201, 2147483648
    %v3330 = vxor.u32 %v3202, 2147483648
    %v3331 = vxor.u32 %v3203, 2147483648
    %v3332 = vxor.u32 %v3204, 2147483648
    %v3333 = vxor.u32 %v3205, 2147483648
    %v3334 = vxor.u32 %v3206, 2147483648
    %v3335 = vxor.u32 %v3207, 2147483648
    %v3336 = vxor.u32 %v3208, 2147483648
    %v3337 = vxor.u32 %v3209, 2147483648
    %v3338 = vxor.u32 %v3210, 2147483648
    %v3339 = vxor.u32 %v3211, 2147483648
    %v3340 = vxor.u32 %v3212, 2147483648
    %v3341 = vxor.u32 %v3213, 2147483648
    %v3342 = vxor.u32 %v3214, 2147483648
    %v3343 = vmul.f32 %v3215, 1.442695
    %v3344 = vpow.pop %v3343
    %v3345 = vmul.f32 %v3216, 1.442695
    %v3346 = vpow.pop %v3345
    %v3347 = vmul.f32 %v3217, 1.442695
    %v3348 = vpow.pop %v3347
    %v3349 = vmul.f32 %v3218, 1.442695
    %v3350 = vpow.pop %v3349
    %v3351 = vmul.f32 %v3219, 1.442695
    %v3352 = vpow.pop %v3351
    %v3353 = vmul.f32 %v3220, 1.442695
    %v3354 = vpow.pop %v3353
    %v3355 = vmul.f32 %v3221, 1.442695
    %v3356 = vpow.pop %v3355
    %v3357 = vmul.f32 %v3222, 1.442695
    %v3358 = vpow.pop %v3357
    %v3359 = vmul.f32 %v3223, 1.442695
    %v3360 = vpow.pop %v3359
    %v3361 = vmul.f32 %v3224, 1.442695
    %v3362 = vpow.pop %v3361
    %v3363 = vmul.f32 %v3225, 1.442695
    %v3364 = vpow.pop %v3363
    %v3365 = vmul.f32 %v3226, 1.442695
    %v3366 = vpow.pop %v3365
    %v3367 = vmul.f32 %v3227, 1.442695
    %v3368 = vpow.pop %v3367
    %v3369 = vmul.f32 %v3228, 1.442695
    %v3370 = vpow.pop %v3369
    %v3371 = vmul.f32 %v3229, 1.442695
    %v3372 = vpow.pop %v3371
    %v3373 = vmul.f32 %v3230, 1.442695
    %v3374 = vpow.pop %v3373
    %v3375 = vmul.f32 %v3231, 1.442695
    %v3376 = vpow.pop %v3375
    %v3377 = vmul.f32 %v3232, 1.442695
    %v3378 = vpow.pop %v3377
    %v3379 = vmul.f32 %v3233, 1.442695
    %v3380 = vpow.pop %v3379
    %v3381 = vmul.f32 %v3234, 1.442695
    %v3382 = vpow.pop %v3381
    %v3383 = vmul.f32 %v3235, 1.442695
    %v3384 = vpow.pop %v3383
    %v3385 = vmul.f32 %v3236, 1.442695
    %v3386 = vpow.pop %v3385
    %v3387 = vmul.f32 %v3237, 1.442695
    %v3388 = vpow.pop %v3387
    %v3389 = vmul.f32 %v3238, 1.442695
    %v3390 = vpow.pop %v3389
    %v3391 = vmul.f32 %v3239, 1.442695
    %v3392 = vpow.pop %v3391
    %v3393 = vmul.f32 %v3240, 1.442695
    %v3394 = vpow.pop %v3393
    %v3395 = vmul.f32 %v3241, 1.442695
    %v3396 = vpow.pop %v3395
    %v3397 = vmul.f32 %v3242, 1.442695
    %v3398 = vpow.pop %v3397
    %v3399 = vmul.f32 %v3243, 1.442695
    %v3400 = vpow.pop %v3399
    %v3401 = vmul.f32 %v3244, 1.442695
    %v3402 = vpow.pop %v3401
    %v3403 = vmul.f32 %v3245, 1.442695
    %v3404 = vpow.pop %v3403
    %v3405 = vmul.f32 %v3246, 1.442695
    %v3406 = vpow.pop %v3405
    %v3407 = vmul.f32 %v3247, 1.442695
    %v3408 = vpow.pop %v3407
    %v3409 = vmul.f32 %v3248, 1.442695
    %v3410 = vpow.pop %v3409
    %v3411 = vmul.f32 %v3249, 1.442695
    %v3412 = vpow.pop %v3411
    %v3413 = vmul.f32 %v3250, 1.442695
    %v3414 = vpow.pop %v3413
    %v3415 = vmul.f32 %v3251, 1.442695
    %v3416 = vpow.pop %v3415
    %v3417 = vmul.f32 %v3252, 1.442695
    %v3418 = vpow.pop %v3417
    %v3419 = vmul.f32 %v3253, 1.442695
    %v3420 = vpow.pop %v3419
    %v3421 = vmul.f32 %v3254, 1.442695
    %v3422 = vpow.pop %v3421
    %v3423 = vmul.f32 %v3255, 1.442695
    %v3424 = vpow.pop %v3423
    %v3425 = vmul.f32 %v3256, 1.442695
    %v3426 = vpow.pop %v3425
    %v3427 = vmul.f32 %v3257, 1.442695
    %v3428 = vpow.pop %v3427
    %v3429 = vmul.f32 %v3258, 1.442695
    %v3430 = vpow.pop %v3429
    %v3431 = vmul.f32 %v3259, 1.442695
    %v3432 = vpow.pop %v3431
    %v3433 = vmul.f32 %v3260, 1.442695
    %v3434 = vpow.pop %v3433
    %v3435 = vmul.f32 %v3261, 1.442695
    %v3436 = vpow.pop %v3435
    %v3437 = vmul.f32 %v3262, 1.442695
    %v3438 = vpow.pop %v3437
    %v3439 = vmul.f32 %v3263, 1.442695
    %v3440 = vpow.pop %v3439
    %v3441 = vmul.f32 %v3264, 1.442695
    %v3442 = vpow.pop %v3441
    %v3443 = vmul.f32 %v3265, 1.442695
    %v3444 = vpow.pop %v3443
    %v3445 = vmul.f32 %v3266, 1.442695
    %v3446 = vpow.pop %v3445
    %v3447 = vmul.f32 %v3267, 1.442695
    %v3448 = vpow.pop %v3447
    %v3449 = vmul.f32 %v3268, 1.442695
    %v3450 = vpow.pop %v3449
    %v3451 = vmul.f32 %v3269, 1.442695
    %v3452 = vpow.pop %v3451
    %v3453 = vmul.f32 %v3270, 1.442695
    %v3454 = vpow.pop %v3453
    %v3455 = vmul.f32 %v3271, 1.442695
    %v3456 = vpow.pop %v3455
    %v3457 = vmul.f32 %v3272, 1.442695
    %v3458 = vpow.pop %v3457
    %v3459 = vmul.f32 %v3273, 1.442695
    %v3460 = vpow.pop %v3459
    %v3461 = vmul.f32 %v3274, 1.442695
    %v3462 = vpow.pop %v3461
    %v3463 = vmul.f32 %v3275, 1.442695
    %v3464 = vpow.pop %v3463
    %v3465 = vmul.f32 %v3276, 1.442695
    %v3466 = vpow.pop %v3465
    %v3467 = vmul.f32 %v3277, 1.442695
    %v3468 = vpow.pop %v3467
    %v3469 = vmul.f32 %v3278, 1.442695
    %v3470 = vpow.pop %v3469
    %v3471 = vmul.f32 %v3279, 1.442695
    %v3472 = vpow.pop %v3471
    %v3473 = vmul.f32 %v3280, 1.442695
    %v3474 = vpow.pop %v3473
    %v3475 = vmul.f32 %v3281, 1.442695
    %v3476 = vpow.pop %v3475
    %v3477 = vmul.f32 %v3282, 1.442695
    %v3478 = vpow.pop %v3477
    %v3479 = vmul.f32 %v3283, 1.442695
    %v3480 = vpow.pop %v3479
    %v3481 = vmul.f32 %v3284, 1.442695
    %v3482 = vpow.pop %v3481
    %v3483 = vmul.f32 %v3285, 1.442695
    %v3484 = vpow.pop %v3483
    %v3485 = vmul.f32 %v3286, 1.442695
    %v3486 = vpow.pop %v3485
    %v3487 = vmul.f32 %v3287, 1.442695
    %v3488 = vpow.pop %v3487
    %v3489 = vmul.f32 %v3288, 1.442695
    %v3490 = vpow.pop %v3489
    %v3491 = vmul.f32 %v3289, 1.442695
    %v3492 = vpow.pop %v3491
    %v3493 = vmul.f32 %v3290, 1.442695
    %v3494 = vpow.pop %v3493
    %v3495 = vmul.f32 %v3291, 1.442695
    %v3496 = vpow.pop %v3495
    %v3497 = vmul.f32 %v3292, 1.442695
    %v3498 = vpow.pop %v3497
    %v3499 = vmul.f32 %v3293, 1.442695
    %v3500 = vpow.pop %v3499
    %v3501 = vmul.f32 %v3294, 1.442695
    %v3502 = vpow.pop %v3501
    %v3503 = vmul.f32 %v3295, 1.442695
    %v3504 = vpow.pop %v3503
    %v3505 = vmul.f32 %v3296, 1.442695
    %v3506 = vpow.pop %v3505
    %v3507 = vmul.f32 %v3297, 1.442695
    %v3508 = vpow.pop %v3507
    %v3509 = vmul.f32 %v3298, 1.442695
    %v3510 = vpow.pop %v3509
    %v3511 = vmul.f32 %v3299, 1.442695
    %v3512 = vpow.pop %v3511
    %v3513 = vmul.f32 %v3300, 1.442695
    %v3514 = vpow.pop %v3513
    %v3515 = vmul.f32 %v3301, 1.442695
    %v3516 = vpow.pop %v3515
    %v3517 = vmul.f32 %v3302, 1.442695
    %v3518 = vpow.pop %v3517
    %v3519 = vmul.f32 %v3303, 1.442695
    %v3520 = vpow.pop %v3519
    %v3521 = vmul.f32 %v3304, 1.442695
    %v3522 = vpow.pop %v3521
    %v3523 = vmul.f32 %v3305, 1.442695
    %v3524 = vpow.pop %v3523
    %v3525 = vmul.f32 %v3306, 1.442695
    %v3526 = vpow.pop %v3525
    %v3527 = vmul.f32 %v3307, 1.442695
    %v3528 = vpow.pop %v3527
    %v3529 = vmul.f32 %v3308, 1.442695
    %v3530 = vpow.pop %v3529
    %v3531 = vmul.f32 %v3309, 1.442695
    %v3532 = vpow.pop %v3531
    %v3533 = vmul.f32 %v3310, 1.442695
    %v3534 = vpow.pop %v3533
    %v3535 = vmul.f32 %v3311, 1.442695
    %v3536 = vpow.pop %v3535
    %v3537 = vmul.f32 %v3312, 1.442695
    %v3538 = vpow.pop %v3537
    %v3539 = vmul.f32 %v3313, 1.442695
    %v3540 = vpow.pop %v3539
    %v3541 = vmul.f32 %v3314, 1.442695
    %v3542 = vpow.pop %v3541
    %v3543 = vmul.f32 %v3315, 1.442695
    %v3544 = vpow.pop %v3543
    %v3545 = vmul.f32 %v3316, 1.442695
    %v3546 = vpow.pop %v3545
    %v3547 = vmul.f32 %v3317, 1.442695
    %v3548 = vpow.pop %v3547
    %v3549 = vmul.f32 %v3318, 1.442695
    %v3550 = vpow.pop %v3549
    %v3551 = vmul.f32 %v3319, 1.442695
    %v3552 = vpow.pop %v3551
    %v3553 = vmul.f32 %v3320, 1.442695
    %v3554 = vpow.pop %v3553
    %v3555 = vmul.f32 %v3321, 1.442695
    %v3556 = vpow.pop %v3555
    %v3557 = vmul.f32 %v3322, 1.442695
    %v3558 = vpow.pop %v3557
    %v3559 = vmul.f32 %v3323, 1.442695
    %v3560 = vpow.pop %v3559
    %v3561 = vmul.f32 %v3324, 1.442695
    %v3562 = vpow.pop %v3561
    %v3563 = vmul.f32 %v3325, 1.442695
    %v3564 = vpow.pop %v3563
    %v3565 = vmul.f32 %v3326, 1.442695
    %v3566 = vpow.pop %v3565
    %v3567 = vmul.f32 %v3327, 1.442695
    %v3568 = vpow.pop %v3567
    %v3569 = vmul.f32 %v3328, 1.442695
    %v3570 = vpow.pop %v3569
    %v3571 = vmul.f32 %v3329, 1.442695
    %v3572 = vpow.pop %v3571
    %v3573 = vmul.f32 %v3330, 1.442695
    %v3574 = vpow.pop %v3573
    %v3575 = vmul.f32 %v3331, 1.442695
    %v3576 = vpow.pop %v3575
    %v3577 = vmul.f32 %v3332, 1.442695
    %v3578 = vpow.pop %v3577
    %v3579 = vmul.f32 %v3333, 1.442695
    %v3580 = vpow.pop %v3579
    %v3581 = vmul.f32 %v3334, 1.442695
    %v3582 = vpow.pop %v3581
    %v3583 = vmul.f32 %v3335, 1.442695
    %v3584 = vpow.pop %v3583
    %v3585 = vmul.f32 %v3336, 1.442695
    %v3586 = vpow.pop %v3585
    %v3587 = vmul.f32 %v3337, 1.442695
    %v3588 = vpow.pop %v3587
    %v3589 = vmul.f32 %v3338, 1.442695
    %v3590 = vpow.pop %v3589
    %v3591 = vmul.f32 %v3339, 1.442695
    %v3592 = vpow.pop %v3591
    %v3593 = vmul.f32 %v3340, 1.442695
    %v3594 = vpow.pop %v3593
    %v3595 = vmul.f32 %v3341, 1.442695
    %v3596 = vpow.pop %v3595
    %v3597 = vmul.f32 %v3342, 1.442695
    %v3598 = vpow.pop %v3597
    %v3599 = vadd.f32 %v3344, 1.0
    %v3600 = vadd.f32 %v3346, 1.0
    %v3601 = vadd.f32 %v3348, 1.0
    %v3602 = vadd.f32 %v3350, 1.0
    %v3603 = vadd.f32 %v3352, 1.0
    %v3604 = vadd.f32 %v3354, 1.0
    %v3605 = vadd.f32 %v3356, 1.0
    %v3606 = vadd.f32 %v3358, 1.0
    %v3607 = vadd.f32 %v3360, 1.0
    %v3608 = vadd.f32 %v3362, 1.0
    %v3609 = vadd.f32 %v3364, 1.0
    %v3610 = vadd.f32 %v3366, 1.0
    %v3611 = vadd.f32 %v3368, 1.0
    %v3612 = vadd.f32 %v3370, 1.0
    %v3613 = vadd.f32 %v3372, 1.0
    %v3614 = vadd.f32 %v3374, 1.0
    %v3615 = vadd.f32 %v3376, 1.0
    %v3616 = vadd.f32 %v3378, 1.0
    %v3617 = vadd.f32 %v3380, 1.0
    %v3618 = vadd.f32 %v3382, 1.0
    %v3619 = vadd.f32 %v3384, 1.0
    %v3620 = vadd.f32 %v3386, 1.0
    %v3621 = vadd.f32 %v3388, 1.0
    %v3622 = vadd.f32 %v3390, 1.0
    %v3623 = vadd.f32 %v3392, 1.0
    %v3624 = vadd.f32 %v3394, 1.0
    %v3625 = vadd.f32 %v3396, 1.0
    %v3626 = vadd.f32 %v3398, 1.0
    %v3627 = vadd.f32 %v3400, 1.0
    %v3628 = vadd.f32 %v3402, 1.0
    %v3629 = vadd.f32 %v3404, 1.0
    %v3630 = vadd.f32 %v3406, 1.0
    %v3631 = vadd.f32 %v3408, 1.0
    %v3632 = vadd.f32 %v3410, 1.0
    %v3633 = vadd.f32 %v3412, 1.0
    %v3634 = vadd.f32 %v3414, 1.0
    %v3635 = vadd.f32 %v3416, 1.0
    %v3636 = vadd.f32 %v3418, 1.0
    %v3637 = vadd.f32 %v3420, 1.0
    %v3638 = vadd.f32 %v3422, 1.0
    %v3639 = vadd.f32 %v3424, 1.0
    %v3640 = vadd.f32 %v3426, 1.0
    %v3641 = vadd.f32 %v3428, 1.0
    %v3642 = vadd.f32 %v3430, 1.0
    %v3643 = vadd.f32 %v3432, 1.0
    %v3644 = vadd.f32 %v3434, 1.0
    %v3645 = vadd.f32 %v3436, 1.0
    %v3646 = vadd.f32 %v3438, 1.0
    %v3647 = vadd.f32 %v3440, 1.0
    %v3648 = vadd.f32 %v3442, 1.0
    %v3649 = vadd.f32 %v3444, 1.0
    %v3650 = vadd.f32 %v3446, 1.0
    %v3651 = vadd.f32 %v3448, 1.0
    %v3652 = vadd.f32 %v3450, 1.0
    %v3653 = vadd.f32 %v3452, 1.0
    %v3654 = vadd.f32 %v3454, 1.0
    %v3655 = vadd.f32 %v3456, 1.0
    %v3656 = vadd.f32 %v3458, 1.0
    %v3657 = vadd.f32 %v3460, 1.0
    %v3658 = vadd.f32 %v3462, 1.0
    %v3659 = vadd.f32 %v3464, 1.0
    %v3660 = vadd.f32 %v3466, 1.0
    %v3661 = vadd.f32 %v3468, 1.0
    %v3662 = vadd.f32 %v3470, 1.0
    %v3663 = vadd.f32 %v3472, 1.0
    %v3664 = vadd.f32 %v3474, 1.0
    %v3665 = vadd.f32 %v3476, 1.0
    %v3666 = vadd.f32 %v3478, 1.0
    %v3667 = vadd.f32 %v3480, 1.0
    %v3668 = vadd.f32 %v3482, 1.0
    %v3669 = vadd.f32 %v3484, 1.0
    %v3670 = vadd.f32 %v3486, 1.0
    %v3671 = vadd.f32 %v3488, 1.0
    %v3672 = vadd.f32 %v3490, 1.0
    %v3673 = vadd.f32 %v3492, 1.0
    %v3674 = vadd.f32 %v3494, 1.0
    %v3675 = vadd.f32 %v3496, 1.0
    %v3676 = vadd.f32 %v3498, 1.0
    %v3677 = vadd.f32 %v3500, 1.0
    %v3678 = vadd.f32 %v3502, 1.0
    %v3679 = vadd.f32 %v3504, 1.0
    %v3680 = vadd.f32 %v3506, 1.0
    %v3681 = vadd.f32 %v3508, 1.0
    %v3682 = vadd.f32 %v3510, 1.0
    %v3683 = vadd.f32 %v3512, 1.0
    %v3684 = vadd.f32 %v3514, 1.0
    %v3685 = vadd.f32 %v3516, 1.0
    %v3686 = vadd.f32 %v3518, 1.0
    %v3687 = vadd.f32 %v3520, 1.0
    %v3688 = vadd.f32 %v3522, 1.0
    %v3689 = vadd.f32 %v3524, 1.0
    %v3690 = vadd.f32 %v3526, 1.0
    %v3691 = vadd.f32 %v3528, 1.0
    %v3692 = vadd.f32 %v3530, 1.0
    %v3693 = vadd.f32 %v3532, 1.0
    %v3694 = vadd.f32 %v3534, 1.0
    %v3695 = vadd.f32 %v3536, 1.0
    %v3696 = vadd.f32 %v3538, 1.0
    %v3697 = vadd.f32 %v3540, 1.0
    %v3698 = vadd.f32 %v3542, 1.0
    %v3699 = vadd.f32 %v3544, 1.0
    %v3700 = vadd.f32 %v3546, 1.0
    %v3701 = vadd.f32 %v3548, 1.0
    %v3702 = vadd.f32 %v3550, 1.0
    %v3703 = vadd.f32 %v3552, 1.0
    %v3704 = vadd.f32 %v3554, 1.0
    %v3705 = vadd.f32 %v3556, 1.0
    %v3706 = vadd.f32 %v3558, 1.0
    %v3707 = vadd.f32 %v3560, 1.0
    %v3708 = vadd.f32 %v3562, 1.0
    %v3709 = vadd.f32 %v3564, 1.0
    %v3710 = vadd.f32 %v3566, 1.0
    %v3711 = vadd.f32 %v3568, 1.0
    %v3712 = vadd.f32 %v3570, 1.0
    %v3713 = vadd.f32 %v3572, 1.0
    %v3714 = vadd.f32 %v3574, 1.0
    %v3715 = vadd.f32 %v3576, 1.0
    %v3716 = vadd.f32 %v3578, 1.0
    %v3717 = vadd.f32 %v3580, 1.0
    %v3718 = vadd.f32 %v3582, 1.0
    %v3719 = vadd.f32 %v3584, 1.0
    %v3720 = vadd.f32 %v3586, 1.0
    %v3721 = vadd.f32 %v3588, 1.0
    %v3722 = vadd.f32 %v3590, 1.0
    %v3723 = vadd.f32 %v3592, 1.0
    %v3724 = vadd.f32 %v3594, 1.0
    %v3725 = vadd.f32 %v3596, 1.0
    %v3726 = vadd.f32 %v3598, 1.0
    %v3727 = vrcp.pop %v3599
    %v3728 = vmul.f32 1.0, %v3727
    %v3729 = vrcp.pop %v3600
    %v3730 = vmul.f32 1.0, %v3729
    %v3731 = vrcp.pop %v3601
    %v3732 = vmul.f32 1.0, %v3731
    %v3733 = vrcp.pop %v3602
    %v3734 = vmul.f32 1.0, %v3733
    %v3735 = vrcp.pop %v3603
    %v3736 = vmul.f32 1.0, %v3735
    %v3737 = vrcp.pop %v3604
    %v3738 = vmul.f32 1.0, %v3737
    %v3739 = vrcp.pop %v3605
    %v3740 = vmul.f32 1.0, %v3739
    %v3741 = vrcp.pop %v3606
    %v3742 = vmul.f32 1.0, %v3741
    %v3743 = vrcp.pop %v3607
    %v3744 = vmul.f32 1.0, %v3743
    %v3745 = vrcp.pop %v3608
    %v3746 = vmul.f32 1.0, %v3745
    %v3747 = vrcp.pop %v3609
    %v3748 = vmul.f32 1.0, %v3747
    %v3749 = vrcp.pop %v3610
    %v3750 = vmul.f32 1.0, %v3749
    %v3751 = vrcp.pop %v3611
    %v3752 = vmul.f32 1.0, %v3751
    %v3753 = vrcp.pop %v3612
    %v3754 = vmul.f32 1.0, %v3753
    %v3755 = vrcp.pop %v3613
    %v3756 = vmul.f32 1.0, %v3755
    %v3757 = vrcp.pop %v3614
    %v3758 = vmul.f32 1.0, %v3757
    %v3759 = vrcp.pop %v3615
    %v3760 = vmul.f32 1.0, %v3759
    %v3761 = vrcp.pop %v3616
    %v3762 = vmul.f32 1.0, %v3761
    %v3763 = vrcp.pop %v3617
    %v3764 = vmul.f32 1.0, %v3763
    %v3765 = vrcp.pop %v3618
    %v3766 = vmul.f32 1.0, %v3765
    %v3767 = vrcp.pop %v3619
    %v3768 = vmul.f32 1.0, %v3767
    %v3769 = vrcp.pop %v3620
    %v3770 = vmul.f32 1.0, %v3769
    %v3771 = vrcp.pop %v3621
    %v3772 = vmul.f32 1.0, %v3771
    %v3773 = vrcp.pop %v3622
    %v3774 = vmul.f32 1.0, %v3773
    %v3775 = vrcp.pop %v3623
    %v3776 = vmul.f32 1.0, %v3775
    %v3777 = vrcp.pop %v3624
    %v3778 = vmul.f32 1.0, %v3777
    %v3779 = vrcp.pop %v3625
    %v3780 = vmul.f32 1.0, %v3779
    %v3781 = vrcp.pop %v3626
    %v3782 = vmul.f32 1.0, %v3781
    %v3783 = vrcp.pop %v3627
    %v3784 = vmul.f32 1.0, %v3783
    %v3785 = vrcp.pop %v3628
    %v3786 = vmul.f32 1.0, %v3785
    %v3787 = vrcp.pop %v3629
    %v3788 = vmul.f32 1.0, %v3787
    %v3789 = vrcp.pop %v3630
    %v3790 = vmul.f32 1.0, %v3789
    %v3791 = vrcp.pop %v3631
    %v3792 = vmul.f32 1.0, %v3791
    %v3793 = vrcp.pop %v3632
    %v3794 = vmul.f32 1.0, %v3793
    %v3795 = vrcp.pop %v3633
    %v3796 = vmul.f32 1.0, %v3795
    %v3797 = vrcp.pop %v3634
    %v3798 = vmul.f32 1.0, %v3797
    %v3799 = vrcp.pop %v3635
    %v3800 = vmul.f32 1.0, %v3799
    %v3801 = vrcp.pop %v3636
    %v3802 = vmul.f32 1.0, %v3801
    %v3803 = vrcp.pop %v3637
    %v3804 = vmul.f32 1.0, %v3803
    %v3805 = vrcp.pop %v3638
    %v3806 = vmul.f32 1.0, %v3805
    %v3807 = vrcp.pop %v3639
    %v3808 = vmul.f32 1.0, %v3807
    %v3809 = vrcp.pop %v3640
    %v3810 = vmul.f32 1.0, %v3809
    %v3811 = vrcp.pop %v3641
    %v3812 = vmul.f32 1.0, %v3811
    %v3813 = vrcp.pop %v3642
    %v3814 = vmul.f32 1.0, %v3813
    %v3815 = vrcp.pop %v3643
    %v3816 = vmul.f32 1.0, %v3815
    %v3817 = vrcp.pop %v3644
    %v3818 = vmul.f32 1.0, %v3817
    %v3819 = vrcp.pop %v3645
    %v3820 = vmul.f32 1.0, %v3819
    %v3821 = vrcp.pop %v3646
    %v3822 = vmul.f32 1.0, %v3821
    %v3823 = vrcp.pop %v3647
    %v3824 = vmul.f32 1.0, %v3823
    %v3825 = vrcp.pop %v3648
    %v3826 = vmul.f32 1.0, %v3825
    %v3827 = vrcp.pop %v3649
    %v3828 = vmul.f32 1.0, %v3827
    %v3829 = vrcp.pop %v3650
    %v3830 = vmul.f32 1.0, %v3829
    %v3831 = vrcp.pop %v3651
    %v3832 = vmul.f32 1.0, %v3831
    %v3833 = vrcp.pop %v3652
    %v3834 = vmul.f32 1.0, %v3833
    %v3835 = vrcp.pop %v3653
    %v3836 = vmul.f32 1.0, %v3835
    %v3837 = vrcp.pop %v3654
    %v3838 = vmul.f32 1.0, %v3837
    %v3839 = vrcp.pop %v3655
    %v3840 = vmul.f32 1.0, %v3839
    %v3841 = vrcp.pop %v3656
    %v3842 = vmul.f32 1.0, %v3841
    %v3843 = vrcp.pop %v3657
    %v3844 = vmul.f32 1.0, %v3843
    %v3845 = vrcp.pop %v3658
    %v3846 = vmul.f32 1.0, %v3845
    %v3847 = vrcp.pop %v3659
    %v3848 = vmul.f32 1.0, %v3847
    %v3849 = vrcp.pop %v3660
    %v3850 = vmul.f32 1.0, %v3849
    %v3851 = vrcp.pop %v3661
    %v3852 = vmul.f32 1.0, %v3851
    %v3853 = vrcp.pop %v3662
    %v3854 = vmul.f32 1.0, %v3853
    %v3855 = vrcp.pop %v3663
    %v3856 = vmul.f32 1.0, %v3855
    %v3857 = vrcp.pop %v3664
    %v3858 = vmul.f32 1.0, %v3857
    %v3859 = vrcp.pop %v3665
    %v3860 = vmul.f32 1.0, %v3859
    %v3861 = vrcp.pop %v3666
    %v3862 = vmul.f32 1.0, %v3861
    %v3863 = vrcp.pop %v3667
    %v3864 = vmul.f32 1.0, %v3863
    %v3865 = vrcp.pop %v3668
    %v3866 = vmul.f32 1.0, %v3865
    %v3867 = vrcp.pop %v3669
    %v3868 = vmul.f32 1.0, %v3867
    %v3869 = vrcp.pop %v3670
    %v3870 = vmul.f32 1.0, %v3869
    %v3871 = vrcp.pop %v3671
    %v3872 = vmul.f32 1.0, %v3871
    %v3873 = vrcp.pop %v3672
    %v3874 = vmul.f32 1.0, %v3873
    %v3875 = vrcp.pop %v3673
    %v3876 = vmul.f32 1.0, %v3875
    %v3877 = vrcp.pop %v3674
    %v3878 = vmul.f32 1.0, %v3877
    %v3879 = vrcp.pop %v3675
    %v3880 = vmul.f32 1.0, %v3879
    %v3881 = vrcp.pop %v3676
    %v3882 = vmul.f32 1.0, %v3881
    %v3883 = vrcp.pop %v3677
    %v3884 = vmul.f32 1.0, %v3883
    %v3885 = vrcp.pop %v3678
    %v3886 = vmul.f32 1.0, %v3885
    %v3887 = vrcp.pop %v3679
    %v3888 = vmul.f32 1.0, %v3887
    %v3889 = vrcp.pop %v3680
    %v3890 = vmul.f32 1.0, %v3889
    %v3891 = vrcp.pop %v3681
    %v3892 = vmul.f32 1.0, %v3891
    %v3893 = vrcp.pop %v3682
    %v3894 = vmul.f32 1.0, %v3893
    %v3895 = vrcp.pop %v3683
    %v3896 = vmul.f32 1.0, %v3895
    %v3897 = vrcp.pop %v3684
    %v3898 = vmul.f32 1.0, %v3897
    %v3899 = vrcp.pop %v3685
    %v3900 = vmul.f32 1.0, %v3899
    %v3901 = vrcp.pop %v3686
    %v3902 = vmul.f32 1.0, %v3901
    %v3903 = vrcp.pop %v3687
    %v3904 = vmul.f32 1.0, %v3903
    %v3905 = vrcp.pop %v3688
    %v3906 = vmul.f32 1.0, %v3905
    %v3907 = vrcp.pop %v3689
    %v3908 = vmul.f32 1.0, %v3907
    %v3909 = vrcp.pop %v3690
    %v3910 = vmul.f32 1.0, %v3909
    %v3911 = vrcp.pop %v3691
    %v3912 = vmul.f32 1.0, %v3911
    %v3913 = vrcp.pop %v3692
    %v3914 = vmul.f32 1.0, %v3913
    %v3915 = vrcp.pop %v3693
    %v3916 = vmul.f32 1.0, %v3915
    %v3917 = vrcp.pop %v3694
    %v3918 = vmul.f32 1.0, %v3917
    %v3919 = vrcp.pop %v3695
    %v3920 = vmul.f32 1.0, %v3919
    %v3921 = vrcp.pop %v3696
    %v3922 = vmul.f32 1.0, %v3921
    %v3923 = vrcp.pop %v3697
    %v3924 = vmul.f32 1.0, %v3923
    %v3925 = vrcp.pop %v3698
    %v3926 = vmul.f32 1.0, %v3925
    %v3927 = vrcp.pop %v3699
    %v3928 = vmul.f32 1.0, %v3927
    %v3929 = vrcp.pop %v3700
    %v3930 = vmul.f32 1.0, %v3929
    %v3931 = vrcp.pop %v3701
    %v3932 = vmul.f32 1.0, %v3931
    %v3933 = vrcp.pop %v3702
    %v3934 = vmul.f32 1.0, %v3933
    %v3935 = vrcp.pop %v3703
    %v3936 = vmul.f32 1.0, %v3935
    %v3937 = vrcp.pop %v3704
    %v3938 = vmul.f32 1.0, %v3937
    %v3939 = vrcp.pop %v3705
    %v3940 = vmul.f32 1.0, %v3939
    %v3941 = vrcp.pop %v3706
    %v3942 = vmul.f32 1.0, %v3941
    %v3943 = vrcp.pop %v3707
    %v3944 = vmul.f32 1.0, %v3943
    %v3945 = vrcp.pop %v3708
    %v3946 = vmul.f32 1.0, %v3945
    %v3947 = vrcp.pop %v3709
    %v3948 = vmul.f32 1.0, %v3947
    %v3949 = vrcp.pop %v3710
    %v3950 = vmul.f32 1.0, %v3949
    %v3951 = vrcp.pop %v3711
    %v3952 = vmul.f32 1.0, %v3951
    %v3953 = vrcp.pop %v3712
    %v3954 = vmul.f32 1.0, %v3953
    %v3955 = vrcp.pop %v3713
    %v3956 = vmul.f32 1.0, %v3955
    %v3957 = vrcp.pop %v3714
    %v3958 = vmul.f32 1.0, %v3957
    %v3959 = vrcp.pop %v3715
    %v3960 = vmul.f32 1.0, %v3959
    %v3961 = vrcp.pop %v3716
    %v3962 = vmul.f32 1.0, %v3961
    %v3963 = vrcp.pop %v3717
    %v3964 = vmul.f32 1.0, %v3963
    %v3965 = vrcp.pop %v3718
    %v3966 = vmul.f32 1.0, %v3965
    %v3967 = vrcp.pop %v3719
    %v3968 = vmul.f32 1.0, %v3967
    %v3969 = vrcp.pop %v3720
    %v3970 = vmul.f32 1.0, %v3969
    %v3971 = vrcp.pop %v3721
    %v3972 = vmul.f32 1.0, %v3971
    %v3973 = vrcp.pop %v3722
    %v3974 = vmul.f32 1.0, %v3973
    %v3975 = vrcp.pop %v3723
    %v3976 = vmul.f32 1.0, %v3975
    %v3977 = vrcp.pop %v3724
    %v3978 = vmul.f32 1.0, %v3977
    %v3979 = vrcp.pop %v3725
    %v3980 = vmul.f32 1.0, %v3979
    %v3981 = vrcp.pop %v3726
    %v3982 = vmul.f32 1.0, %v3981
    %v3983 = vmul.f32 %v3087, %v3728
    %v3984 = vmul.f32 %v3088, %v3730
    %v3985 = vmul.f32 %v3089, %v3732
    %v3986 = vmul.f32 %v3090, %v3734
    %v3987 = vmul.f32 %v3091, %v3736
    %v3988 = vmul.f32 %v3092, %v3738
    %v3989 = vmul.f32 %v3093, %v3740
    %v3990 = vmul.f32 %v3094, %v3742
    %v3991 = vmul.f32 %v3095, %v3744
    %v3992 = vmul.f32 %v3096, %v3746
    %v3993 = vmul.f32 %v3097, %v3748
    %v3994 = vmul.f32 %v3098, %v3750
    %v3995 = vmul.f32 %v3099, %v3752
    %v3996 = vmul.f32 %v3100, %v3754
    %v3997 = vmul.f32 %v3101, %v3756
    %v3998 = vmul.f32 %v3102, %v3758
    %v3999 = vmul.f32 %v3103, %v3760
    %v4000 = vmul.f32 %v3104, %v3762
    %v4001 = vmul.f32 %v3105, %v3764
    %v4002 = vmul.f32 %v3106, %v3766
    %v4003 = vmul.f32 %v3107, %v3768
    %v4004 = vmul.f32 %v3108, %v3770
    %v4005 = vmul.f32 %v3109, %v3772
    %v4006 = vmul.f32 %v3110, %v3774
    %v4007 = vmul.f32 %v3111, %v3776
    %v4008 = vmul.f32 %v3112, %v3778
    %v4009 = vmul.f32 %v3113, %v3780
    %v4010 = vmul.f32 %v3114, %v3782
    %v4011 = vmul.f32 %v3115, %v3784
    %v4012 = vmul.f32 %v3116, %v3786
    %v4013 = vmul.f32 %v3117, %v3788
    %v4014 = vmul.f32 %v3118, %v3790
    %v4015 = vmul.f32 %v3119, %v3792
    %v4016 = vmul.f32 %v3120, %v3794
    %v4017 = vmul.f32 %v3121, %v3796
    %v4018 = vmul.f32 %v3122, %v3798
    %v4019 = vmul.f32 %v3123, %v3800
    %v4020 = vmul.f32 %v3124, %v3802
    %v4021 = vmul.f32 %v3125, %v3804
    %v4022 = vmul.f32 %v3126, %v3806
    %v4023 = vmul.f32 %v3127, %v3808
    %v4024 = vmul.f32 %v3128, %v3810
    %v4025 = vmul.f32 %v3129, %v3812
    %v4026 = vmul.f32 %v3130, %v3814
    %v4027 = vmul.f32 %v3131, %v3816
    %v4028 = vmul.f32 %v3132, %v3818
    %v4029 = vmul.f32 %v3133, %v3820
    %v4030 = vmul.f32 %v3134, %v3822
    %v4031 = vmul.f32 %v3135, %v3824
    %v4032 = vmul.f32 %v3136, %v3826
    %v4033 = vmul.f32 %v3137, %v3828
    %v4034 = vmul.f32 %v3138, %v3830
    %v4035 = vmul.f32 %v3139, %v3832
    %v4036 = vmul.f32 %v3140, %v3834
    %v4037 = vmul.f32 %v3141, %v3836
    %v4038 = vmul.f32 %v3142, %v3838
    %v4039 = vmul.f32 %v3143, %v3840
    %v4040 = vmul.f32 %v3144, %v3842
    %v4041 = vmul.f32 %v3145, %v3844
    %v4042 = vmul.f32 %v3146, %v3846
    %v4043 = vmul.f32 %v3147, %v3848
    %v4044 = vmul.f32 %v3148, %v3850
    %v4045 = vmul.f32 %v3149, %v3852
    %v4046 = vmul.f32 %v3150, %v3854
    %v4047 = vmul.f32 %v3151, %v3856
    %v4048 = vmul.f32 %v3152, %v3858
    %v4049 = vmul.f32 %v3153, %v3860
    %v4050 = vmul.f32 %v3154, %v3862
    %v4051 = vmul.f32 %v3155, %v3864
    %v4052 = vmul.f32 %v3156, %v3866
    %v4053 = vmul.f32 %v3157, %v3868
    %v4054 = vmul.f32 %v3158, %v3870
    %v4055 = vmul.f32 %v3159, %v3872
    %v4056 = vmul.f32 %v3160, %v3874
    %v4057 = vmul.f32 %v3161, %v3876
    %v4058 = vmul.f32 %v3162, %v3878
    %v4059 = vmul.f32 %v3163, %v3880
    %v4060 = vmul.f32 %v3164, %v3882
    %v4061 = vmul.f32 %v3165, %v3884
    %v4062 = vmul.f32 %v3166, %v3886
    %v4063 = vmul.f32 %v3167, %v3888
    %v4064 = vmul.f32 %v3168, %v3890
    %v4065 = vmul.f32 %v3169, %v3892
    %v4066 = vmul.f32 %v3170, %v3894
    %v4067 = vmul.f32 %v3171, %v3896
    %v4068 = vmul.f32 %v3172, %v3898
    %v4069 = vmul.f32 %v3173, %v3900
    %v4070 = vmul.f32 %v3174, %v3902
    %v4071 = vmul.f32 %v3175, %v3904
    %v4072 = vmul.f32 %v3176, %v3906
    %v4073 = vmul.f32 %v3177, %v3908
    %v4074 = vmul.f32 %v3178, %v3910
    %v4075 = vmul.f32 %v3179, %v3912
    %v4076 = vmul.f32 %v3180, %v3914
    %v4077 = vmul.f32 %v3181, %v3916
    %v4078 = vmul.f32 %v3182, %v3918
    %v4079 = vmul.f32 %v3183, %v3920
    %v4080 = vmul.f32 %v3184, %v3922
    %v4081 = vmul.f32 %v3185, %v3924
    %v4082 = vmul.f32 %v3186, %v3926
    %v4083 = vmul.f32 %v3187, %v3928
    %v4084 = vmul.f32 %v3188, %v3930
    %v4085 = vmul.f32 %v3189, %v3932
    %v4086 = vmul.f32 %v3190, %v3934
    %v4087 = vmul.f32 %v3191, %v3936
    %v4088 = vmul.f32 %v3192, %v3938
    %v4089 = vmul.f32 %v3193, %v3940
    %v4090 = vmul.f32 %v3194, %v3942
    %v4091 = vmul.f32 %v3195, %v3944
    %v4092 = vmul.f32 %v3196, %v3946
    %v4093 = vmul.f32 %v3197, %v3948
    %v4094 = vmul.f32 %v3198, %v3950
    %v4095 = vmul.f32 %v3199, %v3952
    %v4096 = vmul.f32 %v3200, %v3954
    %v4097 = vmul.f32 %v3201, %v3956
    %v4098 = vmul.f32 %v3202, %v3958
    %v4099 = vmul.f32 %v3203, %v3960
    %v4100 = vmul.f32 %v3204, %v3962
    %v4101 = vmul.f32 %v3205, %v3964
    %v4102 = vmul.f32 %v3206, %v3966
    %v4103 = vmul.f32 %v3207, %v3968
    %v4104 = vmul.f32 %v3208, %v3970
    %v4105 = vmul.f32 %v3209, %v3972
    %v4106 = vmul.f32 %v3210, %v3974
    %v4107 = vmul.f32 %v3211, %v3976
    %v4108 = vmul.f32 %v3212, %v3978
    %v4109 = vmul.f32 %v3213, %v3980
    %v4110 = vmul.f32 %v3214, %v3982
    %v4111 = vmul.f32 %v3983, %v657
    %v4112 = vmul.f32 %v3984, %v661
    %v4113 = vmul.f32 %v3985, %v665
    %v4114 = vmul.f32 %v3986, %v669
    %v4115 = vmul.f32 %v3987, %v676
    %v4116 = vmul.f32 %v3988, %v680
    %v4117 = vmul.f32 %v3989, %v684
    %v4118 = vmul.f32 %v3990, %v688
    %v4119 = vmul.f32 %v3991, %v695
    %v4120 = vmul.f32 %v3992, %v699
    %v4121 = vmul.f32 %v3993, %v703
    %v4122 = vmul.f32 %v3994, %v707
    %v4123 = vmul.f32 %v3995, %v714
    %v4124 = vmul.f32 %v3996, %v718
    %v4125 = vmul.f32 %v3997, %v722
    %v4126 = vmul.f32 %v3998, %v726
    %v4127 = vmul.f32 %v3999, %v733
    %v4128 = vmul.f32 %v4000, %v737
    %v4129 = vmul.f32 %v4001, %v741
    %v4130 = vmul.f32 %v4002, %v745
    %v4131 = vmul.f32 %v4003, %v752
    %v4132 = vmul.f32 %v4004, %v756
    %v4133 = vmul.f32 %v4005, %v760
    %v4134 = vmul.f32 %v4006, %v764
    %v4135 = vmul.f32 %v4007, %v771
    %v4136 = vmul.f32 %v4008, %v775
    %v4137 = vmul.f32 %v4009, %v779
    %v4138 = vmul.f32 %v4010, %v783
    %v4139 = vmul.f32 %v4011, %v790
    %v4140 = vmul.f32 %v4012, %v794
    %v4141 = vmul.f32 %v4013, %v798
    %v4142 = vmul.f32 %v4014, %v802
    %v4143 = vmul.f32 %v4015, %v809
    %v4144 = vmul.f32 %v4016, %v813
    %v4145 = vmul.f32 %v4017, %v817
    %v4146 = vmul.f32 %v4018, %v821
    %v4147 = vmul.f32 %v4019, %v828
    %v4148 = vmul.f32 %v4020, %v832
    %v4149 = vmul.f32 %v4021, %v836
    %v4150 = vmul.f32 %v4022, %v840
    %v4151 = vmul.f32 %v4023, %v847
    %v4152 = vmul.f32 %v4024, %v851
    %v4153 = vmul.f32 %v4025, %v855
    %v4154 = vmul.f32 %v4026, %v859
    %v4155 = vmul.f32 %v4027, %v866
    %v4156 = vmul.f32 %v4028, %v870
    %v4157 = vmul.f32 %v4029, %v874
    %v4158 = vmul.f32 %v4030, %v878
    %v4159 = vmul.f32 %v4031, %v885
    %v4160 = vmul.f32 %v4032, %v889
    %v4161 = vmul.f32 %v4033, %v893
    %v4162 = vmul.f32 %v4034, %v897
    %v4163 = vmul.f32 %v4035, %v904
    %v4164 = vmul.f32 %v4036, %v908
    %v4165 = vmul.f32 %v4037, %v912
    %v4166 = vmul.f32 %v4038, %v916
    %v4167 = vmul.f32 %v4039, %v923
    %v4168 = vmul.f32 %v4040, %v927
    %v4169 = vmul.f32 %v4041, %v931
    %v4170 = vmul.f32 %v4042, %v935
    %v4171 = vmul.f32 %v4043, %v942
    %v4172 = vmul.f32 %v4044, %v946
    %v4173 = vmul.f32 %v4045, %v950
    %v4174 = vmul.f32 %v4046, %v954
    %v4175 = vmul.f32 %v4047, %v961
    %v4176 = vmul.f32 %v4048, %v965
    %v4177 = vmul.f32 %v4049, %v969
    %v4178 = vmul.f32 %v4050, %v973
    %v4179 = vmul.f32 %v4051, %v980
    %v4180 = vmul.f32 %v4052, %v984
    %v4181 = vmul.f32 %v4053, %v988
    %v4182 = vmul.f32 %v4054, %v992
    %v4183 = vmul.f32 %v4055, %v999
    %v4184 = vmul.f32 %v4056, %v1003
    %v4185 = vmul.f32 %v4057, %v1007
    %v4186 = vmul.f32 %v4058, %v1011
    %v4187 = vmul.f32 %v4059, %v1018
    %v4188 = vmul.f32 %v4060, %v1022
    %v4189 = vmul.f32 %v4061, %v1026
    %v4190 = vmul.f32 %v4062, %v1030
    %v4191 = vmul.f32 %v4063, %v1037
    %v4192 = vmul.f32 %v4064, %v1041
    %v4193 = vmul.f32 %v4065, %v1045
    %v4194 = vmul.f32 %v4066, %v1049
    %v4195 = vmul.f32 %v4067, %v1056
    %v4196 = vmul.f32 %v4068, %v1060
    %v4197 = vmul.f32 %v4069, %v1064
    %v4198 = vmul.f32 %v4070, %v1068
    %v4199 = vmul.f32 %v4071, %v1075
    %v4200 = vmul.f32 %v4072, %v1079
    %v4201 = vmul.f32 %v4073, %v1083
    %v4202 = vmul.f32 %v4074, %v1087
    %v4203 = vmul.f32 %v4075, %v1094
    %v4204 = vmul.f32 %v4076, %v1098
    %v4205 = vmul.f32 %v4077, %v1102
    %v4206 = vmul.f32 %v4078, %v1106
    %v4207 = vmul.f32 %v4079, %v1113
    %v4208 = vmul.f32 %v4080, %v1117
    %v4209 = vmul.f32 %v4081, %v1121
    %v4210 = vmul.f32 %v4082, %v1125
    %v4211 = vmul.f32 %v4083, %v1132
    %v4212 = vmul.f32 %v4084, %v1136
    %v4213 = vmul.f32 %v4085, %v1140
    %v4214 = vmul.f32 %v4086, %v1144
    %v4215 = vmul.f32 %v4087, %v1151
    %v4216 = vmul.f32 %v4088, %v1155
    %v4217 = vmul.f32 %v4089, %v1159
    %v4218 = vmul.f32 %v4090, %v1163
    %v4219 = vmul.f32 %v4091, %v1170
    %v4220 = vmul.f32 %v4092, %v1174
    %v4221 = vmul.f32 %v4093, %v1178
    %v4222 = vmul.f32 %v4094, %v1182
    %v4223 = vmul.f32 %v4095, %v1189
    %v4224 = vmul.f32 %v4096, %v1193
    %v4225 = vmul.f32 %v4097, %v1197
    %v4226 = vmul.f32 %v4098, %v1201
    %v4227 = vmul.f32 %v4099, %v1208
    %v4228 = vmul.f32 %v4100, %v1212
    %v4229 = vmul.f32 %v4101, %v1216
    %v4230 = vmul.f32 %v4102, %v1220
    %v4231 = vmul.f32 %v4103, %v1227
    %v4232 = vmul.f32 %v4104, %v1231
    %v4233 = vmul.f32 %v4105, %v1235
    %v4234 = vmul.f32 %v4106, %v1239
    %v4235 = vmul.f32 %v4107, %v1246
    %v4236 = vmul.f32 %v4108, %v1250
    %v4237 = vmul.f32 %v4109, %v1254
    %v4238 = vmul.f32 %v4110, %v1258
    %v4239 = vsel %vm554, %v4111, 0.0
    %v4240 = vsel %vm554, %v4112, 0.0
    %v4241 = vadd.f32 %v4239, %v4240
    %v4242 = vsel %vm554, %v4113, 0.0
    %v4243 = vadd.f32 %v4241, %v4242
    %v4244 = vsel %vm554, %v4114, 0.0
    %v4245 = vadd.f32 %v4243, %v4244
    %v4246 = vrot.slane %v4245, 4
    %v4247 = vadd.f32 %v4245, %v4246
    %v4248 = vrot.slane %v4247, 2
    %v4249 = vadd.f32 %v4247, %v4248
    %v4250 = vrot.slane %v4249, 1
    %v4251 = vadd.f32 %v4249, %v4250
    %v4252 = vsel %vm554, %v4115, 0.0
    %v4253 = vsel %vm554, %v4116, 0.0
    %v4254 = vadd.f32 %v4252, %v4253
    %v4255 = vsel %vm554, %v4117, 0.0
    %v4256 = vadd.f32 %v4254, %v4255
    %v4257 = vsel %vm554, %v4118, 0.0
    %v4258 = vadd.f32 %v4256, %v4257
    %v4259 = vrot.slane %v4258, 4
    %v4260 = vadd.f32 %v4258, %v4259
    %v4261 = vrot.slane %v4260, 2
    %v4262 = vadd.f32 %v4260, %v4261
    %v4263 = vrot.slane %v4262, 1
    %v4264 = vadd.f32 %v4262, %v4263
    %v4265 = vsel %vm554, %v4119, 0.0
    %v4266 = vsel %vm554, %v4120, 0.0
    %v4267 = vadd.f32 %v4265, %v4266
    %v4268 = vsel %vm554, %v4121, 0.0
    %v4269 = vadd.f32 %v4267, %v4268
    %v4270 = vsel %vm554, %v4122, 0.0
    %v4271 = vadd.f32 %v4269, %v4270
    %v4272 = vrot.slane %v4271, 4
    %v4273 = vadd.f32 %v4271, %v4272
    %v4274 = vrot.slane %v4273, 2
    %v4275 = vadd.f32 %v4273, %v4274
    %v4276 = vrot.slane %v4275, 1
    %v4277 = vadd.f32 %v4275, %v4276
    %v4278 = vsel %vm554, %v4123, 0.0
    %v4279 = vsel %vm554, %v4124, 0.0
    %v4280 = vadd.f32 %v4278, %v4279
    %v4281 = vsel %vm554, %v4125, 0.0
    %v4282 = vadd.f32 %v4280, %v4281
    %v4283 = vsel %vm554, %v4126, 0.0
    %v4284 = vadd.f32 %v4282, %v4283
    %v4285 = vrot.slane %v4284, 4
    %v4286 = vadd.f32 %v4284, %v4285
    %v4287 = vrot.slane %v4286, 2
    %v4288 = vadd.f32 %v4286, %v4287
    %v4289 = vrot.slane %v4288, 1
    %v4290 = vadd.f32 %v4288, %v4289
    %v4291 = vsel %vm554, %v4127, 0.0
    %v4292 = vsel %vm554, %v4128, 0.0
    %v4293 = vadd.f32 %v4291, %v4292
    %v4294 = vsel %vm554, %v4129, 0.0
    %v4295 = vadd.f32 %v4293, %v4294
    %v4296 = vsel %vm554, %v4130, 0.0
    %v4297 = vadd.f32 %v4295, %v4296
    %v4298 = vrot.slane %v4297, 4
    %v4299 = vadd.f32 %v4297, %v4298
    %v4300 = vrot.slane %v4299, 2
    %v4301 = vadd.f32 %v4299, %v4300
    %v4302 = vrot.slane %v4301, 1
    %v4303 = vadd.f32 %v4301, %v4302
    %v4304 = vsel %vm554, %v4131, 0.0
    %v4305 = vsel %vm554, %v4132, 0.0
    %v4306 = vadd.f32 %v4304, %v4305
    %v4307 = vsel %vm554, %v4133, 0.0
    %v4308 = vadd.f32 %v4306, %v4307
    %v4309 = vsel %vm554, %v4134, 0.0
    %v4310 = vadd.f32 %v4308, %v4309
    %v4311 = vrot.slane %v4310, 4
    %v4312 = vadd.f32 %v4310, %v4311
    %v4313 = vrot.slane %v4312, 2
    %v4314 = vadd.f32 %v4312, %v4313
    %v4315 = vrot.slane %v4314, 1
    %v4316 = vadd.f32 %v4314, %v4315
    %v4317 = vsel %vm554, %v4135, 0.0
    %v4318 = vsel %vm554, %v4136, 0.0
    %v4319 = vadd.f32 %v4317, %v4318
    %v4320 = vsel %vm554, %v4137, 0.0
    %v4321 = vadd.f32 %v4319, %v4320
    %v4322 = vsel %vm554, %v4138, 0.0
    %v4323 = vadd.f32 %v4321, %v4322
    %v4324 = vrot.slane %v4323, 4
    %v4325 = vadd.f32 %v4323, %v4324
    %v4326 = vrot.slane %v4325, 2
    %v4327 = vadd.f32 %v4325, %v4326
    %v4328 = vrot.slane %v4327, 1
    %v4329 = vadd.f32 %v4327, %v4328
    %v4330 = vsel %vm554, %v4139, 0.0
    %v4331 = vsel %vm554, %v4140, 0.0
    %v4332 = vadd.f32 %v4330, %v4331
    %v4333 = vsel %vm554, %v4141, 0.0
    %v4334 = vadd.f32 %v4332, %v4333
    %v4335 = vsel %vm554, %v4142, 0.0
    %v4336 = vadd.f32 %v4334, %v4335
    %v4337 = vrot.slane %v4336, 4
    %v4338 = vadd.f32 %v4336, %v4337
    %v4339 = vrot.slane %v4338, 2
    %v4340 = vadd.f32 %v4338, %v4339
    %v4341 = vrot.slane %v4340, 1
    %v4342 = vadd.f32 %v4340, %v4341
    %v4343 = vsel %vm554, %v4143, 0.0
    %v4344 = vsel %vm554, %v4144, 0.0
    %v4345 = vadd.f32 %v4343, %v4344
    %v4346 = vsel %vm554, %v4145, 0.0
    %v4347 = vadd.f32 %v4345, %v4346
    %v4348 = vsel %vm554, %v4146, 0.0
    %v4349 = vadd.f32 %v4347, %v4348
    %v4350 = vrot.slane %v4349, 4
    %v4351 = vadd.f32 %v4349, %v4350
    %v4352 = vrot.slane %v4351, 2
    %v4353 = vadd.f32 %v4351, %v4352
    %v4354 = vrot.slane %v4353, 1
    %v4355 = vadd.f32 %v4353, %v4354
    %v4356 = vsel %vm554, %v4147, 0.0
    %v4357 = vsel %vm554, %v4148, 0.0
    %v4358 = vadd.f32 %v4356, %v4357
    %v4359 = vsel %vm554, %v4149, 0.0
    %v4360 = vadd.f32 %v4358, %v4359
    %v4361 = vsel %vm554, %v4150, 0.0
    %v4362 = vadd.f32 %v4360, %v4361
    %v4363 = vrot.slane %v4362, 4
    %v4364 = vadd.f32 %v4362, %v4363
    %v4365 = vrot.slane %v4364, 2
    %v4366 = vadd.f32 %v4364, %v4365
    %v4367 = vrot.slane %v4366, 1
    %v4368 = vadd.f32 %v4366, %v4367
    %v4369 = vsel %vm554, %v4151, 0.0
    %v4370 = vsel %vm554, %v4152, 0.0
    %v4371 = vadd.f32 %v4369, %v4370
    %v4372 = vsel %vm554, %v4153, 0.0
    %v4373 = vadd.f32 %v4371, %v4372
    %v4374 = vsel %vm554, %v4154, 0.0
    %v4375 = vadd.f32 %v4373, %v4374
    %v4376 = vrot.slane %v4375, 4
    %v4377 = vadd.f32 %v4375, %v4376
    %v4378 = vrot.slane %v4377, 2
    %v4379 = vadd.f32 %v4377, %v4378
    %v4380 = vrot.slane %v4379, 1
    %v4381 = vadd.f32 %v4379, %v4380
    %v4382 = vsel %vm554, %v4155, 0.0
    %v4383 = vsel %vm554, %v4156, 0.0
    %v4384 = vadd.f32 %v4382, %v4383
    %v4385 = vsel %vm554, %v4157, 0.0
    %v4386 = vadd.f32 %v4384, %v4385
    %v4387 = vsel %vm554, %v4158, 0.0
    %v4388 = vadd.f32 %v4386, %v4387
    %v4389 = vrot.slane %v4388, 4
    %v4390 = vadd.f32 %v4388, %v4389
    %v4391 = vrot.slane %v4390, 2
    %v4392 = vadd.f32 %v4390, %v4391
    %v4393 = vrot.slane %v4392, 1
    %v4394 = vadd.f32 %v4392, %v4393
    %v4395 = vsel %vm554, %v4159, 0.0
    %v4396 = vsel %vm554, %v4160, 0.0
    %v4397 = vadd.f32 %v4395, %v4396
    %v4398 = vsel %vm554, %v4161, 0.0
    %v4399 = vadd.f32 %v4397, %v4398
    %v4400 = vsel %vm554, %v4162, 0.0
    %v4401 = vadd.f32 %v4399, %v4400
    %v4402 = vrot.slane %v4401, 4
    %v4403 = vadd.f32 %v4401, %v4402
    %v4404 = vrot.slane %v4403, 2
    %v4405 = vadd.f32 %v4403, %v4404
    %v4406 = vrot.slane %v4405, 1
    %v4407 = vadd.f32 %v4405, %v4406
    %v4408 = vsel %vm554, %v4163, 0.0
    %v4409 = vsel %vm554, %v4164, 0.0
    %v4410 = vadd.f32 %v4408, %v4409
    %v4411 = vsel %vm554, %v4165, 0.0
    %v4412 = vadd.f32 %v4410, %v4411
    %v4413 = vsel %vm554, %v4166, 0.0
    %v4414 = vadd.f32 %v4412, %v4413
    %v4415 = vrot.slane %v4414, 4
    %v4416 = vadd.f32 %v4414, %v4415
    %v4417 = vrot.slane %v4416, 2
    %v4418 = vadd.f32 %v4416, %v4417
    %v4419 = vrot.slane %v4418, 1
    %v4420 = vadd.f32 %v4418, %v4419
    %v4421 = vsel %vm554, %v4167, 0.0
    %v4422 = vsel %vm554, %v4168, 0.0
    %v4423 = vadd.f32 %v4421, %v4422
    %v4424 = vsel %vm554, %v4169, 0.0
    %v4425 = vadd.f32 %v4423, %v4424
    %v4426 = vsel %vm554, %v4170, 0.0
    %v4427 = vadd.f32 %v4425, %v4426
    %v4428 = vrot.slane %v4427, 4
    %v4429 = vadd.f32 %v4427, %v4428
    %v4430 = vrot.slane %v4429, 2
    %v4431 = vadd.f32 %v4429, %v4430
    %v4432 = vrot.slane %v4431, 1
    %v4433 = vadd.f32 %v4431, %v4432
    %v4434 = vsel %vm554, %v4171, 0.0
    %v4435 = vsel %vm554, %v4172, 0.0
    %v4436 = vadd.f32 %v4434, %v4435
    %v4437 = vsel %vm554, %v4173, 0.0
    %v4438 = vadd.f32 %v4436, %v4437
    %v4439 = vsel %vm554, %v4174, 0.0
    %v4440 = vadd.f32 %v4438, %v4439
    %v4441 = vrot.slane %v4440, 4
    %v4442 = vadd.f32 %v4440, %v4441
    %v4443 = vrot.slane %v4442, 2
    %v4444 = vadd.f32 %v4442, %v4443
    %v4445 = vrot.slane %v4444, 1
    %v4446 = vadd.f32 %v4444, %v4445
    %v4447 = vsel %vm554, %v4175, 0.0
    %v4448 = vsel %vm554, %v4176, 0.0
    %v4449 = vadd.f32 %v4447, %v4448
    %v4450 = vsel %vm554, %v4177, 0.0
    %v4451 = vadd.f32 %v4449, %v4450
    %v4452 = vsel %vm554, %v4178, 0.0
    %v4453 = vadd.f32 %v4451, %v4452
    %v4454 = vrot.slane %v4453, 4
    %v4455 = vadd.f32 %v4453, %v4454
    %v4456 = vrot.slane %v4455, 2
    %v4457 = vadd.f32 %v4455, %v4456
    %v4458 = vrot.slane %v4457, 1
    %v4459 = vadd.f32 %v4457, %v4458
    %v4460 = vsel %vm554, %v4179, 0.0
    %v4461 = vsel %vm554, %v4180, 0.0
    %v4462 = vadd.f32 %v4460, %v4461
    %v4463 = vsel %vm554, %v4181, 0.0
    %v4464 = vadd.f32 %v4462, %v4463
    %v4465 = vsel %vm554, %v4182, 0.0
    %v4466 = vadd.f32 %v4464, %v4465
    %v4467 = vrot.slane %v4466, 4
    %v4468 = vadd.f32 %v4466, %v4467
    %v4469 = vrot.slane %v4468, 2
    %v4470 = vadd.f32 %v4468, %v4469
    %v4471 = vrot.slane %v4470, 1
    %v4472 = vadd.f32 %v4470, %v4471
    %v4473 = vsel %vm554, %v4183, 0.0
    %v4474 = vsel %vm554, %v4184, 0.0
    %v4475 = vadd.f32 %v4473, %v4474
    %v4476 = vsel %vm554, %v4185, 0.0
    %v4477 = vadd.f32 %v4475, %v4476
    %v4478 = vsel %vm554, %v4186, 0.0
    %v4479 = vadd.f32 %v4477, %v4478
    %v4480 = vrot.slane %v4479, 4
    %v4481 = vadd.f32 %v4479, %v4480
    %v4482 = vrot.slane %v4481, 2
    %v4483 = vadd.f32 %v4481, %v4482
    %v4484 = vrot.slane %v4483, 1
    %v4485 = vadd.f32 %v4483, %v4484
    %v4486 = vsel %vm554, %v4187, 0.0
    %v4487 = vsel %vm554, %v4188, 0.0
    %v4488 = vadd.f32 %v4486, %v4487
    %v4489 = vsel %vm554, %v4189, 0.0
    %v4490 = vadd.f32 %v4488, %v4489
    %v4491 = vsel %vm554, %v4190, 0.0
    %v4492 = vadd.f32 %v4490, %v4491
    %v4493 = vrot.slane %v4492, 4
    %v4494 = vadd.f32 %v4492, %v4493
    %v4495 = vrot.slane %v4494, 2
    %v4496 = vadd.f32 %v4494, %v4495
    %v4497 = vrot.slane %v4496, 1
    %v4498 = vadd.f32 %v4496, %v4497
    %v4499 = vsel %vm554, %v4191, 0.0
    %v4500 = vsel %vm554, %v4192, 0.0
    %v4501 = vadd.f32 %v4499, %v4500
    %v4502 = vsel %vm554, %v4193, 0.0
    %v4503 = vadd.f32 %v4501, %v4502
    %v4504 = vsel %vm554, %v4194, 0.0
    %v4505 = vadd.f32 %v4503, %v4504
    %v4506 = vrot.slane %v4505, 4
    %v4507 = vadd.f32 %v4505, %v4506
    %v4508 = vrot.slane %v4507, 2
    %v4509 = vadd.f32 %v4507, %v4508
    %v4510 = vrot.slane %v4509, 1
    %v4511 = vadd.f32 %v4509, %v4510
    %v4512 = vsel %vm554, %v4195, 0.0
    %v4513 = vsel %vm554, %v4196, 0.0
    %v4514 = vadd.f32 %v4512, %v4513
    %v4515 = vsel %vm554, %v4197, 0.0
    %v4516 = vadd.f32 %v4514, %v4515
    %v4517 = vsel %vm554, %v4198, 0.0
    %v4518 = vadd.f32 %v4516, %v4517
    %v4519 = vrot.slane %v4518, 4
    %v4520 = vadd.f32 %v4518, %v4519
    %v4521 = vrot.slane %v4520, 2
    %v4522 = vadd.f32 %v4520, %v4521
    %v4523 = vrot.slane %v4522, 1
    %v4524 = vadd.f32 %v4522, %v4523
    %v4525 = vsel %vm554, %v4199, 0.0
    %v4526 = vsel %vm554, %v4200, 0.0
    %v4527 = vadd.f32 %v4525, %v4526
    %v4528 = vsel %vm554, %v4201, 0.0
    %v4529 = vadd.f32 %v4527, %v4528
    %v4530 = vsel %vm554, %v4202, 0.0
    %v4531 = vadd.f32 %v4529, %v4530
    %v4532 = vrot.slane %v4531, 4
    %v4533 = vadd.f32 %v4531, %v4532
    %v4534 = vrot.slane %v4533, 2
    %v4535 = vadd.f32 %v4533, %v4534
    %v4536 = vrot.slane %v4535, 1
    %v4537 = vadd.f32 %v4535, %v4536
    %v4538 = vsel %vm554, %v4203, 0.0
    %v4539 = vsel %vm554, %v4204, 0.0
    %v4540 = vadd.f32 %v4538, %v4539
    %v4541 = vsel %vm554, %v4205, 0.0
    %v4542 = vadd.f32 %v4540, %v4541
    %v4543 = vsel %vm554, %v4206, 0.0
    %v4544 = vadd.f32 %v4542, %v4543
    %v4545 = vrot.slane %v4544, 4
    %v4546 = vadd.f32 %v4544, %v4545
    %v4547 = vrot.slane %v4546, 2
    %v4548 = vadd.f32 %v4546, %v4547
    %v4549 = vrot.slane %v4548, 1
    %v4550 = vadd.f32 %v4548, %v4549
    %v4551 = vsel %vm554, %v4207, 0.0
    %v4552 = vsel %vm554, %v4208, 0.0
    %v4553 = vadd.f32 %v4551, %v4552
    %v4554 = vsel %vm554, %v4209, 0.0
    %v4555 = vadd.f32 %v4553, %v4554
    %v4556 = vsel %vm554, %v4210, 0.0
    %v4557 = vadd.f32 %v4555, %v4556
    %v4558 = vrot.slane %v4557, 4
    %v4559 = vadd.f32 %v4557, %v4558
    %v4560 = vrot.slane %v4559, 2
    %v4561 = vadd.f32 %v4559, %v4560
    %v4562 = vrot.slane %v4561, 1
    %v4563 = vadd.f32 %v4561, %v4562
    %v4564 = vsel %vm554, %v4211, 0.0
    %v4565 = vsel %vm554, %v4212, 0.0
    %v4566 = vadd.f32 %v4564, %v4565
    %v4567 = vsel %vm554, %v4213, 0.0
    %v4568 = vadd.f32 %v4566, %v4567
    %v4569 = vsel %vm554, %v4214, 0.0
    %v4570 = vadd.f32 %v4568, %v4569
    %v4571 = vrot.slane %v4570, 4
    %v4572 = vadd.f32 %v4570, %v4571
    %v4573 = vrot.slane %v4572, 2
    %v4574 = vadd.f32 %v4572, %v4573
    %v4575 = vrot.slane %v4574, 1
    %v4576 = vadd.f32 %v4574, %v4575
    %v4577 = vsel %vm554, %v4215, 0.0
    %v4578 = vsel %vm554, %v4216, 0.0
    %v4579 = vadd.f32 %v4577, %v4578
    %v4580 = vsel %vm554, %v4217, 0.0
    %v4581 = vadd.f32 %v4579, %v4580
    %v4582 = vsel %vm554, %v4218, 0.0
    %v4583 = vadd.f32 %v4581, %v4582
    %v4584 = vrot.slane %v4583, 4
    %v4585 = vadd.f32 %v4583, %v4584
    %v4586 = vrot.slane %v4585, 2
    %v4587 = vadd.f32 %v4585, %v4586
    %v4588 = vrot.slane %v4587, 1
    %v4589 = vadd.f32 %v4587, %v4588
    %v4590 = vsel %vm554, %v4219, 0.0
    %v4591 = vsel %vm554, %v4220, 0.0
    %v4592 = vadd.f32 %v4590, %v4591
    %v4593 = vsel %vm554, %v4221, 0.0
    %v4594 = vadd.f32 %v4592, %v4593
    %v4595 = vsel %vm554, %v4222, 0.0
    %v4596 = vadd.f32 %v4594, %v4595
    %v4597 = vrot.slane %v4596, 4
    %v4598 = vadd.f32 %v4596, %v4597
    %v4599 = vrot.slane %v4598, 2
    %v4600 = vadd.f32 %v4598, %v4599
    %v4601 = vrot.slane %v4600, 1
    %v4602 = vadd.f32 %v4600, %v4601
    %v4603 = vsel %vm554, %v4223, 0.0
    %v4604 = vsel %vm554, %v4224, 0.0
    %v4605 = vadd.f32 %v4603, %v4604
    %v4606 = vsel %vm554, %v4225, 0.0
    %v4607 = vadd.f32 %v4605, %v4606
    %v4608 = vsel %vm554, %v4226, 0.0
    %v4609 = vadd.f32 %v4607, %v4608
    %v4610 = vrot.slane %v4609, 4
    %v4611 = vadd.f32 %v4609, %v4610
    %v4612 = vrot.slane %v4611, 2
    %v4613 = vadd.f32 %v4611, %v4612
    %v4614 = vrot.slane %v4613, 1
    %v4615 = vadd.f32 %v4613, %v4614
    %v4616 = vsel %vm554, %v4227, 0.0
    %v4617 = vsel %vm554, %v4228, 0.0
    %v4618 = vadd.f32 %v4616, %v4617
    %v4619 = vsel %vm554, %v4229, 0.0
    %v4620 = vadd.f32 %v4618, %v4619
    %v4621 = vsel %vm554, %v4230, 0.0
    %v4622 = vadd.f32 %v4620, %v4621
    %v4623 = vrot.slane %v4622, 4
    %v4624 = vadd.f32 %v4622, %v4623
    %v4625 = vrot.slane %v4624, 2
    %v4626 = vadd.f32 %v4624, %v4625
    %v4627 = vrot.slane %v4626, 1
    %v4628 = vadd.f32 %v4626, %v4627
    %v4629 = vsel %vm554, %v4231, 0.0
    %v4630 = vsel %vm554, %v4232, 0.0
    %v4631 = vadd.f32 %v4629, %v4630
    %v4632 = vsel %vm554, %v4233, 0.0
    %v4633 = vadd.f32 %v4631, %v4632
    %v4634 = vsel %vm554, %v4234, 0.0
    %v4635 = vadd.f32 %v4633, %v4634
    %v4636 = vrot.slane %v4635, 4
    %v4637 = vadd.f32 %v4635, %v4636
    %v4638 = vrot.slane %v4637, 2
    %v4639 = vadd.f32 %v4637, %v4638
    %v4640 = vrot.slane %v4639, 1
    %v4641 = vadd.f32 %v4639, %v4640
    %v4642 = vsel %vm554, %v4235, 0.0
    %v4643 = vsel %vm554, %v4236, 0.0
    %v4644 = vadd.f32 %v4642, %v4643
    %v4645 = vsel %vm554, %v4237, 0.0
    %v4646 = vadd.f32 %v4644, %v4645
    %v4647 = vsel %vm554, %v4238, 0.0
    %v4648 = vadd.f32 %v4646, %v4647
    %v4649 = vrot.slane %v4648, 4
    %v4650 = vadd.f32 %v4648, %v4649
    %v4651 = vrot.slane %v4650, 2
    %v4652 = vadd.f32 %v4650, %v4651
    %v4653 = vrot.slane %v4652, 1
    %v4654 = vadd.f32 %v4652, %v4653
    %v4656 = vlaneseq
    %v4657 = vshrl.u32 %v4656, 7
    %v4658 = vsub.s32 0, %v4657
    %v4659 = vrot.slane %v2164, %v4658
    %v4661 = vmul.f32 %v641, %v4659
    %v4662 = vmul.f32 %v644, %v4659
    %v4663 = vmul.f32 %v647, %v4659
    %v4664 = vmul.f32 %v650, %v4659
    %vm4697 = vcmask 1041409
    %v4698 = vsel %vm4697, %v4264, %v4251
    %vm4699 = vcmask 1042434
    %v4700 = vsel %vm4699, %v4277, %v4698
    %vm4701 = vcmask 1043459
    %v4702 = vsel %vm4701, %v4290, %v4700
    %vm4703 = vcmask 1044484
    %v4704 = vsel %vm4703, %v4303, %v4702
    %vm4705 = vcmask 1045509
    %v4706 = vsel %vm4705, %v4316, %v4704
    %vm4707 = vcmask 1046534
    %v4708 = vsel %vm4707, %v4329, %v4706
    %vm4709 = vcmask 1047559
    %v4710 = vsel %vm4709, %v4342, %v4708
    %v4711 = vsel %vm4697, %v4368, %v4355
    %v4712 = vsel %vm4699, %v4381, %v4711
    %v4713 = vsel %vm4701, %v4394, %v4712
    %v4714 = vsel %vm4703, %v4407, %v4713
    %v4715 = vsel %vm4705, %v4420, %v4714
    %v4716 = vsel %vm4707, %v4433, %v4715
    %v4717 = vsel %vm4709, %v4446, %v4716
    %v4718 = vsel %vm4697, %v4472, %v4459
    %v4719 = vsel %vm4699, %v4485, %v4718
    %v4720 = vsel %vm4701, %v4498, %v4719
    %v4721 = vsel %vm4703, %v4511, %v4720
    %v4722 = vsel %vm4705, %v4524, %v4721
    %v4723 = vsel %vm4707, %v4537, %v4722
    %v4724 = vsel %vm4709, %v4550, %v4723
    %v4725 = vsel %vm4697, %v4576, %v4563
    %v4726 = vsel %vm4699, %v4589, %v4725
    %v4727 = vsel %vm4701, %v4602, %v4726
    %v4728 = vsel %vm4703, %v4615, %v4727
    %v4729 = vsel %vm4705, %v4628, %v4728
    %v4730 = vsel %vm4707, %v4641, %v4729
    %v4731 = vsel %vm4709, %v4654, %v4730
    %v4732 = vsel %vm554, %v4710, 0
    %v4734 = vsel %vm554, %v4717, 0
    %v4736 = vsel %vm554, %v4724, 0
    %v4738 = vsel %vm554, %v4731, 0
    %4740 = vmatprep.subr.mxu0 0.0
    %4741 = vmatpush1.msra.mxu0 %v2160
    %4742 = vmatprep.subr.mxu0 0.0
    %4743 = vmatpush1.msra.mxu0 %v2161
    %4744 = vmatprep.subr.mxu0 0.0
    %4745 = vmatpush1.msra.mxu0 %v2162
    %4746 = vmatprep.subr.mxu0 0.0
    %4747 = vmatpush1.msra.mxu0 %v2163
    %4748 = vmatprep.subr.mxu0 0.0
    %4749 = vmatpush1.msra.mxu0 0.0
    %4750 = vmatprep.subr.mxu0 0.0
    %4751 = vmatpush1.msra.mxu0 0.0
    %4752 = vmatprep.subr.mxu0 0.0
    %4753 = vmatpush1.msra.mxu0 0.0
    %4754 = vmatprep.subr.mxu0 0.0
    %4755 = vmatpush1.msra.mxu0 0.0
    %4756 = vmatprep.subr.mxu0 0.0
    %4757 = vmatpush1.msra.mxu0 0.0
    %4758 = vmatprep.subr.mxu0 0.0
    %4759 = vmatpush1.msra.mxu0 0.0
    %4760 = vmatprep.subr.mxu0 0.0
    %4761 = vmatpush1.msra.mxu0 0.0
    %4762 = vmatprep.subr.mxu0 0.0
    %4763 = vmatpush1.msra.mxu0 0.0
    %4764 = vmatprep.subr.mxu0 0.0
    %4765 = vmatpush1.msra.mxu0 0.0
    %4766 = vmatprep.subr.mxu0 0.0
    %4767 = vmatpush1.msra.mxu0 0.0
    %4768 = vmatprep.subr.mxu0 0.0
    %4769 = vmatpush1.msra.mxu0 0.0
    %4770 = vmatprep.subr.mxu0 0.0
    %4771 = vmatpush1.msra.mxu0 0.0
    %4772 = vmatprep.subr.mxu0 0.0
    %4773 = vmatpush1.msra.mxu0 0.0
    %4774 = vmatprep.subr.mxu0 0.0
    %4775 = vmatpush1.msra.mxu0 0.0
    %4776 = vmatprep.subr.mxu0 0.0
    %4777 = vmatpush1.msra.mxu0 0.0
    %4778 = vmatprep.subr.mxu0 0.0
    %4779 = vmatpush1.msra.mxu0 0.0
    %4780 = vmatprep.subr.mxu0 0.0
    %4781 = vmatpush1.msra.mxu0 0.0
    %4782 = vmatprep.subr.mxu0 0.0
    %4783 = vmatpush1.msra.mxu0 0.0
    %4784 = vmatprep.subr.mxu0 0.0
    %4785 = vmatpush1.msra.mxu0 0.0
    %4786 = vmatprep.subr.mxu0 0.0
    %4787 = vmatpush1.msra.mxu0 0.0
    %4788 = vmatprep.subr.mxu0 0.0
    %4789 = vmatpush1.msra.mxu0 0.0
    %4790 = vmatprep.subr.mxu0 0.0
    %4791 = vmatpush1.msra.mxu0 0.0
    %4792 = vmatprep.subr.mxu0 0.0
    %4793 = vmatpush1.msra.mxu0 0.0
    %4794 = vmatprep.subr.mxu0 0.0
    %4795 = vmatpush1.msra.mxu0 0.0
    %4796 = vmatprep.subr.mxu0 0.0
    %4797 = vmatpush1.msra.mxu0 0.0
    %4798 = vmatprep.subr.mxu0 0.0
    %4799 = vmatpush1.msra.mxu0 0.0
    %4800 = vmatprep.subr.mxu0 0.0
    %4801 = vmatpush1.msra.mxu0 0.0
    %4802 = vmatprep.subr.mxu0 0.0
    %4803 = vmatpush1.msra.mxu0 0.0
    %4804 = vmatprep.mubr.f32.mxu0 0.0
    %4805 = vmatmul.mubr.f32.gmra.mrb[0].mxu0 %v4732
    %v4806 = vpop.f32.mrb[0].mxu0
    %v4807 = vadd.f32 %v4661, %v4806
    %v4808 = vpop.f32.mrb[0].mxu0
    %4809 = vmatprep.mubr.f32.mxu0 0.0
    %4810 = vmatmul.mubr.f32.gmra.mrb[0].mxu0 %v4734
    %v4811 = vpop.f32.mrb[0].mxu0
    %v4812 = vadd.f32 %v4662, %v4811
    %v4813 = vpop.f32.mrb[0].mxu0
    %4814 = vmatprep.mubr.f32.mxu0 0.0
    %4815 = vmatmul.mubr.f32.gmra.mrb[0].mxu0 %v4736
    %v4816 = vpop.f32.mrb[0].mxu0
    %v4817 = vadd.f32 %v4663, %v4816
    %v4818 = vpop.f32.mrb[0].mxu0
    %4819 = vmatprep.mubr.f32.mxu0 0.0
    %4820 = vmatmul.mubr.f32.gmra.mrb[0].mxu0 %v4738
    %v4821 = vpop.f32.mrb[0].mxu0
    %v4822 = vadd.f32 %v4664, %v4821
    %v4823 = vpop.f32.mrb[0].mxu0
    %4824 = vdwg.mxu0
    %v4825 = vxor.u32 %v4807, 2147483648
    %v4826 = vxor.u32 %v4812, 2147483648
    %v4827 = vxor.u32 %v4817, 2147483648
    %v4828 = vxor.u32 %v4822, 2147483648
    %v4829 = vmul.f32 %v4825, 1.442695
    %v4830 = vpow.pop %v4829
    %v4831 = vmul.f32 %v4826, 1.442695
    %v4832 = vpow.pop %v4831
    %v4833 = vmul.f32 %v4827, 1.442695
    %v4834 = vpow.pop %v4833
    %v4835 = vmul.f32 %v4828, 1.442695
    %v4836 = vpow.pop %v4835
    %v4837 = vadd.f32 %v4830, 1.0
    %v4838 = vadd.f32 %v4832, 1.0
    %v4839 = vadd.f32 %v4834, 1.0
    %v4840 = vadd.f32 %v4836, 1.0
    %v4841 = vrcp.pop %v4837
    %v4842 = vmul.f32 1.0, %v4841
    %v4843 = vrcp.pop %v4838
    %v4844 = vmul.f32 1.0, %v4843
    %v4845 = vrcp.pop %v4839
    %v4846 = vmul.f32 1.0, %v4845
    %v4847 = vrcp.pop %v4840
    %v4848 = vmul.f32 1.0, %v4847
    %v4849 = vmul.f32 %v4807, %v4842
    %v4850 = vmul.f32 %v4812, %v4844
    %v4851 = vmul.f32 %v4817, %v4846
    %v4852 = vmul.f32 %v4822, %v4848
    %v4853 = vld [vmem:[%s35] sm:$0xff]
    %v4854 = vld [vmem:[%s35 + $0x8] sm:$0xff]
    %v4855 = vld [vmem:[%s35 + $0x10] sm:$0xff]
    %v4856 = vld [vmem:[%s35 + $0x18] sm:$0xff]
    %v4857 = vld [vmem:[%s37] sm:$0xff]
    %v4858 = vld [vmem:[%s37 + $0x8] sm:$0xff]
    %v4859 = vld [vmem:[%s37 + $0x10] sm:$0xff]
    %v4860 = vld [vmem:[%s37 + $0x18] sm:$0xff]
    %v4861 = vld [vmem:[%s39] sm:$0x1]
    %v4862 = vld [vmem:[%s41] sm:$0xf]
    %v4863 = vld [vmem:[%s43] sm:$0x1]
    %v4864 = vld [vmem:[%s45] sm:$0xff]
    %v4865 = vld [vmem:[%s45 + $0x8] sm:$0xff]
    %v4866 = vld [vmem:[%s45 + $0x10] sm:$0xff]
    %v4867 = vld [vmem:[%s45 + $0x18] sm:$0xff]
    %v4868 = vld [vmem:[%s47] sm:$0x1]
    %v4870 = vsel %vm1892, %v4862, 0
    %4872 = vmatprep.subr.mxu0 0.0
    %4873 = vmatpush1.msra.mxu0 %v4870
    %4874 = vmatprep.subr.mxu0 0.0
    %4875 = vmatpush1.msra.mxu0 0.0
    %4876 = vmatprep.subr.mxu0 0.0
    %4877 = vmatpush1.msra.mxu0 0.0
    %4878 = vmatprep.subr.mxu0 0.0
    %4879 = vmatpush1.msra.mxu0 0.0
    %4880 = vmatprep.subr.mxu0 0.0
    %4881 = vmatpush1.msra.mxu0 0.0
    %4882 = vmatprep.subr.mxu0 0.0
    %4883 = vmatpush1.msra.mxu0 0.0
    %4884 = vmatprep.subr.mxu0 0.0
    %4885 = vmatpush1.msra.mxu0 0.0
    %4886 = vmatprep.subr.mxu0 0.0
    %4887 = vmatpush1.msra.mxu0 0.0
    %4888 = vmatprep.subr.mxu0 0.0
    %4889 = vmatpush1.msra.mxu0 0.0
    %4890 = vmatprep.subr.mxu0 0.0
    %4891 = vmatpush1.msra.mxu0 0.0
    %4892 = vmatprep.subr.mxu0 0.0
    %4893 = vmatpush1.msra.mxu0 0.0
    %4894 = vmatprep.subr.mxu0 0.0
    %4895 = vmatpush1.msra.mxu0 0.0
    %4896 = vmatprep.subr.mxu0 0.0
    %4897 = vmatpush1.msra.mxu0 0.0
    %4898 = vmatprep.subr.mxu0 0.0
    %4899 = vmatpush1.msra.mxu0 0.0
    %4900 = vmatprep.subr.mxu0 0.0
    %4901 = vmatpush1.msra.mxu0 0.0
    %4902 = vmatprep.subr.mxu0 0.0
    %4903 = vmatpush1.msra.mxu0 0.0
    %4904 = vmatprep.subr.mxu0 0.0
    %4905 = vmatpush1.msra.mxu0 0.0
    %4906 = vmatprep.subr.mxu0 0.0
    %4907 = vmatpush1.msra.mxu0 0.0
    %4908 = vmatprep.subr.mxu0 0.0
    %4909 = vmatpush1.msra.mxu0 0.0
    %4910 = vmatprep.subr.mxu0 0.0
    %4911 = vmatpush1.msra.mxu0 0.0
    %4912 = vmatprep.subr.mxu0 0.0
    %4913 = vmatpush1.msra.mxu0 0.0
    %4914 = vmatprep.subr.mxu0 0.0
    %4915 = vmatpush1.msra.mxu0 0.0
    %4916 = vmatprep.subr.mxu0 0.0
    %4917 = vmatpush1.msra.mxu0 0.0
    %4918 = vmatprep.subr.mxu0 0.0
    %4919 = vmatpush1.msra.mxu0 0.0
    %4920 = vmatprep.subr.mxu0 0.0
    %4921 = vmatpush1.msra.mxu0 0.0
    %4922 = vmatprep.subr.mxu0 0.0
    %4923 = vmatpush1.msra.mxu0 0.0
    %4924 = vmatprep.subr.mxu0 0.0
    %4925 = vmatpush1.msra.mxu0 0.0
    %4926 = vmatprep.subr.mxu0 0.0
    %4927 = vmatpush1.msra.mxu0 0.0
    %4928 = vmatprep.subr.mxu0 0.0
    %4929 = vmatpush1.msra.mxu0 0.0
    %4930 = vmatprep.subr.mxu0 0.0
    %4931 = vmatpush1.msra.mxu0 0.0
    %4932 = vmatprep.subr.mxu0 0.0
    %4933 = vmatpush1.msra.mxu0 0.0
    %4934 = vmatprep.subr.mxu0 0.0
    %4935 = vmatpush1.msra.mxu0 0.0
    %4936 = vmatprep.mubr.f32.mxu0 0.0
    %4937 = vmatmul.mubr.f32.gmra.mrb[0].mxu0 %v2166
    %v4938 = vpop.f32.mrb[0].mxu0
    %v4939 = vadd.f32 0.0, %v4938
    %v4940 = vpop.f32.mrb[0].mxu0
    %4941 = vmatprep.mubr.f32.mxu0 0.0
    %4942 = vmatmul.mubr.f32.gmra.mrb[0].mxu0 %v2169
    %v4943 = vpop.f32.mrb[0].mxu0
    %v4944 = vadd.f32 0.0, %v4943
    %v4945 = vpop.f32.mrb[0].mxu0
    %4946 = vmatprep.mubr.f32.mxu0 0.0
    %4947 = vmatmul.mubr.f32.gmra.mrb[0].mxu0 %v2172
    %v4948 = vpop.f32.mrb[0].mxu0
    %v4949 = vadd.f32 0.0, %v4948
    %v4950 = vpop.f32.mrb[0].mxu0
    %4951 = vmatprep.mubr.f32.mxu0 0.0
    %4952 = vmatmul.mubr.f32.gmra.mrb[0].mxu0 %v2175
    %v4953 = vpop.f32.mrb[0].mxu0
    %v4954 = vadd.f32 0.0, %v4953
    %v4955 = vpop.f32.mrb[0].mxu0
    %4956 = vdwg.mxu0
    %v4958 = vsel %vm554, %v4849, 0
    %v4961 = vsel %vm554, %v4850, 0
    %v4964 = vsel %vm554, %v4851, 0
    %v4967 = vsel %vm554, %v4852, 0
    %4969 = vmatprep.subr.mxu0 0.0
    %4970 = vmatpush1.msra.mxu0 %v4853
    %4971 = vmatprep.subr.mxu0 0.0
    %4972 = vmatpush1.msra.mxu0 %v4854
    %4973 = vmatprep.subr.mxu0 0.0
    %4974 = vmatpush1.msra.mxu0 %v4855
    %4975 = vmatprep.subr.mxu0 0.0
    %4976 = vmatpush1.msra.mxu0 %v4856
    %4977 = vmatprep.subr.mxu0 0.0
    %4978 = vmatpush1.msra.mxu0 0.0
    %4979 = vmatprep.subr.mxu0 0.0
    %4980 = vmatpush1.msra.mxu0 0.0
    %4981 = vmatprep.subr.mxu0 0.0
    %4982 = vmatpush1.msra.mxu0 0.0
    %4983 = vmatprep.subr.mxu0 0.0
    %4984 = vmatpush1.msra.mxu0 0.0
    %4985 = vmatprep.subr.mxu0 0.0
    %4986 = vmatpush1.msra.mxu0 0.0
    %4987 = vmatprep.subr.mxu0 0.0
    %4988 = vmatpush1.msra.mxu0 0.0
    %4989 = vmatprep.subr.mxu0 0.0
    %4990 = vmatpush1.msra.mxu0 0.0
    %4991 = vmatprep.subr.mxu0 0.0
    %4992 = vmatpush1.msra.mxu0 0.0
    %4993 = vmatprep.subr.mxu0 0.0
    %4994 = vmatpush1.msra.mxu0 0.0
    %4995 = vmatprep.subr.mxu0 0.0
    %4996 = vmatpush1.msra.mxu0 0.0
    %4997 = vmatprep.subr.mxu0 0.0
    %4998 = vmatpush1.msra.mxu0 0.0
    %4999 = vmatprep.subr.mxu0 0.0
    %5000 = vmatpush1.msra.mxu0 0.0
    %5001 = vmatprep.subr.mxu0 0.0
    %5002 = vmatpush1.msra.mxu0 0.0
    %5003 = vmatprep.subr.mxu0 0.0
    %5004 = vmatpush1.msra.mxu0 0.0
    %5005 = vmatprep.subr.mxu0 0.0
    %5006 = vmatpush1.msra.mxu0 0.0
    %5007 = vmatprep.subr.mxu0 0.0
    %5008 = vmatpush1.msra.mxu0 0.0
    %5009 = vmatprep.subr.mxu0 0.0
    %5010 = vmatpush1.msra.mxu0 0.0
    %5011 = vmatprep.subr.mxu0 0.0
    %5012 = vmatpush1.msra.mxu0 0.0
    %5013 = vmatprep.subr.mxu0 0.0
    %5014 = vmatpush1.msra.mxu0 0.0
    %5015 = vmatprep.subr.mxu0 0.0
    %5016 = vmatpush1.msra.mxu0 0.0
    %5017 = vmatprep.subr.mxu0 0.0
    %5018 = vmatpush1.msra.mxu0 0.0
    %5019 = vmatprep.subr.mxu0 0.0
    %5020 = vmatpush1.msra.mxu0 0.0
    %5021 = vmatprep.subr.mxu0 0.0
    %5022 = vmatpush1.msra.mxu0 0.0
    %5023 = vmatprep.subr.mxu0 0.0
    %5024 = vmatpush1.msra.mxu0 0.0
    %5025 = vmatprep.subr.mxu0 0.0
    %5026 = vmatpush1.msra.mxu0 0.0
    %5027 = vmatprep.subr.mxu0 0.0
    %5028 = vmatpush1.msra.mxu0 0.0
    %5029 = vmatprep.subr.mxu0 0.0
    %5030 = vmatpush1.msra.mxu0 0.0
    %5031 = vmatprep.subr.mxu0 0.0
    %5032 = vmatpush1.msra.mxu0 0.0
    %5033 = vmatprep.mubr.f32.mxu0 0.0
    %5034 = vmatmul.mubr.f32.gmra.mrb[0].mxu0 %v4958
    %v5035 = vpop.f32.mrb[0].mxu0
    %v5036 = vadd.f32 %v4939, %v5035
    %v5037 = vpop.f32.mrb[0].mxu0
    %5038 = vmatprep.mubr.f32.mxu0 0.0
    %5039 = vmatmul.mubr.f32.gmra.mrb[0].mxu0 %v4961
    %v5040 = vpop.f32.mrb[0].mxu0
    %v5041 = vadd.f32 %v4944, %v5040
    %v5042 = vpop.f32.mrb[0].mxu0
    %5043 = vmatprep.mubr.f32.mxu0 0.0
    %5044 = vmatmul.mubr.f32.gmra.mrb[0].mxu0 %v4964
    %v5045 = vpop.f32.mrb[0].mxu0
    %v5046 = vadd.f32 %v4949, %v5045
    %v5047 = vpop.f32.mrb[0].mxu0
    %5048 = vmatprep.mubr.f32.mxu0 0.0
    %5049 = vmatmul.mubr.f32.gmra.mrb[0].mxu0 %v4967
    %v5050 = vpop.f32.mrb[0].mxu0
    %v5051 = vadd.f32 %v4954, %v5050
    %v5052 = vpop.f32.mrb[0].mxu0
    %5053 = vdwg.mxu0
    %v5055 = vlaneseq
    %v5056 = vshrl.u32 %v5055, 7
    %v5057 = vsub.s32 0, %v5056
    %v5058 = vrot.slane %v4863, %v5057
    %v5060 = vadd.f32 %v5036, %v5058
    %v5061 = vadd.f32 %v5041, %v5058
    %v5062 = vadd.f32 %v5046, %v5058
    %v5063 = vadd.f32 %v5051, %v5058
    %5064 = vmatprep.subr.mxu0 0.0
    %5065 = vmatpush1.msra.mxu0 %v4857
    %5066 = vmatprep.subr.mxu0 0.0
    %5067 = vmatpush1.msra.mxu0 %v4858
    %5068 = vmatprep.subr.mxu0 0.0
    %5069 = vmatpush1.msra.mxu0 %v4859
    %5070 = vmatprep.subr.mxu0 0.0
    %5071 = vmatpush1.msra.mxu0 %v4860
    %5072 = vmatprep.subr.mxu0 0.0
    %5073 = vmatpush1.msra.mxu0 0.0
    %5074 = vmatprep.subr.mxu0 0.0
    %5075 = vmatpush1.msra.mxu0 0.0
    %5076 = vmatprep.subr.mxu0 0.0
    %5077 = vmatpush1.msra.mxu0 0.0
    %5078 = vmatprep.subr.mxu0 0.0
    %5079 = vmatpush1.msra.mxu0 0.0
    %5080 = vmatprep.subr.mxu0 0.0
    %5081 = vmatpush1.msra.mxu0 0.0
    %5082 = vmatprep.subr.mxu0 0.0
    %5083 = vmatpush1.msra.mxu0 0.0
    %5084 = vmatprep.subr.mxu0 0.0
    %5085 = vmatpush1.msra.mxu0 0.0
    %5086 = vmatprep.subr.mxu0 0.0
    %5087 = vmatpush1.msra.mxu0 0.0
    %5088 = vmatprep.subr.mxu0 0.0
    %5089 = vmatpush1.msra.mxu0 0.0
    %5090 = vmatprep.subr.mxu0 0.0
    %5091 = vmatpush1.msra.mxu0 0.0
    %5092 = vmatprep.subr.mxu0 0.0
    %5093 = vmatpush1.msra.mxu0 0.0
    %5094 = vmatprep.subr.mxu0 0.0
    %5095 = vmatpush1.msra.mxu0 0.0
    %5096 = vmatprep.subr.mxu0 0.0
    %5097 = vmatpush1.msra.mxu0 0.0
    %5098 = vmatprep.subr.mxu0 0.0
    %5099 = vmatpush1.msra.mxu0 0.0
    %5100 = vmatprep.subr.mxu0 0.0
    %5101 = vmatpush1.msra.mxu0 0.0
    %5102 = vmatprep.subr.mxu0 0.0
    %5103 = vmatpush1.msra.mxu0 0.0
    %5104 = vmatprep.subr.mxu0 0.0
    %5105 = vmatpush1.msra.mxu0 0.0
    %5106 = vmatprep.subr.mxu0 0.0
    %5107 = vmatpush1.msra.mxu0 0.0
    %5108 = vmatprep.subr.mxu0 0.0
    %5109 = vmatpush1.msra.mxu0 0.0
    %5110 = vmatprep.subr.mxu0 0.0
    %5111 = vmatpush1.msra.mxu0 0.0
    %5112 = vmatprep.subr.mxu0 0.0
    %5113 = vmatpush1.msra.mxu0 0.0
    %5114 = vmatprep.subr.mxu0 0.0
    %5115 = vmatpush1.msra.mxu0 0.0
    %5116 = vmatprep.subr.mxu0 0.0
    %5117 = vmatpush1.msra.mxu0 0.0
    %5118 = vmatprep.subr.mxu0 0.0
    %5119 = vmatpush1.msra.mxu0 0.0
    %5120 = vmatprep.subr.mxu0 0.0
    %5121 = vmatpush1.msra.mxu0 0.0
    %5122 = vmatprep.subr.mxu0 0.0
    %5123 = vmatpush1.msra.mxu0 0.0
    %5124 = vmatprep.subr.mxu0 0.0
    %5125 = vmatpush1.msra.mxu0 0.0
    %5126 = vmatprep.subr.mxu0 0.0
    %5127 = vmatpush1.msra.mxu0 0.0
    %5128 = vmatprep.mubr.f32.mxu0 0.0
    %5129 = vmatmul.mubr.f32.gmra.mrb[0].mxu0 %v4958
    %v5130 = vpop.f32.mrb[0].mxu0
    %v5131 = vadd.f32 0.0, %v5130
    %v5132 = vpop.f32.mrb[0].mxu0
    %5133 = vmatprep.mubr.f32.mxu0 0.0
    %5134 = vmatmul.mubr.f32.gmra.mrb[0].mxu0 %v4961
    %v5135 = vpop.f32.mrb[0].mxu0
    %v5136 = vadd.f32 0.0, %v5135
    %v5137 = vpop.f32.mrb[0].mxu0
    %5138 = vmatprep.mubr.f32.mxu0 0.0
    %5139 = vmatmul.mubr.f32.gmra.mrb[0].mxu0 %v4964
    %v5140 = vpop.f32.mrb[0].mxu0
    %v5141 = vadd.f32 0.0, %v5140
    %v5142 = vpop.f32.mrb[0].mxu0
    %5143 = vmatprep.mubr.f32.mxu0 0.0
    %5144 = vmatmul.mubr.f32.gmra.mrb[0].mxu0 %v4967
    %v5145 = vpop.f32.mrb[0].mxu0
    %v5146 = vadd.f32 0.0, %v5145
    %v5147 = vpop.f32.mrb[0].mxu0
    %5148 = vdwg.mxu0
    %v5153 = vcombine.high %v5060, %v5060
    %v5155 = vunpack.c.l.s4 1966171168
    %v5156 = vunpack.c.0.s8 %v5155
    %v5157 = vlaneseq
    %v5158 = vshrl.u32 %v5157, 7
    %v5159 = vsub.s32 %v5156, %v5158
    %v5160 = vrot.slane %v5060, %v5159
    %v5162 = vunpack.c.l.s4 1966171168
    %v5163 = vunpack.c.0.s8 %v5162
    %v5164 = vlaneseq
    %v5165 = vshrl.u32 %v5164, 7
    %v5166 = vsub.s32 %v5163, %v5165
    %v5167 = vrot.slane %v5153, %v5166
    %v5168 = vcombine.high %v5160, %v5160
    %v5169 = vcombine.high %v5167, %v5167
    %v5171 = vunpack.c.l.s4 1966171168
    %v5172 = vunpack.c.0.s8 %v5171
    %v5173 = vlaneseq
    %v5174 = vshrl.u32 %v5173, 7
    %v5175 = vsub.s32 %v5172, %v5174
    %v5176 = vrot.slane %v5160, %v5175
    %v5178 = vunpack.c.l.s4 1966171168
    %v5179 = vunpack.c.0.s8 %v5178
    %v5180 = vlaneseq
    %v5181 = vshrl.u32 %v5180, 7
    %v5182 = vsub.s32 %v5179, %v5181
    %v5183 = vrot.slane %v5167, %v5182
    %v5185 = vunpack.c.l.s4 1966171168
    %v5186 = vunpack.c.0.s8 %v5185
    %v5187 = vlaneseq
    %v5188 = vshrl.u32 %v5187, 7
    %v5189 = vsub.s32 %v5186, %v5188
    %v5190 = vrot.slane %v5168, %v5189
    %v5192 = vunpack.c.l.s4 1966171168
    %v5193 = vunpack.c.0.s8 %v5192
    %v5194 = vlaneseq
    %v5195 = vshrl.u32 %v5194, 7
    %v5196 = vsub.s32 %v5193, %v5195
    %v5197 = vrot.slane %v5169, %v5196
    %v5198 = vcombine.high %v5176, %v5176
    %v5199 = vcombine.high %v5183, %v5183
    %v5200 = vcombine.high %v5190, %v5190
    %v5201 = vcombine.high %v5197, %v5197
    %v5202 = vcombine.high %v5061, %v5061
    %v5204 = vunpack.c.l.s4 1966171168
    %v5205 = vunpack.c.0.s8 %v5204
    %v5206 = vlaneseq
    %v5207 = vshrl.u32 %v5206, 7
    %v5208 = vsub.s32 %v5205, %v5207
    %v5209 = vrot.slane %v5061, %v5208
    %v5211 = vunpack.c.l.s4 1966171168
    %v5212 = vunpack.c.0.s8 %v5211
    %v5213 = vlaneseq
    %v5214 = vshrl.u32 %v5213, 7
    %v5215 = vsub.s32 %v5212, %v5214
    %v5216 = vrot.slane %v5202, %v5215
    %v5217 = vcombine.high %v5209, %v5209
    %v5218 = vcombine.high %v5216, %v5216
    %v5220 = vunpack.c.l.s4 1966171168
    %v5221 = vunpack.c.0.s8 %v5220
    %v5222 = vlaneseq
    %v5223 = vshrl.u32 %v5222, 7
    %v5224 = vsub.s32 %v5221, %v5223
    %v5225 = vrot.slane %v5209, %v5224
    %v5227 = vunpack.c.l.s4 1966171168
    %v5228 = vunpack.c.0.s8 %v5227
    %v5229 = vlaneseq
    %v5230 = vshrl.u32 %v5229, 7
    %v5231 = vsub.s32 %v5228, %v5230
    %v5232 = vrot.slane %v5216, %v5231
    %v5234 = vunpack.c.l.s4 1966171168
    %v5235 = vunpack.c.0.s8 %v5234
    %v5236 = vlaneseq
    %v5237 = vshrl.u32 %v5236, 7
    %v5238 = vsub.s32 %v5235, %v5237
    %v5239 = vrot.slane %v5217, %v5238
    %v5241 = vunpack.c.l.s4 1966171168
    %v5242 = vunpack.c.0.s8 %v5241
    %v5243 = vlaneseq
    %v5244 = vshrl.u32 %v5243, 7
    %v5245 = vsub.s32 %v5242, %v5244
    %v5246 = vrot.slane %v5218, %v5245
    %v5247 = vcombine.high %v5225, %v5225
    %v5248 = vcombine.high %v5232, %v5232
    %v5249 = vcombine.high %v5239, %v5239
    %v5250 = vcombine.high %v5246, %v5246
    %v5251 = vcombine.high %v5062, %v5062
    %v5253 = vunpack.c.l.s4 1966171168
    %v5254 = vunpack.c.0.s8 %v5253
    %v5255 = vlaneseq
    %v5256 = vshrl.u32 %v5255, 7
    %v5257 = vsub.s32 %v5254, %v5256
    %v5258 = vrot.slane %v5062, %v5257
    %v5260 = vunpack.c.l.s4 1966171168
    %v5261 = vunpack.c.0.s8 %v5260
    %v5262 = vlaneseq
    %v5263 = vshrl.u32 %v5262, 7
    %v5264 = vsub.s32 %v5261, %v5263
    %v5265 = vrot.slane %v5251, %v5264
    %v5266 = vcombine.high %v5258, %v5258
    %v5267 = vcombine.high %v5265, %v5265
    %v5269 = vunpack.c.l.s4 1966171168
    %v5270 = vunpack.c.0.s8 %v5269
    %v5271 = vlaneseq
    %v5272 = vshrl.u32 %v5271, 7
    %v5273 = vsub.s32 %v5270, %v5272
    %v5274 = vrot.slane %v5258, %v5273
    %v5276 = vunpack.c.l.s4 1966171168
    %v5277 = vunpack.c.0.s8 %v5276
    %v5278 = vlaneseq
    %v5279 = vshrl.u32 %v5278, 7
    %v5280 = vsub.s32 %v5277, %v5279
    %v5281 = vrot.slane %v5265, %v5280
    %v5283 = vunpack.c.l.s4 1966171168
    %v5284 = vunpack.c.0.s8 %v5283
    %v5285 = vlaneseq
    %v5286 = vshrl.u32 %v5285, 7
    %v5287 = vsub.s32 %v5284, %v5286
    %v5288 = vrot.slane %v5266, %v5287
    %v5290 = vunpack.c.l.s4 1966171168
    %v5291 = vunpack.c.0.s8 %v5290
    %v5292 = vlaneseq
    %v5293 = vshrl.u32 %v5292, 7
    %v5294 = vsub.s32 %v5291, %v5293
    %v5295 = vrot.slane %v5267, %v5294
    %v5296 = vcombine.high %v5274, %v5274
    %v5297 = vcombine.high %v5281, %v5281
    %v5298 = vcombine.high %v5288, %v5288
    %v5299 = vcombine.high %v5295, %v5295
    %v5300 = vcombine.high %v5063, %v5063
    %v5302 = vunpack.c.l.s4 1966171168
    %v5303 = vunpack.c.0.s8 %v5302
    %v5304 = vlaneseq
    %v5305 = vshrl.u32 %v5304, 7
    %v5306 = vsub.s32 %v5303, %v5305
    %v5307 = vrot.slane %v5063, %v5306
    %v5309 = vunpack.c.l.s4 1966171168
    %v5310 = vunpack.c.0.s8 %v5309
    %v5311 = vlaneseq
    %v5312 = vshrl.u32 %v5311, 7
    %v5313 = vsub.s32 %v5310, %v5312
    %v5314 = vrot.slane %v5300, %v5313
    %v5315 = vcombine.high %v5307, %v5307
    %v5316 = vcombine.high %v5314, %v5314
    %v5318 = vunpack.c.l.s4 1966171168
    %v5319 = vunpack.c.0.s8 %v5318
    %v5320 = vlaneseq
    %v5321 = vshrl.u32 %v5320, 7
    %v5322 = vsub.s32 %v5319, %v5321
    %v5323 = vrot.slane %v5307, %v5322
    %v5325 = vunpack.c.l.s4 1966171168
    %v5326 = vunpack.c.0.s8 %v5325
    %v5327 = vlaneseq
    %v5328 = vshrl.u32 %v5327, 7
    %v5329 = vsub.s32 %v5326, %v5328
    %v5330 = vrot.slane %v5314, %v5329
    %v5332 = vunpack.c.l.s4 1966171168
    %v5333 = vunpack.c.0.s8 %v5332
    %v5334 = vlaneseq
    %v5335 = vshrl.u32 %v5334, 7
    %v5336 = vsub.s32 %v5333, %v5335
    %v5337 = vrot.slane %v5315, %v5336
    %v5339 = vunpack.c.l.s4 1966171168
    %v5340 = vunpack.c.0.s8 %v5339
    %v5341 = vlaneseq
    %v5342 = vshrl.u32 %v5341, 7
    %v5343 = vsub.s32 %v5340, %v5342
    %v5344 = vrot.slane %v5316, %v5343
    %v5345 = vcombine.high %v5323, %v5323
    %v5346 = vcombine.high %v5330, %v5330
    %v5347 = vcombine.high %v5337, %v5337
    %v5348 = vcombine.high %v5344, %v5344
    %v5349 = vlaneseq
    %v5350 = vshrl.u32 %v5349, 7
    %v5351 = vsub.s32 0, %v5350
    %v5352 = vrot.slane %v5176, %v5351
    %v5353 = vlaneseq
    %v5354 = vshrl.u32 %v5353, 7
    %v5355 = vsub.s32 0, %v5354
    %v5356 = vrot.slane %v5190, %v5355
    %v5357 = vlaneseq
    %v5358 = vshrl.u32 %v5357, 7
    %v5359 = vsub.s32 0, %v5358
    %v5360 = vrot.slane %v5198, %v5359
    %v5361 = vlaneseq
    %v5362 = vshrl.u32 %v5361, 7
    %v5363 = vsub.s32 0, %v5362
    %v5364 = vrot.slane %v5200, %v5363
    %v5365 = vlaneseq
    %v5366 = vshrl.u32 %v5365, 7
    %v5367 = vsub.s32 0, %v5366
    %v5368 = vrot.slane %v5183, %v5367
    %v5369 = vlaneseq
    %v5370 = vshrl.u32 %v5369, 7
    %v5371 = vsub.s32 0, %v5370
    %v5372 = vrot.slane %v5197, %v5371
    %v5373 = vlaneseq
    %v5374 = vshrl.u32 %v5373, 7
    %v5375 = vsub.s32 0, %v5374
    %v5376 = vrot.slane %v5199, %v5375
    %v5377 = vlaneseq
    %v5378 = vshrl.u32 %v5377, 7
    %v5379 = vsub.s32 0, %v5378
    %v5380 = vrot.slane %v5201, %v5379
    %v5381 = vlaneseq
    %v5382 = vshrl.u32 %v5381, 7
    %v5383 = vsub.s32 0, %v5382
    %v5384 = vrot.slane %v5225, %v5383
    %v5385 = vlaneseq
    %v5386 = vshrl.u32 %v5385, 7
    %v5387 = vsub.s32 0, %v5386
    %v5388 = vrot.slane %v5239, %v5387
    %v5389 = vlaneseq
    %v5390 = vshrl.u32 %v5389, 7
    %v5391 = vsub.s32 0, %v5390
    %v5392 = vrot.slane %v5247, %v5391
    %v5393 = vlaneseq
    %v5394 = vshrl.u32 %v5393, 7
    %v5395 = vsub.s32 0, %v5394
    %v5396 = vrot.slane %v5249, %v5395
    %v5397 = vlaneseq
    %v5398 = vshrl.u32 %v5397, 7
    %v5399 = vsub.s32 0, %v5398
    %v5400 = vrot.slane %v5232, %v5399
    %v5401 = vlaneseq
    %v5402 = vshrl.u32 %v5401, 7
    %v5403 = vsub.s32 0, %v5402
    %v5404 = vrot.slane %v5246, %v5403
    %v5405 = vlaneseq
    %v5406 = vshrl.u32 %v5405, 7
    %v5407 = vsub.s32 0, %v5406
    %v5408 = vrot.slane %v5248, %v5407
    %v5409 = vlaneseq
    %v5410 = vshrl.u32 %v5409, 7
    %v5411 = vsub.s32 0, %v5410
    %v5412 = vrot.slane %v5250, %v5411
    %v5413 = vlaneseq
    %v5414 = vshrl.u32 %v5413, 7
    %v5415 = vsub.s32 0, %v5414
    %v5416 = vrot.slane %v5274, %v5415
    %v5417 = vlaneseq
    %v5418 = vshrl.u32 %v5417, 7
    %v5419 = vsub.s32 0, %v5418
    %v5420 = vrot.slane %v5288, %v5419
    %v5421 = vlaneseq
    %v5422 = vshrl.u32 %v5421, 7
    %v5423 = vsub.s32 0, %v5422
    %v5424 = vrot.slane %v5296, %v5423
    %v5425 = vlaneseq
    %v5426 = vshrl.u32 %v5425, 7
    %v5427 = vsub.s32 0, %v5426
    %v5428 = vrot.slane %v5298, %v5427
    %v5429 = vlaneseq
    %v5430 = vshrl.u32 %v5429, 7
    %v5431 = vsub.s32 0, %v5430
    %v5432 = vrot.slane %v5281, %v5431
    %v5433 = vlaneseq
    %v5434 = vshrl.u32 %v5433, 7
    %v5435 = vsub.s32 0, %v5434
    %v5436 = vrot.slane %v5295, %v5435
    %v5437 = vlaneseq
    %v5438 = vshrl.u32 %v5437, 7
    %v5439 = vsub.s32 0, %v5438
    %v5440 = vrot.slane %v5297, %v5439
    %v5441 = vlaneseq
    %v5442 = vshrl.u32 %v5441, 7
    %v5443 = vsub.s32 0, %v5442
    %v5444 = vrot.slane %v5299, %v5443
    %v5445 = vlaneseq
    %v5446 = vshrl.u32 %v5445, 7
    %v5447 = vsub.s32 0, %v5446
    %v5448 = vrot.slane %v5323, %v5447
    %v5449 = vlaneseq
    %v5450 = vshrl.u32 %v5449, 7
    %v5451 = vsub.s32 0, %v5450
    %v5452 = vrot.slane %v5337, %v5451
    %v5453 = vlaneseq
    %v5454 = vshrl.u32 %v5453, 7
    %v5455 = vsub.s32 0, %v5454
    %v5456 = vrot.slane %v5345, %v5455
    %v5457 = vlaneseq
    %v5458 = vshrl.u32 %v5457, 7
    %v5459 = vsub.s32 0, %v5458
    %v5460 = vrot.slane %v5347, %v5459
    %v5461 = vlaneseq
    %v5462 = vshrl.u32 %v5461, 7
    %v5463 = vsub.s32 0, %v5462
    %v5464 = vrot.slane %v5330, %v5463
    %v5465 = vlaneseq
    %v5466 = vshrl.u32 %v5465, 7
    %v5467 = vsub.s32 0, %v5466
    %v5468 = vrot.slane %v5344, %v5467
    %v5469 = vlaneseq
    %v5470 = vshrl.u32 %v5469, 7
    %v5471 = vsub.s32 0, %v5470
    %v5472 = vrot.slane %v5346, %v5471
    %v5473 = vlaneseq
    %v5474 = vshrl.u32 %v5473, 7
    %v5475 = vsub.s32 0, %v5474
    %v5476 = vrot.slane %v5348, %v5475
    %v5509 = vadd.f32 %v5352, %v5131
    %v5510 = vadd.f32 %v5352, %v5136
    %v5511 = vadd.f32 %v5352, %v5141
    %v5512 = vadd.f32 %v5352, %v5146
    %v5513 = vadd.f32 %v5356, %v5131
    %v5514 = vadd.f32 %v5356, %v5136
    %v5515 = vadd.f32 %v5356, %v5141
    %v5516 = vadd.f32 %v5356, %v5146
    %v5517 = vadd.f32 %v5360, %v5131
    %v5518 = vadd.f32 %v5360, %v5136
    %v5519 = vadd.f32 %v5360, %v5141
    %v5520 = vadd.f32 %v5360, %v5146
    %v5521 = vadd.f32 %v5364, %v5131
    %v5522 = vadd.f32 %v5364, %v5136
    %v5523 = vadd.f32 %v5364, %v5141
    %v5524 = vadd.f32 %v5364, %v5146
    %v5525 = vadd.f32 %v5368, %v5131
    %v5526 = vadd.f32 %v5368, %v5136
    %v5527 = vadd.f32 %v5368, %v5141
    %v5528 = vadd.f32 %v5368, %v5146
    %v5529 = vadd.f32 %v5372, %v5131
    %v5530 = vadd.f32 %v5372, %v5136
    %v5531 = vadd.f32 %v5372, %v5141
    %v5532 = vadd.f32 %v5372, %v5146
    %v5533 = vadd.f32 %v5376, %v5131
    %v5534 = vadd.f32 %v5376, %v5136
    %v5535 = vadd.f32 %v5376, %v5141
    %v5536 = vadd.f32 %v5376, %v5146
    %v5537 = vadd.f32 %v5380, %v5131
    %v5538 = vadd.f32 %v5380, %v5136
    %v5539 = vadd.f32 %v5380, %v5141
    %v5540 = vadd.f32 %v5380, %v5146
    %v5541 = vadd.f32 %v5384, %v5131
    %v5542 = vadd.f32 %v5384, %v5136
    %v5543 = vadd.f32 %v5384, %v5141
    %v5544 = vadd.f32 %v5384, %v5146
    %v5545 = vadd.f32 %v5388, %v5131
    %v5546 = vadd.f32 %v5388, %v5136
    %v5547 = vadd.f32 %v5388, %v5141
    %v5548 = vadd.f32 %v5388, %v5146
    %v5549 = vadd.f32 %v5392, %v5131
    %v5550 = vadd.f32 %v5392, %v5136
    %v5551 = vadd.f32 %v5392, %v5141
    %v5552 = vadd.f32 %v5392, %v5146
    %v5553 = vadd.f32 %v5396, %v5131
    %v5554 = vadd.f32 %v5396, %v5136
    %v5555 = vadd.f32 %v5396, %v5141
    %v5556 = vadd.f32 %v5396, %v5146
    %v5557 = vadd.f32 %v5400, %v5131
    %v5558 = vadd.f32 %v5400, %v5136
    %v5559 = vadd.f32 %v5400, %v5141
    %v5560 = vadd.f32 %v5400, %v5146
    %v5561 = vadd.f32 %v5404, %v5131
    %v5562 = vadd.f32 %v5404, %v5136
    %v5563 = vadd.f32 %v5404, %v5141
    %v5564 = vadd.f32 %v5404, %v5146
    %v5565 = vadd.f32 %v5408, %v5131
    %v5566 = vadd.f32 %v5408, %v5136
    %v5567 = vadd.f32 %v5408, %v5141
    %v5568 = vadd.f32 %v5408, %v5146
    %v5569 = vadd.f32 %v5412, %v5131
    %v5570 = vadd.f32 %v5412, %v5136
    %v5571 = vadd.f32 %v5412, %v5141
    %v5572 = vadd.f32 %v5412, %v5146
    %v5573 = vadd.f32 %v5416, %v5131
    %v5574 = vadd.f32 %v5416, %v5136
    %v5575 = vadd.f32 %v5416, %v5141
    %v5576 = vadd.f32 %v5416, %v5146
    %v5577 = vadd.f32 %v5420, %v5131
    %v5578 = vadd.f32 %v5420, %v5136
    %v5579 = vadd.f32 %v5420, %v5141
    %v5580 = vadd.f32 %v5420, %v5146
    %v5581 = vadd.f32 %v5424, %v5131
    %v5582 = vadd.f32 %v5424, %v5136
    %v5583 = vadd.f32 %v5424, %v5141
    %v5584 = vadd.f32 %v5424, %v5146
    %v5585 = vadd.f32 %v5428, %v5131
    %v5586 = vadd.f32 %v5428, %v5136
    %v5587 = vadd.f32 %v5428, %v5141
    %v5588 = vadd.f32 %v5428, %v5146
    %v5589 = vadd.f32 %v5432, %v5131
    %v5590 = vadd.f32 %v5432, %v5136
    %v5591 = vadd.f32 %v5432, %v5141
    %v5592 = vadd.f32 %v5432, %v5146
    %v5593 = vadd.f32 %v5436, %v5131
    %v5594 = vadd.f32 %v5436, %v5136
    %v5595 = vadd.f32 %v5436, %v5141
    %v5596 = vadd.f32 %v5436, %v5146
    %v5597 = vadd.f32 %v5440, %v5131
    %v5598 = vadd.f32 %v5440, %v5136
    %v5599 = vadd.f32 %v5440, %v5141
    %v5600 = vadd.f32 %v5440, %v5146
    %v5601 = vadd.f32 %v5444, %v5131
    %v5602 = vadd.f32 %v5444, %v5136
    %v5603 = vadd.f32 %v5444, %v5141
    %v5604 = vadd.f32 %v5444, %v5146
    %v5605 = vadd.f32 %v5448, %v5131
    %v5606 = vadd.f32 %v5448, %v5136
    %v5607 = vadd.f32 %v5448, %v5141
    %v5608 = vadd.f32 %v5448, %v5146
    %v5609 = vadd.f32 %v5452, %v5131
    %v5610 = vadd.f32 %v5452, %v5136
    %v5611 = vadd.f32 %v5452, %v5141
    %v5612 = vadd.f32 %v5452, %v5146
    %v5613 = vadd.f32 %v5456, %v5131
    %v5614 = vadd.f32 %v5456, %v5136
    %v5615 = vadd.f32 %v5456, %v5141
    %v5616 = vadd.f32 %v5456, %v5146
    %v5617 = vadd.f32 %v5460, %v5131
    %v5618 = vadd.f32 %v5460, %v5136
    %v5619 = vadd.f32 %v5460, %v5141
    %v5620 = vadd.f32 %v5460, %v5146
    %v5621 = vadd.f32 %v5464, %v5131
    %v5622 = vadd.f32 %v5464, %v5136
    %v5623 = vadd.f32 %v5464, %v5141
    %v5624 = vadd.f32 %v5464, %v5146
    %v5625 = vadd.f32 %v5468, %v5131
    %v5626 = vadd.f32 %v5468, %v5136
    %v5627 = vadd.f32 %v5468, %v5141
    %v5628 = vadd.f32 %v5468, %v5146
    %v5629 = vadd.f32 %v5472, %v5131
    %v5630 = vadd.f32 %v5472, %v5136
    %v5631 = vadd.f32 %v5472, %v5141
    %v5632 = vadd.f32 %v5472, %v5146
    %v5633 = vadd.f32 %v5476, %v5131
    %v5634 = vadd.f32 %v5476, %v5136
    %v5635 = vadd.f32 %v5476, %v5141
    %v5636 = vadd.f32 %v5476, %v5146
    %v5638 = vlaneseq
    %v5639 = vshrl.u32 %v5638, 7
    %v5640 = vsub.s32 0, %v5639
    %v5641 = vrot.slane %v4861, %v5640
    %v5643 = vmul.f32 %v1265, %v5641
    %v5644 = vmul.f32 %v1269, %v5641
    %v5645 = vmul.f32 %v1273, %v5641
    %v5646 = vmul.f32 %v1277, %v5641
    %v5647 = vmul.f32 %v1284, %v5641
    %v5648 = vmul.f32 %v1288, %v5641
    %v5649 = vmul.f32 %v1292, %v5641
    %v5650 = vmul.f32 %v1296, %v5641
    %v5651 = vmul.f32 %v1303, %v5641
    %v5652 = vmul.f32 %v1307, %v5641
    %v5653 = vmul.f32 %v1311, %v5641
    %v5654 = vmul.f32 %v1315, %v5641
    %v5655 = vmul.f32 %v1322, %v5641
    %v5656 = vmul.f32 %v1326, %v5641
    %v5657 = vmul.f32 %v1330, %v5641
    %v5658 = vmul.f32 %v1334, %v5641
    %v5659 = vmul.f32 %v1341, %v5641
    %v5660 = vmul.f32 %v1345, %v5641
    %v5661 = vmul.f32 %v1349, %v5641
    %v5662 = vmul.f32 %v1353, %v5641
    %v5663 = vmul.f32 %v1360, %v5641
    %v5664 = vmul.f32 %v1364, %v5641
    %v5665 = vmul.f32 %v1368, %v5641
    %v5666 = vmul.f32 %v1372, %v5641
    %v5667 = vmul.f32 %v1379, %v5641
    %v5668 = vmul.f32 %v1383, %v5641
    %v5669 = vmul.f32 %v1387, %v5641
    %v5670 = vmul.f32 %v1391, %v5641
    %v5671 = vmul.f32 %v1398, %v5641
    %v5672 = vmul.f32 %v1402, %v5641
    %v5673 = vmul.f32 %v1406, %v5641
    %v5674 = vmul.f32 %v1410, %v5641
    %v5675 = vmul.f32 %v1417, %v5641
    %v5676 = vmul.f32 %v1421, %v5641
    %v5677 = vmul.f32 %v1425, %v5641
    %v5678 = vmul.f32 %v1429, %v5641
    %v5679 = vmul.f32 %v1436, %v5641
    %v5680 = vmul.f32 %v1440, %v5641
    %v5681 = vmul.f32 %v1444, %v5641
    %v5682 = vmul.f32 %v1448, %v5641
    %v5683 = vmul.f32 %v1455, %v5641
    %v5684 = vmul.f32 %v1459, %v5641
    %v5685 = vmul.f32 %v1463, %v5641
    %v5686 = vmul.f32 %v1467, %v5641
    %v5687 = vmul.f32 %v1474, %v5641
    %v5688 = vmul.f32 %v1478, %v5641
    %v5689 = vmul.f32 %v1482, %v5641
    %v5690 = vmul.f32 %v1486, %v5641
    %v5691 = vmul.f32 %v1493, %v5641
    %v5692 = vmul.f32 %v1497, %v5641
    %v5693 = vmul.f32 %v1501, %v5641
    %v5694 = vmul.f32 %v1505, %v5641
    %v5695 = vmul.f32 %v1512, %v5641
    %v5696 = vmul.f32 %v1516, %v5641
    %v5697 = vmul.f32 %v1520, %v5641
    %v5698 = vmul.f32 %v1524, %v5641
    %v5699 = vmul.f32 %v1531, %v5641
    %v5700 = vmul.f32 %v1535, %v5641
    %v5701 = vmul.f32 %v1539, %v5641
    %v5702 = vmul.f32 %v1543, %v5641
    %v5703 = vmul.f32 %v1550, %v5641
    %v5704 = vmul.f32 %v1554, %v5641
    %v5705 = vmul.f32 %v1558, %v5641
    %v5706 = vmul.f32 %v1562, %v5641
    %v5707 = vmul.f32 %v1569, %v5641
    %v5708 = vmul.f32 %v1573, %v5641
    %v5709 = vmul.f32 %v1577, %v5641
    %v5710 = vmul.f32 %v1581, %v5641
    %v5711 = vmul.f32 %v1588, %v5641
    %v5712 = vmul.f32 %v1592, %v5641
    %v5713 = vmul.f32 %v1596, %v5641
    %v5714 = vmul.f32 %v1600, %v5641
    %v5715 = vmul.f32 %v1607, %v5641
    %v5716 = vmul.f32 %v1611, %v5641
    %v5717 = vmul.f32 %v1615, %v5641
    %v5718 = vmul.f32 %v1619, %v5641
    %v5719 = vmul.f32 %v1626, %v5641
    %v5720 = vmul.f32 %v1630, %v5641
    %v5721 = vmul.f32 %v1634, %v5641
    %v5722 = vmul.f32 %v1638, %v5641
    %v5723 = vmul.f32 %v1645, %v5641
    %v5724 = vmul.f32 %v1649, %v5641
    %v5725 = vmul.f32 %v1653, %v5641
    %v5726 = vmul.f32 %v1657, %v5641
    %v5727 = vmul.f32 %v1664, %v5641
    %v5728 = vmul.f32 %v1668, %v5641
    %v5729 = vmul.f32 %v1672, %v5641
    %v5730 = vmul.f32 %v1676, %v5641
    %v5731 = vmul.f32 %v1683, %v5641
    %v5732 = vmul.f32 %v1687, %v5641
    %v5733 = vmul.f32 %v1691, %v5641
    %v5734 = vmul.f32 %v1695, %v5641
    %v5735 = vmul.f32 %v1702, %v5641
    %v5736 = vmul.f32 %v1706, %v5641
    %v5737 = vmul.f32 %v1710, %v5641
    %v5738 = vmul.f32 %v1714, %v5641
    %v5739 = vmul.f32 %v1721, %v5641
    %v5740 = vmul.f32 %v1725, %v5641
    %v5741 = vmul.f32 %v1729, %v5641
    %v5742 = vmul.f32 %v1733, %v5641
    %v5743 = vmul.f32 %v1740, %v5641
    %v5744 = vmul.f32 %v1744, %v5641
    %v5745 = vmul.f32 %v1748, %v5641
    %v5746 = vmul.f32 %v1752, %v5641
    %v5747 = vmul.f32 %v1759, %v5641
    %v5748 = vmul.f32 %v1763, %v5641
    %v5749 = vmul.f32 %v1767, %v5641
    %v5750 = vmul.f32 %v1771, %v5641
    %v5751 = vmul.f32 %v1778, %v5641
    %v5752 = vmul.f32 %v1782, %v5641
    %v5753 = vmul.f32 %v1786, %v5641
    %v5754 = vmul.f32 %v1790, %v5641
    %v5755 = vmul.f32 %v1797, %v5641
    %v5756 = vmul.f32 %v1801, %v5641
    %v5757 = vmul.f32 %v1805, %v5641
    %v5758 = vmul.f32 %v1809, %v5641
    %v5759 = vmul.f32 %v1816, %v5641
    %v5760 = vmul.f32 %v1820, %v5641
    %v5761 = vmul.f32 %v1824, %v5641
    %v5762 = vmul.f32 %v1828, %v5641
    %v5763 = vmul.f32 %v1835, %v5641
    %v5764 = vmul.f32 %v1839, %v5641
    %v5765 = vmul.f32 %v1843, %v5641
    %v5766 = vmul.f32 %v1847, %v5641
    %v5767 = vmul.f32 %v1854, %v5641
    %v5768 = vmul.f32 %v1858, %v5641
    %v5769 = vmul.f32 %v1862, %v5641
    %v5770 = vmul.f32 %v1866, %v5641
    %v5771 = vadd.f32 %v5509, %v5643
    %v5772 = vadd.f32 %v5510, %v5644
    %v5773 = vadd.f32 %v5511, %v5645
    %v5774 = vadd.f32 %v5512, %v5646
    %v5775 = vadd.f32 %v5513, %v5647
    %v5776 = vadd.f32 %v5514, %v5648
    %v5777 = vadd.f32 %v5515, %v5649
    %v5778 = vadd.f32 %v5516, %v5650
    %v5779 = vadd.f32 %v5517, %v5651
    %v5780 = vadd.f32 %v5518, %v5652
    %v5781 = vadd.f32 %v5519, %v5653
    %v5782 = vadd.f32 %v5520, %v5654
    %v5783 = vadd.f32 %v5521, %v5655
    %v5784 = vadd.f32 %v5522, %v5656
    %v5785 = vadd.f32 %v5523, %v5657
    %v5786 = vadd.f32 %v5524, %v5658
    %v5787 = vadd.f32 %v5525, %v5659
    %v5788 = vadd.f32 %v5526, %v5660
    %v5789 = vadd.f32 %v5527, %v5661
    %v5790 = vadd.f32 %v5528, %v5662
    %v5791 = vadd.f32 %v5529, %v5663
    %v5792 = vadd.f32 %v5530, %v5664
    %v5793 = vadd.f32 %v5531, %v5665
    %v5794 = vadd.f32 %v5532, %v5666
    %v5795 = vadd.f32 %v5533, %v5667
    %v5796 = vadd.f32 %v5534, %v5668
    %v5797 = vadd.f32 %v5535, %v5669
    %v5798 = vadd.f32 %v5536, %v5670
    %v5799 = vadd.f32 %v5537, %v5671
    %v5800 = vadd.f32 %v5538, %v5672
    %v5801 = vadd.f32 %v5539, %v5673
    %v5802 = vadd.f32 %v5540, %v5674
    %v5803 = vadd.f32 %v5541, %v5675
    %v5804 = vadd.f32 %v5542, %v5676
    %v5805 = vadd.f32 %v5543, %v5677
    %v5806 = vadd.f32 %v5544, %v5678
    %v5807 = vadd.f32 %v5545, %v5679
    %v5808 = vadd.f32 %v5546, %v5680
    %v5809 = vadd.f32 %v5547, %v5681
    %v5810 = vadd.f32 %v5548, %v5682
    %v5811 = vadd.f32 %v5549, %v5683
    %v5812 = vadd.f32 %v5550, %v5684
    %v5813 = vadd.f32 %v5551, %v5685
    %v5814 = vadd.f32 %v5552, %v5686
    %v5815 = vadd.f32 %v5553, %v5687
    %v5816 = vadd.f32 %v5554, %v5688
    %v5817 = vadd.f32 %v5555, %v5689
    %v5818 = vadd.f32 %v5556, %v5690
    %v5819 = vadd.f32 %v5557, %v5691
    %v5820 = vadd.f32 %v5558, %v5692
    %v5821 = vadd.f32 %v5559, %v5693
    %v5822 = vadd.f32 %v5560, %v5694
    %v5823 = vadd.f32 %v5561, %v5695
    %v5824 = vadd.f32 %v5562, %v5696
    %v5825 = vadd.f32 %v5563, %v5697
    %v5826 = vadd.f32 %v5564, %v5698
    %v5827 = vadd.f32 %v5565, %v5699
    %v5828 = vadd.f32 %v5566, %v5700
    %v5829 = vadd.f32 %v5567, %v5701
    %v5830 = vadd.f32 %v5568, %v5702
    %v5831 = vadd.f32 %v5569, %v5703
    %v5832 = vadd.f32 %v5570, %v5704
    %v5833 = vadd.f32 %v5571, %v5705
    %v5834 = vadd.f32 %v5572, %v5706
    %v5835 = vadd.f32 %v5573, %v5707
    %v5836 = vadd.f32 %v5574, %v5708
    %v5837 = vadd.f32 %v5575, %v5709
    %v5838 = vadd.f32 %v5576, %v5710
    %v5839 = vadd.f32 %v5577, %v5711
    %v5840 = vadd.f32 %v5578, %v5712
    %v5841 = vadd.f32 %v5579, %v5713
    %v5842 = vadd.f32 %v5580, %v5714
    %v5843 = vadd.f32 %v5581, %v5715
    %v5844 = vadd.f32 %v5582, %v5716
    %v5845 = vadd.f32 %v5583, %v5717
    %v5846 = vadd.f32 %v5584, %v5718
    %v5847 = vadd.f32 %v5585, %v5719
    %v5848 = vadd.f32 %v5586, %v5720
    %v5849 = vadd.f32 %v5587, %v5721
    %v5850 = vadd.f32 %v5588, %v5722
    %v5851 = vadd.f32 %v5589, %v5723
    %v5852 = vadd.f32 %v5590, %v5724
    %v5853 = vadd.f32 %v5591, %v5725
    %v5854 = vadd.f32 %v5592, %v5726
    %v5855 = vadd.f32 %v5593, %v5727
    %v5856 = vadd.f32 %v5594, %v5728
    %v5857 = vadd.f32 %v5595, %v5729
    %v5858 = vadd.f32 %v5596, %v5730
    %v5859 = vadd.f32 %v5597, %v5731
    %v5860 = vadd.f32 %v5598, %v5732
    %v5861 = vadd.f32 %v5599, %v5733
    %v5862 = vadd.f32 %v5600, %v5734
    %v5863 = vadd.f32 %v5601, %v5735
    %v5864 = vadd.f32 %v5602, %v5736
    %v5865 = vadd.f32 %v5603, %v5737
    %v5866 = vadd.f32 %v5604, %v5738
    %v5867 = vadd.f32 %v5605, %v5739
    %v5868 = vadd.f32 %v5606, %v5740
    %v5869 = vadd.f32 %v5607, %v5741
    %v5870 = vadd.f32 %v5608, %v5742
    %v5871 = vadd.f32 %v5609, %v5743
    %v5872 = vadd.f32 %v5610, %v5744
    %v5873 = vadd.f32 %v5611, %v5745
    %v5874 = vadd.f32 %v5612, %v5746
    %v5875 = vadd.f32 %v5613, %v5747
    %v5876 = vadd.f32 %v5614, %v5748
    %v5877 = vadd.f32 %v5615, %v5749
    %v5878 = vadd.f32 %v5616, %v5750
    %v5879 = vadd.f32 %v5617, %v5751
    %v5880 = vadd.f32 %v5618, %v5752
    %v5881 = vadd.f32 %v5619, %v5753
    %v5882 = vadd.f32 %v5620, %v5754
    %v5883 = vadd.f32 %v5621, %v5755
    %v5884 = vadd.f32 %v5622, %v5756
    %v5885 = vadd.f32 %v5623, %v5757
    %v5886 = vadd.f32 %v5624, %v5758
    %v5887 = vadd.f32 %v5625, %v5759
    %v5888 = vadd.f32 %v5626, %v5760
    %v5889 = vadd.f32 %v5627, %v5761
    %v5890 = vadd.f32 %v5628, %v5762
    %v5891 = vadd.f32 %v5629, %v5763
    %v5892 = vadd.f32 %v5630, %v5764
    %v5893 = vadd.f32 %v5631, %v5765
    %v5894 = vadd.f32 %v5632, %v5766
    %v5895 = vadd.f32 %v5633, %v5767
    %v5896 = vadd.f32 %v5634, %v5768
    %v5897 = vadd.f32 %v5635, %v5769
    %v5898 = vadd.f32 %v5636, %v5770
    %v5899 = vxor.u32 %v5771, 2147483648
    %v5900 = vxor.u32 %v5772, 2147483648
    %v5901 = vxor.u32 %v5773, 2147483648
    %v5902 = vxor.u32 %v5774, 2147483648
    %v5903 = vxor.u32 %v5775, 2147483648
    %v5904 = vxor.u32 %v5776, 2147483648
    %v5905 = vxor.u32 %v5777, 2147483648
    %v5906 = vxor.u32 %v5778, 2147483648
    %v5907 = vxor.u32 %v5779, 2147483648
    %v5908 = vxor.u32 %v5780, 2147483648
    %v5909 = vxor.u32 %v5781, 2147483648
    %v5910 = vxor.u32 %v5782, 2147483648
    %v5911 = vxor.u32 %v5783, 2147483648
    %v5912 = vxor.u32 %v5784, 2147483648
    %v5913 = vxor.u32 %v5785, 2147483648
    %v5914 = vxor.u32 %v5786, 2147483648
    %v5915 = vxor.u32 %v5787, 2147483648
    %v5916 = vxor.u32 %v5788, 2147483648
    %v5917 = vxor.u32 %v5789, 2147483648
    %v5918 = vxor.u32 %v5790, 2147483648
    %v5919 = vxor.u32 %v5791, 2147483648
    %v5920 = vxor.u32 %v5792, 2147483648
    %v5921 = vxor.u32 %v5793, 2147483648
    %v5922 = vxor.u32 %v5794, 2147483648
    %v5923 = vxor.u32 %v5795, 2147483648
    %v5924 = vxor.u32 %v5796, 2147483648
    %v5925 = vxor.u32 %v5797, 2147483648
    %v5926 = vxor.u32 %v5798, 2147483648
    %v5927 = vxor.u32 %v5799, 2147483648
    %v5928 = vxor.u32 %v5800, 2147483648
    %v5929 = vxor.u32 %v5801, 2147483648
    %v5930 = vxor.u32 %v5802, 2147483648
    %v5931 = vxor.u32 %v5803, 2147483648
    %v5932 = vxor.u32 %v5804, 2147483648
    %v5933 = vxor.u32 %v5805, 2147483648
    %v5934 = vxor.u32 %v5806, 2147483648
    %v5935 = vxor.u32 %v5807, 2147483648
    %v5936 = vxor.u32 %v5808, 2147483648
    %v5937 = vxor.u32 %v5809, 2147483648
    %v5938 = vxor.u32 %v5810, 2147483648
    %v5939 = vxor.u32 %v5811, 2147483648
    %v5940 = vxor.u32 %v5812, 2147483648
    %v5941 = vxor.u32 %v5813, 2147483648
    %v5942 = vxor.u32 %v5814, 2147483648
    %v5943 = vxor.u32 %v5815, 2147483648
    %v5944 = vxor.u32 %v5816, 2147483648
    %v5945 = vxor.u32 %v5817, 2147483648
    %v5946 = vxor.u32 %v5818, 2147483648
    %v5947 = vxor.u32 %v5819, 2147483648
    %v5948 = vxor.u32 %v5820, 2147483648
    %v5949 = vxor.u32 %v5821, 2147483648
    %v5950 = vxor.u32 %v5822, 2147483648
    %v5951 = vxor.u32 %v5823, 2147483648
    %v5952 = vxor.u32 %v5824, 2147483648
    %v5953 = vxor.u32 %v5825, 2147483648
    %v5954 = vxor.u32 %v5826, 2147483648
    %v5955 = vxor.u32 %v5827, 2147483648
    %v5956 = vxor.u32 %v5828, 2147483648
    %v5957 = vxor.u32 %v5829, 2147483648
    %v5958 = vxor.u32 %v5830, 2147483648
    %v5959 = vxor.u32 %v5831, 2147483648
    %v5960 = vxor.u32 %v5832, 2147483648
    %v5961 = vxor.u32 %v5833, 2147483648
    %v5962 = vxor.u32 %v5834, 2147483648
    %v5963 = vxor.u32 %v5835, 2147483648
    %v5964 = vxor.u32 %v5836, 2147483648
    %v5965 = vxor.u32 %v5837, 2147483648
    %v5966 = vxor.u32 %v5838, 2147483648
    %v5967 = vxor.u32 %v5839, 2147483648
    %v5968 = vxor.u32 %v5840, 2147483648
    %v5969 = vxor.u32 %v5841, 2147483648
    %v5970 = vxor.u32 %v5842, 2147483648
    %v5971 = vxor.u32 %v5843, 2147483648
    %v5972 = vxor.u32 %v5844, 2147483648
    %v5973 = vxor.u32 %v5845, 2147483648
    %v5974 = vxor.u32 %v5846, 2147483648
    %v5975 = vxor.u32 %v5847, 2147483648
    %v5976 = vxor.u32 %v5848, 2147483648
    %v5977 = vxor.u32 %v5849, 2147483648
    %v5978 = vxor.u32 %v5850, 2147483648
    %v5979 = vxor.u32 %v5851, 2147483648
    %v5980 = vxor.u32 %v5852, 2147483648
    %v5981 = vxor.u32 %v5853, 2147483648
    %v5982 = vxor.u32 %v5854, 2147483648
    %v5983 = vxor.u32 %v5855, 2147483648
    %v5984 = vxor.u32 %v5856, 2147483648
    %v5985 = vxor.u32 %v5857, 2147483648
    %v5986 = vxor.u32 %v5858, 2147483648
    %v5987 = vxor.u32 %v5859, 2147483648
    %v5988 = vxor.u32 %v5860, 2147483648
    %v5989 = vxor.u32 %v5861, 2147483648
    %v5990 = vxor.u32 %v5862, 2147483648
    %v5991 = vxor.u32 %v5863, 2147483648
    %v5992 = vxor.u32 %v5864, 2147483648
    %v5993 = vxor.u32 %v5865, 2147483648
    %v5994 = vxor.u32 %v5866, 2147483648
    %v5995 = vxor.u32 %v5867, 2147483648
    %v5996 = vxor.u32 %v5868, 2147483648
    %v5997 = vxor.u32 %v5869, 2147483648
    %v5998 = vxor.u32 %v5870, 2147483648
    %v5999 = vxor.u32 %v5871, 2147483648
    %v6000 = vxor.u32 %v5872, 2147483648
    %v6001 = vxor.u32 %v5873, 2147483648
    %v6002 = vxor.u32 %v5874, 2147483648
    %v6003 = vxor.u32 %v5875, 2147483648
    %v6004 = vxor.u32 %v5876, 2147483648
    %v6005 = vxor.u32 %v5877, 2147483648
    %v6006 = vxor.u32 %v5878, 2147483648
    %v6007 = vxor.u32 %v5879, 2147483648
    %v6008 = vxor.u32 %v5880, 2147483648
    %v6009 = vxor.u32 %v5881, 2147483648
    %v6010 = vxor.u32 %v5882, 2147483648
    %v6011 = vxor.u32 %v5883, 2147483648
    %v6012 = vxor.u32 %v5884, 2147483648
    %v6013 = vxor.u32 %v5885, 2147483648
    %v6014 = vxor.u32 %v5886, 2147483648
    %v6015 = vxor.u32 %v5887, 2147483648
    %v6016 = vxor.u32 %v5888, 2147483648
    %v6017 = vxor.u32 %v5889, 2147483648
    %v6018 = vxor.u32 %v5890, 2147483648
    %v6019 = vxor.u32 %v5891, 2147483648
    %v6020 = vxor.u32 %v5892, 2147483648
    %v6021 = vxor.u32 %v5893, 2147483648
    %v6022 = vxor.u32 %v5894, 2147483648
    %v6023 = vxor.u32 %v5895, 2147483648
    %v6024 = vxor.u32 %v5896, 2147483648
    %v6025 = vxor.u32 %v5897, 2147483648
    %v6026 = vxor.u32 %v5898, 2147483648
    %v6027 = vmul.f32 %v5899, 1.442695
    %v6028 = vpow.pop %v6027
    %v6029 = vmul.f32 %v5900, 1.442695
    %v6030 = vpow.pop %v6029
    %v6031 = vmul.f32 %v5901, 1.442695
    %v6032 = vpow.pop %v6031
    %v6033 = vmul.f32 %v5902, 1.442695
    %v6034 = vpow.pop %v6033
    %v6035 = vmul.f32 %v5903, 1.442695
    %v6036 = vpow.pop %v6035
    %v6037 = vmul.f32 %v5904, 1.442695
    %v6038 = vpow.pop %v6037
    %v6039 = vmul.f32 %v5905, 1.442695
    %v6040 = vpow.pop %v6039
    %v6041 = vmul.f32 %v5906, 1.442695
    %v6042 = vpow.pop %v6041
    %v6043 = vmul.f32 %v5907, 1.442695
    %v6044 = vpow.pop %v6043
    %v6045 = vmul.f32 %v5908, 1.442695
    %v6046 = vpow.pop %v6045
    %v6047 = vmul.f32 %v5909, 1.442695
    %v6048 = vpow.pop %v6047
    %v6049 = vmul.f32 %v5910, 1.442695
    %v6050 = vpow.pop %v6049
    %v6051 = vmul.f32 %v5911, 1.442695
    %v6052 = vpow.pop %v6051
    %v6053 = vmul.f32 %v5912, 1.442695
    %v6054 = vpow.pop %v6053
    %v6055 = vmul.f32 %v5913, 1.442695
    %v6056 = vpow.pop %v6055
    %v6057 = vmul.f32 %v5914, 1.442695
    %v6058 = vpow.pop %v6057
    %v6059 = vmul.f32 %v5915, 1.442695
    %v6060 = vpow.pop %v6059
    %v6061 = vmul.f32 %v5916, 1.442695
    %v6062 = vpow.pop %v6061
    %v6063 = vmul.f32 %v5917, 1.442695
    %v6064 = vpow.pop %v6063
    %v6065 = vmul.f32 %v5918, 1.442695
    %v6066 = vpow.pop %v6065
    %v6067 = vmul.f32 %v5919, 1.442695
    %v6068 = vpow.pop %v6067
    %v6069 = vmul.f32 %v5920, 1.442695
    %v6070 = vpow.pop %v6069
    %v6071 = vmul.f32 %v5921, 1.442695
    %v6072 = vpow.pop %v6071
    %v6073 = vmul.f32 %v5922, 1.442695
    %v6074 = vpow.pop %v6073
    %v6075 = vmul.f32 %v5923, 1.442695
    %v6076 = vpow.pop %v6075
    %v6077 = vmul.f32 %v5924, 1.442695
    %v6078 = vpow.pop %v6077
    %v6079 = vmul.f32 %v5925, 1.442695
    %v6080 = vpow.pop %v6079
    %v6081 = vmul.f32 %v5926, 1.442695
    %v6082 = vpow.pop %v6081
    %v6083 = vmul.f32 %v5927, 1.442695
    %v6084 = vpow.pop %v6083
    %v6085 = vmul.f32 %v5928, 1.442695
    %v6086 = vpow.pop %v6085
    %v6087 = vmul.f32 %v5929, 1.442695
    %v6088 = vpow.pop %v6087
    %v6089 = vmul.f32 %v5930, 1.442695
    %v6090 = vpow.pop %v6089
    %v6091 = vmul.f32 %v5931, 1.442695
    %v6092 = vpow.pop %v6091
    %v6093 = vmul.f32 %v5932, 1.442695
    %v6094 = vpow.pop %v6093
    %v6095 = vmul.f32 %v5933, 1.442695
    %v6096 = vpow.pop %v6095
    %v6097 = vmul.f32 %v5934, 1.442695
    %v6098 = vpow.pop %v6097
    %v6099 = vmul.f32 %v5935, 1.442695
    %v6100 = vpow.pop %v6099
    %v6101 = vmul.f32 %v5936, 1.442695
    %v6102 = vpow.pop %v6101
    %v6103 = vmul.f32 %v5937, 1.442695
    %v6104 = vpow.pop %v6103
    %v6105 = vmul.f32 %v5938, 1.442695
    %v6106 = vpow.pop %v6105
    %v6107 = vmul.f32 %v5939, 1.442695
    %v6108 = vpow.pop %v6107
    %v6109 = vmul.f32 %v5940, 1.442695
    %v6110 = vpow.pop %v6109
    %v6111 = vmul.f32 %v5941, 1.442695
    %v6112 = vpow.pop %v6111
    %v6113 = vmul.f32 %v5942, 1.442695
    %v6114 = vpow.pop %v6113
    %v6115 = vmul.f32 %v5943, 1.442695
    %v6116 = vpow.pop %v6115
    %v6117 = vmul.f32 %v5944, 1.442695
    %v6118 = vpow.pop %v6117
    %v6119 = vmul.f32 %v5945, 1.442695
    %v6120 = vpow.pop %v6119
    %v6121 = vmul.f32 %v5946, 1.442695
    %v6122 = vpow.pop %v6121
    %v6123 = vmul.f32 %v5947, 1.442695
    %v6124 = vpow.pop %v6123
    %v6125 = vmul.f32 %v5948, 1.442695
    %v6126 = vpow.pop %v6125
    %v6127 = vmul.f32 %v5949, 1.442695
    %v6128 = vpow.pop %v6127
    %v6129 = vmul.f32 %v5950, 1.442695
    %v6130 = vpow.pop %v6129
    %v6131 = vmul.f32 %v5951, 1.442695
    %v6132 = vpow.pop %v6131
    %v6133 = vmul.f32 %v5952, 1.442695
    %v6134 = vpow.pop %v6133
    %v6135 = vmul.f32 %v5953, 1.442695
    %v6136 = vpow.pop %v6135
    %v6137 = vmul.f32 %v5954, 1.442695
    %v6138 = vpow.pop %v6137
    %v6139 = vmul.f32 %v5955, 1.442695
    %v6140 = vpow.pop %v6139
    %v6141 = vmul.f32 %v5956, 1.442695
    %v6142 = vpow.pop %v6141
    %v6143 = vmul.f32 %v5957, 1.442695
    %v6144 = vpow.pop %v6143
    %v6145 = vmul.f32 %v5958, 1.442695
    %v6146 = vpow.pop %v6145
    %v6147 = vmul.f32 %v5959, 1.442695
    %v6148 = vpow.pop %v6147
    %v6149 = vmul.f32 %v5960, 1.442695
    %v6150 = vpow.pop %v6149
    %v6151 = vmul.f32 %v5961, 1.442695
    %v6152 = vpow.pop %v6151
    %v6153 = vmul.f32 %v5962, 1.442695
    %v6154 = vpow.pop %v6153
    %v6155 = vmul.f32 %v5963, 1.442695
    %v6156 = vpow.pop %v6155
    %v6157 = vmul.f32 %v5964, 1.442695
    %v6158 = vpow.pop %v6157
    %v6159 = vmul.f32 %v5965, 1.442695
    %v6160 = vpow.pop %v6159
    %v6161 = vmul.f32 %v5966, 1.442695
    %v6162 = vpow.pop %v6161
    %v6163 = vmul.f32 %v5967, 1.442695
    %v6164 = vpow.pop %v6163
    %v6165 = vmul.f32 %v5968, 1.442695
    %v6166 = vpow.pop %v6165
    %v6167 = vmul.f32 %v5969, 1.442695
    %v6168 = vpow.pop %v6167
    %v6169 = vmul.f32 %v5970, 1.442695
    %v6170 = vpow.pop %v6169
    %v6171 = vmul.f32 %v5971, 1.442695
    %v6172 = vpow.pop %v6171
    %v6173 = vmul.f32 %v5972, 1.442695
    %v6174 = vpow.pop %v6173
    %v6175 = vmul.f32 %v5973, 1.442695
    %v6176 = vpow.pop %v6175
    %v6177 = vmul.f32 %v5974, 1.442695
    %v6178 = vpow.pop %v6177
    %v6179 = vmul.f32 %v5975, 1.442695
    %v6180 = vpow.pop %v6179
    %v6181 = vmul.f32 %v5976, 1.442695
    %v6182 = vpow.pop %v6181
    %v6183 = vmul.f32 %v5977, 1.442695
    %v6184 = vpow.pop %v6183
    %v6185 = vmul.f32 %v5978, 1.442695
    %v6186 = vpow.pop %v6185
    %v6187 = vmul.f32 %v5979, 1.442695
    %v6188 = vpow.pop %v6187
    %v6189 = vmul.f32 %v5980, 1.442695
    %v6190 = vpow.pop %v6189
    %v6191 = vmul.f32 %v5981, 1.442695
    %v6192 = vpow.pop %v6191
    %v6193 = vmul.f32 %v5982, 1.442695
    %v6194 = vpow.pop %v6193
    %v6195 = vmul.f32 %v5983, 1.442695
    %v6196 = vpow.pop %v6195
    %v6197 = vmul.f32 %v5984, 1.442695
    %v6198 = vpow.pop %v6197
    %v6199 = vmul.f32 %v5985, 1.442695
    %v6200 = vpow.pop %v6199
    %v6201 = vmul.f32 %v5986, 1.442695
    %v6202 = vpow.pop %v6201
    %v6203 = vmul.f32 %v5987, 1.442695
    %v6204 = vpow.pop %v6203
    %v6205 = vmul.f32 %v5988, 1.442695
    %v6206 = vpow.pop %v6205
    %v6207 = vmul.f32 %v5989, 1.442695
    %v6208 = vpow.pop %v6207
    %v6209 = vmul.f32 %v5990, 1.442695
    %v6210 = vpow.pop %v6209
    %v6211 = vmul.f32 %v5991, 1.442695
    %v6212 = vpow.pop %v6211
    %v6213 = vmul.f32 %v5992, 1.442695
    %v6214 = vpow.pop %v6213
    %v6215 = vmul.f32 %v5993, 1.442695
    %v6216 = vpow.pop %v6215
    %v6217 = vmul.f32 %v5994, 1.442695
    %v6218 = vpow.pop %v6217
    %v6219 = vmul.f32 %v5995, 1.442695
    %v6220 = vpow.pop %v6219
    %v6221 = vmul.f32 %v5996, 1.442695
    %v6222 = vpow.pop %v6221
    %v6223 = vmul.f32 %v5997, 1.442695
    %v6224 = vpow.pop %v6223
    %v6225 = vmul.f32 %v5998, 1.442695
    %v6226 = vpow.pop %v6225
    %v6227 = vmul.f32 %v5999, 1.442695
    %v6228 = vpow.pop %v6227
    %v6229 = vmul.f32 %v6000, 1.442695
    %v6230 = vpow.pop %v6229
    %v6231 = vmul.f32 %v6001, 1.442695
    %v6232 = vpow.pop %v6231
    %v6233 = vmul.f32 %v6002, 1.442695
    %v6234 = vpow.pop %v6233
    %v6235 = vmul.f32 %v6003, 1.442695
    %v6236 = vpow.pop %v6235
    %v6237 = vmul.f32 %v6004, 1.442695
    %v6238 = vpow.pop %v6237
    %v6239 = vmul.f32 %v6005, 1.442695
    %v6240 = vpow.pop %v6239
    %v6241 = vmul.f32 %v6006, 1.442695
    %v6242 = vpow.pop %v6241
    %v6243 = vmul.f32 %v6007, 1.442695
    %v6244 = vpow.pop %v6243
    %v6245 = vmul.f32 %v6008, 1.442695
    %v6246 = vpow.pop %v6245
    %v6247 = vmul.f32 %v6009, 1.442695
    %v6248 = vpow.pop %v6247
    %v6249 = vmul.f32 %v6010, 1.442695
    %v6250 = vpow.pop %v6249
    %v6251 = vmul.f32 %v6011, 1.442695
    %v6252 = vpow.pop %v6251
    %v6253 = vmul.f32 %v6012, 1.442695
    %v6254 = vpow.pop %v6253
    %v6255 = vmul.f32 %v6013, 1.442695
    %v6256 = vpow.pop %v6255
    %v6257 = vmul.f32 %v6014, 1.442695
    %v6258 = vpow.pop %v6257
    %v6259 = vmul.f32 %v6015, 1.442695
    %v6260 = vpow.pop %v6259
    %v6261 = vmul.f32 %v6016, 1.442695
    %v6262 = vpow.pop %v6261
    %v6263 = vmul.f32 %v6017, 1.442695
    %v6264 = vpow.pop %v6263
    %v6265 = vmul.f32 %v6018, 1.442695
    %v6266 = vpow.pop %v6265
    %v6267 = vmul.f32 %v6019, 1.442695
    %v6268 = vpow.pop %v6267
    %v6269 = vmul.f32 %v6020, 1.442695
    %v6270 = vpow.pop %v6269
    %v6271 = vmul.f32 %v6021, 1.442695
    %v6272 = vpow.pop %v6271
    %v6273 = vmul.f32 %v6022, 1.442695
    %v6274 = vpow.pop %v6273
    %v6275 = vmul.f32 %v6023, 1.442695
    %v6276 = vpow.pop %v6275
    %v6277 = vmul.f32 %v6024, 1.442695
    %v6278 = vpow.pop %v6277
    %v6279 = vmul.f32 %v6025, 1.442695
    %v6280 = vpow.pop %v6279
    %v6281 = vmul.f32 %v6026, 1.442695
    %v6282 = vpow.pop %v6281
    %v6283 = vadd.f32 %v6028, 1.0
    %v6284 = vadd.f32 %v6030, 1.0
    %v6285 = vadd.f32 %v6032, 1.0
    %v6286 = vadd.f32 %v6034, 1.0
    %v6287 = vadd.f32 %v6036, 1.0
    %v6288 = vadd.f32 %v6038, 1.0
    %v6289 = vadd.f32 %v6040, 1.0
    %v6290 = vadd.f32 %v6042, 1.0
    %v6291 = vadd.f32 %v6044, 1.0
    %v6292 = vadd.f32 %v6046, 1.0
    %v6293 = vadd.f32 %v6048, 1.0
    %v6294 = vadd.f32 %v6050, 1.0
    %v6295 = vadd.f32 %v6052, 1.0
    %v6296 = vadd.f32 %v6054, 1.0
    %v6297 = vadd.f32 %v6056, 1.0
    %v6298 = vadd.f32 %v6058, 1.0
    %v6299 = vadd.f32 %v6060, 1.0
    %v6300 = vadd.f32 %v6062, 1.0
    %v6301 = vadd.f32 %v6064, 1.0
    %v6302 = vadd.f32 %v6066, 1.0
    %v6303 = vadd.f32 %v6068, 1.0
    %v6304 = vadd.f32 %v6070, 1.0
    %v6305 = vadd.f32 %v6072, 1.0
    %v6306 = vadd.f32 %v6074, 1.0
    %v6307 = vadd.f32 %v6076, 1.0
    %v6308 = vadd.f32 %v6078, 1.0
    %v6309 = vadd.f32 %v6080, 1.0
    %v6310 = vadd.f32 %v6082, 1.0
    %v6311 = vadd.f32 %v6084, 1.0
    %v6312 = vadd.f32 %v6086, 1.0
    %v6313 = vadd.f32 %v6088, 1.0
    %v6314 = vadd.f32 %v6090, 1.0
    %v6315 = vadd.f32 %v6092, 1.0
    %v6316 = vadd.f32 %v6094, 1.0
    %v6317 = vadd.f32 %v6096, 1.0
    %v6318 = vadd.f32 %v6098, 1.0
    %v6319 = vadd.f32 %v6100, 1.0
    %v6320 = vadd.f32 %v6102, 1.0
    %v6321 = vadd.f32 %v6104, 1.0
    %v6322 = vadd.f32 %v6106, 1.0
    %v6323 = vadd.f32 %v6108, 1.0
    %v6324 = vadd.f32 %v6110, 1.0
    %v6325 = vadd.f32 %v6112, 1.0
    %v6326 = vadd.f32 %v6114, 1.0
    %v6327 = vadd.f32 %v6116, 1.0
    %v6328 = vadd.f32 %v6118, 1.0
    %v6329 = vadd.f32 %v6120, 1.0
    %v6330 = vadd.f32 %v6122, 1.0
    %v6331 = vadd.f32 %v6124, 1.0
    %v6332 = vadd.f32 %v6126, 1.0
    %v6333 = vadd.f32 %v6128, 1.0
    %v6334 = vadd.f32 %v6130, 1.0
    %v6335 = vadd.f32 %v6132, 1.0
    %v6336 = vadd.f32 %v6134, 1.0
    %v6337 = vadd.f32 %v6136, 1.0
    %v6338 = vadd.f32 %v6138, 1.0
    %v6339 = vadd.f32 %v6140, 1.0
    %v6340 = vadd.f32 %v6142, 1.0
    %v6341 = vadd.f32 %v6144, 1.0
    %v6342 = vadd.f32 %v6146, 1.0
    %v6343 = vadd.f32 %v6148, 1.0
    %v6344 = vadd.f32 %v6150, 1.0
    %v6345 = vadd.f32 %v6152, 1.0
    %v6346 = vadd.f32 %v6154, 1.0
    %v6347 = vadd.f32 %v6156, 1.0
    %v6348 = vadd.f32 %v6158, 1.0
    %v6349 = vadd.f32 %v6160, 1.0
    %v6350 = vadd.f32 %v6162, 1.0
    %v6351 = vadd.f32 %v6164, 1.0
    %v6352 = vadd.f32 %v6166, 1.0
    %v6353 = vadd.f32 %v6168, 1.0
    %v6354 = vadd.f32 %v6170, 1.0
    %v6355 = vadd.f32 %v6172, 1.0
    %v6356 = vadd.f32 %v6174, 1.0
    %v6357 = vadd.f32 %v6176, 1.0
    %v6358 = vadd.f32 %v6178, 1.0
    %v6359 = vadd.f32 %v6180, 1.0
    %v6360 = vadd.f32 %v6182, 1.0
    %v6361 = vadd.f32 %v6184, 1.0
    %v6362 = vadd.f32 %v6186, 1.0
    %v6363 = vadd.f32 %v6188, 1.0
    %v6364 = vadd.f32 %v6190, 1.0
    %v6365 = vadd.f32 %v6192, 1.0
    %v6366 = vadd.f32 %v6194, 1.0
    %v6367 = vadd.f32 %v6196, 1.0
    %v6368 = vadd.f32 %v6198, 1.0
    %v6369 = vadd.f32 %v6200, 1.0
    %v6370 = vadd.f32 %v6202, 1.0
    %v6371 = vadd.f32 %v6204, 1.0
    %v6372 = vadd.f32 %v6206, 1.0
    %v6373 = vadd.f32 %v6208, 1.0
    %v6374 = vadd.f32 %v6210, 1.0
    %v6375 = vadd.f32 %v6212, 1.0
    %v6376 = vadd.f32 %v6214, 1.0
    %v6377 = vadd.f32 %v6216, 1.0
    %v6378 = vadd.f32 %v6218, 1.0
    %v6379 = vadd.f32 %v6220, 1.0
    %v6380 = vadd.f32 %v6222, 1.0
    %v6381 = vadd.f32 %v6224, 1.0
    %v6382 = vadd.f32 %v6226, 1.0
    %v6383 = vadd.f32 %v6228, 1.0
    %v6384 = vadd.f32 %v6230, 1.0
    %v6385 = vadd.f32 %v6232, 1.0
    %v6386 = vadd.f32 %v6234, 1.0
    %v6387 = vadd.f32 %v6236, 1.0
    %v6388 = vadd.f32 %v6238, 1.0
    %v6389 = vadd.f32 %v6240, 1.0
    %v6390 = vadd.f32 %v6242, 1.0
    %v6391 = vadd.f32 %v6244, 1.0
    %v6392 = vadd.f32 %v6246, 1.0
    %v6393 = vadd.f32 %v6248, 1.0
    %v6394 = vadd.f32 %v6250, 1.0
    %v6395 = vadd.f32 %v6252, 1.0
    %v6396 = vadd.f32 %v6254, 1.0
    %v6397 = vadd.f32 %v6256, 1.0
    %v6398 = vadd.f32 %v6258, 1.0
    %v6399 = vadd.f32 %v6260, 1.0
    %v6400 = vadd.f32 %v6262, 1.0
    %v6401 = vadd.f32 %v6264, 1.0
    %v6402 = vadd.f32 %v6266, 1.0
    %v6403 = vadd.f32 %v6268, 1.0
    %v6404 = vadd.f32 %v6270, 1.0
    %v6405 = vadd.f32 %v6272, 1.0
    %v6406 = vadd.f32 %v6274, 1.0
    %v6407 = vadd.f32 %v6276, 1.0
    %v6408 = vadd.f32 %v6278, 1.0
    %v6409 = vadd.f32 %v6280, 1.0
    %v6410 = vadd.f32 %v6282, 1.0
    %v6411 = vrcp.pop %v6283
    %v6412 = vmul.f32 1.0, %v6411
    %v6413 = vrcp.pop %v6284
    %v6414 = vmul.f32 1.0, %v6413
    %v6415 = vrcp.pop %v6285
    %v6416 = vmul.f32 1.0, %v6415
    %v6417 = vrcp.pop %v6286
    %v6418 = vmul.f32 1.0, %v6417
    %v6419 = vrcp.pop %v6287
    %v6420 = vmul.f32 1.0, %v6419
    %v6421 = vrcp.pop %v6288
    %v6422 = vmul.f32 1.0, %v6421
    %v6423 = vrcp.pop %v6289
    %v6424 = vmul.f32 1.0, %v6423
    %v6425 = vrcp.pop %v6290
    %v6426 = vmul.f32 1.0, %v6425
    %v6427 = vrcp.pop %v6291
    %v6428 = vmul.f32 1.0, %v6427
    %v6429 = vrcp.pop %v6292
    %v6430 = vmul.f32 1.0, %v6429
    %v6431 = vrcp.pop %v6293
    %v6432 = vmul.f32 1.0, %v6431
    %v6433 = vrcp.pop %v6294
    %v6434 = vmul.f32 1.0, %v6433
    %v6435 = vrcp.pop %v6295
    %v6436 = vmul.f32 1.0, %v6435
    %v6437 = vrcp.pop %v6296
    %v6438 = vmul.f32 1.0, %v6437
    %v6439 = vrcp.pop %v6297
    %v6440 = vmul.f32 1.0, %v6439
    %v6441 = vrcp.pop %v6298
    %v6442 = vmul.f32 1.0, %v6441
    %v6443 = vrcp.pop %v6299
    %v6444 = vmul.f32 1.0, %v6443
    %v6445 = vrcp.pop %v6300
    %v6446 = vmul.f32 1.0, %v6445
    %v6447 = vrcp.pop %v6301
    %v6448 = vmul.f32 1.0, %v6447
    %v6449 = vrcp.pop %v6302
    %v6450 = vmul.f32 1.0, %v6449
    %v6451 = vrcp.pop %v6303
    %v6452 = vmul.f32 1.0, %v6451
    %v6453 = vrcp.pop %v6304
    %v6454 = vmul.f32 1.0, %v6453
    %v6455 = vrcp.pop %v6305
    %v6456 = vmul.f32 1.0, %v6455
    %v6457 = vrcp.pop %v6306
    %v6458 = vmul.f32 1.0, %v6457
    %v6459 = vrcp.pop %v6307
    %v6460 = vmul.f32 1.0, %v6459
    %v6461 = vrcp.pop %v6308
    %v6462 = vmul.f32 1.0, %v6461
    %v6463 = vrcp.pop %v6309
    %v6464 = vmul.f32 1.0, %v6463
    %v6465 = vrcp.pop %v6310
    %v6466 = vmul.f32 1.0, %v6465
    %v6467 = vrcp.pop %v6311
    %v6468 = vmul.f32 1.0, %v6467
    %v6469 = vrcp.pop %v6312
    %v6470 = vmul.f32 1.0, %v6469
    %v6471 = vrcp.pop %v6313
    %v6472 = vmul.f32 1.0, %v6471
    %v6473 = vrcp.pop %v6314
    %v6474 = vmul.f32 1.0, %v6473
    %v6475 = vrcp.pop %v6315
    %v6476 = vmul.f32 1.0, %v6475
    %v6477 = vrcp.pop %v6316
    %v6478 = vmul.f32 1.0, %v6477
    %v6479 = vrcp.pop %v6317
    %v6480 = vmul.f32 1.0, %v6479
    %v6481 = vrcp.pop %v6318
    %v6482 = vmul.f32 1.0, %v6481
    %v6483 = vrcp.pop %v6319
    %v6484 = vmul.f32 1.0, %v6483
    %v6485 = vrcp.pop %v6320
    %v6486 = vmul.f32 1.0, %v6485
    %v6487 = vrcp.pop %v6321
    %v6488 = vmul.f32 1.0, %v6487
    %v6489 = vrcp.pop %v6322
    %v6490 = vmul.f32 1.0, %v6489
    %v6491 = vrcp.pop %v6323
    %v6492 = vmul.f32 1.0, %v6491
    %v6493 = vrcp.pop %v6324
    %v6494 = vmul.f32 1.0, %v6493
    %v6495 = vrcp.pop %v6325
    %v6496 = vmul.f32 1.0, %v6495
    %v6497 = vrcp.pop %v6326
    %v6498 = vmul.f32 1.0, %v6497
    %v6499 = vrcp.pop %v6327
    %v6500 = vmul.f32 1.0, %v6499
    %v6501 = vrcp.pop %v6328
    %v6502 = vmul.f32 1.0, %v6501
    %v6503 = vrcp.pop %v6329
    %v6504 = vmul.f32 1.0, %v6503
    %v6505 = vrcp.pop %v6330
    %v6506 = vmul.f32 1.0, %v6505
    %v6507 = vrcp.pop %v6331
    %v6508 = vmul.f32 1.0, %v6507
    %v6509 = vrcp.pop %v6332
    %v6510 = vmul.f32 1.0, %v6509
    %v6511 = vrcp.pop %v6333
    %v6512 = vmul.f32 1.0, %v6511
    %v6513 = vrcp.pop %v6334
    %v6514 = vmul.f32 1.0, %v6513
    %v6515 = vrcp.pop %v6335
    %v6516 = vmul.f32 1.0, %v6515
    %v6517 = vrcp.pop %v6336
    %v6518 = vmul.f32 1.0, %v6517
    %v6519 = vrcp.pop %v6337
    %v6520 = vmul.f32 1.0, %v6519
    %v6521 = vrcp.pop %v6338
    %v6522 = vmul.f32 1.0, %v6521
    %v6523 = vrcp.pop %v6339
    %v6524 = vmul.f32 1.0, %v6523
    %v6525 = vrcp.pop %v6340
    %v6526 = vmul.f32 1.0, %v6525
    %v6527 = vrcp.pop %v6341
    %v6528 = vmul.f32 1.0, %v6527
    %v6529 = vrcp.pop %v6342
    %v6530 = vmul.f32 1.0, %v6529
    %v6531 = vrcp.pop %v6343
    %v6532 = vmul.f32 1.0, %v6531
    %v6533 = vrcp.pop %v6344
    %v6534 = vmul.f32 1.0, %v6533
    %v6535 = vrcp.pop %v6345
    %v6536 = vmul.f32 1.0, %v6535
    %v6537 = vrcp.pop %v6346
    %v6538 = vmul.f32 1.0, %v6537
    %v6539 = vrcp.pop %v6347
    %v6540 = vmul.f32 1.0, %v6539
    %v6541 = vrcp.pop %v6348
    %v6542 = vmul.f32 1.0, %v6541
    %v6543 = vrcp.pop %v6349
    %v6544 = vmul.f32 1.0, %v6543
    %v6545 = vrcp.pop %v6350
    %v6546 = vmul.f32 1.0, %v6545
    %v6547 = vrcp.pop %v6351
    %v6548 = vmul.f32 1.0, %v6547
    %v6549 = vrcp.pop %v6352
    %v6550 = vmul.f32 1.0, %v6549
    %v6551 = vrcp.pop %v6353
    %v6552 = vmul.f32 1.0, %v6551
    %v6553 = vrcp.pop %v6354
    %v6554 = vmul.f32 1.0, %v6553
    %v6555 = vrcp.pop %v6355
    %v6556 = vmul.f32 1.0, %v6555
    %v6557 = vrcp.pop %v6356
    %v6558 = vmul.f32 1.0, %v6557
    %v6559 = vrcp.pop %v6357
    %v6560 = vmul.f32 1.0, %v6559
    %v6561 = vrcp.pop %v6358
    %v6562 = vmul.f32 1.0, %v6561
    %v6563 = vrcp.pop %v6359
    %v6564 = vmul.f32 1.0, %v6563
    %v6565 = vrcp.pop %v6360
    %v6566 = vmul.f32 1.0, %v6565
    %v6567 = vrcp.pop %v6361
    %v6568 = vmul.f32 1.0, %v6567
    %v6569 = vrcp.pop %v6362
    %v6570 = vmul.f32 1.0, %v6569
    %v6571 = vrcp.pop %v6363
    %v6572 = vmul.f32 1.0, %v6571
    %v6573 = vrcp.pop %v6364
    %v6574 = vmul.f32 1.0, %v6573
    %v6575 = vrcp.pop %v6365
    %v6576 = vmul.f32 1.0, %v6575
    %v6577 = vrcp.pop %v6366
    %v6578 = vmul.f32 1.0, %v6577
    %v6579 = vrcp.pop %v6367
    %v6580 = vmul.f32 1.0, %v6579
    %v6581 = vrcp.pop %v6368
    %v6582 = vmul.f32 1.0, %v6581
    %v6583 = vrcp.pop %v6369
    %v6584 = vmul.f32 1.0, %v6583
    %v6585 = vrcp.pop %v6370
    %v6586 = vmul.f32 1.0, %v6585
    %v6587 = vrcp.pop %v6371
    %v6588 = vmul.f32 1.0, %v6587
    %v6589 = vrcp.pop %v6372
    %v6590 = vmul.f32 1.0, %v6589
    %v6591 = vrcp.pop %v6373
    %v6592 = vmul.f32 1.0, %v6591
    %v6593 = vrcp.pop %v6374
    %v6594 = vmul.f32 1.0, %v6593
    %v6595 = vrcp.pop %v6375
    %v6596 = vmul.f32 1.0, %v6595
    %v6597 = vrcp.pop %v6376
    %v6598 = vmul.f32 1.0, %v6597
    %v6599 = vrcp.pop %v6377
    %v6600 = vmul.f32 1.0, %v6599
    %v6601 = vrcp.pop %v6378
    %v6602 = vmul.f32 1.0, %v6601
    %v6603 = vrcp.pop %v6379
    %v6604 = vmul.f32 1.0, %v6603
    %v6605 = vrcp.pop %v6380
    %v6606 = vmul.f32 1.0, %v6605
    %v6607 = vrcp.pop %v6381
    %v6608 = vmul.f32 1.0, %v6607
    %v6609 = vrcp.pop %v6382
    %v6610 = vmul.f32 1.0, %v6609
    %v6611 = vrcp.pop %v6383
    %v6612 = vmul.f32 1.0, %v6611
    %v6613 = vrcp.pop %v6384
    %v6614 = vmul.f32 1.0, %v6613
    %v6615 = vrcp.pop %v6385
    %v6616 = vmul.f32 1.0, %v6615
    %v6617 = vrcp.pop %v6386
    %v6618 = vmul.f32 1.0, %v6617
    %v6619 = vrcp.pop %v6387
    %v6620 = vmul.f32 1.0, %v6619
    %v6621 = vrcp.pop %v6388
    %v6622 = vmul.f32 1.0, %v6621
    %v6623 = vrcp.pop %v6389
    %v6624 = vmul.f32 1.0, %v6623
    %v6625 = vrcp.pop %v6390
    %v6626 = vmul.f32 1.0, %v6625
    %v6627 = vrcp.pop %v6391
    %v6628 = vmul.f32 1.0, %v6627
    %v6629 = vrcp.pop %v6392
    %v6630 = vmul.f32 1.0, %v6629
    %v6631 = vrcp.pop %v6393
    %v6632 = vmul.f32 1.0, %v6631
    %v6633 = vrcp.pop %v6394
    %v6634 = vmul.f32 1.0, %v6633
    %v6635 = vrcp.pop %v6395
    %v6636 = vmul.f32 1.0, %v6635
    %v6637 = vrcp.pop %v6396
    %v6638 = vmul.f32 1.0, %v6637
    %v6639 = vrcp.pop %v6397
    %v6640 = vmul.f32 1.0, %v6639
    %v6641 = vrcp.pop %v6398
    %v6642 = vmul.f32 1.0, %v6641
    %v6643 = vrcp.pop %v6399
    %v6644 = vmul.f32 1.0, %v6643
    %v6645 = vrcp.pop %v6400
    %v6646 = vmul.f32 1.0, %v6645
    %v6647 = vrcp.pop %v6401
    %v6648 = vmul.f32 1.0, %v6647
    %v6649 = vrcp.pop %v6402
    %v6650 = vmul.f32 1.0, %v6649
    %v6651 = vrcp.pop %v6403
    %v6652 = vmul.f32 1.0, %v6651
    %v6653 = vrcp.pop %v6404
    %v6654 = vmul.f32 1.0, %v6653
    %v6655 = vrcp.pop %v6405
    %v6656 = vmul.f32 1.0, %v6655
    %v6657 = vrcp.pop %v6406
    %v6658 = vmul.f32 1.0, %v6657
    %v6659 = vrcp.pop %v6407
    %v6660 = vmul.f32 1.0, %v6659
    %v6661 = vrcp.pop %v6408
    %v6662 = vmul.f32 1.0, %v6661
    %v6663 = vrcp.pop %v6409
    %v6664 = vmul.f32 1.0, %v6663
    %v6665 = vrcp.pop %v6410
    %v6666 = vmul.f32 1.0, %v6665
    %v6667 = vmul.f32 %v5771, %v6412
    %v6668 = vmul.f32 %v5772, %v6414
    %v6669 = vmul.f32 %v5773, %v6416
    %v6670 = vmul.f32 %v5774, %v6418
    %v6671 = vmul.f32 %v5775, %v6420
    %v6672 = vmul.f32 %v5776, %v6422
    %v6673 = vmul.f32 %v5777, %v6424
    %v6674 = vmul.f32 %v5778, %v6426
    %v6675 = vmul.f32 %v5779, %v6428
    %v6676 = vmul.f32 %v5780, %v6430
    %v6677 = vmul.f32 %v5781, %v6432
    %v6678 = vmul.f32 %v5782, %v6434
    %v6679 = vmul.f32 %v5783, %v6436
    %v6680 = vmul.f32 %v5784, %v6438
    %v6681 = vmul.f32 %v5785, %v6440
    %v6682 = vmul.f32 %v5786, %v6442
    %v6683 = vmul.f32 %v5787, %v6444
    %v6684 = vmul.f32 %v5788, %v6446
    %v6685 = vmul.f32 %v5789, %v6448
    %v6686 = vmul.f32 %v5790, %v6450
    %v6687 = vmul.f32 %v5791, %v6452
    %v6688 = vmul.f32 %v5792, %v6454
    %v6689 = vmul.f32 %v5793, %v6456
    %v6690 = vmul.f32 %v5794, %v6458
    %v6691 = vmul.f32 %v5795, %v6460
    %v6692 = vmul.f32 %v5796, %v6462
    %v6693 = vmul.f32 %v5797, %v6464
    %v6694 = vmul.f32 %v5798, %v6466
    %v6695 = vmul.f32 %v5799, %v6468
    %v6696 = vmul.f32 %v5800, %v6470
    %v6697 = vmul.f32 %v5801, %v6472
    %v6698 = vmul.f32 %v5802, %v6474
    %v6699 = vmul.f32 %v5803, %v6476
    %v6700 = vmul.f32 %v5804, %v6478
    %v6701 = vmul.f32 %v5805, %v6480
    %v6702 = vmul.f32 %v5806, %v6482
    %v6703 = vmul.f32 %v5807, %v6484
    %v6704 = vmul.f32 %v5808, %v6486
    %v6705 = vmul.f32 %v5809, %v6488
    %v6706 = vmul.f32 %v5810, %v6490
    %v6707 = vmul.f32 %v5811, %v6492
    %v6708 = vmul.f32 %v5812, %v6494
    %v6709 = vmul.f32 %v5813, %v6496
    %v6710 = vmul.f32 %v5814, %v6498
    %v6711 = vmul.f32 %v5815, %v6500
    %v6712 = vmul.f32 %v5816, %v6502
    %v6713 = vmul.f32 %v5817, %v6504
    %v6714 = vmul.f32 %v5818, %v6506
    %v6715 = vmul.f32 %v5819, %v6508
    %v6716 = vmul.f32 %v5820, %v6510
    %v6717 = vmul.f32 %v5821, %v6512
    %v6718 = vmul.f32 %v5822, %v6514
    %v6719 = vmul.f32 %v5823, %v6516
    %v6720 = vmul.f32 %v5824, %v6518
    %v6721 = vmul.f32 %v5825, %v6520
    %v6722 = vmul.f32 %v5826, %v6522
    %v6723 = vmul.f32 %v5827, %v6524
    %v6724 = vmul.f32 %v5828, %v6526
    %v6725 = vmul.f32 %v5829, %v6528
    %v6726 = vmul.f32 %v5830, %v6530
    %v6727 = vmul.f32 %v5831, %v6532
    %v6728 = vmul.f32 %v5832, %v6534
    %v6729 = vmul.f32 %v5833, %v6536
    %v6730 = vmul.f32 %v5834, %v6538
    %v6731 = vmul.f32 %v5835, %v6540
    %v6732 = vmul.f32 %v5836, %v6542
    %v6733 = vmul.f32 %v5837, %v6544
    %v6734 = vmul.f32 %v5838, %v6546
    %v6735 = vmul.f32 %v5839, %v6548
    %v6736 = vmul.f32 %v5840, %v6550
    %v6737 = vmul.f32 %v5841, %v6552
    %v6738 = vmul.f32 %v5842, %v6554
    %v6739 = vmul.f32 %v5843, %v6556
    %v6740 = vmul.f32 %v5844, %v6558
    %v6741 = vmul.f32 %v5845, %v6560
    %v6742 = vmul.f32 %v5846, %v6562
    %v6743 = vmul.f32 %v5847, %v6564
    %v6744 = vmul.f32 %v5848, %v6566
    %v6745 = vmul.f32 %v5849, %v6568
    %v6746 = vmul.f32 %v5850, %v6570
    %v6747 = vmul.f32 %v5851, %v6572
    %v6748 = vmul.f32 %v5852, %v6574
    %v6749 = vmul.f32 %v5853, %v6576
    %v6750 = vmul.f32 %v5854, %v6578
    %v6751 = vmul.f32 %v5855, %v6580
    %v6752 = vmul.f32 %v5856, %v6582
    %v6753 = vmul.f32 %v5857, %v6584
    %v6754 = vmul.f32 %v5858, %v6586
    %v6755 = vmul.f32 %v5859, %v6588
    %v6756 = vmul.f32 %v5860, %v6590
    %v6757 = vmul.f32 %v5861, %v6592
    %v6758 = vmul.f32 %v5862, %v6594
    %v6759 = vmul.f32 %v5863, %v6596
    %v6760 = vmul.f32 %v5864, %v6598
    %v6761 = vmul.f32 %v5865, %v6600
    %v6762 = vmul.f32 %v5866, %v6602
    %v6763 = vmul.f32 %v5867, %v6604
    %v6764 = vmul.f32 %v5868, %v6606
    %v6765 = vmul.f32 %v5869, %v6608
    %v6766 = vmul.f32 %v5870, %v6610
    %v6767 = vmul.f32 %v5871, %v6612
    %v6768 = vmul.f32 %v5872, %v6614
    %v6769 = vmul.f32 %v5873, %v6616
    %v6770 = vmul.f32 %v5874, %v6618
    %v6771 = vmul.f32 %v5875, %v6620
    %v6772 = vmul.f32 %v5876, %v6622
    %v6773 = vmul.f32 %v5877, %v6624
    %v6774 = vmul.f32 %v5878, %v6626
    %v6775 = vmul.f32 %v5879, %v6628
    %v6776 = vmul.f32 %v5880, %v6630
    %v6777 = vmul.f32 %v5881, %v6632
    %v6778 = vmul.f32 %v5882, %v6634
    %v6779 = vmul.f32 %v5883, %v6636
    %v6780 = vmul.f32 %v5884, %v6638
    %v6781 = vmul.f32 %v5885, %v6640
    %v6782 = vmul.f32 %v5886, %v6642
    %v6783 = vmul.f32 %v5887, %v6644
    %v6784 = vmul.f32 %v5888, %v6646
    %v6785 = vmul.f32 %v5889, %v6648
    %v6786 = vmul.f32 %v5890, %v6650
    %v6787 = vmul.f32 %v5891, %v6652
    %v6788 = vmul.f32 %v5892, %v6654
    %v6789 = vmul.f32 %v5893, %v6656
    %v6790 = vmul.f32 %v5894, %v6658
    %v6791 = vmul.f32 %v5895, %v6660
    %v6792 = vmul.f32 %v5896, %v6662
    %v6793 = vmul.f32 %v5897, %v6664
    %v6794 = vmul.f32 %v5898, %v6666
    %v6795 = vmul.f32 %v6667, %v657
    %v6796 = vmul.f32 %v6668, %v661
    %v6797 = vmul.f32 %v6669, %v665
    %v6798 = vmul.f32 %v6670, %v669
    %v6799 = vmul.f32 %v6671, %v676
    %v6800 = vmul.f32 %v6672, %v680
    %v6801 = vmul.f32 %v6673, %v684
    %v6802 = vmul.f32 %v6674, %v688
    %v6803 = vmul.f32 %v6675, %v695
    %v6804 = vmul.f32 %v6676, %v699
    %v6805 = vmul.f32 %v6677, %v703
    %v6806 = vmul.f32 %v6678, %v707
    %v6807 = vmul.f32 %v6679, %v714
    %v6808 = vmul.f32 %v6680, %v718
    %v6809 = vmul.f32 %v6681, %v722
    %v6810 = vmul.f32 %v6682, %v726
    %v6811 = vmul.f32 %v6683, %v733
    %v6812 = vmul.f32 %v6684, %v737
    %v6813 = vmul.f32 %v6685, %v741
    %v6814 = vmul.f32 %v6686, %v745
    %v6815 = vmul.f32 %v6687, %v752
    %v6816 = vmul.f32 %v6688, %v756
    %v6817 = vmul.f32 %v6689, %v760
    %v6818 = vmul.f32 %v6690, %v764
    %v6819 = vmul.f32 %v6691, %v771
    %v6820 = vmul.f32 %v6692, %v775
    %v6821 = vmul.f32 %v6693, %v779
    %v6822 = vmul.f32 %v6694, %v783
    %v6823 = vmul.f32 %v6695, %v790
    %v6824 = vmul.f32 %v6696, %v794
    %v6825 = vmul.f32 %v6697, %v798
    %v6826 = vmul.f32 %v6698, %v802
    %v6827 = vmul.f32 %v6699, %v809
    %v6828 = vmul.f32 %v6700, %v813
    %v6829 = vmul.f32 %v6701, %v817
    %v6830 = vmul.f32 %v6702, %v821
    %v6831 = vmul.f32 %v6703, %v828
    %v6832 = vmul.f32 %v6704, %v832
    %v6833 = vmul.f32 %v6705, %v836
    %v6834 = vmul.f32 %v6706, %v840
    %v6835 = vmul.f32 %v6707, %v847
    %v6836 = vmul.f32 %v6708, %v851
    %v6837 = vmul.f32 %v6709, %v855
    %v6838 = vmul.f32 %v6710, %v859
    %v6839 = vmul.f32 %v6711, %v866
    %v6840 = vmul.f32 %v6712, %v870
    %v6841 = vmul.f32 %v6713, %v874
    %v6842 = vmul.f32 %v6714, %v878
    %v6843 = vmul.f32 %v6715, %v885
    %v6844 = vmul.f32 %v6716, %v889
    %v6845 = vmul.f32 %v6717, %v893
    %v6846 = vmul.f32 %v6718, %v897
    %v6847 = vmul.f32 %v6719, %v904
    %v6848 = vmul.f32 %v6720, %v908
    %v6849 = vmul.f32 %v6721, %v912
    %v6850 = vmul.f32 %v6722, %v916
    %v6851 = vmul.f32 %v6723, %v923
    %v6852 = vmul.f32 %v6724, %v927
    %v6853 = vmul.f32 %v6725, %v931
    %v6854 = vmul.f32 %v6726, %v935
    %v6855 = vmul.f32 %v6727, %v942
    %v6856 = vmul.f32 %v6728, %v946
    %v6857 = vmul.f32 %v6729, %v950
    %v6858 = vmul.f32 %v6730, %v954
    %v6859 = vmul.f32 %v6731, %v961
    %v6860 = vmul.f32 %v6732, %v965
    %v6861 = vmul.f32 %v6733, %v969
    %v6862 = vmul.f32 %v6734, %v973
    %v6863 = vmul.f32 %v6735, %v980
    %v6864 = vmul.f32 %v6736, %v984
    %v6865 = vmul.f32 %v6737, %v988
    %v6866 = vmul.f32 %v6738, %v992
    %v6867 = vmul.f32 %v6739, %v999
    %v6868 = vmul.f32 %v6740, %v1003
    %v6869 = vmul.f32 %v6741, %v1007
    %v6870 = vmul.f32 %v6742, %v1011
    %v6871 = vmul.f32 %v6743, %v1018
    %v6872 = vmul.f32 %v6744, %v1022
    %v6873 = vmul.f32 %v6745, %v1026
    %v6874 = vmul.f32 %v6746, %v1030
    %v6875 = vmul.f32 %v6747, %v1037
    %v6876 = vmul.f32 %v6748, %v1041
    %v6877 = vmul.f32 %v6749, %v1045
    %v6878 = vmul.f32 %v6750, %v1049
    %v6879 = vmul.f32 %v6751, %v1056
    %v6880 = vmul.f32 %v6752, %v1060
    %v6881 = vmul.f32 %v6753, %v1064
    %v6882 = vmul.f32 %v6754, %v1068
    %v6883 = vmul.f32 %v6755, %v1075
    %v6884 = vmul.f32 %v6756, %v1079
    %v6885 = vmul.f32 %v6757, %v1083
    %v6886 = vmul.f32 %v6758, %v1087
    %v6887 = vmul.f32 %v6759, %v1094
    %v6888 = vmul.f32 %v6760, %v1098
    %v6889 = vmul.f32 %v6761, %v1102
    %v6890 = vmul.f32 %v6762, %v1106
    %v6891 = vmul.f32 %v6763, %v1113
    %v6892 = vmul.f32 %v6764, %v1117
    %v6893 = vmul.f32 %v6765, %v1121
    %v6894 = vmul.f32 %v6766, %v1125
    %v6895 = vmul.f32 %v6767, %v1132
    %v6896 = vmul.f32 %v6768, %v1136
    %v6897 = vmul.f32 %v6769, %v1140
    %v6898 = vmul.f32 %v6770, %v1144
    %v6899 = vmul.f32 %v6771, %v1151
    %v6900 = vmul.f32 %v6772, %v1155
    %v6901 = vmul.f32 %v6773, %v1159
    %v6902 = vmul.f32 %v6774, %v1163
    %v6903 = vmul.f32 %v6775, %v1170
    %v6904 = vmul.f32 %v6776, %v1174
    %v6905 = vmul.f32 %v6777, %v1178
    %v6906 = vmul.f32 %v6778, %v1182
    %v6907 = vmul.f32 %v6779, %v1189
    %v6908 = vmul.f32 %v6780, %v1193
    %v6909 = vmul.f32 %v6781, %v1197
    %v6910 = vmul.f32 %v6782, %v1201
    %v6911 = vmul.f32 %v6783, %v1208
    %v6912 = vmul.f32 %v6784, %v1212
    %v6913 = vmul.f32 %v6785, %v1216
    %v6914 = vmul.f32 %v6786, %v1220
    %v6915 = vmul.f32 %v6787, %v1227
    %v6916 = vmul.f32 %v6788, %v1231
    %v6917 = vmul.f32 %v6789, %v1235
    %v6918 = vmul.f32 %v6790, %v1239
    %v6919 = vmul.f32 %v6791, %v1246
    %v6920 = vmul.f32 %v6792, %v1250
    %v6921 = vmul.f32 %v6793, %v1254
    %v6922 = vmul.f32 %v6794, %v1258
    %v6923 = vsel %vm554, %v6795, 0.0
    %v6924 = vsel %vm554, %v6796, 0.0
    %v6925 = vadd.f32 %v6923, %v6924
    %v6926 = vsel %vm554, %v6797, 0.0
    %v6927 = vadd.f32 %v6925, %v6926
    %v6928 = vsel %vm554, %v6798, 0.0
    %v6929 = vadd.f32 %v6927, %v6928
    %v6930 = vrot.slane %v6929, 4
    %v6931 = vadd.f32 %v6929, %v6930
    %v6932 = vrot.slane %v6931, 2
    %v6933 = vadd.f32 %v6931, %v6932
    %v6934 = vrot.slane %v6933, 1
    %v6935 = vadd.f32 %v6933, %v6934
    %v6936 = vsel %vm554, %v6799, 0.0
    %v6937 = vsel %vm554, %v6800, 0.0
    %v6938 = vadd.f32 %v6936, %v6937
    %v6939 = vsel %vm554, %v6801, 0.0
    %v6940 = vadd.f32 %v6938, %v6939
    %v6941 = vsel %vm554, %v6802, 0.0
    %v6942 = vadd.f32 %v6940, %v6941
    %v6943 = vrot.slane %v6942, 4
    %v6944 = vadd.f32 %v6942, %v6943
    %v6945 = vrot.slane %v6944, 2
    %v6946 = vadd.f32 %v6944, %v6945
    %v6947 = vrot.slane %v6946, 1
    %v6948 = vadd.f32 %v6946, %v6947
    %v6949 = vsel %vm554, %v6803, 0.0
    %v6950 = vsel %vm554, %v6804, 0.0
    %v6951 = vadd.f32 %v6949, %v6950
    %v6952 = vsel %vm554, %v6805, 0.0
    %v6953 = vadd.f32 %v6951, %v6952
    %v6954 = vsel %vm554, %v6806, 0.0
    %v6955 = vadd.f32 %v6953, %v6954
    %v6956 = vrot.slane %v6955, 4
    %v6957 = vadd.f32 %v6955, %v6956
    %v6958 = vrot.slane %v6957, 2
    %v6959 = vadd.f32 %v6957, %v6958
    %v6960 = vrot.slane %v6959, 1
    %v6961 = vadd.f32 %v6959, %v6960
    %v6962 = vsel %vm554, %v6807, 0.0
    %v6963 = vsel %vm554, %v6808, 0.0
    %v6964 = vadd.f32 %v6962, %v6963
    %v6965 = vsel %vm554, %v6809, 0.0
    %v6966 = vadd.f32 %v6964, %v6965
    %v6967 = vsel %vm554, %v6810, 0.0
    %v6968 = vadd.f32 %v6966, %v6967
    %v6969 = vrot.slane %v6968, 4
    %v6970 = vadd.f32 %v6968, %v6969
    %v6971 = vrot.slane %v6970, 2
    %v6972 = vadd.f32 %v6970, %v6971
    %v6973 = vrot.slane %v6972, 1
    %v6974 = vadd.f32 %v6972, %v6973
    %v6975 = vsel %vm554, %v6811, 0.0
    %v6976 = vsel %vm554, %v6812, 0.0
    %v6977 = vadd.f32 %v6975, %v6976
    %v6978 = vsel %vm554, %v6813, 0.0
    %v6979 = vadd.f32 %v6977, %v6978
    %v6980 = vsel %vm554, %v6814, 0.0
    %v6981 = vadd.f32 %v6979, %v6980
    %v6982 = vrot.slane %v6981, 4
    %v6983 = vadd.f32 %v6981, %v6982
    %v6984 = vrot.slane %v6983, 2
    %v6985 = vadd.f32 %v6983, %v6984
    %v6986 = vrot.slane %v6985, 1
    %v6987 = vadd.f32 %v6985, %v6986
    %v6988 = vsel %vm554, %v6815, 0.0
    %v6989 = vsel %vm554, %v6816, 0.0
    %v6990 = vadd.f32 %v6988, %v6989
    %v6991 = vsel %vm554, %v6817, 0.0
    %v6992 = vadd.f32 %v6990, %v6991
    %v6993 = vsel %vm554, %v6818, 0.0
    %v6994 = vadd.f32 %v6992, %v6993
    %v6995 = vrot.slane %v6994, 4
    %v6996 = vadd.f32 %v6994, %v6995
    %v6997 = vrot.slane %v6996, 2
    %v6998 = vadd.f32 %v6996, %v6997
    %v6999 = vrot.slane %v6998, 1
    %v7000 = vadd.f32 %v6998, %v6999
    %v7001 = vsel %vm554, %v6819, 0.0
    %v7002 = vsel %vm554, %v6820, 0.0
    %v7003 = vadd.f32 %v7001, %v7002
    %v7004 = vsel %vm554, %v6821, 0.0
    %v7005 = vadd.f32 %v7003, %v7004
    %v7006 = vsel %vm554, %v6822, 0.0
    %v7007 = vadd.f32 %v7005, %v7006
    %v7008 = vrot.slane %v7007, 4
    %v7009 = vadd.f32 %v7007, %v7008
    %v7010 = vrot.slane %v7009, 2
    %v7011 = vadd.f32 %v7009, %v7010
    %v7012 = vrot.slane %v7011, 1
    %v7013 = vadd.f32 %v7011, %v7012
    %v7014 = vsel %vm554, %v6823, 0.0
    %v7015 = vsel %vm554, %v6824, 0.0
    %v7016 = vadd.f32 %v7014, %v7015
    %v7017 = vsel %vm554, %v6825, 0.0
    %v7018 = vadd.f32 %v7016, %v7017
    %v7019 = vsel %vm554, %v6826, 0.0
    %v7020 = vadd.f32 %v7018, %v7019
    %v7021 = vrot.slane %v7020, 4
    %v7022 = vadd.f32 %v7020, %v7021
    %v7023 = vrot.slane %v7022, 2
    %v7024 = vadd.f32 %v7022, %v7023
    %v7025 = vrot.slane %v7024, 1
    %v7026 = vadd.f32 %v7024, %v7025
    %v7027 = vsel %vm554, %v6827, 0.0
    %v7028 = vsel %vm554, %v6828, 0.0
    %v7029 = vadd.f32 %v7027, %v7028
    %v7030 = vsel %vm554, %v6829, 0.0
    %v7031 = vadd.f32 %v7029, %v7030
    %v7032 = vsel %vm554, %v6830, 0.0
    %v7033 = vadd.f32 %v7031, %v7032
    %v7034 = vrot.slane %v7033, 4
    %v7035 = vadd.f32 %v7033, %v7034
    %v7036 = vrot.slane %v7035, 2
    %v7037 = vadd.f32 %v7035, %v7036
    %v7038 = vrot.slane %v7037, 1
    %v7039 = vadd.f32 %v7037, %v7038
    %v7040 = vsel %vm554, %v6831, 0.0
    %v7041 = vsel %vm554, %v6832, 0.0
    %v7042 = vadd.f32 %v7040, %v7041
    %v7043 = vsel %vm554, %v6833, 0.0
    %v7044 = vadd.f32 %v7042, %v7043
    %v7045 = vsel %vm554, %v6834, 0.0
    %v7046 = vadd.f32 %v7044, %v7045
    %v7047 = vrot.slane %v7046, 4
    %v7048 = vadd.f32 %v7046, %v7047
    %v7049 = vrot.slane %v7048, 2
    %v7050 = vadd.f32 %v7048, %v7049
    %v7051 = vrot.slane %v7050, 1
    %v7052 = vadd.f32 %v7050, %v7051
    %v7053 = vsel %vm554, %v6835, 0.0
    %v7054 = vsel %vm554, %v6836, 0.0
    %v7055 = vadd.f32 %v7053, %v7054
    %v7056 = vsel %vm554, %v6837, 0.0
    %v7057 = vadd.f32 %v7055, %v7056
    %v7058 = vsel %vm554, %v6838, 0.0
    %v7059 = vadd.f32 %v7057, %v7058
    %v7060 = vrot.slane %v7059, 4
    %v7061 = vadd.f32 %v7059, %v7060
    %v7062 = vrot.slane %v7061, 2
    %v7063 = vadd.f32 %v7061, %v7062
    %v7064 = vrot.slane %v7063, 1
    %v7065 = vadd.f32 %v7063, %v7064
    %v7066 = vsel %vm554, %v6839, 0.0
    %v7067 = vsel %vm554, %v6840, 0.0
    %v7068 = vadd.f32 %v7066, %v7067
    %v7069 = vsel %vm554, %v6841, 0.0
    %v7070 = vadd.f32 %v7068, %v7069
    %v7071 = vsel %vm554, %v6842, 0.0
    %v7072 = vadd.f32 %v7070, %v7071
    %v7073 = vrot.slane %v7072, 4
    %v7074 = vadd.f32 %v7072, %v7073
    %v7075 = vrot.slane %v7074, 2
    %v7076 = vadd.f32 %v7074, %v7075
    %v7077 = vrot.slane %v7076, 1
    %v7078 = vadd.f32 %v7076, %v7077
    %v7079 = vsel %vm554, %v6843, 0.0
    %v7080 = vsel %vm554, %v6844, 0.0
    %v7081 = vadd.f32 %v7079, %v7080
    %v7082 = vsel %vm554, %v6845, 0.0
    %v7083 = vadd.f32 %v7081, %v7082
    %v7084 = vsel %vm554, %v6846, 0.0
    %v7085 = vadd.f32 %v7083, %v7084
    %v7086 = vrot.slane %v7085, 4
    %v7087 = vadd.f32 %v7085, %v7086
    %v7088 = vrot.slane %v7087, 2
    %v7089 = vadd.f32 %v7087, %v7088
    %v7090 = vrot.slane %v7089, 1
    %v7091 = vadd.f32 %v7089, %v7090
    %v7092 = vsel %vm554, %v6847, 0.0
    %v7093 = vsel %vm554, %v6848, 0.0
    %v7094 = vadd.f32 %v7092, %v7093
    %v7095 = vsel %vm554, %v6849, 0.0
    %v7096 = vadd.f32 %v7094, %v7095
    %v7097 = vsel %vm554, %v6850, 0.0
    %v7098 = vadd.f32 %v7096, %v7097
    %v7099 = vrot.slane %v7098, 4
    %v7100 = vadd.f32 %v7098, %v7099
    %v7101 = vrot.slane %v7100, 2
    %v7102 = vadd.f32 %v7100, %v7101
    %v7103 = vrot.slane %v7102, 1
    %v7104 = vadd.f32 %v7102, %v7103
    %v7105 = vsel %vm554, %v6851, 0.0
    %v7106 = vsel %vm554, %v6852, 0.0
    %v7107 = vadd.f32 %v7105, %v7106
    %v7108 = vsel %vm554, %v6853, 0.0
    %v7109 = vadd.f32 %v7107, %v7108
    %v7110 = vsel %vm554, %v6854, 0.0
    %v7111 = vadd.f32 %v7109, %v7110
    %v7112 = vrot.slane %v7111, 4
    %v7113 = vadd.f32 %v7111, %v7112
    %v7114 = vrot.slane %v7113, 2
    %v7115 = vadd.f32 %v7113, %v7114
    %v7116 = vrot.slane %v7115, 1
    %v7117 = vadd.f32 %v7115, %v7116
    %v7118 = vsel %vm554, %v6855, 0.0
    %v7119 = vsel %vm554, %v6856, 0.0
    %v7120 = vadd.f32 %v7118, %v7119
    %v7121 = vsel %vm554, %v6857, 0.0
    %v7122 = vadd.f32 %v7120, %v7121
    %v7123 = vsel %vm554, %v6858, 0.0
    %v7124 = vadd.f32 %v7122, %v7123
    %v7125 = vrot.slane %v7124, 4
    %v7126 = vadd.f32 %v7124, %v7125
    %v7127 = vrot.slane %v7126, 2
    %v7128 = vadd.f32 %v7126, %v7127
    %v7129 = vrot.slane %v7128, 1
    %v7130 = vadd.f32 %v7128, %v7129
    %v7131 = vsel %vm554, %v6859, 0.0
    %v7132 = vsel %vm554, %v6860, 0.0
    %v7133 = vadd.f32 %v7131, %v7132
    %v7134 = vsel %vm554, %v6861, 0.0
    %v7135 = vadd.f32 %v7133, %v7134
    %v7136 = vsel %vm554, %v6862, 0.0
    %v7137 = vadd.f32 %v7135, %v7136
    %v7138 = vrot.slane %v7137, 4
    %v7139 = vadd.f32 %v7137, %v7138
    %v7140 = vrot.slane %v7139, 2
    %v7141 = vadd.f32 %v7139, %v7140
    %v7142 = vrot.slane %v7141, 1
    %v7143 = vadd.f32 %v7141, %v7142
    %v7144 = vsel %vm554, %v6863, 0.0
    %v7145 = vsel %vm554, %v6864, 0.0
    %v7146 = vadd.f32 %v7144, %v7145
    %v7147 = vsel %vm554, %v6865, 0.0
    %v7148 = vadd.f32 %v7146, %v7147
    %v7149 = vsel %vm554, %v6866, 0.0
    %v7150 = vadd.f32 %v7148, %v7149
    %v7151 = vrot.slane %v7150, 4
    %v7152 = vadd.f32 %v7150, %v7151
    %v7153 = vrot.slane %v7152, 2
    %v7154 = vadd.f32 %v7152, %v7153
    %v7155 = vrot.slane %v7154, 1
    %v7156 = vadd.f32 %v7154, %v7155
    %v7157 = vsel %vm554, %v6867, 0.0
    %v7158 = vsel %vm554, %v6868, 0.0
    %v7159 = vadd.f32 %v7157, %v7158
    %v7160 = vsel %vm554, %v6869, 0.0
    %v7161 = vadd.f32 %v7159, %v7160
    %v7162 = vsel %vm554, %v6870, 0.0
    %v7163 = vadd.f32 %v7161, %v7162
    %v7164 = vrot.slane %v7163, 4
    %v7165 = vadd.f32 %v7163, %v7164
    %v7166 = vrot.slane %v7165, 2
    %v7167 = vadd.f32 %v7165, %v7166
    %v7168 = vrot.slane %v7167, 1
    %v7169 = vadd.f32 %v7167, %v7168
    %v7170 = vsel %vm554, %v6871, 0.0
    %v7171 = vsel %vm554, %v6872, 0.0
    %v7172 = vadd.f32 %v7170, %v7171
    %v7173 = vsel %vm554, %v6873, 0.0
    %v7174 = vadd.f32 %v7172, %v7173
    %v7175 = vsel %vm554, %v6874, 0.0
    %v7176 = vadd.f32 %v7174, %v7175
    %v7177 = vrot.slane %v7176, 4
    %v7178 = vadd.f32 %v7176, %v7177
    %v7179 = vrot.slane %v7178, 2
    %v7180 = vadd.f32 %v7178, %v7179
    %v7181 = vrot.slane %v7180, 1
    %v7182 = vadd.f32 %v7180, %v7181
    %v7183 = vsel %vm554, %v6875, 0.0
    %v7184 = vsel %vm554, %v6876, 0.0
    %v7185 = vadd.f32 %v7183, %v7184
    %v7186 = vsel %vm554, %v6877, 0.0
    %v7187 = vadd.f32 %v7185, %v7186
    %v7188 = vsel %vm554, %v6878, 0.0
    %v7189 = vadd.f32 %v7187, %v7188
    %v7190 = vrot.slane %v7189, 4
    %v7191 = vadd.f32 %v7189, %v7190
    %v7192 = vrot.slane %v7191, 2
    %v7193 = vadd.f32 %v7191, %v7192
    %v7194 = vrot.slane %v7193, 1
    %v7195 = vadd.f32 %v7193, %v7194
    %v7196 = vsel %vm554, %v6879, 0.0
    %v7197 = vsel %vm554, %v6880, 0.0
    %v7198 = vadd.f32 %v7196, %v7197
    %v7199 = vsel %vm554, %v6881, 0.0
    %v7200 = vadd.f32 %v7198, %v7199
    %v7201 = vsel %vm554, %v6882, 0.0
    %v7202 = vadd.f32 %v7200, %v7201
    %v7203 = vrot.slane %v7202, 4
    %v7204 = vadd.f32 %v7202, %v7203
    %v7205 = vrot.slane %v7204, 2
    %v7206 = vadd.f32 %v7204, %v7205
    %v7207 = vrot.slane %v7206, 1
    %v7208 = vadd.f32 %v7206, %v7207
    %v7209 = vsel %vm554, %v6883, 0.0
    %v7210 = vsel %vm554, %v6884, 0.0
    %v7211 = vadd.f32 %v7209, %v7210
    %v7212 = vsel %vm554, %v6885, 0.0
    %v7213 = vadd.f32 %v7211, %v7212
    %v7214 = vsel %vm554, %v6886, 0.0
    %v7215 = vadd.f32 %v7213, %v7214
    %v7216 = vrot.slane %v7215, 4
    %v7217 = vadd.f32 %v7215, %v7216
    %v7218 = vrot.slane %v7217, 2
    %v7219 = vadd.f32 %v7217, %v7218
    %v7220 = vrot.slane %v7219, 1
    %v7221 = vadd.f32 %v7219, %v7220
    %v7222 = vsel %vm554, %v6887, 0.0
    %v7223 = vsel %vm554, %v6888, 0.0
    %v7224 = vadd.f32 %v7222, %v7223
    %v7225 = vsel %vm554, %v6889, 0.0
    %v7226 = vadd.f32 %v7224, %v7225
    %v7227 = vsel %vm554, %v6890, 0.0
    %v7228 = vadd.f32 %v7226, %v7227
    %v7229 = vrot.slane %v7228, 4
    %v7230 = vadd.f32 %v7228, %v7229
    %v7231 = vrot.slane %v7230, 2
    %v7232 = vadd.f32 %v7230, %v7231
    %v7233 = vrot.slane %v7232, 1
    %v7234 = vadd.f32 %v7232, %v7233
    %v7235 = vsel %vm554, %v6891, 0.0
    %v7236 = vsel %vm554, %v6892, 0.0
    %v7237 = vadd.f32 %v7235, %v7236
    %v7238 = vsel %vm554, %v6893, 0.0
    %v7239 = vadd.f32 %v7237, %v7238
    %v7240 = vsel %vm554, %v6894, 0.0
    %v7241 = vadd.f32 %v7239, %v7240
    %v7242 = vrot.slane %v7241, 4
    %v7243 = vadd.f32 %v7241, %v7242
    %v7244 = vrot.slane %v7243, 2
    %v7245 = vadd.f32 %v7243, %v7244
    %v7246 = vrot.slane %v7245, 1
    %v7247 = vadd.f32 %v7245, %v7246
    %v7248 = vsel %vm554, %v6895, 0.0
    %v7249 = vsel %vm554, %v6896, 0.0
    %v7250 = vadd.f32 %v7248, %v7249
    %v7251 = vsel %vm554, %v6897, 0.0
    %v7252 = vadd.f32 %v7250, %v7251
    %v7253 = vsel %vm554, %v6898, 0.0
    %v7254 = vadd.f32 %v7252, %v7253
    %v7255 = vrot.slane %v7254, 4
    %v7256 = vadd.f32 %v7254, %v7255
    %v7257 = vrot.slane %v7256, 2
    %v7258 = vadd.f32 %v7256, %v7257
    %v7259 = vrot.slane %v7258, 1
    %v7260 = vadd.f32 %v7258, %v7259
    %v7261 = vsel %vm554, %v6899, 0.0
    %v7262 = vsel %vm554, %v6900, 0.0
    %v7263 = vadd.f32 %v7261, %v7262
    %v7264 = vsel %vm554, %v6901, 0.0
    %v7265 = vadd.f32 %v7263, %v7264
    %v7266 = vsel %vm554, %v6902, 0.0
    %v7267 = vadd.f32 %v7265, %v7266
    %v7268 = vrot.slane %v7267, 4
    %v7269 = vadd.f32 %v7267, %v7268
    %v7270 = vrot.slane %v7269, 2
    %v7271 = vadd.f32 %v7269, %v7270
    %v7272 = vrot.slane %v7271, 1
    %v7273 = vadd.f32 %v7271, %v7272
    %v7274 = vsel %vm554, %v6903, 0.0
    %v7275 = vsel %vm554, %v6904, 0.0
    %v7276 = vadd.f32 %v7274, %v7275
    %v7277 = vsel %vm554, %v6905, 0.0
    %v7278 = vadd.f32 %v7276, %v7277
    %v7279 = vsel %vm554, %v6906, 0.0
    %v7280 = vadd.f32 %v7278, %v7279
    %v7281 = vrot.slane %v7280, 4
    %v7282 = vadd.f32 %v7280, %v7281
    %v7283 = vrot.slane %v7282, 2
    %v7284 = vadd.f32 %v7282, %v7283
    %v7285 = vrot.slane %v7284, 1
    %v7286 = vadd.f32 %v7284, %v7285
    %v7287 = vsel %vm554, %v6907, 0.0
    %v7288 = vsel %vm554, %v6908, 0.0
    %v7289 = vadd.f32 %v7287, %v7288
    %v7290 = vsel %vm554, %v6909, 0.0
    %v7291 = vadd.f32 %v7289, %v7290
    %v7292 = vsel %vm554, %v6910, 0.0
    %v7293 = vadd.f32 %v7291, %v7292
    %v7294 = vrot.slane %v7293, 4
    %v7295 = vadd.f32 %v7293, %v7294
    %v7296 = vrot.slane %v7295, 2
    %v7297 = vadd.f32 %v7295, %v7296
    %v7298 = vrot.slane %v7297, 1
    %v7299 = vadd.f32 %v7297, %v7298
    %v7300 = vsel %vm554, %v6911, 0.0
    %v7301 = vsel %vm554, %v6912, 0.0
    %v7302 = vadd.f32 %v7300, %v7301
    %v7303 = vsel %vm554, %v6913, 0.0
    %v7304 = vadd.f32 %v7302, %v7303
    %v7305 = vsel %vm554, %v6914, 0.0
    %v7306 = vadd.f32 %v7304, %v7305
    %v7307 = vrot.slane %v7306, 4
    %v7308 = vadd.f32 %v7306, %v7307
    %v7309 = vrot.slane %v7308, 2
    %v7310 = vadd.f32 %v7308, %v7309
    %v7311 = vrot.slane %v7310, 1
    %v7312 = vadd.f32 %v7310, %v7311
    %v7313 = vsel %vm554, %v6915, 0.0
    %v7314 = vsel %vm554, %v6916, 0.0
    %v7315 = vadd.f32 %v7313, %v7314
    %v7316 = vsel %vm554, %v6917, 0.0
    %v7317 = vadd.f32 %v7315, %v7316
    %v7318 = vsel %vm554, %v6918, 0.0
    %v7319 = vadd.f32 %v7317, %v7318
    %v7320 = vrot.slane %v7319, 4
    %v7321 = vadd.f32 %v7319, %v7320
    %v7322 = vrot.slane %v7321, 2
    %v7323 = vadd.f32 %v7321, %v7322
    %v7324 = vrot.slane %v7323, 1
    %v7325 = vadd.f32 %v7323, %v7324
    %v7326 = vsel %vm554, %v6919, 0.0
    %v7327 = vsel %vm554, %v6920, 0.0
    %v7328 = vadd.f32 %v7326, %v7327
    %v7329 = vsel %vm554, %v6921, 0.0
    %v7330 = vadd.f32 %v7328, %v7329
    %v7331 = vsel %vm554, %v6922, 0.0
    %v7332 = vadd.f32 %v7330, %v7331
    %v7333 = vrot.slane %v7332, 4
    %v7334 = vadd.f32 %v7332, %v7333
    %v7335 = vrot.slane %v7334, 2
    %v7336 = vadd.f32 %v7334, %v7335
    %v7337 = vrot.slane %v7336, 1
    %v7338 = vadd.f32 %v7336, %v7337
    %v7340 = vlaneseq
    %v7341 = vshrl.u32 %v7340, 7
    %v7342 = vsub.s32 0, %v7341
    %v7343 = vrot.slane %v4868, %v7342
    %v7345 = vmul.f32 %v641, %v7343
    %v7346 = vmul.f32 %v644, %v7343
    %v7347 = vmul.f32 %v647, %v7343
    %v7348 = vmul.f32 %v650, %v7343
    %v7381 = vsel %vm4697, %v6948, %v6935
    %v7382 = vsel %vm4699, %v6961, %v7381
    %v7383 = vsel %vm4701, %v6974, %v7382
    %v7384 = vsel %vm4703, %v6987, %v7383
    %v7385 = vsel %vm4705, %v7000, %v7384
    %v7386 = vsel %vm4707, %v7013, %v7385
    %v7387 = vsel %vm4709, %v7026, %v7386
    %v7388 = vsel %vm4697, %v7052, %v7039
    %v7389 = vsel %vm4699, %v7065, %v7388
    %v7390 = vsel %vm4701, %v7078, %v7389
    %v7391 = vsel %vm4703, %v7091, %v7390
    %v7392 = vsel %vm4705, %v7104, %v7391
    %v7393 = vsel %vm4707, %v7117, %v7392
    %v7394 = vsel %vm4709, %v7130, %v7393
    %v7395 = vsel %vm4697, %v7156, %v7143
    %v7396 = vsel %vm4699, %v7169, %v7395
    %v7397 = vsel %vm4701, %v7182, %v7396
    %v7398 = vsel %vm4703, %v7195, %v7397
    %v7399 = vsel %vm4705, %v7208, %v7398
    %v7400 = vsel %vm4707, %v7221, %v7399
    %v7401 = vsel %vm4709, %v7234, %v7400
    %v7402 = vsel %vm4697, %v7260, %v7247
    %v7403 = vsel %vm4699, %v7273, %v7402
    %v7404 = vsel %vm4701, %v7286, %v7403
    %v7405 = vsel %vm4703, %v7299, %v7404
    %v7406 = vsel %vm4705, %v7312, %v7405
    %v7407 = vsel %vm4707, %v7325, %v7406
    %v7408 = vsel %vm4709, %v7338, %v7407
    %v7409 = vsel %vm554, %v7387, 0
    %v7411 = vsel %vm554, %v7394, 0
    %v7413 = vsel %vm554, %v7401, 0
    %v7415 = vsel %vm554, %v7408, 0
    %7417 = vmatprep.subr.mxu0 0.0
    %7418 = vmatpush1.msra.mxu0 %v4864
    %7419 = vmatprep.subr.mxu0 0.0
    %7420 = vmatpush1.msra.mxu0 %v4865
    %7421 = vmatprep.subr.mxu0 0.0
    %7422 = vmatpush1.msra.mxu0 %v4866
    %7423 = vmatprep.subr.mxu0 0.0
    %7424 = vmatpush1.msra.mxu0 %v4867
    %7425 = vmatprep.subr.mxu0 0.0
    %7426 = vmatpush1.msra.mxu0 0.0
    %7427 = vmatprep.subr.mxu0 0.0
    %7428 = vmatpush1.msra.mxu0 0.0
    %7429 = vmatprep.subr.mxu0 0.0
    %7430 = vmatpush1.msra.mxu0 0.0
    %7431 = vmatprep.subr.mxu0 0.0
    %7432 = vmatpush1.msra.mxu0 0.0
    %7433 = vmatprep.subr.mxu0 0.0
    %7434 = vmatpush1.msra.mxu0 0.0
    %7435 = vmatprep.subr.mxu0 0.0
    %7436 = vmatpush1.msra.mxu0 0.0
    %7437 = vmatprep.subr.mxu0 0.0
    %7438 = vmatpush1.msra.mxu0 0.0
    %7439 = vmatprep.subr.mxu0 0.0
    %7440 = vmatpush1.msra.mxu0 0.0
    %7441 = vmatprep.subr.mxu0 0.0
    %7442 = vmatpush1.msra.mxu0 0.0
    %7443 = vmatprep.subr.mxu0 0.0
    %7444 = vmatpush1.msra.mxu0 0.0
    %7445 = vmatprep.subr.mxu0 0.0
    %7446 = vmatpush1.msra.mxu0 0.0
    %7447 = vmatprep.subr.mxu0 0.0
    %7448 = vmatpush1.msra.mxu0 0.0
    %7449 = vmatprep.subr.mxu0 0.0
    %7450 = vmatpush1.msra.mxu0 0.0
    %7451 = vmatprep.subr.mxu0 0.0
    %7452 = vmatpush1.msra.mxu0 0.0
    %7453 = vmatprep.subr.mxu0 0.0
    %7454 = vmatpush1.msra.mxu0 0.0
    %7455 = vmatprep.subr.mxu0 0.0
    %7456 = vmatpush1.msra.mxu0 0.0
    %7457 = vmatprep.subr.mxu0 0.0
    %7458 = vmatpush1.msra.mxu0 0.0
    %7459 = vmatprep.subr.mxu0 0.0
    %7460 = vmatpush1.msra.mxu0 0.0
    %7461 = vmatprep.subr.mxu0 0.0
    %7462 = vmatpush1.msra.mxu0 0.0
    %7463 = vmatprep.subr.mxu0 0.0
    %7464 = vmatpush1.msra.mxu0 0.0
    %7465 = vmatprep.subr.mxu0 0.0
    %7466 = vmatpush1.msra.mxu0 0.0
    %7467 = vmatprep.subr.mxu0 0.0
    %7468 = vmatpush1.msra.mxu0 0.0
    %7469 = vmatprep.subr.mxu0 0.0
    %7470 = vmatpush1.msra.mxu0 0.0
    %7471 = vmatprep.subr.mxu0 0.0
    %7472 = vmatpush1.msra.mxu0 0.0
    %7473 = vmatprep.subr.mxu0 0.0
    %7474 = vmatpush1.msra.mxu0 0.0
    %7475 = vmatprep.subr.mxu0 0.0
    %7476 = vmatpush1.msra.mxu0 0.0
    %7477 = vmatprep.subr.mxu0 0.0
    %7478 = vmatpush1.msra.mxu0 0.0
    %7479 = vmatprep.subr.mxu0 0.0
    %7480 = vmatpush1.msra.mxu0 0.0
    %7481 = vmatprep.mubr.f32.mxu0 0.0
    %7482 = vmatmul.mubr.f32.gmra.mrb[0].mxu0 %v7409
    %v7483 = vpop.f32.mrb[0].mxu0
    %v7484 = vadd.f32 %v7345, %v7483
    %v7485 = vpop.f32.mrb[0].mxu0
    %7486 = vmatprep.mubr.f32.mxu0 0.0
    %7487 = vmatmul.mubr.f32.gmra.mrb[0].mxu0 %v7411
    %v7488 = vpop.f32.mrb[0].mxu0
    %v7489 = vadd.f32 %v7346, %v7488
    %v7490 = vpop.f32.mrb[0].mxu0
    %7491 = vmatprep.mubr.f32.mxu0 0.0
    %7492 = vmatmul.mubr.f32.gmra.mrb[0].mxu0 %v7413
    %v7493 = vpop.f32.mrb[0].mxu0
    %v7494 = vadd.f32 %v7347, %v7493
    %v7495 = vpop.f32.mrb[0].mxu0
    %7496 = vmatprep.mubr.f32.mxu0 0.0
    %7497 = vmatmul.mubr.f32.gmra.mrb[0].mxu0 %v7415
    %v7498 = vpop.f32.mrb[0].mxu0
    %v7499 = vadd.f32 %v7348, %v7498
    %v7500 = vpop.f32.mrb[0].mxu0
    %7501 = vdwg.mxu0
    %v7502 = vxor.u32 %v7484, 2147483648
    %v7503 = vxor.u32 %v7489, 2147483648
    %v7504 = vxor.u32 %v7494, 2147483648
    %v7505 = vxor.u32 %v7499, 2147483648
    %v7506 = vmul.f32 %v7502, 1.442695
    %v7507 = vpow.pop %v7506
    %v7508 = vmul.f32 %v7503, 1.442695
    %v7509 = vpow.pop %v7508
    %v7510 = vmul.f32 %v7504, 1.442695
    %v7511 = vpow.pop %v7510
    %v7512 = vmul.f32 %v7505, 1.442695
    %v7513 = vpow.pop %v7512
    %v7514 = vadd.f32 %v7507, 1.0
    %v7515 = vadd.f32 %v7509, 1.0
    %v7516 = vadd.f32 %v7511, 1.0
    %v7517 = vadd.f32 %v7513, 1.0
    %v7518 = vrcp.pop %v7514
    %v7519 = vmul.f32 1.0, %v7518
    %v7520 = vrcp.pop %v7515
    %v7521 = vmul.f32 1.0, %v7520
    %v7522 = vrcp.pop %v7516
    %v7523 = vmul.f32 1.0, %v7522
    %v7524 = vrcp.pop %v7517
    %v7525 = vmul.f32 1.0, %v7524
    %v7526 = vmul.f32 %v7484, %v7519
    %v7527 = vmul.f32 %v7489, %v7521
    %v7528 = vmul.f32 %v7494, %v7523
    %v7529 = vmul.f32 %v7499, %v7525
    %v7530 = vld [vmem:[%s49] sm:$0xff]
    %v7531 = vld [vmem:[%s49 + $0x8] sm:$0xff]
    %v7532 = vld [vmem:[%s49 + $0x10] sm:$0xff]
    %v7533 = vld [vmem:[%s49 + $0x18] sm:$0xff]
    %v7534 = vld [vmem:[%s51] sm:$0xff]
    %v7535 = vld [vmem:[%s51 + $0x8] sm:$0xff]
    %v7536 = vld [vmem:[%s51 + $0x10] sm:$0xff]
    %v7537 = vld [vmem:[%s51 + $0x18] sm:$0xff]
    %v7538 = vld [vmem:[%s53] sm:$0x1]
    %v7539 = vld [vmem:[%s55] sm:$0xf]
    %v7540 = vld [vmem:[%s57] sm:$0x1]
    %v7541 = vld [vmem:[%s59] sm:$0xff]
    %v7542 = vld [vmem:[%s59 + $0x8] sm:$0xff]
    %v7543 = vld [vmem:[%s59 + $0x10] sm:$0xff]
    %v7544 = vld [vmem:[%s59 + $0x18] sm:$0xff]
    %v7545 = vld [vmem:[%s61] sm:$0x1]
    %v7547 = vsel %vm1892, %v7539, 0
    %7549 = vmatprep.subr.mxu0 0.0
    %7550 = vmatpush1.msra.mxu0 %v7547
    %7551 = vmatprep.subr.mxu0 0.0
    %7552 = vmatpush1.msra.mxu0 0.0
    %7553 = vmatprep.subr.mxu0 0.0
    %7554 = vmatpush1.msra.mxu0 0.0
    %7555 = vmatprep.subr.mxu0 0.0
    %7556 = vmatpush1.msra.mxu0 0.0
    %7557 = vmatprep.subr.mxu0 0.0
    %7558 = vmatpush1.msra.mxu0 0.0
    %7559 = vmatprep.subr.mxu0 0.0
    %7560 = vmatpush1.msra.mxu0 0.0
    %7561 = vmatprep.subr.mxu0 0.0
    %7562 = vmatpush1.msra.mxu0 0.0
    %7563 = vmatprep.subr.mxu0 0.0
    %7564 = vmatpush1.msra.mxu0 0.0
    %7565 = vmatprep.subr.mxu0 0.0
    %7566 = vmatpush1.msra.mxu0 0.0
    %7567 = vmatprep.subr.mxu0 0.0
    %7568 = vmatpush1.msra.mxu0 0.0
    %7569 = vmatprep.subr.mxu0 0.0
    %7570 = vmatpush1.msra.mxu0 0.0
    %7571 = vmatprep.subr.mxu0 0.0
    %7572 = vmatpush1.msra.mxu0 0.0
    %7573 = vmatprep.subr.mxu0 0.0
    %7574 = vmatpush1.msra.mxu0 0.0
    %7575 = vmatprep.subr.mxu0 0.0
    %7576 = vmatpush1.msra.mxu0 0.0
    %7577 = vmatprep.subr.mxu0 0.0
    %7578 = vmatpush1.msra.mxu0 0.0
    %7579 = vmatprep.subr.mxu0 0.0
    %7580 = vmatpush1.msra.mxu0 0.0
    %7581 = vmatprep.subr.mxu0 0.0
    %7582 = vmatpush1.msra.mxu0 0.0
    %7583 = vmatprep.subr.mxu0 0.0
    %7584 = vmatpush1.msra.mxu0 0.0
    %7585 = vmatprep.subr.mxu0 0.0
    %7586 = vmatpush1.msra.mxu0 0.0
    %7587 = vmatprep.subr.mxu0 0.0
    %7588 = vmatpush1.msra.mxu0 0.0
    %7589 = vmatprep.subr.mxu0 0.0
    %7590 = vmatpush1.msra.mxu0 0.0
    %7591 = vmatprep.subr.mxu0 0.0
    %7592 = vmatpush1.msra.mxu0 0.0
    %7593 = vmatprep.subr.mxu0 0.0
    %7594 = vmatpush1.msra.mxu0 0.0
    %7595 = vmatprep.subr.mxu0 0.0
    %7596 = vmatpush1.msra.mxu0 0.0
    %7597 = vmatprep.subr.mxu0 0.0
    %7598 = vmatpush1.msra.mxu0 0.0
    %7599 = vmatprep.subr.mxu0 0.0
    %7600 = vmatpush1.msra.mxu0 0.0
    %7601 = vmatprep.subr.mxu0 0.0
    %7602 = vmatpush1.msra.mxu0 0.0
    %7603 = vmatprep.subr.mxu0 0.0
    %7604 = vmatpush1.msra.mxu0 0.0
    %7605 = vmatprep.subr.mxu0 0.0
    %7606 = vmatpush1.msra.mxu0 0.0
    %7607 = vmatprep.subr.mxu0 0.0
    %7608 = vmatpush1.msra.mxu0 0.0
    %7609 = vmatprep.subr.mxu0 0.0
    %7610 = vmatpush1.msra.mxu0 0.0
    %7611 = vmatprep.subr.mxu0 0.0
    %7612 = vmatpush1.msra.mxu0 0.0
    %7613 = vmatprep.mubr.f32.mxu0 0.0
    %7614 = vmatmul.mubr.f32.gmra.mrb[0].mxu0 %v2166
    %v7615 = vpop.f32.mrb[0].mxu0
    %v7616 = vadd.f32 0.0, %v7615
    %v7617 = vpop.f32.mrb[0].mxu0
    %7618 = vmatprep.mubr.f32.mxu0 0.0
    %7619 = vmatmul.mubr.f32.gmra.mrb[0].mxu0 %v2169
    %v7620 = vpop.f32.mrb[0].mxu0
    %v7621 = vadd.f32 0.0, %v7620
    %v7622 = vpop.f32.mrb[0].mxu0
    %7623 = vmatprep.mubr.f32.mxu0 0.0
    %7624 = vmatmul.mubr.f32.gmra.mrb[0].mxu0 %v2172
    %v7625 = vpop.f32.mrb[0].mxu0
    %v7626 = vadd.f32 0.0, %v7625
    %v7627 = vpop.f32.mrb[0].mxu0
    %7628 = vmatprep.mubr.f32.mxu0 0.0
    %7629 = vmatmul.mubr.f32.gmra.mrb[0].mxu0 %v2175
    %v7630 = vpop.f32.mrb[0].mxu0
    %v7631 = vadd.f32 0.0, %v7630
    %v7632 = vpop.f32.mrb[0].mxu0
    %7633 = vdwg.mxu0
    %v7635 = vsel %vm554, %v7526, 0
    %v7638 = vsel %vm554, %v7527, 0
    %v7641 = vsel %vm554, %v7528, 0
    %v7644 = vsel %vm554, %v7529, 0
    %7646 = vmatprep.subr.mxu0 0.0
    %7647 = vmatpush1.msra.mxu0 %v7530
    %7648 = vmatprep.subr.mxu0 0.0
    %7649 = vmatpush1.msra.mxu0 %v7531
    %7650 = vmatprep.subr.mxu0 0.0
    %7651 = vmatpush1.msra.mxu0 %v7532
    %7652 = vmatprep.subr.mxu0 0.0
    %7653 = vmatpush1.msra.mxu0 %v7533
    %7654 = vmatprep.subr.mxu0 0.0
    %7655 = vmatpush1.msra.mxu0 0.0
    %7656 = vmatprep.subr.mxu0 0.0
    %7657 = vmatpush1.msra.mxu0 0.0
    %7658 = vmatprep.subr.mxu0 0.0
    %7659 = vmatpush1.msra.mxu0 0.0
    %7660 = vmatprep.subr.mxu0 0.0
    %7661 = vmatpush1.msra.mxu0 0.0
    %7662 = vmatprep.subr.mxu0 0.0
    %7663 = vmatpush1.msra.mxu0 0.0
    %7664 = vmatprep.subr.mxu0 0.0
    %7665 = vmatpush1.msra.mxu0 0.0
    %7666 = vmatprep.subr.mxu0 0.0
    %7667 = vmatpush1.msra.mxu0 0.0
    %7668 = vmatprep.subr.mxu0 0.0
    %7669 = vmatpush1.msra.mxu0 0.0
    %7670 = vmatprep.subr.mxu0 0.0
    %7671 = vmatpush1.msra.mxu0 0.0
    %7672 = vmatprep.subr.mxu0 0.0
    %7673 = vmatpush1.msra.mxu0 0.0
    %7674 = vmatprep.subr.mxu0 0.0
    %7675 = vmatpush1.msra.mxu0 0.0
    %7676 = vmatprep.subr.mxu0 0.0
    %7677 = vmatpush1.msra.mxu0 0.0
    %7678 = vmatprep.subr.mxu0 0.0
    %7679 = vmatpush1.msra.mxu0 0.0
    %7680 = vmatprep.subr.mxu0 0.0
    %7681 = vmatpush1.msra.mxu0 0.0
    %7682 = vmatprep.subr.mxu0 0.0
    %7683 = vmatpush1.msra.mxu0 0.0
    %7684 = vmatprep.subr.mxu0 0.0
    %7685 = vmatpush1.msra.mxu0 0.0
    %7686 = vmatprep.subr.mxu0 0.0
    %7687 = vmatpush1.msra.mxu0 0.0
    %7688 = vmatprep.subr.mxu0 0.0
    %7689 = vmatpush1.msra.mxu0 0.0
    %7690 = vmatprep.subr.mxu0 0.0
    %7691 = vmatpush1.msra.mxu0 0.0
    %7692 = vmatprep.subr.mxu0 0.0
    %7693 = vmatpush1.msra.mxu0 0.0
    %7694 = vmatprep.subr.mxu0 0.0
    %7695 = vmatpush1.msra.mxu0 0.0
    %7696 = vmatprep.subr.mxu0 0.0
    %7697 = vmatpush1.msra.mxu0 0.0
    %7698 = vmatprep.subr.mxu0 0.0
    %7699 = vmatpush1.msra.mxu0 0.0
    %7700 = vmatprep.subr.mxu0 0.0
    %7701 = vmatpush1.msra.mxu0 0.0
    %7702 = vmatprep.subr.mxu0 0.0
    %7703 = vmatpush1.msra.mxu0 0.0
    %7704 = vmatprep.subr.mxu0 0.0
    %7705 = vmatpush1.msra.mxu0 0.0
    %7706 = vmatprep.subr.mxu0 0.0
    %7707 = vmatpush1.msra.mxu0 0.0
    %7708 = vmatprep.subr.mxu0 0.0
    %7709 = vmatpush1.msra.mxu0 0.0
    %7710 = vmatprep.mubr.f32.mxu0 0.0
    %7711 = vmatmul.mubr.f32.gmra.mrb[0].mxu0 %v7635
    %v7712 = vpop.f32.mrb[0].mxu0
    %v7713 = vadd.f32 %v7616, %v7712
    %v7714 = vpop.f32.mrb[0].mxu0
    %7715 = vmatprep.mubr.f32.mxu0 0.0
    %7716 = vmatmul.mubr.f32.gmra.mrb[0].mxu0 %v7638
    %v7717 = vpop.f32.mrb[0].mxu0
    %v7718 = vadd.f32 %v7621, %v7717
    %v7719 = vpop.f32.mrb[0].mxu0
    %7720 = vmatprep.mubr.f32.mxu0 0.0
    %7721 = vmatmul.mubr.f32.gmra.mrb[0].mxu0 %v7641
    %v7722 = vpop.f32.mrb[0].mxu0
    %v7723 = vadd.f32 %v7626, %v7722
    %v7724 = vpop.f32.mrb[0].mxu0
    %7725 = vmatprep.mubr.f32.mxu0 0.0
    %7726 = vmatmul.mubr.f32.gmra.mrb[0].mxu0 %v7644
    %v7727 = vpop.f32.mrb[0].mxu0
    %v7728 = vadd.f32 %v7631, %v7727
    %v7729 = vpop.f32.mrb[0].mxu0
    %7730 = vdwg.mxu0
    %v7732 = vlaneseq
    %v7733 = vshrl.u32 %v7732, 7
    %v7734 = vsub.s32 0, %v7733
    %v7735 = vrot.slane %v7540, %v7734
    %v7737 = vadd.f32 %v7713, %v7735
    %v7738 = vadd.f32 %v7718, %v7735
    %v7739 = vadd.f32 %v7723, %v7735
    %v7740 = vadd.f32 %v7728, %v7735
    %7741 = vmatprep.subr.mxu0 0.0
    %7742 = vmatpush1.msra.mxu0 %v7534
    %7743 = vmatprep.subr.mxu0 0.0
    %7744 = vmatpush1.msra.mxu0 %v7535
    %7745 = vmatprep.subr.mxu0 0.0
    %7746 = vmatpush1.msra.mxu0 %v7536
    %7747 = vmatprep.subr.mxu0 0.0
    %7748 = vmatpush1.msra.mxu0 %v7537
    %7749 = vmatprep.subr.mxu0 0.0
    %7750 = vmatpush1.msra.mxu0 0.0
    %7751 = vmatprep.subr.mxu0 0.0
    %7752 = vmatpush1.msra.mxu0 0.0
    %7753 = vmatprep.subr.mxu0 0.0
    %7754 = vmatpush1.msra.mxu0 0.0
    %7755 = vmatprep.subr.mxu0 0.0
    %7756 = vmatpush1.msra.mxu0 0.0
    %7757 = vmatprep.subr.mxu0 0.0
    %7758 = vmatpush1.msra.mxu0 0.0
    %7759 = vmatprep.subr.mxu0 0.0
    %7760 = vmatpush1.msra.mxu0 0.0
    %7761 = vmatprep.subr.mxu0 0.0
    %7762 = vmatpush1.msra.mxu0 0.0
    %7763 = vmatprep.subr.mxu0 0.0
    %7764 = vmatpush1.msra.mxu0 0.0
    %7765 = vmatprep.subr.mxu0 0.0
    %7766 = vmatpush1.msra.mxu0 0.0
    %7767 = vmatprep.subr.mxu0 0.0
    %7768 = vmatpush1.msra.mxu0 0.0
    %7769 = vmatprep.subr.mxu0 0.0
    %7770 = vmatpush1.msra.mxu0 0.0
    %7771 = vmatprep.subr.mxu0 0.0
    %7772 = vmatpush1.msra.mxu0 0.0
    %7773 = vmatprep.subr.mxu0 0.0
    %7774 = vmatpush1.msra.mxu0 0.0
    %7775 = vmatprep.subr.mxu0 0.0
    %7776 = vmatpush1.msra.mxu0 0.0
    %7777 = vmatprep.subr.mxu0 0.0
    %7778 = vmatpush1.msra.mxu0 0.0
    %7779 = vmatprep.subr.mxu0 0.0
    %7780 = vmatpush1.msra.mxu0 0.0
    %7781 = vmatprep.subr.mxu0 0.0
    %7782 = vmatpush1.msra.mxu0 0.0
    %7783 = vmatprep.subr.mxu0 0.0
    %7784 = vmatpush1.msra.mxu0 0.0
    %7785 = vmatprep.subr.mxu0 0.0
    %7786 = vmatpush1.msra.mxu0 0.0
    %7787 = vmatprep.subr.mxu0 0.0
    %7788 = vmatpush1.msra.mxu0 0.0
    %7789 = vmatprep.subr.mxu0 0.0
    %7790 = vmatpush1.msra.mxu0 0.0
    %7791 = vmatprep.subr.mxu0 0.0
    %7792 = vmatpush1.msra.mxu0 0.0
    %7793 = vmatprep.subr.mxu0 0.0
    %7794 = vmatpush1.msra.mxu0 0.0
    %7795 = vmatprep.subr.mxu0 0.0
    %7796 = vmatpush1.msra.mxu0 0.0
    %7797 = vmatprep.subr.mxu0 0.0
    %7798 = vmatpush1.msra.mxu0 0.0
    %7799 = vmatprep.subr.mxu0 0.0
    %7800 = vmatpush1.msra.mxu0 0.0
    %7801 = vmatprep.subr.mxu0 0.0
    %7802 = vmatpush1.msra.mxu0 0.0
    %7803 = vmatprep.subr.mxu0 0.0
    %7804 = vmatpush1.msra.mxu0 0.0
    %7805 = vmatprep.mubr.f32.mxu0 0.0
    %7806 = vmatmul.mubr.f32.gmra.mrb[0].mxu0 %v7635
    %v7807 = vpop.f32.mrb[0].mxu0
    %v7808 = vadd.f32 0.0, %v7807
    %v7809 = vpop.f32.mrb[0].mxu0
    %7810 = vmatprep.mubr.f32.mxu0 0.0
    %7811 = vmatmul.mubr.f32.gmra.mrb[0].mxu0 %v7638
    %v7812 = vpop.f32.mrb[0].mxu0
    %v7813 = vadd.f32 0.0, %v7812
    %v7814 = vpop.f32.mrb[0].mxu0
    %7815 = vmatprep.mubr.f32.mxu0 0.0
    %7816 = vmatmul.mubr.f32.gmra.mrb[0].mxu0 %v7641
    %v7817 = vpop.f32.mrb[0].mxu0
    %v7818 = vadd.f32 0.0, %v7817
    %v7819 = vpop.f32.mrb[0].mxu0
    %7820 = vmatprep.mubr.f32.mxu0 0.0
    %7821 = vmatmul.mubr.f32.gmra.mrb[0].mxu0 %v7644
    %v7822 = vpop.f32.mrb[0].mxu0
    %v7823 = vadd.f32 0.0, %v7822
    %v7824 = vpop.f32.mrb[0].mxu0
    %7825 = vdwg.mxu0
    %v7830 = vcombine.high %v7737, %v7737
    %v7832 = vunpack.c.l.s4 1966171168
    %v7833 = vunpack.c.0.s8 %v7832
    %v7834 = vlaneseq
    %v7835 = vshrl.u32 %v7834, 7
    %v7836 = vsub.s32 %v7833, %v7835
    %v7837 = vrot.slane %v7737, %v7836
    %v7839 = vunpack.c.l.s4 1966171168
    %v7840 = vunpack.c.0.s8 %v7839
    %v7841 = vlaneseq
    %v7842 = vshrl.u32 %v7841, 7
    %v7843 = vsub.s32 %v7840, %v7842
    %v7844 = vrot.slane %v7830, %v7843
    %v7845 = vcombine.high %v7837, %v7837
    %v7846 = vcombine.high %v7844, %v7844
    %v7848 = vunpack.c.l.s4 1966171168
    %v7849 = vunpack.c.0.s8 %v7848
    %v7850 = vlaneseq
    %v7851 = vshrl.u32 %v7850, 7
    %v7852 = vsub.s32 %v7849, %v7851
    %v7853 = vrot.slane %v7837, %v7852
    %v7855 = vunpack.c.l.s4 1966171168
    %v7856 = vunpack.c.0.s8 %v7855
    %v7857 = vlaneseq
    %v7858 = vshrl.u32 %v7857, 7
    %v7859 = vsub.s32 %v7856, %v7858
    %v7860 = vrot.slane %v7844, %v7859
    %v7862 = vunpack.c.l.s4 1966171168
    %v7863 = vunpack.c.0.s8 %v7862
    %v7864 = vlaneseq
    %v7865 = vshrl.u32 %v7864, 7
    %v7866 = vsub.s32 %v7863, %v7865
    %v7867 = vrot.slane %v7845, %v7866
    %v7869 = vunpack.c.l.s4 1966171168
    %v7870 = vunpack.c.0.s8 %v7869
    %v7871 = vlaneseq
    %v7872 = vshrl.u32 %v7871, 7
    %v7873 = vsub.s32 %v7870, %v7872
    %v7874 = vrot.slane %v7846, %v7873
    %v7875 = vcombine.high %v7853, %v7853
    %v7876 = vcombine.high %v7860, %v7860
    %v7877 = vcombine.high %v7867, %v7867
    %v7878 = vcombine.high %v7874, %v7874
    %v7879 = vcombine.high %v7738, %v7738
    %v7881 = vunpack.c.l.s4 1966171168
    %v7882 = vunpack.c.0.s8 %v7881
    %v7883 = vlaneseq
    %v7884 = vshrl.u32 %v7883, 7
    %v7885 = vsub.s32 %v7882, %v7884
    %v7886 = vrot.slane %v7738, %v7885
    %v7888 = vunpack.c.l.s4 1966171168
    %v7889 = vunpack.c.0.s8 %v7888
    %v7890 = vlaneseq
    %v7891 = vshrl.u32 %v7890, 7
    %v7892 = vsub.s32 %v7889, %v7891
    %v7893 = vrot.slane %v7879, %v7892
    %v7894 = vcombine.high %v7886, %v7886
    %v7895 = vcombine.high %v7893, %v7893
    %v7897 = vunpack.c.l.s4 1966171168
    %v7898 = vunpack.c.0.s8 %v7897
    %v7899 = vlaneseq
    %v7900 = vshrl.u32 %v7899, 7
    %v7901 = vsub.s32 %v7898, %v7900
    %v7902 = vrot.slane %v7886, %v7901
    %v7904 = vunpack.c.l.s4 1966171168
    %v7905 = vunpack.c.0.s8 %v7904
    %v7906 = vlaneseq
    %v7907 = vshrl.u32 %v7906, 7
    %v7908 = vsub.s32 %v7905, %v7907
    %v7909 = vrot.slane %v7893, %v7908
    %v7911 = vunpack.c.l.s4 1966171168
    %v7912 = vunpack.c.0.s8 %v7911
    %v7913 = vlaneseq
    %v7914 = vshrl.u32 %v7913, 7
    %v7915 = vsub.s32 %v7912, %v7914
    %v7916 = vrot.slane %v7894, %v7915
    %v7918 = vunpack.c.l.s4 1966171168
    %v7919 = vunpack.c.0.s8 %v7918
    %v7920 = vlaneseq
    %v7921 = vshrl.u32 %v7920, 7
    %v7922 = vsub.s32 %v7919, %v7921
    %v7923 = vrot.slane %v7895, %v7922
    %v7924 = vcombine.high %v7902, %v7902
    %v7925 = vcombine.high %v7909, %v7909
    %v7926 = vcombine.high %v7916, %v7916
    %v7927 = vcombine.high %v7923, %v7923
    %v7928 = vcombine.high %v7739, %v7739
    %v7930 = vunpack.c.l.s4 1966171168
    %v7931 = vunpack.c.0.s8 %v7930
    %v7932 = vlaneseq
    %v7933 = vshrl.u32 %v7932, 7
    %v7934 = vsub.s32 %v7931, %v7933
    %v7935 = vrot.slane %v7739, %v7934
    %v7937 = vunpack.c.l.s4 1966171168
    %v7938 = vunpack.c.0.s8 %v7937
    %v7939 = vlaneseq
    %v7940 = vshrl.u32 %v7939, 7
    %v7941 = vsub.s32 %v7938, %v7940
    %v7942 = vrot.slane %v7928, %v7941
    %v7943 = vcombine.high %v7935, %v7935
    %v7944 = vcombine.high %v7942, %v7942
    %v7946 = vunpack.c.l.s4 1966171168
    %v7947 = vunpack.c.0.s8 %v7946
    %v7948 = vlaneseq
    %v7949 = vshrl.u32 %v7948, 7
    %v7950 = vsub.s32 %v7947, %v7949
    %v7951 = vrot.slane %v7935, %v7950
    %v7953 = vunpack.c.l.s4 1966171168
    %v7954 = vunpack.c.0.s8 %v7953
    %v7955 = vlaneseq
    %v7956 = vshrl.u32 %v7955, 7
    %v7957 = vsub.s32 %v7954, %v7956
    %v7958 = vrot.slane %v7942, %v7957
    %v7960 = vunpack.c.l.s4 1966171168
    %v7961 = vunpack.c.0.s8 %v7960
    %v7962 = vlaneseq
    %v7963 = vshrl.u32 %v7962, 7
    %v7964 = vsub.s32 %v7961, %v7963
    %v7965 = vrot.slane %v7943, %v7964
    %v7967 = vunpack.c.l.s4 1966171168
    %v7968 = vunpack.c.0.s8 %v7967
    %v7969 = vlaneseq
    %v7970 = vshrl.u32 %v7969, 7
    %v7971 = vsub.s32 %v7968, %v7970
    %v7972 = vrot.slane %v7944, %v7971
    %v7973 = vcombine.high %v7951, %v7951
    %v7974 = vcombine.high %v7958, %v7958
    %v7975 = vcombine.high %v7965, %v7965
    %v7976 = vcombine.high %v7972, %v7972
    %v7977 = vcombine.high %v7740, %v7740
    %v7979 = vunpack.c.l.s4 1966171168
    %v7980 = vunpack.c.0.s8 %v7979
    %v7981 = vlaneseq
    %v7982 = vshrl.u32 %v7981, 7
    %v7983 = vsub.s32 %v7980, %v7982
    %v7984 = vrot.slane %v7740, %v7983
    %v7986 = vunpack.c.l.s4 1966171168
    %v7987 = vunpack.c.0.s8 %v7986
    %v7988 = vlaneseq
    %v7989 = vshrl.u32 %v7988, 7
    %v7990 = vsub.s32 %v7987, %v7989
    %v7991 = vrot.slane %v7977, %v7990
    %v7992 = vcombine.high %v7984, %v7984
    %v7993 = vcombine.high %v7991, %v7991
    %v7995 = vunpack.c.l.s4 1966171168
    %v7996 = vunpack.c.0.s8 %v7995
    %v7997 = vlaneseq
    %v7998 = vshrl.u32 %v7997, 7
    %v7999 = vsub.s32 %v7996, %v7998
    %v8000 = vrot.slane %v7984, %v7999
    %v8002 = vunpack.c.l.s4 1966171168
    %v8003 = vunpack.c.0.s8 %v8002
    %v8004 = vlaneseq
    %v8005 = vshrl.u32 %v8004, 7
    %v8006 = vsub.s32 %v8003, %v8005
    %v8007 = vrot.slane %v7991, %v8006
    %v8009 = vunpack.c.l.s4 1966171168
    %v8010 = vunpack.c.0.s8 %v8009
    %v8011 = vlaneseq
    %v8012 = vshrl.u32 %v8011, 7
    %v8013 = vsub.s32 %v8010, %v8012
    %v8014 = vrot.slane %v7992, %v8013
    %v8016 = vunpack.c.l.s4 1966171168
    %v8017 = vunpack.c.0.s8 %v8016
    %v8018 = vlaneseq
    %v8019 = vshrl.u32 %v8018, 7
    %v8020 = vsub.s32 %v8017, %v8019
    %v8021 = vrot.slane %v7993, %v8020
    %v8022 = vcombine.high %v8000, %v8000
    %v8023 = vcombine.high %v8007, %v8007
    %v8024 = vcombine.high %v8014, %v8014
    %v8025 = vcombine.high %v8021, %v8021
    %v8026 = vlaneseq
    %v8027 = vshrl.u32 %v8026, 7
    %v8028 = vsub.s32 0, %v8027
    %v8029 = vrot.slane %v7853, %v8028
    %v8030 = vlaneseq
    %v8031 = vshrl.u32 %v8030, 7
    %v8032 = vsub.s32 0, %v8031
    %v8033 = vrot.slane %v7867, %v8032
    %v8034 = vlaneseq
    %v8035 = vshrl.u32 %v8034, 7
    %v8036 = vsub.s32 0, %v8035
    %v8037 = vrot.slane %v7875, %v8036
    %v8038 = vlaneseq
    %v8039 = vshrl.u32 %v8038, 7
    %v8040 = vsub.s32 0, %v8039
    %v8041 = vrot.slane %v7877, %v8040
    %v8042 = vlaneseq
    %v8043 = vshrl.u32 %v8042, 7
    %v8044 = vsub.s32 0, %v8043
    %v8045 = vrot.slane %v7860, %v8044
    %v8046 = vlaneseq
    %v8047 = vshrl.u32 %v8046, 7
    %v8048 = vsub.s32 0, %v8047
    %v8049 = vrot.slane %v7874, %v8048
    %v8050 = vlaneseq
    %v8051 = vshrl.u32 %v8050, 7
    %v8052 = vsub.s32 0, %v8051
    %v8053 = vrot.slane %v7876, %v8052
    %v8054 = vlaneseq
    %v8055 = vshrl.u32 %v8054, 7
    %v8056 = vsub.s32 0, %v8055
    %v8057 = vrot.slane %v7878, %v8056
    %v8058 = vlaneseq
    %v8059 = vshrl.u32 %v8058, 7
    %v8060 = vsub.s32 0, %v8059
    %v8061 = vrot.slane %v7902, %v8060
    %v8062 = vlaneseq
    %v8063 = vshrl.u32 %v8062, 7
    %v8064 = vsub.s32 0, %v8063
    %v8065 = vrot.slane %v7916, %v8064
    %v8066 = vlaneseq
    %v8067 = vshrl.u32 %v8066, 7
    %v8068 = vsub.s32 0, %v8067
    %v8069 = vrot.slane %v7924, %v8068
    %v8070 = vlaneseq
    %v8071 = vshrl.u32 %v8070, 7
    %v8072 = vsub.s32 0, %v8071
    %v8073 = vrot.slane %v7926, %v8072
    %v8074 = vlaneseq
    %v8075 = vshrl.u32 %v8074, 7
    %v8076 = vsub.s32 0, %v8075
    %v8077 = vrot.slane %v7909, %v8076
    %v8078 = vlaneseq
    %v8079 = vshrl.u32 %v8078, 7
    %v8080 = vsub.s32 0, %v8079
    %v8081 = vrot.slane %v7923, %v8080
    %v8082 = vlaneseq
    %v8083 = vshrl.u32 %v8082, 7
    %v8084 = vsub.s32 0, %v8083
    %v8085 = vrot.slane %v7925, %v8084
    %v8086 = vlaneseq
    %v8087 = vshrl.u32 %v8086, 7
    %v8088 = vsub.s32 0, %v8087
    %v8089 = vrot.slane %v7927, %v8088
    %v8090 = vlaneseq
    %v8091 = vshrl.u32 %v8090, 7
    %v8092 = vsub.s32 0, %v8091
    %v8093 = vrot.slane %v7951, %v8092
    %v8094 = vlaneseq
    %v8095 = vshrl.u32 %v8094, 7
    %v8096 = vsub.s32 0, %v8095
    %v8097 = vrot.slane %v7965, %v8096
    %v8098 = vlaneseq
    %v8099 = vshrl.u32 %v8098, 7
    %v8100 = vsub.s32 0, %v8099
    %v8101 = vrot.slane %v7973, %v8100
    %v8102 = vlaneseq
    %v8103 = vshrl.u32 %v8102, 7
    %v8104 = vsub.s32 0, %v8103
    %v8105 = vrot.slane %v7975, %v8104
    %v8106 = vlaneseq
    %v8107 = vshrl.u32 %v8106, 7
    %v8108 = vsub.s32 0, %v8107
    %v8109 = vrot.slane %v7958, %v8108
    %v8110 = vlaneseq
    %v8111 = vshrl.u32 %v8110, 7
    %v8112 = vsub.s32 0, %v8111
    %v8113 = vrot.slane %v7972, %v8112
    %v8114 = vlaneseq
    %v8115 = vshrl.u32 %v8114, 7
    %v8116 = vsub.s32 0, %v8115
    %v8117 = vrot.slane %v7974, %v8116
    %v8118 = vlaneseq
    %v8119 = vshrl.u32 %v8118, 7
    %v8120 = vsub.s32 0, %v8119
    %v8121 = vrot.slane %v7976, %v8120
    %v8122 = vlaneseq
    %v8123 = vshrl.u32 %v8122, 7
    %v8124 = vsub.s32 0, %v8123
    %v8125 = vrot.slane %v8000, %v8124
    %v8126 = vlaneseq
    %v8127 = vshrl.u32 %v8126, 7
    %v8128 = vsub.s32 0, %v8127
    %v8129 = vrot.slane %v8014, %v8128
    %v8130 = vlaneseq
    %v8131 = vshrl.u32 %v8130, 7
    %v8132 = vsub.s32 0, %v8131
    %v8133 = vrot.slane %v8022, %v8132
    %v8134 = vlaneseq
    %v8135 = vshrl.u32 %v8134, 7
    %v8136 = vsub.s32 0, %v8135
    %v8137 = vrot.slane %v8024, %v8136
    %v8138 = vlaneseq
    %v8139 = vshrl.u32 %v8138, 7
    %v8140 = vsub.s32 0, %v8139
    %v8141 = vrot.slane %v8007, %v8140
    %v8142 = vlaneseq
    %v8143 = vshrl.u32 %v8142, 7
    %v8144 = vsub.s32 0, %v8143
    %v8145 = vrot.slane %v8021, %v8144
    %v8146 = vlaneseq
    %v8147 = vshrl.u32 %v8146, 7
    %v8148 = vsub.s32 0, %v8147
    %v8149 = vrot.slane %v8023, %v8148
    %v8150 = vlaneseq
    %v8151 = vshrl.u32 %v8150, 7
    %v8152 = vsub.s32 0, %v8151
    %v8153 = vrot.slane %v8025, %v8152
    %v8186 = vadd.f32 %v8029, %v7808
    %v8187 = vadd.f32 %v8029, %v7813
    %v8188 = vadd.f32 %v8029, %v7818
    %v8189 = vadd.f32 %v8029, %v7823
    %v8190 = vadd.f32 %v8033, %v7808
    %v8191 = vadd.f32 %v8033, %v7813
    %v8192 = vadd.f32 %v8033, %v7818
    %v8193 = vadd.f32 %v8033, %v7823
    %v8194 = vadd.f32 %v8037, %v7808
    %v8195 = vadd.f32 %v8037, %v7813
    %v8196 = vadd.f32 %v8037, %v7818
    %v8197 = vadd.f32 %v8037, %v7823
    %v8198 = vadd.f32 %v8041, %v7808
    %v8199 = vadd.f32 %v8041, %v7813
    %v8200 = vadd.f32 %v8041, %v7818
    %v8201 = vadd.f32 %v8041, %v7823
    %v8202 = vadd.f32 %v8045, %v7808
    %v8203 = vadd.f32 %v8045, %v7813
    %v8204 = vadd.f32 %v8045, %v7818
    %v8205 = vadd.f32 %v8045, %v7823
    %v8206 = vadd.f32 %v8049, %v7808
    %v8207 = vadd.f32 %v8049, %v7813
    %v8208 = vadd.f32 %v8049, %v7818
    %v8209 = vadd.f32 %v8049, %v7823
    %v8210 = vadd.f32 %v8053, %v7808
    %v8211 = vadd.f32 %v8053, %v7813
    %v8212 = vadd.f32 %v8053, %v7818
    %v8213 = vadd.f32 %v8053, %v7823
    %v8214 = vadd.f32 %v8057, %v7808
    %v8215 = vadd.f32 %v8057, %v7813
    %v8216 = vadd.f32 %v8057, %v7818
    %v8217 = vadd.f32 %v8057, %v7823
    %v8218 = vadd.f32 %v8061, %v7808
    %v8219 = vadd.f32 %v8061, %v7813
    %v8220 = vadd.f32 %v8061, %v7818
    %v8221 = vadd.f32 %v8061, %v7823
    %v8222 = vadd.f32 %v8065, %v7808
    %v8223 = vadd.f32 %v8065, %v7813
    %v8224 = vadd.f32 %v8065, %v7818
    %v8225 = vadd.f32 %v8065, %v7823
    %v8226 = vadd.f32 %v8069, %v7808
    %v8227 = vadd.f32 %v8069, %v7813
    %v8228 = vadd.f32 %v8069, %v7818
    %v8229 = vadd.f32 %v8069, %v7823
    %v8230 = vadd.f32 %v8073, %v7808
    %v8231 = vadd.f32 %v8073, %v7813
    %v8232 = vadd.f32 %v8073, %v7818
    %v8233 = vadd.f32 %v8073, %v7823
    %v8234 = vadd.f32 %v8077, %v7808
    %v8235 = vadd.f32 %v8077, %v7813
    %v8236 = vadd.f32 %v8077, %v7818
    %v8237 = vadd.f32 %v8077, %v7823
    %v8238 = vadd.f32 %v8081, %v7808
    %v8239 = vadd.f32 %v8081, %v7813
    %v8240 = vadd.f32 %v8081, %v7818
    %v8241 = vadd.f32 %v8081, %v7823
    %v8242 = vadd.f32 %v8085, %v7808
    %v8243 = vadd.f32 %v8085, %v7813
    %v8244 = vadd.f32 %v8085, %v7818
    %v8245 = vadd.f32 %v8085, %v7823
    %v8246 = vadd.f32 %v8089, %v7808
    %v8247 = vadd.f32 %v8089, %v7813
    %v8248 = vadd.f32 %v8089, %v7818
    %v8249 = vadd.f32 %v8089, %v7823
    %v8250 = vadd.f32 %v8093, %v7808
    %v8251 = vadd.f32 %v8093, %v7813
    %v8252 = vadd.f32 %v8093, %v7818
    %v8253 = vadd.f32 %v8093, %v7823
    %v8254 = vadd.f32 %v8097, %v7808
    %v8255 = vadd.f32 %v8097, %v7813
    %v8256 = vadd.f32 %v8097, %v7818
    %v8257 = vadd.f32 %v8097, %v7823
    %v8258 = vadd.f32 %v8101, %v7808
    %v8259 = vadd.f32 %v8101, %v7813
    %v8260 = vadd.f32 %v8101, %v7818
    %v8261 = vadd.f32 %v8101, %v7823
    %v8262 = vadd.f32 %v8105, %v7808
    %v8263 = vadd.f32 %v8105, %v7813
    %v8264 = vadd.f32 %v8105, %v7818
    %v8265 = vadd.f32 %v8105, %v7823
    %v8266 = vadd.f32 %v8109, %v7808
    %v8267 = vadd.f32 %v8109, %v7813
    %v8268 = vadd.f32 %v8109, %v7818
    %v8269 = vadd.f32 %v8109, %v7823
    %v8270 = vadd.f32 %v8113, %v7808
    %v8271 = vadd.f32 %v8113, %v7813
    %v8272 = vadd.f32 %v8113, %v7818
    %v8273 = vadd.f32 %v8113, %v7823
    %v8274 = vadd.f32 %v8117, %v7808
    %v8275 = vadd.f32 %v8117, %v7813
    %v8276 = vadd.f32 %v8117, %v7818
    %v8277 = vadd.f32 %v8117, %v7823
    %v8278 = vadd.f32 %v8121, %v7808
    %v8279 = vadd.f32 %v8121, %v7813
    %v8280 = vadd.f32 %v8121, %v7818
    %v8281 = vadd.f32 %v8121, %v7823
    %v8282 = vadd.f32 %v8125, %v7808
    %v8283 = vadd.f32 %v8125, %v7813
    %v8284 = vadd.f32 %v8125, %v7818
    %v8285 = vadd.f32 %v8125, %v7823
    %v8286 = vadd.f32 %v8129, %v7808
    %v8287 = vadd.f32 %v8129, %v7813
    %v8288 = vadd.f32 %v8129, %v7818
    %v8289 = vadd.f32 %v8129, %v7823
    %v8290 = vadd.f32 %v8133, %v7808
    %v8291 = vadd.f32 %v8133, %v7813
    %v8292 = vadd.f32 %v8133, %v7818
    %v8293 = vadd.f32 %v8133, %v7823
    %v8294 = vadd.f32 %v8137, %v7808
    %v8295 = vadd.f32 %v8137, %v7813
    %v8296 = vadd.f32 %v8137, %v7818
    %v8297 = vadd.f32 %v8137, %v7823
    %v8298 = vadd.f32 %v8141, %v7808
    %v8299 = vadd.f32 %v8141, %v7813
    %v8300 = vadd.f32 %v8141, %v7818
    %v8301 = vadd.f32 %v8141, %v7823
    %v8302 = vadd.f32 %v8145, %v7808
    %v8303 = vadd.f32 %v8145, %v7813
    %v8304 = vadd.f32 %v8145, %v7818
    %v8305 = vadd.f32 %v8145, %v7823
    %v8306 = vadd.f32 %v8149, %v7808
    %v8307 = vadd.f32 %v8149, %v7813
    %v8308 = vadd.f32 %v8149, %v7818
    %v8309 = vadd.f32 %v8149, %v7823
    %v8310 = vadd.f32 %v8153, %v7808
    %v8311 = vadd.f32 %v8153, %v7813
    %v8312 = vadd.f32 %v8153, %v7818
    %v8313 = vadd.f32 %v8153, %v7823
    %v8315 = vlaneseq
    %v8316 = vshrl.u32 %v8315, 7
    %v8317 = vsub.s32 0, %v8316
    %v8318 = vrot.slane %v7538, %v8317
    %v8320 = vmul.f32 %v1265, %v8318
    %v8321 = vmul.f32 %v1269, %v8318
    %v8322 = vmul.f32 %v1273, %v8318
    %v8323 = vmul.f32 %v1277, %v8318
    %v8324 = vmul.f32 %v1284, %v8318
    %v8325 = vmul.f32 %v1288, %v8318
    %v8326 = vmul.f32 %v1292, %v8318
    %v8327 = vmul.f32 %v1296, %v8318
    %v8328 = vmul.f32 %v1303, %v8318
    %v8329 = vmul.f32 %v1307, %v8318
    %v8330 = vmul.f32 %v1311, %v8318
    %v8331 = vmul.f32 %v1315, %v8318
    %v8332 = vmul.f32 %v1322, %v8318
    %v8333 = vmul.f32 %v1326, %v8318
    %v8334 = vmul.f32 %v1330, %v8318
    %v8335 = vmul.f32 %v1334, %v8318
    %v8336 = vmul.f32 %v1341, %v8318
    %v8337 = vmul.f32 %v1345, %v8318
    %v8338 = vmul.f32 %v1349, %v8318
    %v8339 = vmul.f32 %v1353, %v8318
    %v8340 = vmul.f32 %v1360, %v8318
    %v8341 = vmul.f32 %v1364, %v8318
    %v8342 = vmul.f32 %v1368, %v8318
    %v8343 = vmul.f32 %v1372, %v8318
    %v8344 = vmul.f32 %v1379, %v8318
    %v8345 = vmul.f32 %v1383, %v8318
    %v8346 = vmul.f32 %v1387, %v8318
    %v8347 = vmul.f32 %v1391, %v8318
    %v8348 = vmul.f32 %v1398, %v8318
    %v8349 = vmul.f32 %v1402, %v8318
    %v8350 = vmul.f32 %v1406, %v8318
    %v8351 = vmul.f32 %v1410, %v8318
    %v8352 = vmul.f32 %v1417, %v8318
    %v8353 = vmul.f32 %v1421, %v8318
    %v8354 = vmul.f32 %v1425, %v8318
    %v8355 = vmul.f32 %v1429, %v8318
    %v8356 = vmul.f32 %v1436, %v8318
    %v8357 = vmul.f32 %v1440, %v8318
    %v8358 = vmul.f32 %v1444, %v8318
    %v8359 = vmul.f32 %v1448, %v8318
    %v8360 = vmul.f32 %v1455, %v8318
    %v8361 = vmul.f32 %v1459, %v8318
    %v8362 = vmul.f32 %v1463, %v8318
    %v8363 = vmul.f32 %v1467, %v8318
    %v8364 = vmul.f32 %v1474, %v8318
    %v8365 = vmul.f32 %v1478, %v8318
    %v8366 = vmul.f32 %v1482, %v8318
    %v8367 = vmul.f32 %v1486, %v8318
    %v8368 = vmul.f32 %v1493, %v8318
    %v8369 = vmul.f32 %v1497, %v8318
    %v8370 = vmul.f32 %v1501, %v8318
    %v8371 = vmul.f32 %v1505, %v8318
    %v8372 = vmul.f32 %v1512, %v8318
    %v8373 = vmul.f32 %v1516, %v8318
    %v8374 = vmul.f32 %v1520, %v8318
    %v8375 = vmul.f32 %v1524, %v8318
    %v8376 = vmul.f32 %v1531, %v8318
    %v8377 = vmul.f32 %v1535, %v8318
    %v8378 = vmul.f32 %v1539, %v8318
    %v8379 = vmul.f32 %v1543, %v8318
    %v8380 = vmul.f32 %v1550, %v8318
    %v8381 = vmul.f32 %v1554, %v8318
    %v8382 = vmul.f32 %v1558, %v8318
    %v8383 = vmul.f32 %v1562, %v8318
    %v8384 = vmul.f32 %v1569, %v8318
    %v8385 = vmul.f32 %v1573, %v8318
    %v8386 = vmul.f32 %v1577, %v8318
    %v8387 = vmul.f32 %v1581, %v8318
    %v8388 = vmul.f32 %v1588, %v8318
    %v8389 = vmul.f32 %v1592, %v8318
    %v8390 = vmul.f32 %v1596, %v8318
    %v8391 = vmul.f32 %v1600, %v8318
    %v8392 = vmul.f32 %v1607, %v8318
    %v8393 = vmul.f32 %v1611, %v8318
    %v8394 = vmul.f32 %v1615, %v8318
    %v8395 = vmul.f32 %v1619, %v8318
    %v8396 = vmul.f32 %v1626, %v8318
    %v8397 = vmul.f32 %v1630, %v8318
    %v8398 = vmul.f32 %v1634, %v8318
    %v8399 = vmul.f32 %v1638, %v8318
    %v8400 = vmul.f32 %v1645, %v8318
    %v8401 = vmul.f32 %v1649, %v8318
    %v8402 = vmul.f32 %v1653, %v8318
    %v8403 = vmul.f32 %v1657, %v8318
    %v8404 = vmul.f32 %v1664, %v8318
    %v8405 = vmul.f32 %v1668, %v8318
    %v8406 = vmul.f32 %v1672, %v8318
    %v8407 = vmul.f32 %v1676, %v8318
    %v8408 = vmul.f32 %v1683, %v8318
    %v8409 = vmul.f32 %v1687, %v8318
    %v8410 = vmul.f32 %v1691, %v8318
    %v8411 = vmul.f32 %v1695, %v8318
    %v8412 = vmul.f32 %v1702, %v8318
    %v8413 = vmul.f32 %v1706, %v8318
    %v8414 = vmul.f32 %v1710, %v8318
    %v8415 = vmul.f32 %v1714, %v8318
    %v8416 = vmul.f32 %v1721, %v8318
    %v8417 = vmul.f32 %v1725, %v8318
    %v8418 = vmul.f32 %v1729, %v8318
    %v8419 = vmul.f32 %v1733, %v8318
    %v8420 = vmul.f32 %v1740, %v8318
    %v8421 = vmul.f32 %v1744, %v8318
    %v8422 = vmul.f32 %v1748, %v8318
    %v8423 = vmul.f32 %v1752, %v8318
    %v8424 = vmul.f32 %v1759, %v8318
    %v8425 = vmul.f32 %v1763, %v8318
    %v8426 = vmul.f32 %v1767, %v8318
    %v8427 = vmul.f32 %v1771, %v8318
    %v8428 = vmul.f32 %v1778, %v8318
    %v8429 = vmul.f32 %v1782, %v8318
    %v8430 = vmul.f32 %v1786, %v8318
    %v8431 = vmul.f32 %v1790, %v8318
    %v8432 = vmul.f32 %v1797, %v8318
    %v8433 = vmul.f32 %v1801, %v8318
    %v8434 = vmul.f32 %v1805, %v8318
    %v8435 = vmul.f32 %v1809, %v8318
    %v8436 = vmul.f32 %v1816, %v8318
    %v8437 = vmul.f32 %v1820, %v8318
    %v8438 = vmul.f32 %v1824, %v8318
    %v8439 = vmul.f32 %v1828, %v8318
    %v8440 = vmul.f32 %v1835, %v8318
    %v8441 = vmul.f32 %v1839, %v8318
    %v8442 = vmul.f32 %v1843, %v8318
    %v8443 = vmul.f32 %v1847, %v8318
    %v8444 = vmul.f32 %v1854, %v8318
    %v8445 = vmul.f32 %v1858, %v8318
    %v8446 = vmul.f32 %v1862, %v8318
    %v8447 = vmul.f32 %v1866, %v8318
    %v8448 = vadd.f32 %v8186, %v8320
    %v8449 = vadd.f32 %v8187, %v8321
    %v8450 = vadd.f32 %v8188, %v8322
    %v8451 = vadd.f32 %v8189, %v8323
    %v8452 = vadd.f32 %v8190, %v8324
    %v8453 = vadd.f32 %v8191, %v8325
    %v8454 = vadd.f32 %v8192, %v8326
    %v8455 = vadd.f32 %v8193, %v8327
    %v8456 = vadd.f32 %v8194, %v8328
    %v8457 = vadd.f32 %v8195, %v8329
    %v8458 = vadd.f32 %v8196, %v8330
    %v8459 = vadd.f32 %v8197, %v8331
    %v8460 = vadd.f32 %v8198, %v8332
    %v8461 = vadd.f32 %v8199, %v8333
    %v8462 = vadd.f32 %v8200, %v8334
    %v8463 = vadd.f32 %v8201, %v8335
    %v8464 = vadd.f32 %v8202, %v8336
    %v8465 = vadd.f32 %v8203, %v8337
    %v8466 = vadd.f32 %v8204, %v8338
    %v8467 = vadd.f32 %v8205, %v8339
    %v8468 = vadd.f32 %v8206, %v8340
    %v8469 = vadd.f32 %v8207, %v8341
    %v8470 = vadd.f32 %v8208, %v8342
    %v8471 = vadd.f32 %v8209, %v8343
    %v8472 = vadd.f32 %v8210, %v8344
    %v8473 = vadd.f32 %v8211, %v8345
    %v8474 = vadd.f32 %v8212, %v8346
    %v8475 = vadd.f32 %v8213, %v8347
    %v8476 = vadd.f32 %v8214, %v8348
    %v8477 = vadd.f32 %v8215, %v8349
    %v8478 = vadd.f32 %v8216, %v8350
    %v8479 = vadd.f32 %v8217, %v8351
    %v8480 = vadd.f32 %v8218, %v8352
    %v8481 = vadd.f32 %v8219, %v8353
    %v8482 = vadd.f32 %v8220, %v8354
    %v8483 = vadd.f32 %v8221, %v8355
    %v8484 = vadd.f32 %v8222, %v8356
    %v8485 = vadd.f32 %v8223, %v8357
    %v8486 = vadd.f32 %v8224, %v8358
    %v8487 = vadd.f32 %v8225, %v8359
    %v8488 = vadd.f32 %v8226, %v8360
    %v8489 = vadd.f32 %v8227, %v8361
    %v8490 = vadd.f32 %v8228, %v8362
    %v8491 = vadd.f32 %v8229, %v8363
    %v8492 = vadd.f32 %v8230, %v8364
    %v8493 = vadd.f32 %v8231, %v8365
    %v8494 = vadd.f32 %v8232, %v8366
    %v8495 = vadd.f32 %v8233, %v8367
    %v8496 = vadd.f32 %v8234, %v8368
    %v8497 = vadd.f32 %v8235, %v8369
    %v8498 = vadd.f32 %v8236, %v8370
    %v8499 = vadd.f32 %v8237, %v8371
    %v8500 = vadd.f32 %v8238, %v8372
    %v8501 = vadd.f32 %v8239, %v8373
    %v8502 = vadd.f32 %v8240, %v8374
    %v8503 = vadd.f32 %v8241, %v8375
    %v8504 = vadd.f32 %v8242, %v8376
    %v8505 = vadd.f32 %v8243, %v8377
    %v8506 = vadd.f32 %v8244, %v8378
    %v8507 = vadd.f32 %v8245, %v8379
    %v8508 = vadd.f32 %v8246, %v8380
    %v8509 = vadd.f32 %v8247, %v8381
    %v8510 = vadd.f32 %v8248, %v8382
    %v8511 = vadd.f32 %v8249, %v8383
    %v8512 = vadd.f32 %v8250, %v8384
    %v8513 = vadd.f32 %v8251, %v8385
    %v8514 = vadd.f32 %v8252, %v8386
    %v8515 = vadd.f32 %v8253, %v8387
    %v8516 = vadd.f32 %v8254, %v8388
    %v8517 = vadd.f32 %v8255, %v8389
    %v8518 = vadd.f32 %v8256, %v8390
    %v8519 = vadd.f32 %v8257, %v8391
    %v8520 = vadd.f32 %v8258, %v8392
    %v8521 = vadd.f32 %v8259, %v8393
    %v8522 = vadd.f32 %v8260, %v8394
    %v8523 = vadd.f32 %v8261, %v8395
    %v8524 = vadd.f32 %v8262, %v8396
    %v8525 = vadd.f32 %v8263, %v8397
    %v8526 = vadd.f32 %v8264, %v8398
    %v8527 = vadd.f32 %v8265, %v8399
    %v8528 = vadd.f32 %v8266, %v8400
    %v8529 = vadd.f32 %v8267, %v8401
    %v8530 = vadd.f32 %v8268, %v8402
    %v8531 = vadd.f32 %v8269, %v8403
    %v8532 = vadd.f32 %v8270, %v8404
    %v8533 = vadd.f32 %v8271, %v8405
    %v8534 = vadd.f32 %v8272, %v8406
    %v8535 = vadd.f32 %v8273, %v8407
    %v8536 = vadd.f32 %v8274, %v8408
    %v8537 = vadd.f32 %v8275, %v8409
    %v8538 = vadd.f32 %v8276, %v8410
    %v8539 = vadd.f32 %v8277, %v8411
    %v8540 = vadd.f32 %v8278, %v8412
    %v8541 = vadd.f32 %v8279, %v8413
    %v8542 = vadd.f32 %v8280, %v8414
    %v8543 = vadd.f32 %v8281, %v8415
    %v8544 = vadd.f32 %v8282, %v8416
    %v8545 = vadd.f32 %v8283, %v8417
    %v8546 = vadd.f32 %v8284, %v8418
    %v8547 = vadd.f32 %v8285, %v8419
    %v8548 = vadd.f32 %v8286, %v8420
    %v8549 = vadd.f32 %v8287, %v8421
    %v8550 = vadd.f32 %v8288, %v8422
    %v8551 = vadd.f32 %v8289, %v8423
    %v8552 = vadd.f32 %v8290, %v8424
    %v8553 = vadd.f32 %v8291, %v8425
    %v8554 = vadd.f32 %v8292, %v8426
    %v8555 = vadd.f32 %v8293, %v8427
    %v8556 = vadd.f32 %v8294, %v8428
    %v8557 = vadd.f32 %v8295, %v8429
    %v8558 = vadd.f32 %v8296, %v8430
    %v8559 = vadd.f32 %v8297, %v8431
    %v8560 = vadd.f32 %v8298, %v8432
    %v8561 = vadd.f32 %v8299, %v8433
    %v8562 = vadd.f32 %v8300, %v8434
    %v8563 = vadd.f32 %v8301, %v8435
    %v8564 = vadd.f32 %v8302, %v8436
    %v8565 = vadd.f32 %v8303, %v8437
    %v8566 = vadd.f32 %v8304, %v8438
    %v8567 = vadd.f32 %v8305, %v8439
    %v8568 = vadd.f32 %v8306, %v8440
    %v8569 = vadd.f32 %v8307, %v8441
    %v8570 = vadd.f32 %v8308, %v8442
    %v8571 = vadd.f32 %v8309, %v8443
    %v8572 = vadd.f32 %v8310, %v8444
    %v8573 = vadd.f32 %v8311, %v8445
    %v8574 = vadd.f32 %v8312, %v8446
    %v8575 = vadd.f32 %v8313, %v8447
    %v8576 = vxor.u32 %v8448, 2147483648
    %v8577 = vxor.u32 %v8449, 2147483648
    %v8578 = vxor.u32 %v8450, 2147483648
    %v8579 = vxor.u32 %v8451, 2147483648
    %v8580 = vxor.u32 %v8452, 2147483648
    %v8581 = vxor.u32 %v8453, 2147483648
    %v8582 = vxor.u32 %v8454, 2147483648
    %v8583 = vxor.u32 %v8455, 2147483648
    %v8584 = vxor.u32 %v8456, 2147483648
    %v8585 = vxor.u32 %v8457, 2147483648
    %v8586 = vxor.u32 %v8458, 2147483648
    %v8587 = vxor.u32 %v8459, 2147483648
    %v8588 = vxor.u32 %v8460, 2147483648
    %v8589 = vxor.u32 %v8461, 2147483648
    %v8590 = vxor.u32 %v8462, 2147483648
    %v8591 = vxor.u32 %v8463, 2147483648
    %v8592 = vxor.u32 %v8464, 2147483648
    %v8593 = vxor.u32 %v8465, 2147483648
    %v8594 = vxor.u32 %v8466, 2147483648
    %v8595 = vxor.u32 %v8467, 2147483648
    %v8596 = vxor.u32 %v8468, 2147483648
    %v8597 = vxor.u32 %v8469, 2147483648
    %v8598 = vxor.u32 %v8470, 2147483648
    %v8599 = vxor.u32 %v8471, 2147483648
    %v8600 = vxor.u32 %v8472, 2147483648
    %v8601 = vxor.u32 %v8473, 2147483648
    %v8602 = vxor.u32 %v8474, 2147483648
    %v8603 = vxor.u32 %v8475, 2147483648
    %v8604 = vxor.u32 %v8476, 2147483648
    %v8605 = vxor.u32 %v8477, 2147483648
    %v8606 = vxor.u32 %v8478, 2147483648
    %v8607 = vxor.u32 %v8479, 2147483648
    %v8608 = vxor.u32 %v8480, 2147483648
    %v8609 = vxor.u32 %v8481, 2147483648
    %v8610 = vxor.u32 %v8482, 2147483648
    %v8611 = vxor.u32 %v8483, 2147483648
    %v8612 = vxor.u32 %v8484, 2147483648
    %v8613 = vxor.u32 %v8485, 2147483648
    %v8614 = vxor.u32 %v8486, 2147483648
    %v8615 = vxor.u32 %v8487, 2147483648
    %v8616 = vxor.u32 %v8488, 2147483648
    %v8617 = vxor.u32 %v8489, 2147483648
    %v8618 = vxor.u32 %v8490, 2147483648
    %v8619 = vxor.u32 %v8491, 2147483648
    %v8620 = vxor.u32 %v8492, 2147483648
    %v8621 = vxor.u32 %v8493, 2147483648
    %v8622 = vxor.u32 %v8494, 2147483648
    %v8623 = vxor.u32 %v8495, 2147483648
    %v8624 = vxor.u32 %v8496, 2147483648
    %v8625 = vxor.u32 %v8497, 2147483648
    %v8626 = vxor.u32 %v8498, 2147483648
    %v8627 = vxor.u32 %v8499, 2147483648
    %v8628 = vxor.u32 %v8500, 2147483648
    %v8629 = vxor.u32 %v8501, 2147483648
    %v8630 = vxor.u32 %v8502, 2147483648
    %v8631 = vxor.u32 %v8503, 2147483648
    %v8632 = vxor.u32 %v8504, 2147483648
    %v8633 = vxor.u32 %v8505, 2147483648
    %v8634 = vxor.u32 %v8506, 2147483648
    %v8635 = vxor.u32 %v8507, 2147483648
    %v8636 = vxor.u32 %v8508, 2147483648
    %v8637 = vxor.u32 %v8509, 2147483648
    %v8638 = vxor.u32 %v8510, 2147483648
    %v8639 = vxor.u32 %v8511, 2147483648
    %v8640 = vxor.u32 %v8512, 2147483648
    %v8641 = vxor.u32 %v8513, 2147483648
    %v8642 = vxor.u32 %v8514, 2147483648
    %v8643 = vxor.u32 %v8515, 2147483648
    %v8644 = vxor.u32 %v8516, 2147483648
    %v8645 = vxor.u32 %v8517, 2147483648
    %v8646 = vxor.u32 %v8518, 2147483648
    %v8647 = vxor.u32 %v8519, 2147483648
    %v8648 = vxor.u32 %v8520, 2147483648
    %v8649 = vxor.u32 %v8521, 2147483648
    %v8650 = vxor.u32 %v8522, 2147483648
    %v8651 = vxor.u32 %v8523, 2147483648
    %v8652 = vxor.u32 %v8524, 2147483648
    %v8653 = vxor.u32 %v8525, 2147483648
    %v8654 = vxor.u32 %v8526, 2147483648
    %v8655 = vxor.u32 %v8527, 2147483648
    %v8656 = vxor.u32 %v8528, 2147483648
    %v8657 = vxor.u32 %v8529, 2147483648
    %v8658 = vxor.u32 %v8530, 2147483648
    %v8659 = vxor.u32 %v8531, 2147483648
    %v8660 = vxor.u32 %v8532, 2147483648
    %v8661 = vxor.u32 %v8533, 2147483648
    %v8662 = vxor.u32 %v8534, 2147483648
    %v8663 = vxor.u32 %v8535, 2147483648
    %v8664 = vxor.u32 %v8536, 2147483648
    %v8665 = vxor.u32 %v8537, 2147483648
    %v8666 = vxor.u32 %v8538, 2147483648
    %v8667 = vxor.u32 %v8539, 2147483648
    %v8668 = vxor.u32 %v8540, 2147483648
    %v8669 = vxor.u32 %v8541, 2147483648
    %v8670 = vxor.u32 %v8542, 2147483648
    %v8671 = vxor.u32 %v8543, 2147483648
    %v8672 = vxor.u32 %v8544, 2147483648
    %v8673 = vxor.u32 %v8545, 2147483648
    %v8674 = vxor.u32 %v8546, 2147483648
    %v8675 = vxor.u32 %v8547, 2147483648
    %v8676 = vxor.u32 %v8548, 2147483648
    %v8677 = vxor.u32 %v8549, 2147483648
    %v8678 = vxor.u32 %v8550, 2147483648
    %v8679 = vxor.u32 %v8551, 2147483648
    %v8680 = vxor.u32 %v8552, 2147483648
    %v8681 = vxor.u32 %v8553, 2147483648
    %v8682 = vxor.u32 %v8554, 2147483648
    %v8683 = vxor.u32 %v8555, 2147483648
    %v8684 = vxor.u32 %v8556, 2147483648
    %v8685 = vxor.u32 %v8557, 2147483648
    %v8686 = vxor.u32 %v8558, 2147483648
    %v8687 = vxor.u32 %v8559, 2147483648
    %v8688 = vxor.u32 %v8560, 2147483648
    %v8689 = vxor.u32 %v8561, 2147483648
    %v8690 = vxor.u32 %v8562, 2147483648
    %v8691 = vxor.u32 %v8563, 2147483648
    %v8692 = vxor.u32 %v8564, 2147483648
    %v8693 = vxor.u32 %v8565, 2147483648
    %v8694 = vxor.u32 %v8566, 2147483648
    %v8695 = vxor.u32 %v8567, 2147483648
    %v8696 = vxor.u32 %v8568, 2147483648
    %v8697 = vxor.u32 %v8569, 2147483648
    %v8698 = vxor.u32 %v8570, 2147483648
    %v8699 = vxor.u32 %v8571, 2147483648
    %v8700 = vxor.u32 %v8572, 2147483648
    %v8701 = vxor.u32 %v8573, 2147483648
    %v8702 = vxor.u32 %v8574, 2147483648
    %v8703 = vxor.u32 %v8575, 2147483648
    %v8704 = vmul.f32 %v8576, 1.442695
    %v8705 = vpow.pop %v8704
    %v8706 = vmul.f32 %v8577, 1.442695
    %v8707 = vpow.pop %v8706
    %v8708 = vmul.f32 %v8578, 1.442695
    %v8709 = vpow.pop %v8708
    %v8710 = vmul.f32 %v8579, 1.442695
    %v8711 = vpow.pop %v8710
    %v8712 = vmul.f32 %v8580, 1.442695
    %v8713 = vpow.pop %v8712
    %v8714 = vmul.f32 %v8581, 1.442695
    %v8715 = vpow.pop %v8714
    %v8716 = vmul.f32 %v8582, 1.442695
    %v8717 = vpow.pop %v8716
    %v8718 = vmul.f32 %v8583, 1.442695
    %v8719 = vpow.pop %v8718
    %v8720 = vmul.f32 %v8584, 1.442695
    %v8721 = vpow.pop %v8720
    %v8722 = vmul.f32 %v8585, 1.442695
    %v8723 = vpow.pop %v8722
    %v8724 = vmul.f32 %v8586, 1.442695
    %v8725 = vpow.pop %v8724
    %v8726 = vmul.f32 %v8587, 1.442695
    %v8727 = vpow.pop %v8726
    %v8728 = vmul.f32 %v8588, 1.442695
    %v8729 = vpow.pop %v8728
    %v8730 = vmul.f32 %v8589, 1.442695
    %v8731 = vpow.pop %v8730
    %v8732 = vmul.f32 %v8590, 1.442695
    %v8733 = vpow.pop %v8732
    %v8734 = vmul.f32 %v8591, 1.442695
    %v8735 = vpow.pop %v8734
    %v8736 = vmul.f32 %v8592, 1.442695
    %v8737 = vpow.pop %v8736
    %v8738 = vmul.f32 %v8593, 1.442695
    %v8739 = vpow.pop %v8738
    %v8740 = vmul.f32 %v8594, 1.442695
    %v8741 = vpow.pop %v8740
    %v8742 = vmul.f32 %v8595, 1.442695
    %v8743 = vpow.pop %v8742
    %v8744 = vmul.f32 %v8596, 1.442695
    %v8745 = vpow.pop %v8744
    %v8746 = vmul.f32 %v8597, 1.442695
    %v8747 = vpow.pop %v8746
    %v8748 = vmul.f32 %v8598, 1.442695
    %v8749 = vpow.pop %v8748
    %v8750 = vmul.f32 %v8599, 1.442695
    %v8751 = vpow.pop %v8750
    %v8752 = vmul.f32 %v8600, 1.442695
    %v8753 = vpow.pop %v8752
    %v8754 = vmul.f32 %v8601, 1.442695
    %v8755 = vpow.pop %v8754
    %v8756 = vmul.f32 %v8602, 1.442695
    %v8757 = vpow.pop %v8756
    %v8758 = vmul.f32 %v8603, 1.442695
    %v8759 = vpow.pop %v8758
    %v8760 = vmul.f32 %v8604, 1.442695
    %v8761 = vpow.pop %v8760
    %v8762 = vmul.f32 %v8605, 1.442695
    %v8763 = vpow.pop %v8762
    %v8764 = vmul.f32 %v8606, 1.442695
    %v8765 = vpow.pop %v8764
    %v8766 = vmul.f32 %v8607, 1.442695
    %v8767 = vpow.pop %v8766
    %v8768 = vmul.f32 %v8608, 1.442695
    %v8769 = vpow.pop %v8768
    %v8770 = vmul.f32 %v8609, 1.442695
    %v8771 = vpow.pop %v8770
    %v8772 = vmul.f32 %v8610, 1.442695
    %v8773 = vpow.pop %v8772
    %v8774 = vmul.f32 %v8611, 1.442695
    %v8775 = vpow.pop %v8774
    %v8776 = vmul.f32 %v8612, 1.442695
    %v8777 = vpow.pop %v8776
    %v8778 = vmul.f32 %v8613, 1.442695
    %v8779 = vpow.pop %v8778
    %v8780 = vmul.f32 %v8614, 1.442695
    %v8781 = vpow.pop %v8780
    %v8782 = vmul.f32 %v8615, 1.442695
    %v8783 = vpow.pop %v8782
    %v8784 = vmul.f32 %v8616, 1.442695
    %v8785 = vpow.pop %v8784
    %v8786 = vmul.f32 %v8617, 1.442695
    %v8787 = vpow.pop %v8786
    %v8788 = vmul.f32 %v8618, 1.442695
    %v8789 = vpow.pop %v8788
    %v8790 = vmul.f32 %v8619, 1.442695
    %v8791 = vpow.pop %v8790
    %v8792 = vmul.f32 %v8620, 1.442695
    %v8793 = vpow.pop %v8792
    %v8794 = vmul.f32 %v8621, 1.442695
    %v8795 = vpow.pop %v8794
    %v8796 = vmul.f32 %v8622, 1.442695
    %v8797 = vpow.pop %v8796
    %v8798 = vmul.f32 %v8623, 1.442695
    %v8799 = vpow.pop %v8798
    %v8800 = vmul.f32 %v8624, 1.442695
    %v8801 = vpow.pop %v8800
    %v8802 = vmul.f32 %v8625, 1.442695
    %v8803 = vpow.pop %v8802
    %v8804 = vmul.f32 %v8626, 1.442695
    %v8805 = vpow.pop %v8804
    %v8806 = vmul.f32 %v8627, 1.442695
    %v8807 = vpow.pop %v8806
    %v8808 = vmul.f32 %v8628, 1.442695
    %v8809 = vpow.pop %v8808
    %v8810 = vmul.f32 %v8629, 1.442695
    %v8811 = vpow.pop %v8810
    %v8812 = vmul.f32 %v8630, 1.442695
    %v8813 = vpow.pop %v8812
    %v8814 = vmul.f32 %v8631, 1.442695
    %v8815 = vpow.pop %v8814
    %v8816 = vmul.f32 %v8632, 1.442695
    %v8817 = vpow.pop %v8816
    %v8818 = vmul.f32 %v8633, 1.442695
    %v8819 = vpow.pop %v8818
    %v8820 = vmul.f32 %v8634, 1.442695
    %v8821 = vpow.pop %v8820
    %v8822 = vmul.f32 %v8635, 1.442695
    %v8823 = vpow.pop %v8822
    %v8824 = vmul.f32 %v8636, 1.442695
    %v8825 = vpow.pop %v8824
    %v8826 = vmul.f32 %v8637, 1.442695
    %v8827 = vpow.pop %v8826
    %v8828 = vmul.f32 %v8638, 1.442695
    %v8829 = vpow.pop %v8828
    %v8830 = vmul.f32 %v8639, 1.442695
    %v8831 = vpow.pop %v8830
    %v8832 = vmul.f32 %v8640, 1.442695
    %v8833 = vpow.pop %v8832
    %v8834 = vmul.f32 %v8641, 1.442695
    %v8835 = vpow.pop %v8834
    %v8836 = vmul.f32 %v8642, 1.442695
    %v8837 = vpow.pop %v8836
    %v8838 = vmul.f32 %v8643, 1.442695
    %v8839 = vpow.pop %v8838
    %v8840 = vmul.f32 %v8644, 1.442695
    %v8841 = vpow.pop %v8840
    %v8842 = vmul.f32 %v8645, 1.442695
    %v8843 = vpow.pop %v8842
    %v8844 = vmul.f32 %v8646, 1.442695
    %v8845 = vpow.pop %v8844
    %v8846 = vmul.f32 %v8647, 1.442695
    %v8847 = vpow.pop %v8846
    %v8848 = vmul.f32 %v8648, 1.442695
    %v8849 = vpow.pop %v8848
    %v8850 = vmul.f32 %v8649, 1.442695
    %v8851 = vpow.pop %v8850
    %v8852 = vmul.f32 %v8650, 1.442695
    %v8853 = vpow.pop %v8852
    %v8854 = vmul.f32 %v8651, 1.442695
    %v8855 = vpow.pop %v8854
    %v8856 = vmul.f32 %v8652, 1.442695
    %v8857 = vpow.pop %v8856
    %v8858 = vmul.f32 %v8653, 1.442695
    %v8859 = vpow.pop %v8858
    %v8860 = vmul.f32 %v8654, 1.442695
    %v8861 = vpow.pop %v8860
    %v8862 = vmul.f32 %v8655, 1.442695
    %v8863 = vpow.pop %v8862
    %v8864 = vmul.f32 %v8656, 1.442695
    %v8865 = vpow.pop %v8864
    %v8866 = vmul.f32 %v8657, 1.442695
    %v8867 = vpow.pop %v8866
    %v8868 = vmul.f32 %v8658, 1.442695
    %v8869 = vpow.pop %v8868
    %v8870 = vmul.f32 %v8659, 1.442695
    %v8871 = vpow.pop %v8870
    %v8872 = vmul.f32 %v8660, 1.442695
    %v8873 = vpow.pop %v8872
    %v8874 = vmul.f32 %v8661, 1.442695
    %v8875 = vpow.pop %v8874
    %v8876 = vmul.f32 %v8662, 1.442695
    %v8877 = vpow.pop %v8876
    %v8878 = vmul.f32 %v8663, 1.442695
    %v8879 = vpow.pop %v8878
    %v8880 = vmul.f32 %v8664, 1.442695
    %v8881 = vpow.pop %v8880
    %v8882 = vmul.f32 %v8665, 1.442695
    %v8883 = vpow.pop %v8882
    %v8884 = vmul.f32 %v8666, 1.442695
    %v8885 = vpow.pop %v8884
    %v8886 = vmul.f32 %v8667, 1.442695
    %v8887 = vpow.pop %v8886
    %v8888 = vmul.f32 %v8668, 1.442695
    %v8889 = vpow.pop %v8888
    %v8890 = vmul.f32 %v8669, 1.442695
    %v8891 = vpow.pop %v8890
    %v8892 = vmul.f32 %v8670, 1.442695
    %v8893 = vpow.pop %v8892
    %v8894 = vmul.f32 %v8671, 1.442695
    %v8895 = vpow.pop %v8894
    %v8896 = vmul.f32 %v8672, 1.442695
    %v8897 = vpow.pop %v8896
    %v8898 = vmul.f32 %v8673, 1.442695
    %v8899 = vpow.pop %v8898
    %v8900 = vmul.f32 %v8674, 1.442695
    %v8901 = vpow.pop %v8900
    %v8902 = vmul.f32 %v8675, 1.442695
    %v8903 = vpow.pop %v8902
    %v8904 = vmul.f32 %v8676, 1.442695
    %v8905 = vpow.pop %v8904
    %v8906 = vmul.f32 %v8677, 1.442695
    %v8907 = vpow.pop %v8906
    %v8908 = vmul.f32 %v8678, 1.442695
    %v8909 = vpow.pop %v8908
    %v8910 = vmul.f32 %v8679, 1.442695
    %v8911 = vpow.pop %v8910
    %v8912 = vmul.f32 %v8680, 1.442695
    %v8913 = vpow.pop %v8912
    %v8914 = vmul.f32 %v8681, 1.442695
    %v8915 = vpow.pop %v8914
    %v8916 = vmul.f32 %v8682, 1.442695
    %v8917 = vpow.pop %v8916
    %v8918 = vmul.f32 %v8683, 1.442695
    %v8919 = vpow.pop %v8918
    %v8920 = vmul.f32 %v8684, 1.442695
    %v8921 = vpow.pop %v8920
    %v8922 = vmul.f32 %v8685, 1.442695
    %v8923 = vpow.pop %v8922
    %v8924 = vmul.f32 %v8686, 1.442695
    %v8925 = vpow.pop %v8924
    %v8926 = vmul.f32 %v8687, 1.442695
    %v8927 = vpow.pop %v8926
    %v8928 = vmul.f32 %v8688, 1.442695
    %v8929 = vpow.pop %v8928
    %v8930 = vmul.f32 %v8689, 1.442695
    %v8931 = vpow.pop %v8930
    %v8932 = vmul.f32 %v8690, 1.442695
    %v8933 = vpow.pop %v8932
    %v8934 = vmul.f32 %v8691, 1.442695
    %v8935 = vpow.pop %v8934
    %v8936 = vmul.f32 %v8692, 1.442695
    %v8937 = vpow.pop %v8936
    %v8938 = vmul.f32 %v8693, 1.442695
    %v8939 = vpow.pop %v8938
    %v8940 = vmul.f32 %v8694, 1.442695
    %v8941 = vpow.pop %v8940
    %v8942 = vmul.f32 %v8695, 1.442695
    %v8943 = vpow.pop %v8942
    %v8944 = vmul.f32 %v8696, 1.442695
    %v8945 = vpow.pop %v8944
    %v8946 = vmul.f32 %v8697, 1.442695
    %v8947 = vpow.pop %v8946
    %v8948 = vmul.f32 %v8698, 1.442695
    %v8949 = vpow.pop %v8948
    %v8950 = vmul.f32 %v8699, 1.442695
    %v8951 = vpow.pop %v8950
    %v8952 = vmul.f32 %v8700, 1.442695
    %v8953 = vpow.pop %v8952
    %v8954 = vmul.f32 %v8701, 1.442695
    %v8955 = vpow.pop %v8954
    %v8956 = vmul.f32 %v8702, 1.442695
    %v8957 = vpow.pop %v8956
    %v8958 = vmul.f32 %v8703, 1.442695
    %v8959 = vpow.pop %v8958
    %v8960 = vadd.f32 %v8705, 1.0
    %v8961 = vadd.f32 %v8707, 1.0
    %v8962 = vadd.f32 %v8709, 1.0
    %v8963 = vadd.f32 %v8711, 1.0
    %v8964 = vadd.f32 %v8713, 1.0
    %v8965 = vadd.f32 %v8715, 1.0
    %v8966 = vadd.f32 %v8717, 1.0
    %v8967 = vadd.f32 %v8719, 1.0
    %v8968 = vadd.f32 %v8721, 1.0
    %v8969 = vadd.f32 %v8723, 1.0
    %v8970 = vadd.f32 %v8725, 1.0
    %v8971 = vadd.f32 %v8727, 1.0
    %v8972 = vadd.f32 %v8729, 1.0
    %v8973 = vadd.f32 %v8731, 1.0
    %v8974 = vadd.f32 %v8733, 1.0
    %v8975 = vadd.f32 %v8735, 1.0
    %v8976 = vadd.f32 %v8737, 1.0
    %v8977 = vadd.f32 %v8739, 1.0
    %v8978 = vadd.f32 %v8741, 1.0
    %v8979 = vadd.f32 %v8743, 1.0
    %v8980 = vadd.f32 %v8745, 1.0
    %v8981 = vadd.f32 %v8747, 1.0
    %v8982 = vadd.f32 %v8749, 1.0
    %v8983 = vadd.f32 %v8751, 1.0
    %v8984 = vadd.f32 %v8753, 1.0
    %v8985 = vadd.f32 %v8755, 1.0
    %v8986 = vadd.f32 %v8757, 1.0
    %v8987 = vadd.f32 %v8759, 1.0
    %v8988 = vadd.f32 %v8761, 1.0
    %v8989 = vadd.f32 %v8763, 1.0
    %v8990 = vadd.f32 %v8765, 1.0
    %v8991 = vadd.f32 %v8767, 1.0
    %v8992 = vadd.f32 %v8769, 1.0
    %v8993 = vadd.f32 %v8771, 1.0
    %v8994 = vadd.f32 %v8773, 1.0
    %v8995 = vadd.f32 %v8775, 1.0
    %v8996 = vadd.f32 %v8777, 1.0
    %v8997 = vadd.f32 %v8779, 1.0
    %v8998 = vadd.f32 %v8781, 1.0
    %v8999 = vadd.f32 %v8783, 1.0
    %v9000 = vadd.f32 %v8785, 1.0
    %v9001 = vadd.f32 %v8787, 1.0
    %v9002 = vadd.f32 %v8789, 1.0
    %v9003 = vadd.f32 %v8791, 1.0
    %v9004 = vadd.f32 %v8793, 1.0
    %v9005 = vadd.f32 %v8795, 1.0
    %v9006 = vadd.f32 %v8797, 1.0
    %v9007 = vadd.f32 %v8799, 1.0
    %v9008 = vadd.f32 %v8801, 1.0
    %v9009 = vadd.f32 %v8803, 1.0
    %v9010 = vadd.f32 %v8805, 1.0
    %v9011 = vadd.f32 %v8807, 1.0
    %v9012 = vadd.f32 %v8809, 1.0
    %v9013 = vadd.f32 %v8811, 1.0
    %v9014 = vadd.f32 %v8813, 1.0
    %v9015 = vadd.f32 %v8815, 1.0
    %v9016 = vadd.f32 %v8817, 1.0
    %v9017 = vadd.f32 %v8819, 1.0
    %v9018 = vadd.f32 %v8821, 1.0
    %v9019 = vadd.f32 %v8823, 1.0
    %v9020 = vadd.f32 %v8825, 1.0
    %v9021 = vadd.f32 %v8827, 1.0
    %v9022 = vadd.f32 %v8829, 1.0
    %v9023 = vadd.f32 %v8831, 1.0
    %v9024 = vadd.f32 %v8833, 1.0
    %v9025 = vadd.f32 %v8835, 1.0
    %v9026 = vadd.f32 %v8837, 1.0
    %v9027 = vadd.f32 %v8839, 1.0
    %v9028 = vadd.f32 %v8841, 1.0
    %v9029 = vadd.f32 %v8843, 1.0
    %v9030 = vadd.f32 %v8845, 1.0
    %v9031 = vadd.f32 %v8847, 1.0
    %v9032 = vadd.f32 %v8849, 1.0
    %v9033 = vadd.f32 %v8851, 1.0
    %v9034 = vadd.f32 %v8853, 1.0
    %v9035 = vadd.f32 %v8855, 1.0
    %v9036 = vadd.f32 %v8857, 1.0
    %v9037 = vadd.f32 %v8859, 1.0
    %v9038 = vadd.f32 %v8861, 1.0
    %v9039 = vadd.f32 %v8863, 1.0
    %v9040 = vadd.f32 %v8865, 1.0
    %v9041 = vadd.f32 %v8867, 1.0
    %v9042 = vadd.f32 %v8869, 1.0
    %v9043 = vadd.f32 %v8871, 1.0
    %v9044 = vadd.f32 %v8873, 1.0
    %v9045 = vadd.f32 %v8875, 1.0
    %v9046 = vadd.f32 %v8877, 1.0
    %v9047 = vadd.f32 %v8879, 1.0
    %v9048 = vadd.f32 %v8881, 1.0
    %v9049 = vadd.f32 %v8883, 1.0
    %v9050 = vadd.f32 %v8885, 1.0
    %v9051 = vadd.f32 %v8887, 1.0
    %v9052 = vadd.f32 %v8889, 1.0
    %v9053 = vadd.f32 %v8891, 1.0
    %v9054 = vadd.f32 %v8893, 1.0
    %v9055 = vadd.f32 %v8895, 1.0
    %v9056 = vadd.f32 %v8897, 1.0
    %v9057 = vadd.f32 %v8899, 1.0
    %v9058 = vadd.f32 %v8901, 1.0
    %v9059 = vadd.f32 %v8903, 1.0
    %v9060 = vadd.f32 %v8905, 1.0
    %v9061 = vadd.f32 %v8907, 1.0
    %v9062 = vadd.f32 %v8909, 1.0
    %v9063 = vadd.f32 %v8911, 1.0
    %v9064 = vadd.f32 %v8913, 1.0
    %v9065 = vadd.f32 %v8915, 1.0
    %v9066 = vadd.f32 %v8917, 1.0
    %v9067 = vadd.f32 %v8919, 1.0
    %v9068 = vadd.f32 %v8921, 1.0
    %v9069 = vadd.f32 %v8923, 1.0
    %v9070 = vadd.f32 %v8925, 1.0
    %v9071 = vadd.f32 %v8927, 1.0
    %v9072 = vadd.f32 %v8929, 1.0
    %v9073 = vadd.f32 %v8931, 1.0
    %v9074 = vadd.f32 %v8933, 1.0
    %v9075 = vadd.f32 %v8935, 1.0
    %v9076 = vadd.f32 %v8937, 1.0
    %v9077 = vadd.f32 %v8939, 1.0
    %v9078 = vadd.f32 %v8941, 1.0
    %v9079 = vadd.f32 %v8943, 1.0
    %v9080 = vadd.f32 %v8945, 1.0
    %v9081 = vadd.f32 %v8947, 1.0
    %v9082 = vadd.f32 %v8949, 1.0
    %v9083 = vadd.f32 %v8951, 1.0
    %v9084 = vadd.f32 %v8953, 1.0
    %v9085 = vadd.f32 %v8955, 1.0
    %v9086 = vadd.f32 %v8957, 1.0
    %v9087 = vadd.f32 %v8959, 1.0
    %v9088 = vrcp.pop %v8960
    %v9089 = vmul.f32 1.0, %v9088
    %v9090 = vrcp.pop %v8961
    %v9091 = vmul.f32 1.0, %v9090
    %v9092 = vrcp.pop %v8962
    %v9093 = vmul.f32 1.0, %v9092
    %v9094 = vrcp.pop %v8963
    %v9095 = vmul.f32 1.0, %v9094
    %v9096 = vrcp.pop %v8964
    %v9097 = vmul.f32 1.0, %v9096
    %v9098 = vrcp.pop %v8965
    %v9099 = vmul.f32 1.0, %v9098
    %v9100 = vrcp.pop %v8966
    %v9101 = vmul.f32 1.0, %v9100
    %v9102 = vrcp.pop %v8967
    %v9103 = vmul.f32 1.0, %v9102
    %v9104 = vrcp.pop %v8968
    %v9105 = vmul.f32 1.0, %v9104
    %v9106 = vrcp.pop %v8969
    %v9107 = vmul.f32 1.0, %v9106
    %v9108 = vrcp.pop %v8970
    %v9109 = vmul.f32 1.0, %v9108
    %v9110 = vrcp.pop %v8971
    %v9111 = vmul.f32 1.0, %v9110
    %v9112 = vrcp.pop %v8972
    %v9113 = vmul.f32 1.0, %v9112
    %v9114 = vrcp.pop %v8973
    %v9115 = vmul.f32 1.0, %v9114
    %v9116 = vrcp.pop %v8974
    %v9117 = vmul.f32 1.0, %v9116
    %v9118 = vrcp.pop %v8975
    %v9119 = vmul.f32 1.0, %v9118
    %v9120 = vrcp.pop %v8976
    %v9121 = vmul.f32 1.0, %v9120
    %v9122 = vrcp.pop %v8977
    %v9123 = vmul.f32 1.0, %v9122
    %v9124 = vrcp.pop %v8978
    %v9125 = vmul.f32 1.0, %v9124
    %v9126 = vrcp.pop %v8979
    %v9127 = vmul.f32 1.0, %v9126
    %v9128 = vrcp.pop %v8980
    %v9129 = vmul.f32 1.0, %v9128
    %v9130 = vrcp.pop %v8981
    %v9131 = vmul.f32 1.0, %v9130
    %v9132 = vrcp.pop %v8982
    %v9133 = vmul.f32 1.0, %v9132
    %v9134 = vrcp.pop %v8983
    %v9135 = vmul.f32 1.0, %v9134
    %v9136 = vrcp.pop %v8984
    %v9137 = vmul.f32 1.0, %v9136
    %v9138 = vrcp.pop %v8985
    %v9139 = vmul.f32 1.0, %v9138
    %v9140 = vrcp.pop %v8986
    %v9141 = vmul.f32 1.0, %v9140
    %v9142 = vrcp.pop %v8987
    %v9143 = vmul.f32 1.0, %v9142
    %v9144 = vrcp.pop %v8988
    %v9145 = vmul.f32 1.0, %v9144
    %v9146 = vrcp.pop %v8989
    %v9147 = vmul.f32 1.0, %v9146
    %v9148 = vrcp.pop %v8990
    %v9149 = vmul.f32 1.0, %v9148
    %v9150 = vrcp.pop %v8991
    %v9151 = vmul.f32 1.0, %v9150
    %v9152 = vrcp.pop %v8992
    %v9153 = vmul.f32 1.0, %v9152
    %v9154 = vrcp.pop %v8993
    %v9155 = vmul.f32 1.0, %v9154
    %v9156 = vrcp.pop %v8994
    %v9157 = vmul.f32 1.0, %v9156
    %v9158 = vrcp.pop %v8995
    %v9159 = vmul.f32 1.0, %v9158
    %v9160 = vrcp.pop %v8996
    %v9161 = vmul.f32 1.0, %v9160
    %v9162 = vrcp.pop %v8997
    %v9163 = vmul.f32 1.0, %v9162
    %v9164 = vrcp.pop %v8998
    %v9165 = vmul.f32 1.0, %v9164
    %v9166 = vrcp.pop %v8999
    %v9167 = vmul.f32 1.0, %v9166
    %v9168 = vrcp.pop %v9000
    %v9169 = vmul.f32 1.0, %v9168
    %v9170 = vrcp.pop %v9001
    %v9171 = vmul.f32 1.0, %v9170
    %v9172 = vrcp.pop %v9002
    %v9173 = vmul.f32 1.0, %v9172
    %v9174 = vrcp.pop %v9003
    %v9175 = vmul.f32 1.0, %v9174
    %v9176 = vrcp.pop %v9004
    %v9177 = vmul.f32 1.0, %v9176
    %v9178 = vrcp.pop %v9005
    %v9179 = vmul.f32 1.0, %v9178
    %v9180 = vrcp.pop %v9006
    %v9181 = vmul.f32 1.0, %v9180
    %v9182 = vrcp.pop %v9007
    %v9183 = vmul.f32 1.0, %v9182
    %v9184 = vrcp.pop %v9008
    %v9185 = vmul.f32 1.0, %v9184
    %v9186 = vrcp.pop %v9009
    %v9187 = vmul.f32 1.0, %v9186
    %v9188 = vrcp.pop %v9010
    %v9189 = vmul.f32 1.0, %v9188
    %v9190 = vrcp.pop %v9011
    %v9191 = vmul.f32 1.0, %v9190
    %v9192 = vrcp.pop %v9012
    %v9193 = vmul.f32 1.0, %v9192
    %v9194 = vrcp.pop %v9013
    %v9195 = vmul.f32 1.0, %v9194
    %v9196 = vrcp.pop %v9014
    %v9197 = vmul.f32 1.0, %v9196
    %v9198 = vrcp.pop %v9015
    %v9199 = vmul.f32 1.0, %v9198
    %v9200 = vrcp.pop %v9016
    %v9201 = vmul.f32 1.0, %v9200
    %v9202 = vrcp.pop %v9017
    %v9203 = vmul.f32 1.0, %v9202
    %v9204 = vrcp.pop %v9018
    %v9205 = vmul.f32 1.0, %v9204
    %v9206 = vrcp.pop %v9019
    %v9207 = vmul.f32 1.0, %v9206
    %v9208 = vrcp.pop %v9020
    %v9209 = vmul.f32 1.0, %v9208
    %v9210 = vrcp.pop %v9021
    %v9211 = vmul.f32 1.0, %v9210
    %v9212 = vrcp.pop %v9022
    %v9213 = vmul.f32 1.0, %v9212
    %v9214 = vrcp.pop %v9023
    %v9215 = vmul.f32 1.0, %v9214
    %v9216 = vrcp.pop %v9024
    %v9217 = vmul.f32 1.0, %v9216
    %v9218 = vrcp.pop %v9025
    %v9219 = vmul.f32 1.0, %v9218
    %v9220 = vrcp.pop %v9026
    %v9221 = vmul.f32 1.0, %v9220
    %v9222 = vrcp.pop %v9027
    %v9223 = vmul.f32 1.0, %v9222
    %v9224 = vrcp.pop %v9028
    %v9225 = vmul.f32 1.0, %v9224
    %v9226 = vrcp.pop %v9029
    %v9227 = vmul.f32 1.0, %v9226
    %v9228 = vrcp.pop %v9030
    %v9229 = vmul.f32 1.0, %v9228
    %v9230 = vrcp.pop %v9031
    %v9231 = vmul.f32 1.0, %v9230
    %v9232 = vrcp.pop %v9032
    %v9233 = vmul.f32 1.0, %v9232
    %v9234 = vrcp.pop %v9033
    %v9235 = vmul.f32 1.0, %v9234
    %v9236 = vrcp.pop %v9034
    %v9237 = vmul.f32 1.0, %v9236
    %v9238 = vrcp.pop %v9035
    %v9239 = vmul.f32 1.0, %v9238
    %v9240 = vrcp.pop %v9036
    %v9241 = vmul.f32 1.0, %v9240
    %v9242 = vrcp.pop %v9037
    %v9243 = vmul.f32 1.0, %v9242
    %v9244 = vrcp.pop %v9038
    %v9245 = vmul.f32 1.0, %v9244
    %v9246 = vrcp.pop %v9039
    %v9247 = vmul.f32 1.0, %v9246
    %v9248 = vrcp.pop %v9040
    %v9249 = vmul.f32 1.0, %v9248
    %v9250 = vrcp.pop %v9041
    %v9251 = vmul.f32 1.0, %v9250
    %v9252 = vrcp.pop %v9042
    %v9253 = vmul.f32 1.0, %v9252
    %v9254 = vrcp.pop %v9043
    %v9255 = vmul.f32 1.0, %v9254
    %v9256 = vrcp.pop %v9044
    %v9257 = vmul.f32 1.0, %v9256
    %v9258 = vrcp.pop %v9045
    %v9259 = vmul.f32 1.0, %v9258
    %v9260 = vrcp.pop %v9046
    %v9261 = vmul.f32 1.0, %v9260
    %v9262 = vrcp.pop %v9047
    %v9263 = vmul.f32 1.0, %v9262
    %v9264 = vrcp.pop %v9048
    %v9265 = vmul.f32 1.0, %v9264
    %v9266 = vrcp.pop %v9049
    %v9267 = vmul.f32 1.0, %v9266
    %v9268 = vrcp.pop %v9050
    %v9269 = vmul.f32 1.0, %v9268
    %v9270 = vrcp.pop %v9051
    %v9271 = vmul.f32 1.0, %v9270
    %v9272 = vrcp.pop %v9052
    %v9273 = vmul.f32 1.0, %v9272
    %v9274 = vrcp.pop %v9053
    %v9275 = vmul.f32 1.0, %v9274
    %v9276 = vrcp.pop %v9054
    %v9277 = vmul.f32 1.0, %v9276
    %v9278 = vrcp.pop %v9055
    %v9279 = vmul.f32 1.0, %v9278
    %v9280 = vrcp.pop %v9056
    %v9281 = vmul.f32 1.0, %v9280
    %v9282 = vrcp.pop %v9057
    %v9283 = vmul.f32 1.0, %v9282
    %v9284 = vrcp.pop %v9058
    %v9285 = vmul.f32 1.0, %v9284
    %v9286 = vrcp.pop %v9059
    %v9287 = vmul.f32 1.0, %v9286
    %v9288 = vrcp.pop %v9060
    %v9289 = vmul.f32 1.0, %v9288
    %v9290 = vrcp.pop %v9061
    %v9291 = vmul.f32 1.0, %v9290
    %v9292 = vrcp.pop %v9062
    %v9293 = vmul.f32 1.0, %v9292
    %v9294 = vrcp.pop %v9063
    %v9295 = vmul.f32 1.0, %v9294
    %v9296 = vrcp.pop %v9064
    %v9297 = vmul.f32 1.0, %v9296
    %v9298 = vrcp.pop %v9065
    %v9299 = vmul.f32 1.0, %v9298
    %v9300 = vrcp.pop %v9066
    %v9301 = vmul.f32 1.0, %v9300
    %v9302 = vrcp.pop %v9067
    %v9303 = vmul.f32 1.0, %v9302
    %v9304 = vrcp.pop %v9068
    %v9305 = vmul.f32 1.0, %v9304
    %v9306 = vrcp.pop %v9069
    %v9307 = vmul.f32 1.0, %v9306
    %v9308 = vrcp.pop %v9070
    %v9309 = vmul.f32 1.0, %v9308
    %v9310 = vrcp.pop %v9071
    %v9311 = vmul.f32 1.0, %v9310
    %v9312 = vrcp.pop %v9072
    %v9313 = vmul.f32 1.0, %v9312
    %v9314 = vrcp.pop %v9073
    %v9315 = vmul.f32 1.0, %v9314
    %v9316 = vrcp.pop %v9074
    %v9317 = vmul.f32 1.0, %v9316
    %v9318 = vrcp.pop %v9075
    %v9319 = vmul.f32 1.0, %v9318
    %v9320 = vrcp.pop %v9076
    %v9321 = vmul.f32 1.0, %v9320
    %v9322 = vrcp.pop %v9077
    %v9323 = vmul.f32 1.0, %v9322
    %v9324 = vrcp.pop %v9078
    %v9325 = vmul.f32 1.0, %v9324
    %v9326 = vrcp.pop %v9079
    %v9327 = vmul.f32 1.0, %v9326
    %v9328 = vrcp.pop %v9080
    %v9329 = vmul.f32 1.0, %v9328
    %v9330 = vrcp.pop %v9081
    %v9331 = vmul.f32 1.0, %v9330
    %v9332 = vrcp.pop %v9082
    %v9333 = vmul.f32 1.0, %v9332
    %v9334 = vrcp.pop %v9083
    %v9335 = vmul.f32 1.0, %v9334
    %v9336 = vrcp.pop %v9084
    %v9337 = vmul.f32 1.0, %v9336
    %v9338 = vrcp.pop %v9085
    %v9339 = vmul.f32 1.0, %v9338
    %v9340 = vrcp.pop %v9086
    %v9341 = vmul.f32 1.0, %v9340
    %v9342 = vrcp.pop %v9087
    %v9343 = vmul.f32 1.0, %v9342
    %v9344 = vmul.f32 %v8448, %v9089
    %v9345 = vmul.f32 %v8449, %v9091
    %v9346 = vmul.f32 %v8450, %v9093
    %v9347 = vmul.f32 %v8451, %v9095
    %v9348 = vmul.f32 %v8452, %v9097
    %v9349 = vmul.f32 %v8453, %v9099
    %v9350 = vmul.f32 %v8454, %v9101
    %v9351 = vmul.f32 %v8455, %v9103
    %v9352 = vmul.f32 %v8456, %v9105
    %v9353 = vmul.f32 %v8457, %v9107
    %v9354 = vmul.f32 %v8458, %v9109
    %v9355 = vmul.f32 %v8459, %v9111
    %v9356 = vmul.f32 %v8460, %v9113
    %v9357 = vmul.f32 %v8461, %v9115
    %v9358 = vmul.f32 %v8462, %v9117
    %v9359 = vmul.f32 %v8463, %v9119
    %v9360 = vmul.f32 %v8464, %v9121
    %v9361 = vmul.f32 %v8465, %v9123
    %v9362 = vmul.f32 %v8466, %v9125
    %v9363 = vmul.f32 %v8467, %v9127
    %v9364 = vmul.f32 %v8468, %v9129
    %v9365 = vmul.f32 %v8469, %v9131
    %v9366 = vmul.f32 %v8470, %v9133
    %v9367 = vmul.f32 %v8471, %v9135
    %v9368 = vmul.f32 %v8472, %v9137
    %v9369 = vmul.f32 %v8473, %v9139
    %v9370 = vmul.f32 %v8474, %v9141
    %v9371 = vmul.f32 %v8475, %v9143
    %v9372 = vmul.f32 %v8476, %v9145
    %v9373 = vmul.f32 %v8477, %v9147
    %v9374 = vmul.f32 %v8478, %v9149
    %v9375 = vmul.f32 %v8479, %v9151
    %v9376 = vmul.f32 %v8480, %v9153
    %v9377 = vmul.f32 %v8481, %v9155
    %v9378 = vmul.f32 %v8482, %v9157
    %v9379 = vmul.f32 %v8483, %v9159
    %v9380 = vmul.f32 %v8484, %v9161
    %v9381 = vmul.f32 %v8485, %v9163
    %v9382 = vmul.f32 %v8486, %v9165
    %v9383 = vmul.f32 %v8487, %v9167
    %v9384 = vmul.f32 %v8488, %v9169
    %v9385 = vmul.f32 %v8489, %v9171
    %v9386 = vmul.f32 %v8490, %v9173
    %v9387 = vmul.f32 %v8491, %v9175
    %v9388 = vmul.f32 %v8492, %v9177
    %v9389 = vmul.f32 %v8493, %v9179
    %v9390 = vmul.f32 %v8494, %v9181
    %v9391 = vmul.f32 %v8495, %v9183
    %v9392 = vmul.f32 %v8496, %v9185
    %v9393 = vmul.f32 %v8497, %v9187
    %v9394 = vmul.f32 %v8498, %v9189
    %v9395 = vmul.f32 %v8499, %v9191
    %v9396 = vmul.f32 %v8500, %v9193
    %v9397 = vmul.f32 %v8501, %v9195
    %v9398 = vmul.f32 %v8502, %v9197
    %v9399 = vmul.f32 %v8503, %v9199
    %v9400 = vmul.f32 %v8504, %v9201
    %v9401 = vmul.f32 %v8505, %v9203
    %v9402 = vmul.f32 %v8506, %v9205
    %v9403 = vmul.f32 %v8507, %v9207
    %v9404 = vmul.f32 %v8508, %v9209
    %v9405 = vmul.f32 %v8509, %v9211
    %v9406 = vmul.f32 %v8510, %v9213
    %v9407 = vmul.f32 %v8511, %v9215
    %v9408 = vmul.f32 %v8512, %v9217
    %v9409 = vmul.f32 %v8513, %v9219
    %v9410 = vmul.f32 %v8514, %v9221
    %v9411 = vmul.f32 %v8515, %v9223
    %v9412 = vmul.f32 %v8516, %v9225
    %v9413 = vmul.f32 %v8517, %v9227
    %v9414 = vmul.f32 %v8518, %v9229
    %v9415 = vmul.f32 %v8519, %v9231
    %v9416 = vmul.f32 %v8520, %v9233
    %v9417 = vmul.f32 %v8521, %v9235
    %v9418 = vmul.f32 %v8522, %v9237
    %v9419 = vmul.f32 %v8523, %v9239
    %v9420 = vmul.f32 %v8524, %v9241
    %v9421 = vmul.f32 %v8525, %v9243
    %v9422 = vmul.f32 %v8526, %v9245
    %v9423 = vmul.f32 %v8527, %v9247
    %v9424 = vmul.f32 %v8528, %v9249
    %v9425 = vmul.f32 %v8529, %v9251
    %v9426 = vmul.f32 %v8530, %v9253
    %v9427 = vmul.f32 %v8531, %v9255
    %v9428 = vmul.f32 %v8532, %v9257
    %v9429 = vmul.f32 %v8533, %v9259
    %v9430 = vmul.f32 %v8534, %v9261
    %v9431 = vmul.f32 %v8535, %v9263
    %v9432 = vmul.f32 %v8536, %v9265
    %v9433 = vmul.f32 %v8537, %v9267
    %v9434 = vmul.f32 %v8538, %v9269
    %v9435 = vmul.f32 %v8539, %v9271
    %v9436 = vmul.f32 %v8540, %v9273
    %v9437 = vmul.f32 %v8541, %v9275
    %v9438 = vmul.f32 %v8542, %v9277
    %v9439 = vmul.f32 %v8543, %v9279
    %v9440 = vmul.f32 %v8544, %v9281
    %v9441 = vmul.f32 %v8545, %v9283
    %v9442 = vmul.f32 %v8546, %v9285
    %v9443 = vmul.f32 %v8547, %v9287
    %v9444 = vmul.f32 %v8548, %v9289
    %v9445 = vmul.f32 %v8549, %v9291
    %v9446 = vmul.f32 %v8550, %v9293
    %v9447 = vmul.f32 %v8551, %v9295
    %v9448 = vmul.f32 %v8552, %v9297
    %v9449 = vmul.f32 %v8553, %v9299
    %v9450 = vmul.f32 %v8554, %v9301
    %v9451 = vmul.f32 %v8555, %v9303
    %v9452 = vmul.f32 %v8556, %v9305
    %v9453 = vmul.f32 %v8557, %v9307
    %v9454 = vmul.f32 %v8558, %v9309
    %v9455 = vmul.f32 %v8559, %v9311
    %v9456 = vmul.f32 %v8560, %v9313
    %v9457 = vmul.f32 %v8561, %v9315
    %v9458 = vmul.f32 %v8562, %v9317
    %v9459 = vmul.f32 %v8563, %v9319
    %v9460 = vmul.f32 %v8564, %v9321
    %v9461 = vmul.f32 %v8565, %v9323
    %v9462 = vmul.f32 %v8566, %v9325
    %v9463 = vmul.f32 %v8567, %v9327
    %v9464 = vmul.f32 %v8568, %v9329
    %v9465 = vmul.f32 %v8569, %v9331
    %v9466 = vmul.f32 %v8570, %v9333
    %v9467 = vmul.f32 %v8571, %v9335
    %v9468 = vmul.f32 %v8572, %v9337
    %v9469 = vmul.f32 %v8573, %v9339
    %v9470 = vmul.f32 %v8574, %v9341
    %v9471 = vmul.f32 %v8575, %v9343
    %v9472 = vmul.f32 %v9344, %v657
    %v9473 = vmul.f32 %v9345, %v661
    %v9474 = vmul.f32 %v9346, %v665
    %v9475 = vmul.f32 %v9347, %v669
    %v9476 = vmul.f32 %v9348, %v676
    %v9477 = vmul.f32 %v9349, %v680
    %v9478 = vmul.f32 %v9350, %v684
    %v9479 = vmul.f32 %v9351, %v688
    %v9480 = vmul.f32 %v9352, %v695
    %v9481 = vmul.f32 %v9353, %v699
    %v9482 = vmul.f32 %v9354, %v703
    %v9483 = vmul.f32 %v9355, %v707
    %v9484 = vmul.f32 %v9356, %v714
    %v9485 = vmul.f32 %v9357, %v718
    %v9486 = vmul.f32 %v9358, %v722
    %v9487 = vmul.f32 %v9359, %v726
    %v9488 = vmul.f32 %v9360, %v733
    %v9489 = vmul.f32 %v9361, %v737
    %v9490 = vmul.f32 %v9362, %v741
    %v9491 = vmul.f32 %v9363, %v745
    %v9492 = vmul.f32 %v9364, %v752
    %v9493 = vmul.f32 %v9365, %v756
    %v9494 = vmul.f32 %v9366, %v760
    %v9495 = vmul.f32 %v9367, %v764
    %v9496 = vmul.f32 %v9368, %v771
    %v9497 = vmul.f32 %v9369, %v775
    %v9498 = vmul.f32 %v9370, %v779
    %v9499 = vmul.f32 %v9371, %v783
    %v9500 = vmul.f32 %v9372, %v790
    %v9501 = vmul.f32 %v9373, %v794
    %v9502 = vmul.f32 %v9374, %v798
    %v9503 = vmul.f32 %v9375, %v802
    %v9504 = vmul.f32 %v9376, %v809
    %v9505 = vmul.f32 %v9377, %v813
    %v9506 = vmul.f32 %v9378, %v817
    %v9507 = vmul.f32 %v9379, %v821
    %v9508 = vmul.f32 %v9380, %v828
    %v9509 = vmul.f32 %v9381, %v832
    %v9510 = vmul.f32 %v9382, %v836
    %v9511 = vmul.f32 %v9383, %v840
    %v9512 = vmul.f32 %v9384, %v847
    %v9513 = vmul.f32 %v9385, %v851
    %v9514 = vmul.f32 %v9386, %v855
    %v9515 = vmul.f32 %v9387, %v859
    %v9516 = vmul.f32 %v9388, %v866
    %v9517 = vmul.f32 %v9389, %v870
    %v9518 = vmul.f32 %v9390, %v874
    %v9519 = vmul.f32 %v9391, %v878
    %v9520 = vmul.f32 %v9392, %v885
    %v9521 = vmul.f32 %v9393, %v889
    %v9522 = vmul.f32 %v9394, %v893
    %v9523 = vmul.f32 %v9395, %v897
    %v9524 = vmul.f32 %v9396, %v904
    %v9525 = vmul.f32 %v9397, %v908
    %v9526 = vmul.f32 %v9398, %v912
    %v9527 = vmul.f32 %v9399, %v916
    %v9528 = vmul.f32 %v9400, %v923
    %v9529 = vmul.f32 %v9401, %v927
    %v9530 = vmul.f32 %v9402, %v931
    %v9531 = vmul.f32 %v9403, %v935
    %v9532 = vmul.f32 %v9404, %v942
    %v9533 = vmul.f32 %v9405, %v946
    %v9534 = vmul.f32 %v9406, %v950
    %v9535 = vmul.f32 %v9407, %v954
    %v9536 = vmul.f32 %v9408, %v961
    %v9537 = vmul.f32 %v9409, %v965
    %v9538 = vmul.f32 %v9410, %v969
    %v9539 = vmul.f32 %v9411, %v973
    %v9540 = vmul.f32 %v9412, %v980
    %v9541 = vmul.f32 %v9413, %v984
    %v9542 = vmul.f32 %v9414, %v988
    %v9543 = vmul.f32 %v9415, %v992
    %v9544 = vmul.f32 %v9416, %v999
    %v9545 = vmul.f32 %v9417, %v1003
    %v9546 = vmul.f32 %v9418, %v1007
    %v9547 = vmul.f32 %v9419, %v1011
    %v9548 = vmul.f32 %v9420, %v1018
    %v9549 = vmul.f32 %v9421, %v1022
    %v9550 = vmul.f32 %v9422, %v1026
    %v9551 = vmul.f32 %v9423, %v1030
    %v9552 = vmul.f32 %v9424, %v1037
    %v9553 = vmul.f32 %v9425, %v1041
    %v9554 = vmul.f32 %v9426, %v1045
    %v9555 = vmul.f32 %v9427, %v1049
    %v9556 = vmul.f32 %v9428, %v1056
    %v9557 = vmul.f32 %v9429, %v1060
    %v9558 = vmul.f32 %v9430, %v1064
    %v9559 = vmul.f32 %v9431, %v1068
    %v9560 = vmul.f32 %v9432, %v1075
    %v9561 = vmul.f32 %v9433, %v1079
    %v9562 = vmul.f32 %v9434, %v1083
    %v9563 = vmul.f32 %v9435, %v1087
    %v9564 = vmul.f32 %v9436, %v1094
    %v9565 = vmul.f32 %v9437, %v1098
    %v9566 = vmul.f32 %v9438, %v1102
    %v9567 = vmul.f32 %v9439, %v1106
    %v9568 = vmul.f32 %v9440, %v1113
    %v9569 = vmul.f32 %v9441, %v1117
    %v9570 = vmul.f32 %v9442, %v1121
    %v9571 = vmul.f32 %v9443, %v1125
    %v9572 = vmul.f32 %v9444, %v1132
    %v9573 = vmul.f32 %v9445, %v1136
    %v9574 = vmul.f32 %v9446, %v1140
    %v9575 = vmul.f32 %v9447, %v1144
    %v9576 = vmul.f32 %v9448, %v1151
    %v9577 = vmul.f32 %v9449, %v1155
    %v9578 = vmul.f32 %v9450, %v1159
    %v9579 = vmul.f32 %v9451, %v1163
    %v9580 = vmul.f32 %v9452, %v1170
    %v9581 = vmul.f32 %v9453, %v1174
    %v9582 = vmul.f32 %v9454, %v1178
    %v9583 = vmul.f32 %v9455, %v1182
    %v9584 = vmul.f32 %v9456, %v1189
    %v9585 = vmul.f32 %v9457, %v1193
    %v9586 = vmul.f32 %v9458, %v1197
    %v9587 = vmul.f32 %v9459, %v1201
    %v9588 = vmul.f32 %v9460, %v1208
    %v9589 = vmul.f32 %v9461, %v1212
    %v9590 = vmul.f32 %v9462, %v1216
    %v9591 = vmul.f32 %v9463, %v1220
    %v9592 = vmul.f32 %v9464, %v1227
    %v9593 = vmul.f32 %v9465, %v1231
    %v9594 = vmul.f32 %v9466, %v1235
    %v9595 = vmul.f32 %v9467, %v1239
    %v9596 = vmul.f32 %v9468, %v1246
    %v9597 = vmul.f32 %v9469, %v1250
    %v9598 = vmul.f32 %v9470, %v1254
    %v9599 = vmul.f32 %v9471, %v1258
    %v9600 = vsel %vm554, %v9472, 0.0
    %v9601 = vsel %vm554, %v9473, 0.0
    %v9602 = vadd.f32 %v9600, %v9601
    %v9603 = vsel %vm554, %v9474, 0.0
    %v9604 = vadd.f32 %v9602, %v9603
    %v9605 = vsel %vm554, %v9475, 0.0
    %v9606 = vadd.f32 %v9604, %v9605
    %v9607 = vrot.slane %v9606, 4
    %v9608 = vadd.f32 %v9606, %v9607
    %v9609 = vrot.slane %v9608, 2
    %v9610 = vadd.f32 %v9608, %v9609
    %v9611 = vrot.slane %v9610, 1
    %v9612 = vadd.f32 %v9610, %v9611
    %v9613 = vsel %vm554, %v9476, 0.0
    %v9614 = vsel %vm554, %v9477, 0.0
    %v9615 = vadd.f32 %v9613, %v9614
    %v9616 = vsel %vm554, %v9478, 0.0
    %v9617 = vadd.f32 %v9615, %v9616
    %v9618 = vsel %vm554, %v9479, 0.0
    %v9619 = vadd.f32 %v9617, %v9618
    %v9620 = vrot.slane %v9619, 4
    %v9621 = vadd.f32 %v9619, %v9620
    %v9622 = vrot.slane %v9621, 2
    %v9623 = vadd.f32 %v9621, %v9622
    %v9624 = vrot.slane %v9623, 1
    %v9625 = vadd.f32 %v9623, %v9624
    %v9626 = vsel %vm554, %v9480, 0.0
    %v9627 = vsel %vm554, %v9481, 0.0
    %v9628 = vadd.f32 %v9626, %v9627
    %v9629 = vsel %vm554, %v9482, 0.0
    %v9630 = vadd.f32 %v9628, %v9629
    %v9631 = vsel %vm554, %v9483, 0.0
    %v9632 = vadd.f32 %v9630, %v9631
    %v9633 = vrot.slane %v9632, 4
    %v9634 = vadd.f32 %v9632, %v9633
    %v9635 = vrot.slane %v9634, 2
    %v9636 = vadd.f32 %v9634, %v9635
    %v9637 = vrot.slane %v9636, 1
    %v9638 = vadd.f32 %v9636, %v9637
    %v9639 = vsel %vm554, %v9484, 0.0
    %v9640 = vsel %vm554, %v9485, 0.0
    %v9641 = vadd.f32 %v9639, %v9640
    %v9642 = vsel %vm554, %v9486, 0.0
    %v9643 = vadd.f32 %v9641, %v9642
    %v9644 = vsel %vm554, %v9487, 0.0
    %v9645 = vadd.f32 %v9643, %v9644
    %v9646 = vrot.slane %v9645, 4
    %v9647 = vadd.f32 %v9645, %v9646
    %v9648 = vrot.slane %v9647, 2
    %v9649 = vadd.f32 %v9647, %v9648
    %v9650 = vrot.slane %v9649, 1
    %v9651 = vadd.f32 %v9649, %v9650
    %v9652 = vsel %vm554, %v9488, 0.0
    %v9653 = vsel %vm554, %v9489, 0.0
    %v9654 = vadd.f32 %v9652, %v9653
    %v9655 = vsel %vm554, %v9490, 0.0
    %v9656 = vadd.f32 %v9654, %v9655
    %v9657 = vsel %vm554, %v9491, 0.0
    %v9658 = vadd.f32 %v9656, %v9657
    %v9659 = vrot.slane %v9658, 4
    %v9660 = vadd.f32 %v9658, %v9659
    %v9661 = vrot.slane %v9660, 2
    %v9662 = vadd.f32 %v9660, %v9661
    %v9663 = vrot.slane %v9662, 1
    %v9664 = vadd.f32 %v9662, %v9663
    %v9665 = vsel %vm554, %v9492, 0.0
    %v9666 = vsel %vm554, %v9493, 0.0
    %v9667 = vadd.f32 %v9665, %v9666
    %v9668 = vsel %vm554, %v9494, 0.0
    %v9669 = vadd.f32 %v9667, %v9668
    %v9670 = vsel %vm554, %v9495, 0.0
    %v9671 = vadd.f32 %v9669, %v9670
    %v9672 = vrot.slane %v9671, 4
    %v9673 = vadd.f32 %v9671, %v9672
    %v9674 = vrot.slane %v9673, 2
    %v9675 = vadd.f32 %v9673, %v9674
    %v9676 = vrot.slane %v9675, 1
    %v9677 = vadd.f32 %v9675, %v9676
    %v9678 = vsel %vm554, %v9496, 0.0
    %v9679 = vsel %vm554, %v9497, 0.0
    %v9680 = vadd.f32 %v9678, %v9679
    %v9681 = vsel %vm554, %v9498, 0.0
    %v9682 = vadd.f32 %v9680, %v9681
    %v9683 = vsel %vm554, %v9499, 0.0
    %v9684 = vadd.f32 %v9682, %v9683
    %v9685 = vrot.slane %v9684, 4
    %v9686 = vadd.f32 %v9684, %v9685
    %v9687 = vrot.slane %v9686, 2
    %v9688 = vadd.f32 %v9686, %v9687
    %v9689 = vrot.slane %v9688, 1
    %v9690 = vadd.f32 %v9688, %v9689
    %v9691 = vsel %vm554, %v9500, 0.0
    %v9692 = vsel %vm554, %v9501, 0.0
    %v9693 = vadd.f32 %v9691, %v9692
    %v9694 = vsel %vm554, %v9502, 0.0
    %v9695 = vadd.f32 %v9693, %v9694
    %v9696 = vsel %vm554, %v9503, 0.0
    %v9697 = vadd.f32 %v9695, %v9696
    %v9698 = vrot.slane %v9697, 4
    %v9699 = vadd.f32 %v9697, %v9698
    %v9700 = vrot.slane %v9699, 2
    %v9701 = vadd.f32 %v9699, %v9700
    %v9702 = vrot.slane %v9701, 1
    %v9703 = vadd.f32 %v9701, %v9702
    %v9704 = vsel %vm554, %v9504, 0.0
    %v9705 = vsel %vm554, %v9505, 0.0
    %v9706 = vadd.f32 %v9704, %v9705
    %v9707 = vsel %vm554, %v9506, 0.0
    %v9708 = vadd.f32 %v9706, %v9707
    %v9709 = vsel %vm554, %v9507, 0.0
    %v9710 = vadd.f32 %v9708, %v9709
    %v9711 = vrot.slane %v9710, 4
    %v9712 = vadd.f32 %v9710, %v9711
    %v9713 = vrot.slane %v9712, 2
    %v9714 = vadd.f32 %v9712, %v9713
    %v9715 = vrot.slane %v9714, 1
    %v9716 = vadd.f32 %v9714, %v9715
    %v9717 = vsel %vm554, %v9508, 0.0
    %v9718 = vsel %vm554, %v9509, 0.0
    %v9719 = vadd.f32 %v9717, %v9718
    %v9720 = vsel %vm554, %v9510, 0.0
    %v9721 = vadd.f32 %v9719, %v9720
    %v9722 = vsel %vm554, %v9511, 0.0
    %v9723 = vadd.f32 %v9721, %v9722
    %v9724 = vrot.slane %v9723, 4
    %v9725 = vadd.f32 %v9723, %v9724
    %v9726 = vrot.slane %v9725, 2
    %v9727 = vadd.f32 %v9725, %v9726
    %v9728 = vrot.slane %v9727, 1
    %v9729 = vadd.f32 %v9727, %v9728
    %v9730 = vsel %vm554, %v9512, 0.0
    %v9731 = vsel %vm554, %v9513, 0.0
    %v9732 = vadd.f32 %v9730, %v9731
    %v9733 = vsel %vm554, %v9514, 0.0
    %v9734 = vadd.f32 %v9732, %v9733
    %v9735 = vsel %vm554, %v9515, 0.0
    %v9736 = vadd.f32 %v9734, %v9735
    %v9737 = vrot.slane %v9736, 4
    %v9738 = vadd.f32 %v9736, %v9737
    %v9739 = vrot.slane %v9738, 2
    %v9740 = vadd.f32 %v9738, %v9739
    %v9741 = vrot.slane %v9740, 1
    %v9742 = vadd.f32 %v9740, %v9741
    %v9743 = vsel %vm554, %v9516, 0.0
    %v9744 = vsel %vm554, %v9517, 0.0
    %v9745 = vadd.f32 %v9743, %v9744
    %v9746 = vsel %vm554, %v9518, 0.0
    %v9747 = vadd.f32 %v9745, %v9746
    %v9748 = vsel %vm554, %v9519, 0.0
    %v9749 = vadd.f32 %v9747, %v9748
    %v9750 = vrot.slane %v9749, 4
    %v9751 = vadd.f32 %v9749, %v9750
    %v9752 = vrot.slane %v9751, 2
    %v9753 = vadd.f32 %v9751, %v9752
    %v9754 = vrot.slane %v9753, 1
    %v9755 = vadd.f32 %v9753, %v9754
    %v9756 = vsel %vm554, %v9520, 0.0
    %v9757 = vsel %vm554, %v9521, 0.0
    %v9758 = vadd.f32 %v9756, %v9757
    %v9759 = vsel %vm554, %v9522, 0.0
    %v9760 = vadd.f32 %v9758, %v9759
    %v9761 = vsel %vm554, %v9523, 0.0
    %v9762 = vadd.f32 %v9760, %v9761
    %v9763 = vrot.slane %v9762, 4
    %v9764 = vadd.f32 %v9762, %v9763
    %v9765 = vrot.slane %v9764, 2
    %v9766 = vadd.f32 %v9764, %v9765
    %v9767 = vrot.slane %v9766, 1
    %v9768 = vadd.f32 %v9766, %v9767
    %v9769 = vsel %vm554, %v9524, 0.0
    %v9770 = vsel %vm554, %v9525, 0.0
    %v9771 = vadd.f32 %v9769, %v9770
    %v9772 = vsel %vm554, %v9526, 0.0
    %v9773 = vadd.f32 %v9771, %v9772
    %v9774 = vsel %vm554, %v9527, 0.0
    %v9775 = vadd.f32 %v9773, %v9774
    %v9776 = vrot.slane %v9775, 4
    %v9777 = vadd.f32 %v9775, %v9776
    %v9778 = vrot.slane %v9777, 2
    %v9779 = vadd.f32 %v9777, %v9778
    %v9780 = vrot.slane %v9779, 1
    %v9781 = vadd.f32 %v9779, %v9780
    %v9782 = vsel %vm554, %v9528, 0.0
    %v9783 = vsel %vm554, %v9529, 0.0
    %v9784 = vadd.f32 %v9782, %v9783
    %v9785 = vsel %vm554, %v9530, 0.0
    %v9786 = vadd.f32 %v9784, %v9785
    %v9787 = vsel %vm554, %v9531, 0.0
    %v9788 = vadd.f32 %v9786, %v9787
    %v9789 = vrot.slane %v9788, 4
    %v9790 = vadd.f32 %v9788, %v9789
    %v9791 = vrot.slane %v9790, 2
    %v9792 = vadd.f32 %v9790, %v9791
    %v9793 = vrot.slane %v9792, 1
    %v9794 = vadd.f32 %v9792, %v9793
    %v9795 = vsel %vm554, %v9532, 0.0
    %v9796 = vsel %vm554, %v9533, 0.0
    %v9797 = vadd.f32 %v9795, %v9796
    %v9798 = vsel %vm554, %v9534, 0.0
    %v9799 = vadd.f32 %v9797, %v9798
    %v9800 = vsel %vm554, %v9535, 0.0
    %v9801 = vadd.f32 %v9799, %v9800
    %v9802 = vrot.slane %v9801, 4
    %v9803 = vadd.f32 %v9801, %v9802
    %v9804 = vrot.slane %v9803, 2
    %v9805 = vadd.f32 %v9803, %v9804
    %v9806 = vrot.slane %v9805, 1
    %v9807 = vadd.f32 %v9805, %v9806
    %v9808 = vsel %vm554, %v9536, 0.0
    %v9809 = vsel %vm554, %v9537, 0.0
    %v9810 = vadd.f32 %v9808, %v9809
    %v9811 = vsel %vm554, %v9538, 0.0
    %v9812 = vadd.f32 %v9810, %v9811
    %v9813 = vsel %vm554, %v9539, 0.0
    %v9814 = vadd.f32 %v9812, %v9813
    %v9815 = vrot.slane %v9814, 4
    %v9816 = vadd.f32 %v9814, %v9815
    %v9817 = vrot.slane %v9816, 2
    %v9818 = vadd.f32 %v9816, %v9817
    %v9819 = vrot.slane %v9818, 1
    %v9820 = vadd.f32 %v9818, %v9819
    %v9821 = vsel %vm554, %v9540, 0.0
    %v9822 = vsel %vm554, %v9541, 0.0
    %v9823 = vadd.f32 %v9821, %v9822
    %v9824 = vsel %vm554, %v9542, 0.0
    %v9825 = vadd.f32 %v9823, %v9824
    %v9826 = vsel %vm554, %v9543, 0.0
    %v9827 = vadd.f32 %v9825, %v9826
    %v9828 = vrot.slane %v9827, 4
    %v9829 = vadd.f32 %v9827, %v9828
    %v9830 = vrot.slane %v9829, 2
    %v9831 = vadd.f32 %v9829, %v9830
    %v9832 = vrot.slane %v9831, 1
    %v9833 = vadd.f32 %v9831, %v9832
    %v9834 = vsel %vm554, %v9544, 0.0
    %v9835 = vsel %vm554, %v9545, 0.0
    %v9836 = vadd.f32 %v9834, %v9835
    %v9837 = vsel %vm554, %v9546, 0.0
    %v9838 = vadd.f32 %v9836, %v9837
    %v9839 = vsel %vm554, %v9547, 0.0
    %v9840 = vadd.f32 %v9838, %v9839
    %v9841 = vrot.slane %v9840, 4
    %v9842 = vadd.f32 %v9840, %v9841
    %v9843 = vrot.slane %v9842, 2
    %v9844 = vadd.f32 %v9842, %v9843
    %v9845 = vrot.slane %v9844, 1
    %v9846 = vadd.f32 %v9844, %v9845
    %v9847 = vsel %vm554, %v9548, 0.0
    %v9848 = vsel %vm554, %v9549, 0.0
    %v9849 = vadd.f32 %v9847, %v9848
    %v9850 = vsel %vm554, %v9550, 0.0
    %v9851 = vadd.f32 %v9849, %v9850
    %v9852 = vsel %vm554, %v9551, 0.0
    %v9853 = vadd.f32 %v9851, %v9852
    %v9854 = vrot.slane %v9853, 4
    %v9855 = vadd.f32 %v9853, %v9854
    %v9856 = vrot.slane %v9855, 2
    %v9857 = vadd.f32 %v9855, %v9856
    %v9858 = vrot.slane %v9857, 1
    %v9859 = vadd.f32 %v9857, %v9858
    %v9860 = vsel %vm554, %v9552, 0.0
    %v9861 = vsel %vm554, %v9553, 0.0
    %v9862 = vadd.f32 %v9860, %v9861
    %v9863 = vsel %vm554, %v9554, 0.0
    %v9864 = vadd.f32 %v9862, %v9863
    %v9865 = vsel %vm554, %v9555, 0.0
    %v9866 = vadd.f32 %v9864, %v9865
    %v9867 = vrot.slane %v9866, 4
    %v9868 = vadd.f32 %v9866, %v9867
    %v9869 = vrot.slane %v9868, 2
    %v9870 = vadd.f32 %v9868, %v9869
    %v9871 = vrot.slane %v9870, 1
    %v9872 = vadd.f32 %v9870, %v9871
    %v9873 = vsel %vm554, %v9556, 0.0
    %v9874 = vsel %vm554, %v9557, 0.0
    %v9875 = vadd.f32 %v9873, %v9874
    %v9876 = vsel %vm554, %v9558, 0.0
    %v9877 = vadd.f32 %v9875, %v9876
    %v9878 = vsel %vm554, %v9559, 0.0
    %v9879 = vadd.f32 %v9877, %v9878
    %v9880 = vrot.slane %v9879, 4
    %v9881 = vadd.f32 %v9879, %v9880
    %v9882 = vrot.slane %v9881, 2
    %v9883 = vadd.f32 %v9881, %v9882
    %v9884 = vrot.slane %v9883, 1
    %v9885 = vadd.f32 %v9883, %v9884
    %v9886 = vsel %vm554, %v9560, 0.0
    %v9887 = vsel %vm554, %v9561, 0.0
    %v9888 = vadd.f32 %v9886, %v9887
    %v9889 = vsel %vm554, %v9562, 0.0
    %v9890 = vadd.f32 %v9888, %v9889
    %v9891 = vsel %vm554, %v9563, 0.0
    %v9892 = vadd.f32 %v9890, %v9891
    %v9893 = vrot.slane %v9892, 4
    %v9894 = vadd.f32 %v9892, %v9893
    %v9895 = vrot.slane %v9894, 2
    %v9896 = vadd.f32 %v9894, %v9895
    %v9897 = vrot.slane %v9896, 1
    %v9898 = vadd.f32 %v9896, %v9897
    %v9899 = vsel %vm554, %v9564, 0.0
    %v9900 = vsel %vm554, %v9565, 0.0
    %v9901 = vadd.f32 %v9899, %v9900
    %v9902 = vsel %vm554, %v9566, 0.0
    %v9903 = vadd.f32 %v9901, %v9902
    %v9904 = vsel %vm554, %v9567, 0.0
    %v9905 = vadd.f32 %v9903, %v9904
    %v9906 = vrot.slane %v9905, 4
    %v9907 = vadd.f32 %v9905, %v9906
    %v9908 = vrot.slane %v9907, 2
    %v9909 = vadd.f32 %v9907, %v9908
    %v9910 = vrot.slane %v9909, 1
    %v9911 = vadd.f32 %v9909, %v9910
    %v9912 = vsel %vm554, %v9568, 0.0
    %v9913 = vsel %vm554, %v9569, 0.0
    %v9914 = vadd.f32 %v9912, %v9913
    %v9915 = vsel %vm554, %v9570, 0.0
    %v9916 = vadd.f32 %v9914, %v9915
    %v9917 = vsel %vm554, %v9571, 0.0
    %v9918 = vadd.f32 %v9916, %v9917
    %v9919 = vrot.slane %v9918, 4
    %v9920 = vadd.f32 %v9918, %v9919
    %v9921 = vrot.slane %v9920, 2
    %v9922 = vadd.f32 %v9920, %v9921
    %v9923 = vrot.slane %v9922, 1
    %v9924 = vadd.f32 %v9922, %v9923
    %v9925 = vsel %vm554, %v9572, 0.0
    %v9926 = vsel %vm554, %v9573, 0.0
    %v9927 = vadd.f32 %v9925, %v9926
    %v9928 = vsel %vm554, %v9574, 0.0
    %v9929 = vadd.f32 %v9927, %v9928
    %v9930 = vsel %vm554, %v9575, 0.0
    %v9931 = vadd.f32 %v9929, %v9930
    %v9932 = vrot.slane %v9931, 4
    %v9933 = vadd.f32 %v9931, %v9932
    %v9934 = vrot.slane %v9933, 2
    %v9935 = vadd.f32 %v9933, %v9934
    %v9936 = vrot.slane %v9935, 1
    %v9937 = vadd.f32 %v9935, %v9936
    %v9938 = vsel %vm554, %v9576, 0.0
    %v9939 = vsel %vm554, %v9577, 0.0
    %v9940 = vadd.f32 %v9938, %v9939
    %v9941 = vsel %vm554, %v9578, 0.0
    %v9942 = vadd.f32 %v9940, %v9941
    %v9943 = vsel %vm554, %v9579, 0.0
    %v9944 = vadd.f32 %v9942, %v9943
    %v9945 = vrot.slane %v9944, 4
    %v9946 = vadd.f32 %v9944, %v9945
    %v9947 = vrot.slane %v9946, 2
    %v9948 = vadd.f32 %v9946, %v9947
    %v9949 = vrot.slane %v9948, 1
    %v9950 = vadd.f32 %v9948, %v9949
    %v9951 = vsel %vm554, %v9580, 0.0
    %v9952 = vsel %vm554, %v9581, 0.0
    %v9953 = vadd.f32 %v9951, %v9952
    %v9954 = vsel %vm554, %v9582, 0.0
    %v9955 = vadd.f32 %v9953, %v9954
    %v9956 = vsel %vm554, %v9583, 0.0
    %v9957 = vadd.f32 %v9955, %v9956
    %v9958 = vrot.slane %v9957, 4
    %v9959 = vadd.f32 %v9957, %v9958
    %v9960 = vrot.slane %v9959, 2
    %v9961 = vadd.f32 %v9959, %v9960
    %v9962 = vrot.slane %v9961, 1
    %v9963 = vadd.f32 %v9961, %v9962
    %v9964 = vsel %vm554, %v9584, 0.0
    %v9965 = vsel %vm554, %v9585, 0.0
    %v9966 = vadd.f32 %v9964, %v9965
    %v9967 = vsel %vm554, %v9586, 0.0
    %v9968 = vadd.f32 %v9966, %v9967
    %v9969 = vsel %vm554, %v9587, 0.0
    %v9970 = vadd.f32 %v9968, %v9969
    %v9971 = vrot.slane %v9970, 4
    %v9972 = vadd.f32 %v9970, %v9971
    %v9973 = vrot.slane %v9972, 2
    %v9974 = vadd.f32 %v9972, %v9973
    %v9975 = vrot.slane %v9974, 1
    %v9976 = vadd.f32 %v9974, %v9975
    %v9977 = vsel %vm554, %v9588, 0.0
    %v9978 = vsel %vm554, %v9589, 0.0
    %v9979 = vadd.f32 %v9977, %v9978
    %v9980 = vsel %vm554, %v9590, 0.0
    %v9981 = vadd.f32 %v9979, %v9980
    %v9982 = vsel %vm554, %v9591, 0.0
    %v9983 = vadd.f32 %v9981, %v9982
    %v9984 = vrot.slane %v9983, 4
    %v9985 = vadd.f32 %v9983, %v9984
    %v9986 = vrot.slane %v9985, 2
    %v9987 = vadd.f32 %v9985, %v9986
    %v9988 = vrot.slane %v9987, 1
    %v9989 = vadd.f32 %v9987, %v9988
    %v9990 = vsel %vm554, %v9592, 0.0
    %v9991 = vsel %vm554, %v9593, 0.0
    %v9992 = vadd.f32 %v9990, %v9991
    %v9993 = vsel %vm554, %v9594, 0.0
    %v9994 = vadd.f32 %v9992, %v9993
    %v9995 = vsel %vm554, %v9595, 0.0
    %v9996 = vadd.f32 %v9994, %v9995
    %v9997 = vrot.slane %v9996, 4
    %v9998 = vadd.f32 %v9996, %v9997
    %v9999 = vrot.slane %v9998, 2
    %v10000 = vadd.f32 %v9998, %v9999
    %v10001 = vrot.slane %v10000, 1
    %v10002 = vadd.f32 %v10000, %v10001
    %v10003 = vsel %vm554, %v9596, 0.0
    %v10004 = vsel %vm554, %v9597, 0.0
    %v10005 = vadd.f32 %v10003, %v10004
    %v10006 = vsel %vm554, %v9598, 0.0
    %v10007 = vadd.f32 %v10005, %v10006
    %v10008 = vsel %vm554, %v9599, 0.0
    %v10009 = vadd.f32 %v10007, %v10008
    %v10010 = vrot.slane %v10009, 4
    %v10011 = vadd.f32 %v10009, %v10010
    %v10012 = vrot.slane %v10011, 2
    %v10013 = vadd.f32 %v10011, %v10012
    %v10014 = vrot.slane %v10013, 1
    %v10015 = vadd.f32 %v10013, %v10014
    %v10017 = vlaneseq
    %v10018 = vshrl.u32 %v10017, 7
    %v10019 = vsub.s32 0, %v10018
    %v10020 = vrot.slane %v7545, %v10019
    %v10022 = vmul.f32 %v641, %v10020
    %v10023 = vmul.f32 %v644, %v10020
    %v10024 = vmul.f32 %v647, %v10020
    %v10025 = vmul.f32 %v650, %v10020
    %v10058 = vsel %vm4697, %v9625, %v9612
    %v10059 = vsel %vm4699, %v9638, %v10058
    %v10060 = vsel %vm4701, %v9651, %v10059
    %v10061 = vsel %vm4703, %v9664, %v10060
    %v10062 = vsel %vm4705, %v9677, %v10061
    %v10063 = vsel %vm4707, %v9690, %v10062
    %v10064 = vsel %vm4709, %v9703, %v10063
    %v10065 = vsel %vm4697, %v9729, %v9716
    %v10066 = vsel %vm4699, %v9742, %v10065
    %v10067 = vsel %vm4701, %v9755, %v10066
    %v10068 = vsel %vm4703, %v9768, %v10067
    %v10069 = vsel %vm4705, %v9781, %v10068
    %v10070 = vsel %vm4707, %v9794, %v10069
    %v10071 = vsel %vm4709, %v9807, %v10070
    %v10072 = vsel %vm4697, %v9833, %v9820
    %v10073 = vsel %vm4699, %v9846, %v10072
    %v10074 = vsel %vm4701, %v9859, %v10073
    %v10075 = vsel %vm4703, %v9872, %v10074
    %v10076 = vsel %vm4705, %v9885, %v10075
    %v10077 = vsel %vm4707, %v9898, %v10076
    %v10078 = vsel %vm4709, %v9911, %v10077
    %v10079 = vsel %vm4697, %v9937, %v9924
    %v10080 = vsel %vm4699, %v9950, %v10079
    %v10081 = vsel %vm4701, %v9963, %v10080
    %v10082 = vsel %vm4703, %v9976, %v10081
    %v10083 = vsel %vm4705, %v9989, %v10082
    %v10084 = vsel %vm4707, %v10002, %v10083
    %v10085 = vsel %vm4709, %v10015, %v10084
    %v10086 = vsel %vm554, %v10064, 0
    %v10088 = vsel %vm554, %v10071, 0
    %v10090 = vsel %vm554, %v10078, 0
    %v10092 = vsel %vm554, %v10085, 0
    %10094 = vmatprep.subr.mxu0 0.0
    %10095 = vmatpush1.msra.mxu0 %v7541
    %10096 = vmatprep.subr.mxu0 0.0
    %10097 = vmatpush1.msra.mxu0 %v7542
    %10098 = vmatprep.subr.mxu0 0.0
    %10099 = vmatpush1.msra.mxu0 %v7543
    %10100 = vmatprep.subr.mxu0 0.0
    %10101 = vmatpush1.msra.mxu0 %v7544
    %10102 = vmatprep.subr.mxu0 0.0
    %10103 = vmatpush1.msra.mxu0 0.0
    %10104 = vmatprep.subr.mxu0 0.0
    %10105 = vmatpush1.msra.mxu0 0.0
    %10106 = vmatprep.subr.mxu0 0.0
    %10107 = vmatpush1.msra.mxu0 0.0
    %10108 = vmatprep.subr.mxu0 0.0
    %10109 = vmatpush1.msra.mxu0 0.0
    %10110 = vmatprep.subr.mxu0 0.0
    %10111 = vmatpush1.msra.mxu0 0.0
    %10112 = vmatprep.subr.mxu0 0.0
    %10113 = vmatpush1.msra.mxu0 0.0
    %10114 = vmatprep.subr.mxu0 0.0
    %10115 = vmatpush1.msra.mxu0 0.0
    %10116 = vmatprep.subr.mxu0 0.0
    %10117 = vmatpush1.msra.mxu0 0.0
    %10118 = vmatprep.subr.mxu0 0.0
    %10119 = vmatpush1.msra.mxu0 0.0
    %10120 = vmatprep.subr.mxu0 0.0
    %10121 = vmatpush1.msra.mxu0 0.0
    %10122 = vmatprep.subr.mxu0 0.0
    %10123 = vmatpush1.msra.mxu0 0.0
    %10124 = vmatprep.subr.mxu0 0.0
    %10125 = vmatpush1.msra.mxu0 0.0
    %10126 = vmatprep.subr.mxu0 0.0
    %10127 = vmatpush1.msra.mxu0 0.0
    %10128 = vmatprep.subr.mxu0 0.0
    %10129 = vmatpush1.msra.mxu0 0.0
    %10130 = vmatprep.subr.mxu0 0.0
    %10131 = vmatpush1.msra.mxu0 0.0
    %10132 = vmatprep.subr.mxu0 0.0
    %10133 = vmatpush1.msra.mxu0 0.0
    %10134 = vmatprep.subr.mxu0 0.0
    %10135 = vmatpush1.msra.mxu0 0.0
    %10136 = vmatprep.subr.mxu0 0.0
    %10137 = vmatpush1.msra.mxu0 0.0
    %10138 = vmatprep.subr.mxu0 0.0
    %10139 = vmatpush1.msra.mxu0 0.0
    %10140 = vmatprep.subr.mxu0 0.0
    %10141 = vmatpush1.msra.mxu0 0.0
    %10142 = vmatprep.subr.mxu0 0.0
    %10143 = vmatpush1.msra.mxu0 0.0
    %10144 = vmatprep.subr.mxu0 0.0
    %10145 = vmatpush1.msra.mxu0 0.0
    %10146 = vmatprep.subr.mxu0 0.0
    %10147 = vmatpush1.msra.mxu0 0.0
    %10148 = vmatprep.subr.mxu0 0.0
    %10149 = vmatpush1.msra.mxu0 0.0
    %10150 = vmatprep.subr.mxu0 0.0
    %10151 = vmatpush1.msra.mxu0 0.0
    %10152 = vmatprep.subr.mxu0 0.0
    %10153 = vmatpush1.msra.mxu0 0.0
    %10154 = vmatprep.subr.mxu0 0.0
    %10155 = vmatpush1.msra.mxu0 0.0
    %10156 = vmatprep.subr.mxu0 0.0
    %10157 = vmatpush1.msra.mxu0 0.0
    %10158 = vmatprep.mubr.f32.mxu0 0.0
    %10159 = vmatmul.mubr.f32.gmra.mrb[0].mxu0 %v10086
    %v10160 = vpop.f32.mrb[0].mxu0
    %v10161 = vadd.f32 %v10022, %v10160
    %v10162 = vpop.f32.mrb[0].mxu0
    %10163 = vmatprep.mubr.f32.mxu0 0.0
    %10164 = vmatmul.mubr.f32.gmra.mrb[0].mxu0 %v10088
    %v10165 = vpop.f32.mrb[0].mxu0
    %v10166 = vadd.f32 %v10023, %v10165
    %v10167 = vpop.f32.mrb[0].mxu0
    %10168 = vmatprep.mubr.f32.mxu0 0.0
    %10169 = vmatmul.mubr.f32.gmra.mrb[0].mxu0 %v10090
    %v10170 = vpop.f32.mrb[0].mxu0
    %v10171 = vadd.f32 %v10024, %v10170
    %v10172 = vpop.f32.mrb[0].mxu0
    %10173 = vmatprep.mubr.f32.mxu0 0.0
    %10174 = vmatmul.mubr.f32.gmra.mrb[0].mxu0 %v10092
    %v10175 = vpop.f32.mrb[0].mxu0
    %v10176 = vadd.f32 %v10025, %v10175
    %v10177 = vpop.f32.mrb[0].mxu0
    %10178 = vdwg.mxu0
    %v10179 = vxor.u32 %v10161, 2147483648
    %v10180 = vxor.u32 %v10166, 2147483648
    %v10181 = vxor.u32 %v10171, 2147483648
    %v10182 = vxor.u32 %v10176, 2147483648
    %v10183 = vmul.f32 %v10179, 1.442695
    %v10184 = vpow.pop %v10183
    %v10185 = vmul.f32 %v10180, 1.442695
    %v10186 = vpow.pop %v10185
    %v10187 = vmul.f32 %v10181, 1.442695
    %v10188 = vpow.pop %v10187
    %v10189 = vmul.f32 %v10182, 1.442695
    %v10190 = vpow.pop %v10189
    %v10191 = vadd.f32 %v10184, 1.0
    %v10192 = vadd.f32 %v10186, 1.0
    %v10193 = vadd.f32 %v10188, 1.0
    %v10194 = vadd.f32 %v10190, 1.0
    %v10195 = vrcp.pop %v10191
    %v10196 = vmul.f32 1.0, %v10195
    %v10197 = vrcp.pop %v10192
    %v10198 = vmul.f32 1.0, %v10197
    %v10199 = vrcp.pop %v10193
    %v10200 = vmul.f32 1.0, %v10199
    %v10201 = vrcp.pop %v10194
    %v10202 = vmul.f32 1.0, %v10201
    %v10203 = vadd.f32 %v567, 0.14
    %v10204 = vadd.f32 %v568, 0.14
    %v10205 = vadd.f32 %v569, 0.14
    %v10206 = vadd.f32 %v570, 0.14
    %v10207 = vmul.f32 %v10203, %v10203
    %v10208 = vmul.f32 %v10204, %v10204
    %v10209 = vmul.f32 %v10205, %v10205
    %v10210 = vmul.f32 %v10206, %v10206
    %v10211 = vmul.f32 %v10196, %v10207
    %v10212 = vmul.f32 %v10198, %v10208
    %v10213 = vmul.f32 %v10200, %v10209
    %v10214 = vmul.f32 %v10202, %v10210
    %v10215 = vmul.f32 %v10211, 0.02267728
    %v10216 = vmul.f32 %v10212, 0.02267728
    %v10217 = vmul.f32 %v10213, 0.02267728
    %v10218 = vmul.f32 %v10214, 0.02267728
    %v10219 = vmul.f32 %v10215, 100.0
    %v10220 = vmul.f32 %v10216, 100.0
    %v10221 = vmul.f32 %v10217, 100.0
    %v10222 = vmul.f32 %v10218, 100.0
    %v10223 = vmul.f32 %v10196, 0.5
    %v10224 = vmul.f32 %v10198, 0.5
    %v10225 = vmul.f32 %v10200, 0.5
    %v10226 = vmul.f32 %v10202, 0.5
    %v10227 = vmul.f32 %v10223, 2.0
    %v10228 = vmul.f32 %v10224, 2.0
    %v10229 = vmul.f32 %v10225, 2.0
    %v10230 = vmul.f32 %v10226, 2.0
    %v10231 = vadd.f32 %v10227, 0.5
    %v10232 = vadd.f32 %v10228, 0.5
    %v10233 = vadd.f32 %v10229, 0.5
    %v10234 = vadd.f32 %v10230, 0.5
    %10239 = vrot.lane.b32.xlu0 %v10231, 1
    %v10240 = vpop.permute.xlu0 %10239
    %10241 = vrot.lane.b32.xlu0 %v10232, 1
    %v10242 = vpop.permute.xlu0 %10241
    %10243 = vrot.lane.b32.xlu0 %v10233, 1
    %v10244 = vpop.permute.xlu0 %10243
    %10245 = vrot.lane.b32.xlu0 %v10234, 1
    %v10246 = vpop.permute.xlu0 %10245
    %v10251 = vmul.f32 %v620, %v10240
    %v10252 = vmul.f32 %v622, %v10242
    %v10253 = vmul.f32 %v624, %v10244
    %v10254 = vmul.f32 %v626, %v10246
    %v10255 = vld [vmem:[%s11] sm:$0xff]
    %v10256 = vld [vmem:[%s11 + $0x8] sm:$0xff]
    %v10257 = vld [vmem:[%s11 + $0x10] sm:$0xff]
    %v10258 = vld [vmem:[%s11 + $0x18] sm:$0xff]
    %v10259 = vrcp.pop %v10255
    %v10260 = vmul.f32 1.0, %v10259
    %v10261 = vrcp.pop %v10256
    %v10262 = vmul.f32 1.0, %v10261
    %v10263 = vrcp.pop %v10257
    %v10264 = vmul.f32 1.0, %v10263
    %v10265 = vrcp.pop %v10258
    %v10266 = vmul.f32 1.0, %v10265
    %v10267 = vsub.f32 1.0, %v10260
    %v10268 = vsub.f32 1.0, %v10262
    %v10269 = vsub.f32 1.0, %v10264
    %v10270 = vsub.f32 1.0, %v10266
    %v10271 = vmul.f32 %v10267, -69.46774
    %v10272 = vmul.f32 %v10268, -69.46774
    %v10273 = vmul.f32 %v10269, -69.46774
    %v10274 = vmul.f32 %v10270, -69.46774
    %vm10275 = vcmp.eq.s32.totalorder %v308, %v313
    %vm10276 = vcmp.eq.s32.totalorder %v309, %v313
    %vm10277 = vcmp.eq.s32.totalorder %v310, %v313
    %vm10278 = vcmp.eq.s32.totalorder %v311, %v313
    %v10279 = vsel %vm10275, 1.0, 0.0
    %v10280 = vsel %vm10276, 1.0, 0.0
    %v10281 = vsel %vm10277, 1.0, 0.0
    %v10282 = vsel %vm10278, 1.0, 0.0
    %10284 = vset.pattern.permute.xlu0 1
    %10285 = vperm.xlu0 %10284, %v10251
    %v10286 = vpop.permute.xlu0 %10285
    %10289 = vset.pattern.permute.xlu0 1
    %10290 = vperm.xlu0 %10289, %v10252
    %v10291 = vpop.permute.xlu0 %10290
    %10294 = vset.pattern.permute.xlu0 1
    %10295 = vperm.xlu0 %10294, %v10253
    %v10296 = vpop.permute.xlu0 %10295
    %10299 = vset.pattern.permute.xlu0 1
    %10300 = vperm.xlu0 %10299, %v10254
    %v10301 = vpop.permute.xlu0 %10300
    %v10303 = vmul.f32 %v10279, %v10286
    %v10304 = vmul.f32 %v10280, %v10291
    %v10305 = vmul.f32 %v10281, %v10296
    %v10306 = vmul.f32 %v10282, %v10301
    %v10307 = vsel %vm554, %v10303, 0.0
    %v10308 = vsel %vm554, %v10304, 0.0
    %v10309 = vadd.f32 %v10307, %v10308
    %v10310 = vsel %vm554, %v10305, 0.0
    %v10311 = vadd.f32 %v10309, %v10310
    %v10312 = vsel %vm554, %v10306, 0.0
    %v10313 = vadd.f32 %v10311, %v10312
    %v10314 = vrot.slane %v10313, 4
    %v10315 = vadd.f32 %v10313, %v10314
    %v10316 = vrot.slane %v10315, 2
    %v10317 = vadd.f32 %v10315, %v10316
    %v10318 = vrot.slane %v10317, 1
    %v10319 = vadd.f32 %v10317, %v10318
    %v10320 = vmul.f32 %v10286, %v10319
    %v10321 = vmul.f32 %v10291, %v10319
    %v10322 = vmul.f32 %v10296, %v10319
    %v10323 = vmul.f32 %v10301, %v10319
    %v10324 = vmul.f32 %v349, %v349
    %v10325 = vmul.f32 %v350, %v350
    %v10326 = vmul.f32 %v351, %v351
    %v10327 = vmul.f32 %v352, %v352
    %v10328 = vsub.f32 0.0, %v10324
    %v10329 = vsub.f32 0.0, %v10325
    %v10330 = vsub.f32 0.0, %v10326
    %v10331 = vsub.f32 0.0, %v10327
    %v10332 = vmul.f32 %v10320, 4.0
    %v10333 = vmul.f32 %v10321, 4.0
    %v10334 = vmul.f32 %v10322, 4.0
    %v10335 = vmul.f32 %v10323, 4.0
    %v10336 = vrcp.pop %v10332
    %v10337 = vmul.f32 %v10328, %v10336
    %v10338 = vrcp.pop %v10333
    %v10339 = vmul.f32 %v10329, %v10338
    %v10340 = vrcp.pop %v10334
    %v10341 = vmul.f32 %v10330, %v10340
    %v10342 = vrcp.pop %v10335
    %v10343 = vmul.f32 %v10331, %v10342
    %v10344 = vmul.f32 %v10337, 1.442695
    %v10345 = vpow.pop %v10344
    %v10346 = vmul.f32 %v10339, 1.442695
    %v10347 = vpow.pop %v10346
    %v10348 = vmul.f32 %v10341, 1.442695
    %v10349 = vpow.pop %v10348
    %v10350 = vmul.f32 %v10343, 1.442695
    %v10351 = vpow.pop %v10350
    %v10352 = vmul.f32 %v10320, %v10345
    %v10353 = vmul.f32 %v10321, %v10347
    %v10354 = vmul.f32 %v10322, %v10349
    %v10355 = vmul.f32 %v10323, %v10351
    %v10356 = vadd.f32 %v10324, %v10352
    %v10357 = vadd.f32 %v10325, %v10353
    %v10358 = vadd.f32 %v10326, %v10354
    %v10359 = vadd.f32 %v10327, %v10355
    %v10360 = vrsqrt.pop %v10356
    %v10361 = vmul.f32 %v10356, %v10360
    %vm10362 = vcmp.eq.f32.partialorder %v10356, inf
    %v10363 = vsel %vm10362, %v10356, %v10361
    %vm10364 = vcmp.eq.f32.partialorder %v10356, 0.0
    %v10365 = vand.u32 %v10356, 2147483648
    %v10366 = vsel %vm10364, %v10365, %v10363
    %v10367 = vrsqrt.pop %v10357
    %v10368 = vmul.f32 %v10357, %v10367
    %vm10369 = vcmp.eq.f32.partialorder %v10357, inf
    %v10370 = vsel %vm10369, %v10357, %v10368
    %vm10371 = vcmp.eq.f32.partialorder %v10357, 0.0
    %v10372 = vand.u32 %v10357, 2147483648
    %v10373 = vsel %vm10371, %v10372, %v10370
    %v10374 = vrsqrt.pop %v10358
    %v10375 = vmul.f32 %v10358, %v10374
    %vm10376 = vcmp.eq.f32.partialorder %v10358, inf
    %v10377 = vsel %vm10376, %v10358, %v10375
    %vm10378 = vcmp.eq.f32.partialorder %v10358, 0.0
    %v10379 = vand.u32 %v10358, 2147483648
    %v10380 = vsel %vm10378, %v10379, %v10377
    %v10381 = vrsqrt.pop %v10359
    %v10382 = vmul.f32 %v10359, %v10381
    %vm10383 = vcmp.eq.f32.partialorder %v10359, inf
    %v10384 = vsel %vm10383, %v10359, %v10382
    %vm10385 = vcmp.eq.f32.partialorder %v10359, 0.0
    %v10386 = vand.u32 %v10359, 2147483648
    %v10387 = vsel %vm10385, %v10386, %v10384
    %10388 = vset.pattern.permute.xlu0 0
    %10389 = vperm.xlu0 %10388, %v353
    %v10390 = vpop.permute.xlu0 %10389
    %10392 = vset.pattern.permute.xlu0 0
    %10393 = vperm.xlu0 %10392, %v354
    %v10394 = vpop.permute.xlu0 %10393
    %10396 = vset.pattern.permute.xlu0 0
    %10397 = vperm.xlu0 %10396, %v355
    %v10398 = vpop.permute.xlu0 %10397
    %10400 = vset.pattern.permute.xlu0 0
    %10401 = vperm.xlu0 %10400, %v356
    %v10402 = vpop.permute.xlu0 %10401
    %v10404 = vlaneseq
    %v10405 = vshrl.u32 %v10404, 7
    %v10406 = vsub.s32 0, %v10405
    %v10407 = vrot.slane %v357, %v10406
    %v10408 = vmul.f32 %v10390, %v10407
    %v10409 = vmul.f32 %v10394, %v10407
    %v10410 = vmul.f32 %v10398, %v10407
    %v10411 = vmul.f32 %v10402, %v10407
    %v10412 = vmul.f32 %v345, %v10408
    %v10413 = vmul.f32 %v346, %v10409
    %v10414 = vmul.f32 %v347, %v10410
    %v10415 = vmul.f32 %v348, %v10411
    %v10416 = vrcp.pop %v10366
    %v10417 = vmul.f32 %v10412, %v10416
    %v10418 = vrcp.pop %v10373
    %v10419 = vmul.f32 %v10413, %v10418
    %v10420 = vrcp.pop %v10380
    %v10421 = vmul.f32 %v10414, %v10420
    %v10422 = vrcp.pop %v10387
    %v10423 = vmul.f32 %v10415, %v10422
    %v10424 = vsel %vm554, %v10417, 0.0
    %10425 = vadd.xlane.f32.xlu0 %v10424
    %v10426 = vpop.xlane.xlu0 %10425
    %v10427 = vsel %vm554, %v10419, 0.0
    %10428 = vadd.xlane.f32.xlu0 %v10427
    %v10429 = vpop.xlane.xlu0 %10428
    %v10430 = vsel %vm554, %v10421, 0.0
    %10431 = vadd.xlane.f32.xlu0 %v10430
    %v10432 = vpop.xlane.xlu0 %10431
    %v10433 = vsel %vm554, %v10423, 0.0
    %10434 = vadd.xlane.f32.xlu0 %v10433
    %v10435 = vpop.xlane.xlu0 %10434
    %v10436 = vmul.f32 %v10271, %v10426
    %v10437 = vmul.f32 %v10272, %v10429
    %v10438 = vmul.f32 %v10273, %v10432
    %v10439 = vmul.f32 %v10274, %v10435
    %v10440 = vmul.f32 %v353, %v353
    %v10441 = vmul.f32 %v354, %v354
    %v10442 = vmul.f32 %v355, %v355
    %v10443 = vmul.f32 %v356, %v356
    %v10444 = vmul.f32 %v10271, %v10440
    %v10445 = vmul.f32 %v10272, %v10441
    %v10446 = vmul.f32 %v10273, %v10442
    %v10447 = vmul.f32 %v10274, %v10443
    %10448 = vrot.lane.b32.xlu0 %v10251, 127
    %v10449 = vpop.permute.xlu0 %10448
    %10450 = vrot.lane.b32.xlu0 %v10252, 127
    %v10451 = vpop.permute.xlu0 %10450
    %10452 = vrot.lane.b32.xlu0 %v10253, 127
    %v10453 = vpop.permute.xlu0 %10452
    %10454 = vrot.lane.b32.xlu0 %v10254, 127
    %v10455 = vpop.permute.xlu0 %10454
    %v10460 = vrcp.pop %v10449
    %v10461 = vmul.f32 %v10444, %v10460
    %v10462 = vrcp.pop %v10451
    %v10463 = vmul.f32 %v10445, %v10462
    %v10464 = vrcp.pop %v10453
    %v10465 = vmul.f32 %v10446, %v10464
    %v10466 = vrcp.pop %v10455
    %v10467 = vmul.f32 %v10447, %v10466
    %v10468 = vadd.f32 %v10436, %v10461
    %v10469 = vadd.f32 %v10437, %v10463
    %v10470 = vadd.f32 %v10438, %v10465
    %v10471 = vadd.f32 %v10439, %v10467
    %10476 = vrot.lane.b32.xlu0 %v10219, 127
    %v10477 = vpop.permute.xlu0 %10476
    %10478 = vrot.lane.b32.xlu0 %v10220, 127
    %v10479 = vpop.permute.xlu0 %10478
    %10480 = vrot.lane.b32.xlu0 %v10221, 127
    %v10481 = vpop.permute.xlu0 %10480
    %10482 = vrot.lane.b32.xlu0 %v10222, 127
    %v10483 = vpop.permute.xlu0 %10482
    %v10488 = vadd.f32 %v10468, %v10477
    %v10489 = vadd.f32 %v10469, %v10479
    %v10490 = vadd.f32 %v10470, %v10481
    %v10491 = vadd.f32 %v10471, %v10483
    %v10492 = vsel %vm2145, %v10488, 0.0
    %v10493 = vsel %vm2145, %v10489, 0.0
    %v10494 = vadd.f32 %v10492, %v10493
    %v10495 = vsel %vm2145, %v10490, 0.0
    %v10496 = vadd.f32 %v10494, %v10495
    %v10497 = vsel %vm2145, %v10491, 0.0
    %v10498 = vadd.f32 %v10496, %v10497
    %v10499 = vrot.slane %v10498, 4
    %v10500 = vadd.f32 %v10498, %v10499
    %v10501 = vrot.slane %v10500, 2
    %v10502 = vadd.f32 %v10500, %v10501
    %v10503 = vrot.slane %v10502, 1
    %v10504 = vadd.f32 %v10502, %v10503
    %10506 = vset.pattern.permute.xlu0 0
    %10507 = vperm.xlu0 %10506, %v10504
    %v10508 = vpop.permute.xlu0 %10507
    %10510 = vst [vmem:[#allocation8] sm:$0x1] %v10508
    // Predicated region
    $region138: #{tpu_custom_call.1} parent=1 // pred_check
      _
    $region139: #{tpu_custom_call.1} parent=1 // pred_check_branch
      %10512 = sbr.rel (0) target = $region141
    $region140: #{tpu_custom_call.1} parent=1 // pred_region
      %s10514 = ssub.s32 16, 16
      %10515 = vsyncadd [#allocation4], %s10514
      %s10517 = sshll.u32 [#allocation8], 4
      %s10518 = int_to_ptr.vmem [resolvable:$true] %s10517
      %10520 = dma.vmem_to_hbm [thread:$0]  %s10518, 16, %s63, [#allocation4]
    $region141: #{tpu_custom_call.1} parent=1 // pred_fallthru
      _
    // Predicated region
    $region142: #{tpu_custom_call.1} parent=1 // pred_check
      _
    $region143: #{tpu_custom_call.1} parent=1 // pred_check_branch
      %10522 = sbr.rel (0) target = $region145
    $region144: #{tpu_custom_call.1} parent=1 // pred_region
      %10523 = dma.done [#allocation4], 16
    $region145: #{tpu_custom_call.1} parent=1 // pred_fallthru
      _
    %10524 = vsyncpa [#allocation3], 1
    %10525 = vsyncpa [#allocation6], 1
    %10526 = vsyncpa [#allocation4], 1

</llo_original>
